<compile_context>
chip_gen: v6e
topology: v6e:2x2x1
jax: 0.10.0
libtpu: 0.0.40
codegen_flags: <defaults>
</compile_context>

<pallas_src>
import functools

import jax
import jax.numpy as jnp
from jax import lax
from jax.experimental import pallas as pl
from jax.experimental.pallas import tpu as pltpu


def _rup8(n):
    return ((n + 7) // 8) * 8


# -----------------------------------------------------------------------------
# Fused kernel
# -----------------------------------------------------------------------------
def _pnet_fused_kernel(x_ref, w1_ref, b1_ref, w2_ref, b2_ref, w3_ref, b3_ref,
                       w4_ref, b4_ref, out_ref, act_ref, cols_ref,
                       *, H, W, cins, couts, out_c):
    """Full PNet2d forward for one batch element (channel-major layout).

    x_ref:   (1, cins[0], L)  input, channels zero-padded 6 -> 8
    wN_ref:  (coutN, 9*cinN)  conv weight, BN scale folded in (layers 1-3)
    bN_ref:  (coutN, 1)       folded conv+BN bias
    out_ref: (1, couts[3], L) rows [0:outC) = mu, [outC:2*outC) = sigma
    act_ref:  (Cmax, L)       current activation, channel-major
    cols_ref: (9*Cmax, L)     per-layer im2col slab (K on sublanes)
    """
    L = H * W

    # Spatial-index helpers for the 3x3 boundary masks (computed once).
    lane = lax.broadcasted_iota(jnp.int32, (1, L), 1)
    if (W & (W - 1)) == 0:            # power-of-two fast path (demo: W=16)
        xpos = lane & (W - 1)
    else:
        xpos = lane % W

    def tap_mask(dy, dx):
        conds = []
        if dy < 0:
            conds.append(lane >= (-dy) * W)       # y+dy >= 0
        if dy > 0:
            conds.append(lane < L - dy * W)       # y+dy <= H-1
        if dx < 0:
            conds.append(xpos >= -dx)             # x+dx >= 0
        if dx > 0:
            conds.append(xpos < W - dx)           # x+dx <= W-1
        if not conds:
            return None
        m = conds[0]
        for c in conds[1:]:
            m = jnp.logical_and(m, c)
        return m

    def build_cols(cin):
        """im2col: 9 shifted copies of the activation, stacked along sublanes."""
        src = act_ref[0:cin, :]                   # (cin, L), aligned load
        for ky in range(3):
            for kx in range(3):
                dy, dx = ky - 1, kx - 1
                shift = (-(dy * W + dx)) % L      # want part[:, i] = src[:, i+dy*W+dx]
                part = pltpu.roll(src, shift=shift, axis=1) if shift else src
                m = tap_mask(dy, dx)
                if m is not None:
                    part = jnp.where(m, part, 0.0)
                t = ky * 3 + kx
                cols_ref[t * cin:(t + 1) * cin, :] = part   # aligned, lane-dense
        return 9 * cin

    # Load input (already channel-major and padded to cins[0] rows).
    act_ref[0:cins[0], :] = x_ref[0]

    # Three hidden conv + (folded) BN + LeakyReLU layers: one matmul each.
    hidden = ((w1_ref, b1_ref), (w2_ref, b2_ref), (w3_ref, b3_ref))
    for li in range(3):
        w_ref, b_ref = hidden[li]
        k = build_cols(cins[li])
        y = jnp.dot(w_ref[...], cols_ref[0:k, :],
                    preferred_element_type=jnp.float32) + b_ref[...]
        y = jnp.where(y >= 0, y, 0.01 * y)        # LeakyReLU(0.01)
        act_ref[0:couts[li], :] = y               # aligned full-width store

    # Final conv (no BN / act) with fused mu / sigma epilogue.
    k = build_cols(cins[3])
    y = jnp.dot(w4_ref[...], cols_ref[0:k, :],
                preferred_element_type=jnp.float32) + b4_ref[...]
    row = lax.broadcasted_iota(jnp.int32, (couts[3], L), 0)
    sigma = jnp.exp(jnp.clip(y, -10.0, 10.0))     # EUP; padded rows -> exp(0)=1
    out_ref[0] = jnp.where(row < out_c, y, sigma)


# -----------------------------------------------------------------------------
# Wrapper
# -----------------------------------------------------------------------------
def pnet2d_forward(x, packed, out_channels=10):
    """x: (B, P, A, Cin) -> (mu, sigma), each (B, P, A, out_channels)."""
    w1, b1, w2, b2, w3, b3, w4, b4 = packed
    B, H, W, c_in = x.shape
    L = H * W

    weights = (w1, w2, w3, w4)
    cins = tuple(w.shape[1] // 9 for w in weights)    # (8, 32, 64, 128)
    couts = tuple(w.shape[0] for w in weights)        # (32, 64, 128, 24)
    c_max = max(cins[0], *couts[:3])

    # Channel-major input; pad real channels (6) up to cins[0] (8) only.
    x_cm = jnp.transpose(x.reshape(B, L, c_in).astype(jnp.float32), (0, 2, 1))
    x_cm = jnp.pad(x_cm, ((0, 0), (0, cins[0] - c_in), (0, 0)))

    kernel = functools.partial(_pnet_fused_kernel, H=H, W=W,
                               cins=cins, couts=couts, out_c=out_channels)

    out = pl.pallas_call(
        kernel,
        out_shape=jax.ShapeDtypeStruct((B, couts[3], L), jnp.float32),
        grid_spec=pltpu.PrefetchScalarGridSpec(
            num_scalar_prefetch=0,
            grid=(B,),
            in_specs=[
                pl.BlockSpec((1, cins[0], L), lambda b: (b, 0, 0)),
                pl.BlockSpec(w1.shape, lambda b: (0, 0)),
                pl.BlockSpec(b1.shape, lambda b: (0, 0)),
                pl.BlockSpec(w2.shape, lambda b: (0, 0)),
                pl.BlockSpec(b2.shape, lambda b: (0, 0)),
                pl.BlockSpec(w3.shape, lambda b: (0, 0)),
                pl.BlockSpec(b3.shape, lambda b: (0, 0)),
                pl.BlockSpec(w4.shape, lambda b: (0, 0)),
                pl.BlockSpec(b4.shape, lambda b: (0, 0)),
            ],
            out_specs=pl.BlockSpec((1, couts[3], L), lambda b: (b, 0, 0)),
            scratch_shapes=[
                pltpu.VMEM((c_max, L), jnp.float32),          # activation
                pltpu.VMEM((9 * max(cins), L), jnp.float32),  # im2col slab
            ],
        ),
        compiler_params=pltpu.CompilerParams(
            dimension_semantics=("parallel",)),   # v7x: 2 TCs split the batch
    )(x_cm, w1, b1, w2, b2, w3, b3, w4, b4)

    # Pure layout plumbing (tiny arrays), handled by XLA outside the kernel.
    mu = out[:, :out_channels, :]
    sigma = out[:, out_channels:2 * out_channels, :]
    mu = jnp.transpose(mu, (0, 2, 1)).reshape(B, H, W, out_channels)
    sigma = jnp.transpose(sigma, (0, 2, 1)).reshape(B, H, W, out_channels)
    return mu, sigma


# -----------------------------------------------------------------------------
# Parameters (deterministic; BN in eval mode, folded into conv weights)
# -----------------------------------------------------------------------------
def make_params(key, in_channels=6, out_channels=10,
                hidden_channels=(32, 64, 128)):
    eps = 1e-5
    chans = [in_channels, *hidden_channels, out_channels * 2]
    layers = []
    for li in range(4):
        cin, cout = chans[li], chans[li + 1]
        key, kw, kb, kg, kbeta = jax.random.split(key, 5)
        # conv weight in (kh, kw, Cin, Cout) (PyTorch stores (Cout, Cin, kh, kw))
        w = jax.random.normal(kw, (3, 3, cin, cout), jnp.float32) * 0.05
        b_conv = jax.random.normal(kb, (cout,), jnp.float32) * 0.05
        if li < 3:
            gamma = 1.0 + 0.1 * jax.random.normal(kg, (cout,), jnp.float32)
            beta = 0.1 * jax.random.normal(kbeta, (cout,), jnp.float32)
            run_mean = jnp.zeros((cout,), jnp.float32)   # BN init values
            run_var = jnp.ones((cout,), jnp.float32)
            scale = gamma / jnp.sqrt(run_var + eps)
            w_f = w * scale                               # fold BN into weights
            bias = scale * (b_conv - run_mean) + beta
            act = True
        else:
            w_f, bias, act = w, b_conv, False
        layers.append((w_f, bias, act))
    return layers


def pack_params(layers):
    """Per-layer channel-major weights (Cout_p, 9*Cin_p) with exact-ish K."""
    packed = []
    for (w, b, _) in layers:
        _, _, cin, cout = w.shape
        cin_p = _rup8(cin)        # 8 / 32 / 64 / 128
        cout_p = _rup8(cout)      # 32 / 64 / 128 / 24
        wp = jnp.zeros((cout_p, 9 * cin_p), jnp.float32)
        for ky in range(3):
            for kx in range(3):
                t = ky * 3 + kx
                wp = wp.at[:cout, t * cin_p:t * cin_p + cin].set(
                    jnp.transpose(w[ky, kx]))             # (Cout, Cin)
        bp = jnp.zeros((cout_p, 1), jnp.float32).at[:cout, 0].set(b)
        packed += [wp, bp]
    return tuple(packed)


# -----------------------------------------------------------------------------
# Pure-JAX reference (sanity check)
# -----------------------------------------------------------------------------
def pnet2d_reference(x, layers, out_channels=10):
    h = x
    for (w, bias, act) in layers:
        h = lax.conv_general_dilated(
            h, w, window_strides=(1, 1), padding="SAME",
            dimension_numbers=("NHWC", "HWIO", "NHWC"))
        h = h + bias
        if act:
            h = jnp.where(h >= 0, h, 0.01 * h)
    mu = h[..., :out_channels]
    sigma = jnp.exp(jnp.clip(h[..., out_channels:], -10.0, 10.0))
    return mu, sigma


if __name__ == "__main__":
    key = jax.random.PRNGKey(0)
    key, kx = jax.random.split(key)

    B, P, A, Cin, outC = 2, 16, 16, 6, 10
    x = jax.random.normal(kx, (B, P, A, Cin), jnp.float32)

    layers = make_params(key, in_channels=Cin, out_channels=outC)
    packed = pack_params(layers)

    fwd = jax.jit(lambda xx: pnet2d_forward(xx, packed, out_channels=outC))
    mu, sigma = fwd(x)
    mu = jax.block_until_ready(mu)
    sigma = jax.block_until_ready(sigma)

    mu_ref, sigma_ref = pnet2d_reference(x, layers, out_channels=outC)
    assert mu.shape == (B, P, A, outC) and sigma.shape == (B, P, A, outC)
    assert jnp.allclose(mu, mu_ref, atol=1e-3, rtol=1e-3)
    assert jnp.allclose(sigma, sigma_ref, atol=1e-3, rtol=1e-3)

    print("KERNEL_OK")
</pallas_src>

<mosaic_0001>
module attributes {stable_mosaic.version = 11 : i64} {
  func.func @_pnet_fused_kernel(%arg0: i32, %arg1: memref<1x8x256xf32, #tpu.memory_space<vmem>>, %arg2: memref<32x72xf32, #tpu.memory_space<vmem>>, %arg3: memref<32x1xf32, #tpu.memory_space<vmem>>, %arg4: memref<64x288xf32, #tpu.memory_space<vmem>>, %arg5: memref<64x1xf32, #tpu.memory_space<vmem>>, %arg6: memref<128x576xf32, #tpu.memory_space<vmem>>, %arg7: memref<128x1xf32, #tpu.memory_space<vmem>>, %arg8: memref<24x1152xf32, #tpu.memory_space<vmem>>, %arg9: memref<24x1xf32, #tpu.memory_space<vmem>>, %arg10: memref<1x24x256xf32, #tpu.memory_space<vmem>>, %arg11: memref<128x256xf32, #tpu.memory_space<vmem>>, %arg12: memref<1152x256xf32, #tpu.memory_space<vmem>>) attributes {dimension_semantics = [#tpu.dimension_semantics<parallel>], iteration_bounds = array<i64: 2>, scalar_prefetch = 0 : i64, scratch_operands = 2 : i64, tpu.core_type = #tpu.core_type<tc>, window_params = [{transform_indices = @transform_0, window_bounds = array<i64: 1, 8, 256>}, {pipeline_mode = #tpu.pipeline_mode<synchronous>, transform_indices = @transform_1, window_bounds = array<i64: 32, 72>}, {pipeline_mode = #tpu.pipeline_mode<synchronous>, transform_indices = @transform_2, window_bounds = array<i64: 32, 1>}, {pipeline_mode = #tpu.pipeline_mode<synchronous>, transform_indices = @transform_3, window_bounds = array<i64: 64, 288>}, {pipeline_mode = #tpu.pipeline_mode<synchronous>, transform_indices = @transform_4, window_bounds = array<i64: 64, 1>}, {pipeline_mode = #tpu.pipeline_mode<synchronous>, transform_indices = @transform_5, window_bounds = array<i64: 128, 576>}, {pipeline_mode = #tpu.pipeline_mode<synchronous>, transform_indices = @transform_6, window_bounds = array<i64: 128, 1>}, {pipeline_mode = #tpu.pipeline_mode<synchronous>, transform_indices = @transform_7, window_bounds = array<i64: 24, 1152>}, {pipeline_mode = #tpu.pipeline_mode<synchronous>, transform_indices = @transform_8, window_bounds = array<i64: 24, 1>}, {transform_indices = @transform_9, window_bounds = array<i64: 1, 24, 256>}]} {
    %0 = tpu.iota {dimensions = array<i32: 1>} : vector<1x256xi32>
    %c15_i32 = arith.constant 15 : i32
    %1 = vector.broadcast %c15_i32 : i32 to vector<1x256xi32>
    %2 = arith.andi %0, %1 : vector<1x256xi32>
    %c0 = arith.constant 0 : index
    %c0_0 = arith.constant 0 : index
    %c0_1 = arith.constant 0 : index
    %3 = vector.load %arg1[%c0, %c0_0, %c0_1] : memref<1x8x256xf32, #tpu.memory_space<vmem>>, vector<1x8x256xf32>
    %4 = vector.shape_cast %3 : vector<1x8x256xf32> to vector<8x256xf32>
    %c0_2 = arith.constant 0 : index
    %c0_3 = arith.constant 0 : index
    %5 = vector.load %arg11[%c0_2, %c0_3] : memref<128x256xf32, #tpu.memory_space<vmem>>, vector<8x256xf32>
    tpu.vector_store %arg11[%c0_2, %c0_3], %4 {strides = array<i32>} : memref<128x256xf32, #tpu.memory_space<vmem>>, vector<8x256xf32>,
    %c0_4 = arith.constant 0 : index
    %c0_5 = arith.constant 0 : index
    %6 = vector.load %arg11[%c0_4, %c0_5] : memref<128x256xf32, #tpu.memory_space<vmem>>, vector<8x256xf32>
    %c17_i32 = arith.constant 17 : i32
    %7 = tpu.dynamic_rotate %6 by %c17_i32 dim 1 : vector<8x256xf32>, i32 -> vector<8x256xf32>
    %c16_i32 = arith.constant 16 : i32
    %8 = vector.broadcast %c16_i32 : i32 to vector<1x256xi32>
    %9 = arith.cmpi sge, %0, %8 : vector<1x256xi32>
    %c1_i32 = arith.constant 1 : i32
    %10 = vector.broadcast %c1_i32 : i32 to vector<1x256xi32>
    %11 = arith.cmpi sge, %2, %10 : vector<1x256xi32>
    %12 = arith.andi %9, %11 : vector<1x256xi1>
    %cst = arith.constant 0.000000e+00 : f32
    %13 = vector.shape_cast %12 : vector<1x256xi1> to vector<1x256xi1>
    %14 = vector.broadcast %13 : vector<1x256xi1> to vector<8x256xi1>
    %15 = vector.broadcast %cst : f32 to vector<8x256xf32>
    %16 = arith.select %14, %7, %15 : vector<8x256xi1>, vector<8x256xf32>
    %c0_6 = arith.constant 0 : index
    %c0_7 = arith.constant 0 : index
    %17 = vector.load %arg12[%c0_6, %c0_7] : memref<1152x256xf32, #tpu.memory_space<vmem>>, vector<8x256xf32>
    tpu.vector_store %arg12[%c0_6, %c0_7], %16 {strides = array<i32>} : memref<1152x256xf32, #tpu.memory_space<vmem>>, vector<8x256xf32>,
    %c16_i32_8 = arith.constant 16 : i32
    %18 = tpu.dynamic_rotate %6 by %c16_i32_8 dim 1 : vector<8x256xf32>, i32 -> vector<8x256xf32>
    %c16_i32_9 = arith.constant 16 : i32
    %19 = vector.broadcast %c16_i32_9 : i32 to vector<1x256xi32>
    %20 = arith.cmpi sge, %0, %19 : vector<1x256xi32>
    %cst_10 = arith.constant 0.000000e+00 : f32
    %21 = vector.shape_cast %20 : vector<1x256xi1> to vector<1x256xi1>
    %22 = vector.broadcast %21 : vector<1x256xi1> to vector<8x256xi1>
    %23 = vector.broadcast %cst_10 : f32 to vector<8x256xf32>
    %24 = arith.select %22, %18, %23 : vector<8x256xi1>, vector<8x256xf32>
    %c8 = arith.constant 8 : index
    %c0_11 = arith.constant 0 : index
    %25 = vector.load %arg12[%c8, %c0_11] : memref<1152x256xf32, #tpu.memory_space<vmem>>, vector<8x256xf32>
    tpu.vector_store %arg12[%c8, %c0_11], %24 {strides = array<i32>} : memref<1152x256xf32, #tpu.memory_space<vmem>>, vector<8x256xf32>,
    %c15_i32_12 = arith.constant 15 : i32
    %26 = tpu.dynamic_rotate %6 by %c15_i32_12 dim 1 : vector<8x256xf32>, i32 -> vector<8x256xf32>
    %c16_i32_13 = arith.constant 16 : i32
    %27 = vector.broadcast %c16_i32_13 : i32 to vector<1x256xi32>
    %28 = arith.cmpi sge, %0, %27 : vector<1x256xi32>
    %c15_i32_14 = arith.constant 15 : i32
    %29 = vector.broadcast %c15_i32_14 : i32 to vector<1x256xi32>
    %30 = arith.cmpi slt, %2, %29 : vector<1x256xi32>
    %31 = arith.andi %28, %30 : vector<1x256xi1>
    %cst_15 = arith.constant 0.000000e+00 : f32
    %32 = vector.shape_cast %31 : vector<1x256xi1> to vector<1x256xi1>
    %33 = vector.broadcast %32 : vector<1x256xi1> to vector<8x256xi1>
    %34 = vector.broadcast %cst_15 : f32 to vector<8x256xf32>
    %35 = arith.select %33, %26, %34 : vector<8x256xi1>, vector<8x256xf32>
    %c16 = arith.constant 16 : index
    %c0_16 = arith.constant 0 : index
    %36 = vector.load %arg12[%c16, %c0_16] : memref<1152x256xf32, #tpu.memory_space<vmem>>, vector<8x256xf32>
    tpu.vector_store %arg12[%c16, %c0_16], %35 {strides = array<i32>} : memref<1152x256xf32, #tpu.memory_space<vmem>>, vector<8x256xf32>,
    %c1_i32_17 = arith.constant 1 : i32
    %37 = tpu.dynamic_rotate %6 by %c1_i32_17 dim 1 : vector<8x256xf32>, i32 -> vector<8x256xf32>
    %c1_i32_18 = arith.constant 1 : i32
    %38 = vector.broadcast %c1_i32_18 : i32 to vector<1x256xi32>
    %39 = arith.cmpi sge, %2, %38 : vector<1x256xi32>
    %cst_19 = arith.constant 0.000000e+00 : f32
    %40 = vector.shape_cast %39 : vector<1x256xi1> to vector<1x256xi1>
    %41 = vector.broadcast %40 : vector<1x256xi1> to vector<8x256xi1>
    %42 = vector.broadcast %cst_19 : f32 to vector<8x256xf32>
    %43 = arith.select %41, %37, %42 : vector<8x256xi1>, vector<8x256xf32>
    %c24 = arith.constant 24 : index
    %c0_20 = arith.constant 0 : index
    %44 = vector.load %arg12[%c24, %c0_20] : memref<1152x256xf32, #tpu.memory_space<vmem>>, vector<8x256xf32>
    tpu.vector_store %arg12[%c24, %c0_20], %43 {strides = array<i32>} : memref<1152x256xf32, #tpu.memory_space<vmem>>, vector<8x256xf32>,
    %c32 = arith.constant 32 : index
    %c0_21 = arith.constant 0 : index
    %45 = vector.load %arg12[%c32, %c0_21] : memref<1152x256xf32, #tpu.memory_space<vmem>>, vector<8x256xf32>
    tpu.vector_store %arg12[%c32, %c0_21], %6 {strides = array<i32>} : memref<1152x256xf32, #tpu.memory_space<vmem>>, vector<8x256xf32>,
    %c255_i32 = arith.constant 255 : i32
    %46 = tpu.dynamic_rotate %6 by %c255_i32 dim 1 : vector<8x256xf32>, i32 -> vector<8x256xf32>
    %c15_i32_22 = arith.constant 15 : i32
    %47 = vector.broadcast %c15_i32_22 : i32 to vector<1x256xi32>
    %48 = arith.cmpi slt, %2, %47 : vector<1x256xi32>
    %cst_23 = arith.constant 0.000000e+00 : f32
    %49 = vector.shape_cast %48 : vector<1x256xi1> to vector<1x256xi1>
    %50 = vector.broadcast %49 : vector<1x256xi1> to vector<8x256xi1>
    %51 = vector.broadcast %cst_23 : f32 to vector<8x256xf32>
    %52 = arith.select %50, %46, %51 : vector<8x256xi1>, vector<8x256xf32>
    %c40 = arith.constant 40 : index
    %c0_24 = arith.constant 0 : index
    %53 = vector.load %arg12[%c40, %c0_24] : memref<1152x256xf32, #tpu.memory_space<vmem>>, vector<8x256xf32>
    tpu.vector_store %arg12[%c40, %c0_24], %52 {strides = array<i32>} : memref<1152x256xf32, #tpu.memory_space<vmem>>, vector<8x256xf32>,
    %c241_i32 = arith.constant 241 : i32
    %54 = tpu.dynamic_rotate %6 by %c241_i32 dim 1 : vector<8x256xf32>, i32 -> vector<8x256xf32>
    %c240_i32 = arith.constant 240 : i32
    %55 = vector.broadcast %c240_i32 : i32 to vector<1x256xi32>
    %56 = arith.cmpi slt, %0, %55 : vector<1x256xi32>
    %c1_i32_25 = arith.constant 1 : i32
    %57 = vector.broadcast %c1_i32_25 : i32 to vector<1x256xi32>
    %58 = arith.cmpi sge, %2, %57 : vector<1x256xi32>
    %59 = arith.andi %56, %58 : vector<1x256xi1>
    %cst_26 = arith.constant 0.000000e+00 : f32
    %60 = vector.shape_cast %59 : vector<1x256xi1> to vector<1x256xi1>
    %61 = vector.broadcast %60 : vector<1x256xi1> to vector<8x256xi1>
    %62 = vector.broadcast %cst_26 : f32 to vector<8x256xf32>
    %63 = arith.select %61, %54, %62 : vector<8x256xi1>, vector<8x256xf32>
    %c48 = arith.constant 48 : index
    %c0_27 = arith.constant 0 : index
    %64 = vector.load %arg12[%c48, %c0_27] : memref<1152x256xf32, #tpu.memory_space<vmem>>, vector<8x256xf32>
    tpu.vector_store %arg12[%c48, %c0_27], %63 {strides = array<i32>} : memref<1152x256xf32, #tpu.memory_space<vmem>>, vector<8x256xf32>,
    %c240_i32_28 = arith.constant 240 : i32
    %65 = tpu.dynamic_rotate %6 by %c240_i32_28 dim 1 : vector<8x256xf32>, i32 -> vector<8x256xf32>
    %c240_i32_29 = arith.constant 240 : i32
    %66 = vector.broadcast %c240_i32_29 : i32 to vector<1x256xi32>
    %67 = arith.cmpi slt, %0, %66 : vector<1x256xi32>
    %cst_30 = arith.constant 0.000000e+00 : f32
    %68 = vector.shape_cast %67 : vector<1x256xi1> to vector<1x256xi1>
    %69 = vector.broadcast %68 : vector<1x256xi1> to vector<8x256xi1>
    %70 = vector.broadcast %cst_30 : f32 to vector<8x256xf32>
    %71 = arith.select %69, %65, %70 : vector<8x256xi1>, vector<8x256xf32>
    %c56 = arith.constant 56 : index
    %c0_31 = arith.constant 0 : index
    %72 = vector.load %arg12[%c56, %c0_31] : memref<1152x256xf32, #tpu.memory_space<vmem>>, vector<8x256xf32>
    tpu.vector_store %arg12[%c56, %c0_31], %71 {strides = array<i32>} : memref<1152x256xf32, #tpu.memory_space<vmem>>, vector<8x256xf32>,
    %c239_i32 = arith.constant 239 : i32
    %73 = tpu.dynamic_rotate %6 by %c239_i32 dim 1 : vector<8x256xf32>, i32 -> vector<8x256xf32>
    %c240_i32_32 = arith.constant 240 : i32
    %74 = vector.broadcast %c240_i32_32 : i32 to vector<1x256xi32>
    %75 = arith.cmpi slt, %0, %74 : vector<1x256xi32>
    %c15_i32_33 = arith.constant 15 : i32
    %76 = vector.broadcast %c15_i32_33 : i32 to vector<1x256xi32>
    %77 = arith.cmpi slt, %2, %76 : vector<1x256xi32>
    %78 = arith.andi %75, %77 : vector<1x256xi1>
    %cst_34 = arith.constant 0.000000e+00 : f32
    %79 = vector.shape_cast %78 : vector<1x256xi1> to vector<1x256xi1>
    %80 = vector.broadcast %79 : vector<1x256xi1> to vector<8x256xi1>
    %81 = vector.broadcast %cst_34 : f32 to vector<8x256xf32>
    %82 = arith.select %80, %73, %81 : vector<8x256xi1>, vector<8x256xf32>
    %c64 = arith.constant 64 : index
    %c0_35 = arith.constant 0 : index
    %83 = vector.load %arg12[%c64, %c0_35] : memref<1152x256xf32, #tpu.memory_space<vmem>>, vector<8x256xf32>
    tpu.vector_store %arg12[%c64, %c0_35], %82 {strides = array<i32>} : memref<1152x256xf32, #tpu.memory_space<vmem>>, vector<8x256xf32>,
    %c0_36 = arith.constant 0 : index
    %c0_37 = arith.constant 0 : index
    %84 = vector.load %arg2[%c0_36, %c0_37] : memref<32x72xf32, #tpu.memory_space<vmem>>, vector<32x72xf32>
    %c0_38 = arith.constant 0 : index
    %c0_39 = arith.constant 0 : index
    %85 = vector.load %arg12[%c0_38, %c0_39] : memref<1152x256xf32, #tpu.memory_space<vmem>>, vector<72x256xf32>
    %cst_40 = arith.constant dense<0.000000e+00> : vector<32x256xf32>
    %86 = tpu.matmul %84, %85, %cst_40 {dimension_numbers = #tpu.dot_dimension_numbers<[1], [0], [0], [1], [0, 0, 1, 1], [], []>} : vector<32x72xf32>, vector<72x256xf32>, vector<32x256xf32> -> vector<32x256xf32>
    %c0_41 = arith.constant 0 : index
    %c0_42 = arith.constant 0 : index
    %87 = vector.load %arg3[%c0_41, %c0_42] : memref<32x1xf32, #tpu.memory_space<vmem>>, vector<32x1xf32>
    %88 = vector.broadcast %87 : vector<32x1xf32> to vector<32x256xf32>
    %89 = arith.addf %86, %88 : vector<32x256xf32>
    %cst_43 = arith.constant 0.000000e+00 : f32
    %90 = vector.broadcast %cst_43 : f32 to vector<32x256xf32>
    %91 = arith.cmpf oge, %89, %90 : vector<32x256xf32>
    %cst_44 = arith.constant 0.00999999977 : f32
    %92 = vector.broadcast %cst_44 : f32 to vector<32x256xf32>
    %93 = arith.mulf %92, %89 : vector<32x256xf32>
    %94 = arith.select %91, %89, %93 : vector<32x256xi1>, vector<32x256xf32>
    %c0_45 = arith.constant 0 : index
    %c0_46 = arith.constant 0 : index
    %95 = vector.load %arg11[%c0_45, %c0_46] : memref<128x256xf32, #tpu.memory_space<vmem>>, vector<32x256xf32>
    tpu.vector_store %arg11[%c0_45, %c0_46], %94 {strides = array<i32>} : memref<128x256xf32, #tpu.memory_space<vmem>>, vector<32x256xf32>,
    %c0_47 = arith.constant 0 : index
    %c0_48 = arith.constant 0 : index
    %96 = vector.load %arg11[%c0_47, %c0_48] : memref<128x256xf32, #tpu.memory_space<vmem>>, vector<32x256xf32>
    %c17_i32_49 = arith.constant 17 : i32
    %97 = tpu.dynamic_rotate %96 by %c17_i32_49 dim 1 : vector<32x256xf32>, i32 -> vector<32x256xf32>
    %c16_i32_50 = arith.constant 16 : i32
    %98 = vector.broadcast %c16_i32_50 : i32 to vector<1x256xi32>
    %99 = arith.cmpi sge, %0, %98 : vector<1x256xi32>
    %c1_i32_51 = arith.constant 1 : i32
    %100 = vector.broadcast %c1_i32_51 : i32 to vector<1x256xi32>
    %101 = arith.cmpi sge, %2, %100 : vector<1x256xi32>
    %102 = arith.andi %99, %101 : vector<1x256xi1>
    %cst_52 = arith.constant 0.000000e+00 : f32
    %103 = vector.shape_cast %102 : vector<1x256xi1> to vector<1x256xi1>
    %104 = vector.broadcast %103 : vector<1x256xi1> to vector<32x256xi1>
    %105 = vector.broadcast %cst_52 : f32 to vector<32x256xf32>
    %106 = arith.select %104, %97, %105 : vector<32x256xi1>, vector<32x256xf32>
    %c0_53 = arith.constant 0 : index
    %c0_54 = arith.constant 0 : index
    %107 = vector.load %arg12[%c0_53, %c0_54] : memref<1152x256xf32, #tpu.memory_space<vmem>>, vector<32x256xf32>
    tpu.vector_store %arg12[%c0_53, %c0_54], %106 {strides = array<i32>} : memref<1152x256xf32, #tpu.memory_space<vmem>>, vector<32x256xf32>,
    %c16_i32_55 = arith.constant 16 : i32
    %108 = tpu.dynamic_rotate %96 by %c16_i32_55 dim 1 : vector<32x256xf32>, i32 -> vector<32x256xf32>
    %c16_i32_56 = arith.constant 16 : i32
    %109 = vector.broadcast %c16_i32_56 : i32 to vector<1x256xi32>
    %110 = arith.cmpi sge, %0, %109 : vector<1x256xi32>
    %cst_57 = arith.constant 0.000000e+00 : f32
    %111 = vector.shape_cast %110 : vector<1x256xi1> to vector<1x256xi1>
    %112 = vector.broadcast %111 : vector<1x256xi1> to vector<32x256xi1>
    %113 = vector.broadcast %cst_57 : f32 to vector<32x256xf32>
    %114 = arith.select %112, %108, %113 : vector<32x256xi1>, vector<32x256xf32>
    %c32_58 = arith.constant 32 : index
    %c0_59 = arith.constant 0 : index
    %115 = vector.load %arg12[%c32_58, %c0_59] : memref<1152x256xf32, #tpu.memory_space<vmem>>, vector<32x256xf32>
    tpu.vector_store %arg12[%c32_58, %c0_59], %114 {strides = array<i32>} : memref<1152x256xf32, #tpu.memory_space<vmem>>, vector<32x256xf32>,
    %c15_i32_60 = arith.constant 15 : i32
    %116 = tpu.dynamic_rotate %96 by %c15_i32_60 dim 1 : vector<32x256xf32>, i32 -> vector<32x256xf32>
    %c16_i32_61 = arith.constant 16 : i32
    %117 = vector.broadcast %c16_i32_61 : i32 to vector<1x256xi32>
    %118 = arith.cmpi sge, %0, %117 : vector<1x256xi32>
    %c15_i32_62 = arith.constant 15 : i32
    %119 = vector.broadcast %c15_i32_62 : i32 to vector<1x256xi32>
    %120 = arith.cmpi slt, %2, %119 : vector<1x256xi32>
    %121 = arith.andi %118, %120 : vector<1x256xi1>
    %cst_63 = arith.constant 0.000000e+00 : f32
    %122 = vector.shape_cast %121 : vector<1x256xi1> to vector<1x256xi1>
    %123 = vector.broadcast %122 : vector<1x256xi1> to vector<32x256xi1>
    %124 = vector.broadcast %cst_63 : f32 to vector<32x256xf32>
    %125 = arith.select %123, %116, %124 : vector<32x256xi1>, vector<32x256xf32>
    %c64_64 = arith.constant 64 : index
    %c0_65 = arith.constant 0 : index
    %126 = vector.load %arg12[%c64_64, %c0_65] : memref<1152x256xf32, #tpu.memory_space<vmem>>, vector<32x256xf32>
    tpu.vector_store %arg12[%c64_64, %c0_65], %125 {strides = array<i32>} : memref<1152x256xf32, #tpu.memory_space<vmem>>, vector<32x256xf32>,
    %c1_i32_66 = arith.constant 1 : i32
    %127 = tpu.dynamic_rotate %96 by %c1_i32_66 dim 1 : vector<32x256xf32>, i32 -> vector<32x256xf32>
    %c1_i32_67 = arith.constant 1 : i32
    %128 = vector.broadcast %c1_i32_67 : i32 to vector<1x256xi32>
    %129 = arith.cmpi sge, %2, %128 : vector<1x256xi32>
    %cst_68 = arith.constant 0.000000e+00 : f32
    %130 = vector.shape_cast %129 : vector<1x256xi1> to vector<1x256xi1>
    %131 = vector.broadcast %130 : vector<1x256xi1> to vector<32x256xi1>
    %132 = vector.broadcast %cst_68 : f32 to vector<32x256xf32>
    %133 = arith.select %131, %127, %132 : vector<32x256xi1>, vector<32x256xf32>
    %c96 = arith.constant 96 : index
    %c0_69 = arith.constant 0 : index
    %134 = vector.load %arg12[%c96, %c0_69] : memref<1152x256xf32, #tpu.memory_space<vmem>>, vector<32x256xf32>
    tpu.vector_store %arg12[%c96, %c0_69], %133 {strides = array<i32>} : memref<1152x256xf32, #tpu.memory_space<vmem>>, vector<32x256xf32>,
    %c128 = arith.constant 128 : index
    %c0_70 = arith.constant 0 : index
    %135 = vector.load %arg12[%c128, %c0_70] : memref<1152x256xf32, #tpu.memory_space<vmem>>, vector<32x256xf32>
    tpu.vector_store %arg12[%c128, %c0_70], %96 {strides = array<i32>} : memref<1152x256xf32, #tpu.memory_space<vmem>>, vector<32x256xf32>,
    %c255_i32_71 = arith.constant 255 : i32
    %136 = tpu.dynamic_rotate %96 by %c255_i32_71 dim 1 : vector<32x256xf32>, i32 -> vector<32x256xf32>
    %c15_i32_72 = arith.constant 15 : i32
    %137 = vector.broadcast %c15_i32_72 : i32 to vector<1x256xi32>
    %138 = arith.cmpi slt, %2, %137 : vector<1x256xi32>
    %cst_73 = arith.constant 0.000000e+00 : f32
    %139 = vector.shape_cast %138 : vector<1x256xi1> to vector<1x256xi1>
    %140 = vector.broadcast %139 : vector<1x256xi1> to vector<32x256xi1>
    %141 = vector.broadcast %cst_73 : f32 to vector<32x256xf32>
    %142 = arith.select %140, %136, %141 : vector<32x256xi1>, vector<32x256xf32>
    %c160 = arith.constant 160 : index
    %c0_74 = arith.constant 0 : index
    %143 = vector.load %arg12[%c160, %c0_74] : memref<1152x256xf32, #tpu.memory_space<vmem>>, vector<32x256xf32>
    tpu.vector_store %arg12[%c160, %c0_74], %142 {strides = array<i32>} : memref<1152x256xf32, #tpu.memory_space<vmem>>, vector<32x256xf32>,
    %c241_i32_75 = arith.constant 241 : i32
    %144 = tpu.dynamic_rotate %96 by %c241_i32_75 dim 1 : vector<32x256xf32>, i32 -> vector<32x256xf32>
    %c240_i32_76 = arith.constant 240 : i32
    %145 = vector.broadcast %c240_i32_76 : i32 to vector<1x256xi32>
    %146 = arith.cmpi slt, %0, %145 : vector<1x256xi32>
    %c1_i32_77 = arith.constant 1 : i32
    %147 = vector.broadcast %c1_i32_77 : i32 to vector<1x256xi32>
    %148 = arith.cmpi sge, %2, %147 : vector<1x256xi32>
    %149 = arith.andi %146, %148 : vector<1x256xi1>
    %cst_78 = arith.constant 0.000000e+00 : f32
    %150 = vector.shape_cast %149 : vector<1x256xi1> to vector<1x256xi1>
    %151 = vector.broadcast %150 : vector<1x256xi1> to vector<32x256xi1>
    %152 = vector.broadcast %cst_78 : f32 to vector<32x256xf32>
    %153 = arith.select %151, %144, %152 : vector<32x256xi1>, vector<32x256xf32>
    %c192 = arith.constant 192 : index
    %c0_79 = arith.constant 0 : index
    %154 = vector.load %arg12[%c192, %c0_79] : memref<1152x256xf32, #tpu.memory_space<vmem>>, vector<32x256xf32>
    tpu.vector_store %arg12[%c192, %c0_79], %153 {strides = array<i32>} : memref<1152x256xf32, #tpu.memory_space<vmem>>, vector<32x256xf32>,
    %c240_i32_80 = arith.constant 240 : i32
    %155 = tpu.dynamic_rotate %96 by %c240_i32_80 dim 1 : vector<32x256xf32>, i32 -> vector<32x256xf32>
    %c240_i32_81 = arith.constant 240 : i32
    %156 = vector.broadcast %c240_i32_81 : i32 to vector<1x256xi32>
    %157 = arith.cmpi slt, %0, %156 : vector<1x256xi32>
    %cst_82 = arith.constant 0.000000e+00 : f32
    %158 = vector.shape_cast %157 : vector<1x256xi1> to vector<1x256xi1>
    %159 = vector.broadcast %158 : vector<1x256xi1> to vector<32x256xi1>
    %160 = vector.broadcast %cst_82 : f32 to vector<32x256xf32>
    %161 = arith.select %159, %155, %160 : vector<32x256xi1>, vector<32x256xf32>
    %c224 = arith.constant 224 : index
    %c0_83 = arith.constant 0 : index
    %162 = vector.load %arg12[%c224, %c0_83] : memref<1152x256xf32, #tpu.memory_space<vmem>>, vector<32x256xf32>
    tpu.vector_store %arg12[%c224, %c0_83], %161 {strides = array<i32>} : memref<1152x256xf32, #tpu.memory_space<vmem>>, vector<32x256xf32>,
    %c239_i32_84 = arith.constant 239 : i32
    %163 = tpu.dynamic_rotate %96 by %c239_i32_84 dim 1 : vector<32x256xf32>, i32 -> vector<32x256xf32>
    %c240_i32_85 = arith.constant 240 : i32
    %164 = vector.broadcast %c240_i32_85 : i32 to vector<1x256xi32>
    %165 = arith.cmpi slt, %0, %164 : vector<1x256xi32>
    %c15_i32_86 = arith.constant 15 : i32
    %166 = vector.broadcast %c15_i32_86 : i32 to vector<1x256xi32>
    %167 = arith.cmpi slt, %2, %166 : vector<1x256xi32>
    %168 = arith.andi %165, %167 : vector<1x256xi1>
    %cst_87 = arith.constant 0.000000e+00 : f32
    %169 = vector.shape_cast %168 : vector<1x256xi1> to vector<1x256xi1>
    %170 = vector.broadcast %169 : vector<1x256xi1> to vector<32x256xi1>
    %171 = vector.broadcast %cst_87 : f32 to vector<32x256xf32>
    %172 = arith.select %170, %163, %171 : vector<32x256xi1>, vector<32x256xf32>
    %c256 = arith.constant 256 : index
    %c0_88 = arith.constant 0 : index
    %173 = vector.load %arg12[%c256, %c0_88] : memref<1152x256xf32, #tpu.memory_space<vmem>>, vector<32x256xf32>
    tpu.vector_store %arg12[%c256, %c0_88], %172 {strides = array<i32>} : memref<1152x256xf32, #tpu.memory_space<vmem>>, vector<32x256xf32>,
    %c0_89 = arith.constant 0 : index
    %c0_90 = arith.constant 0 : index
    %174 = vector.load %arg4[%c0_89, %c0_90] : memref<64x288xf32, #tpu.memory_space<vmem>>, vector<64x288xf32>
    %c0_91 = arith.constant 0 : index
    %c0_92 = arith.constant 0 : index
    %175 = vector.load %arg12[%c0_91, %c0_92] : memref<1152x256xf32, #tpu.memory_space<vmem>>, vector<288x256xf32>
    %cst_93 = arith.constant dense<0.000000e+00> : vector<64x256xf32>
    %176 = tpu.matmul %174, %175, %cst_93 {dimension_numbers = #tpu.dot_dimension_numbers<[1], [0], [0], [1], [0, 0, 1, 1], [], []>} : vector<64x288xf32>, vector<288x256xf32>, vector<64x256xf32> -> vector<64x256xf32>
    %c0_94 = arith.constant 0 : index
    %c0_95 = arith.constant 0 : index
    %177 = vector.load %arg5[%c0_94, %c0_95] : memref<64x1xf32, #tpu.memory_space<vmem>>, vector<64x1xf32>
    %178 = vector.broadcast %177 : vector<64x1xf32> to vector<64x256xf32>
    %179 = arith.addf %176, %178 : vector<64x256xf32>
    %cst_96 = arith.constant 0.000000e+00 : f32
    %180 = vector.broadcast %cst_96 : f32 to vector<64x256xf32>
    %181 = arith.cmpf oge, %179, %180 : vector<64x256xf32>
    %cst_97 = arith.constant 0.00999999977 : f32
    %182 = vector.broadcast %cst_97 : f32 to vector<64x256xf32>
    %183 = arith.mulf %182, %179 : vector<64x256xf32>
    %184 = arith.select %181, %179, %183 : vector<64x256xi1>, vector<64x256xf32>
    %c0_98 = arith.constant 0 : index
    %c0_99 = arith.constant 0 : index
    %185 = vector.load %arg11[%c0_98, %c0_99] : memref<128x256xf32, #tpu.memory_space<vmem>>, vector<64x256xf32>
    tpu.vector_store %arg11[%c0_98, %c0_99], %184 {strides = array<i32>} : memref<128x256xf32, #tpu.memory_space<vmem>>, vector<64x256xf32>,
    %c0_100 = arith.constant 0 : index
    %c0_101 = arith.constant 0 : index
    %186 = vector.load %arg11[%c0_100, %c0_101] : memref<128x256xf32, #tpu.memory_space<vmem>>, vector<64x256xf32>
    %c17_i32_102 = arith.constant 17 : i32
    %187 = tpu.dynamic_rotate %186 by %c17_i32_102 dim 1 : vector<64x256xf32>, i32 -> vector<64x256xf32>
    %c16_i32_103 = arith.constant 16 : i32
    %188 = vector.broadcast %c16_i32_103 : i32 to vector<1x256xi32>
    %189 = arith.cmpi sge, %0, %188 : vector<1x256xi32>
    %c1_i32_104 = arith.constant 1 : i32
    %190 = vector.broadcast %c1_i32_104 : i32 to vector<1x256xi32>
    %191 = arith.cmpi sge, %2, %190 : vector<1x256xi32>
    %192 = arith.andi %189, %191 : vector<1x256xi1>
    %cst_105 = arith.constant 0.000000e+00 : f32
    %193 = vector.shape_cast %192 : vector<1x256xi1> to vector<1x256xi1>
    %194 = vector.broadcast %193 : vector<1x256xi1> to vector<64x256xi1>
    %195 = vector.broadcast %cst_105 : f32 to vector<64x256xf32>
    %196 = arith.select %194, %187, %195 : vector<64x256xi1>, vector<64x256xf32>
    %c0_106 = arith.constant 0 : index
    %c0_107 = arith.constant 0 : index
    %197 = vector.load %arg12[%c0_106, %c0_107] : memref<1152x256xf32, #tpu.memory_space<vmem>>, vector<64x256xf32>
    tpu.vector_store %arg12[%c0_106, %c0_107], %196 {strides = array<i32>} : memref<1152x256xf32, #tpu.memory_space<vmem>>, vector<64x256xf32>,
    %c16_i32_108 = arith.constant 16 : i32
    %198 = tpu.dynamic_rotate %186 by %c16_i32_108 dim 1 : vector<64x256xf32>, i32 -> vector<64x256xf32>
    %c16_i32_109 = arith.constant 16 : i32
    %199 = vector.broadcast %c16_i32_109 : i32 to vector<1x256xi32>
    %200 = arith.cmpi sge, %0, %199 : vector<1x256xi32>
    %cst_110 = arith.constant 0.000000e+00 : f32
    %201 = vector.shape_cast %200 : vector<1x256xi1> to vector<1x256xi1>
    %202 = vector.broadcast %201 : vector<1x256xi1> to vector<64x256xi1>
    %203 = vector.broadcast %cst_110 : f32 to vector<64x256xf32>
    %204 = arith.select %202, %198, %203 : vector<64x256xi1>, vector<64x256xf32>
    %c64_111 = arith.constant 64 : index
    %c0_112 = arith.constant 0 : index
    %205 = vector.load %arg12[%c64_111, %c0_112] : memref<1152x256xf32, #tpu.memory_space<vmem>>, vector<64x256xf32>
    tpu.vector_store %arg12[%c64_111, %c0_112], %204 {strides = array<i32>} : memref<1152x256xf32, #tpu.memory_space<vmem>>, vector<64x256xf32>,
    %c15_i32_113 = arith.constant 15 : i32
    %206 = tpu.dynamic_rotate %186 by %c15_i32_113 dim 1 : vector<64x256xf32>, i32 -> vector<64x256xf32>
    %c16_i32_114 = arith.constant 16 : i32
    %207 = vector.broadcast %c16_i32_114 : i32 to vector<1x256xi32>
    %208 = arith.cmpi sge, %0, %207 : vector<1x256xi32>
    %c15_i32_115 = arith.constant 15 : i32
    %209 = vector.broadcast %c15_i32_115 : i32 to vector<1x256xi32>
    %210 = arith.cmpi slt, %2, %209 : vector<1x256xi32>
    %211 = arith.andi %208, %210 : vector<1x256xi1>
    %cst_116 = arith.constant 0.000000e+00 : f32
    %212 = vector.shape_cast %211 : vector<1x256xi1> to vector<1x256xi1>
    %213 = vector.broadcast %212 : vector<1x256xi1> to vector<64x256xi1>
    %214 = vector.broadcast %cst_116 : f32 to vector<64x256xf32>
    %215 = arith.select %213, %206, %214 : vector<64x256xi1>, vector<64x256xf32>
    %c128_117 = arith.constant 128 : index
    %c0_118 = arith.constant 0 : index
    %216 = vector.load %arg12[%c128_117, %c0_118] : memref<1152x256xf32, #tpu.memory_space<vmem>>, vector<64x256xf32>
    tpu.vector_store %arg12[%c128_117, %c0_118], %215 {strides = array<i32>} : memref<1152x256xf32, #tpu.memory_space<vmem>>, vector<64x256xf32>,
    %c1_i32_119 = arith.constant 1 : i32
    %217 = tpu.dynamic_rotate %186 by %c1_i32_119 dim 1 : vector<64x256xf32>, i32 -> vector<64x256xf32>
    %c1_i32_120 = arith.constant 1 : i32
    %218 = vector.broadcast %c1_i32_120 : i32 to vector<1x256xi32>
    %219 = arith.cmpi sge, %2, %218 : vector<1x256xi32>
    %cst_121 = arith.constant 0.000000e+00 : f32
    %220 = vector.shape_cast %219 : vector<1x256xi1> to vector<1x256xi1>
    %221 = vector.broadcast %220 : vector<1x256xi1> to vector<64x256xi1>
    %222 = vector.broadcast %cst_121 : f32 to vector<64x256xf32>
    %223 = arith.select %221, %217, %222 : vector<64x256xi1>, vector<64x256xf32>
    %c192_122 = arith.constant 192 : index
    %c0_123 = arith.constant 0 : index
    %224 = vector.load %arg12[%c192_122, %c0_123] : memref<1152x256xf32, #tpu.memory_space<vmem>>, vector<64x256xf32>
    tpu.vector_store %arg12[%c192_122, %c0_123], %223 {strides = array<i32>} : memref<1152x256xf32, #tpu.memory_space<vmem>>, vector<64x256xf32>,
    %c256_124 = arith.constant 256 : index
    %c0_125 = arith.constant 0 : index
    %225 = vector.load %arg12[%c256_124, %c0_125] : memref<1152x256xf32, #tpu.memory_space<vmem>>, vector<64x256xf32>
    tpu.vector_store %arg12[%c256_124, %c0_125], %186 {strides = array<i32>} : memref<1152x256xf32, #tpu.memory_space<vmem>>, vector<64x256xf32>,
    %c255_i32_126 = arith.constant 255 : i32
    %226 = tpu.dynamic_rotate %186 by %c255_i32_126 dim 1 : vector<64x256xf32>, i32 -> vector<64x256xf32>
    %c15_i32_127 = arith.constant 15 : i32
    %227 = vector.broadcast %c15_i32_127 : i32 to vector<1x256xi32>
    %228 = arith.cmpi slt, %2, %227 : vector<1x256xi32>
    %cst_128 = arith.constant 0.000000e+00 : f32
    %229 = vector.shape_cast %228 : vector<1x256xi1> to vector<1x256xi1>
    %230 = vector.broadcast %229 : vector<1x256xi1> to vector<64x256xi1>
    %231 = vector.broadcast %cst_128 : f32 to vector<64x256xf32>
    %232 = arith.select %230, %226, %231 : vector<64x256xi1>, vector<64x256xf32>
    %c320 = arith.constant 320 : index
    %c0_129 = arith.constant 0 : index
    %233 = vector.load %arg12[%c320, %c0_129] : memref<1152x256xf32, #tpu.memory_space<vmem>>, vector<64x256xf32>
    tpu.vector_store %arg12[%c320, %c0_129], %232 {strides = array<i32>} : memref<1152x256xf32, #tpu.memory_space<vmem>>, vector<64x256xf32>,
    %c241_i32_130 = arith.constant 241 : i32
    %234 = tpu.dynamic_rotate %186 by %c241_i32_130 dim 1 : vector<64x256xf32>, i32 -> vector<64x256xf32>
    %c240_i32_131 = arith.constant 240 : i32
    %235 = vector.broadcast %c240_i32_131 : i32 to vector<1x256xi32>
    %236 = arith.cmpi slt, %0, %235 : vector<1x256xi32>
    %c1_i32_132 = arith.constant 1 : i32
    %237 = vector.broadcast %c1_i32_132 : i32 to vector<1x256xi32>
    %238 = arith.cmpi sge, %2, %237 : vector<1x256xi32>
    %239 = arith.andi %236, %238 : vector<1x256xi1>
    %cst_133 = arith.constant 0.000000e+00 : f32
    %240 = vector.shape_cast %239 : vector<1x256xi1> to vector<1x256xi1>
    %241 = vector.broadcast %240 : vector<1x256xi1> to vector<64x256xi1>
    %242 = vector.broadcast %cst_133 : f32 to vector<64x256xf32>
    %243 = arith.select %241, %234, %242 : vector<64x256xi1>, vector<64x256xf32>
    %c384 = arith.constant 384 : index
    %c0_134 = arith.constant 0 : index
    %244 = vector.load %arg12[%c384, %c0_134] : memref<1152x256xf32, #tpu.memory_space<vmem>>, vector<64x256xf32>
    tpu.vector_store %arg12[%c384, %c0_134], %243 {strides = array<i32>} : memref<1152x256xf32, #tpu.memory_space<vmem>>, vector<64x256xf32>,
    %c240_i32_135 = arith.constant 240 : i32
    %245 = tpu.dynamic_rotate %186 by %c240_i32_135 dim 1 : vector<64x256xf32>, i32 -> vector<64x256xf32>
    %c240_i32_136 = arith.constant 240 : i32
    %246 = vector.broadcast %c240_i32_136 : i32 to vector<1x256xi32>
    %247 = arith.cmpi slt, %0, %246 : vector<1x256xi32>
    %cst_137 = arith.constant 0.000000e+00 : f32
    %248 = vector.shape_cast %247 : vector<1x256xi1> to vector<1x256xi1>
    %249 = vector.broadcast %248 : vector<1x256xi1> to vector<64x256xi1>
    %250 = vector.broadcast %cst_137 : f32 to vector<64x256xf32>
    %251 = arith.select %249, %245, %250 : vector<64x256xi1>, vector<64x256xf32>
    %c448 = arith.constant 448 : index
    %c0_138 = arith.constant 0 : index
    %252 = vector.load %arg12[%c448, %c0_138] : memref<1152x256xf32, #tpu.memory_space<vmem>>, vector<64x256xf32>
    tpu.vector_store %arg12[%c448, %c0_138], %251 {strides = array<i32>} : memref<1152x256xf32, #tpu.memory_space<vmem>>, vector<64x256xf32>,
    %c239_i32_139 = arith.constant 239 : i32
    %253 = tpu.dynamic_rotate %186 by %c239_i32_139 dim 1 : vector<64x256xf32>, i32 -> vector<64x256xf32>
    %c240_i32_140 = arith.constant 240 : i32
    %254 = vector.broadcast %c240_i32_140 : i32 to vector<1x256xi32>
    %255 = arith.cmpi slt, %0, %254 : vector<1x256xi32>
    %c15_i32_141 = arith.constant 15 : i32
    %256 = vector.broadcast %c15_i32_141 : i32 to vector<1x256xi32>
    %257 = arith.cmpi slt, %2, %256 : vector<1x256xi32>
    %258 = arith.andi %255, %257 : vector<1x256xi1>
    %cst_142 = arith.constant 0.000000e+00 : f32
    %259 = vector.shape_cast %258 : vector<1x256xi1> to vector<1x256xi1>
    %260 = vector.broadcast %259 : vector<1x256xi1> to vector<64x256xi1>
    %261 = vector.broadcast %cst_142 : f32 to vector<64x256xf32>
    %262 = arith.select %260, %253, %261 : vector<64x256xi1>, vector<64x256xf32>
    %c512 = arith.constant 512 : index
    %c0_143 = arith.constant 0 : index
    %263 = vector.load %arg12[%c512, %c0_143] : memref<1152x256xf32, #tpu.memory_space<vmem>>, vector<64x256xf32>
    tpu.vector_store %arg12[%c512, %c0_143], %262 {strides = array<i32>} : memref<1152x256xf32, #tpu.memory_space<vmem>>, vector<64x256xf32>,
    %c0_144 = arith.constant 0 : index
    %c0_145 = arith.constant 0 : index
    %264 = vector.load %arg6[%c0_144, %c0_145] : memref<128x576xf32, #tpu.memory_space<vmem>>, vector<128x576xf32>
    %c0_146 = arith.constant 0 : index
    %c0_147 = arith.constant 0 : index
    %265 = vector.load %arg12[%c0_146, %c0_147] : memref<1152x256xf32, #tpu.memory_space<vmem>>, vector<576x256xf32>
    %cst_148 = arith.constant dense<0.000000e+00> : vector<128x256xf32>
    %266 = tpu.matmul %264, %265, %cst_148 {dimension_numbers = #tpu.dot_dimension_numbers<[1], [0], [0], [1], [0, 0, 1, 1], [], []>} : vector<128x576xf32>, vector<576x256xf32>, vector<128x256xf32> -> vector<128x256xf32>
    %c0_149 = arith.constant 0 : index
    %c0_150 = arith.constant 0 : index
    %267 = vector.load %arg7[%c0_149, %c0_150] : memref<128x1xf32, #tpu.memory_space<vmem>>, vector<128x1xf32>
    %268 = vector.broadcast %267 : vector<128x1xf32> to vector<128x256xf32>
    %269 = arith.addf %266, %268 : vector<128x256xf32>
    %cst_151 = arith.constant 0.000000e+00 : f32
    %270 = vector.broadcast %cst_151 : f32 to vector<128x256xf32>
    %271 = arith.cmpf oge, %269, %270 : vector<128x256xf32>
    %cst_152 = arith.constant 0.00999999977 : f32
    %272 = vector.broadcast %cst_152 : f32 to vector<128x256xf32>
    %273 = arith.mulf %272, %269 : vector<128x256xf32>
    %274 = arith.select %271, %269, %273 : vector<128x256xi1>, vector<128x256xf32>
    %c0_153 = arith.constant 0 : index
    %c0_154 = arith.constant 0 : index
    %275 = vector.load %arg11[%c0_153, %c0_154] : memref<128x256xf32, #tpu.memory_space<vmem>>, vector<128x256xf32>
    tpu.vector_store %arg11[%c0_153, %c0_154], %274 {strides = array<i32>} : memref<128x256xf32, #tpu.memory_space<vmem>>, vector<128x256xf32>,
    %c0_155 = arith.constant 0 : index
    %c0_156 = arith.constant 0 : index
    %276 = vector.load %arg11[%c0_155, %c0_156] : memref<128x256xf32, #tpu.memory_space<vmem>>, vector<128x256xf32>
    %c17_i32_157 = arith.constant 17 : i32
    %277 = tpu.dynamic_rotate %276 by %c17_i32_157 dim 1 : vector<128x256xf32>, i32 -> vector<128x256xf32>
    %c16_i32_158 = arith.constant 16 : i32
    %278 = vector.broadcast %c16_i32_158 : i32 to vector<1x256xi32>
    %279 = arith.cmpi sge, %0, %278 : vector<1x256xi32>
    %c1_i32_159 = arith.constant 1 : i32
    %280 = vector.broadcast %c1_i32_159 : i32 to vector<1x256xi32>
    %281 = arith.cmpi sge, %2, %280 : vector<1x256xi32>
    %282 = arith.andi %279, %281 : vector<1x256xi1>
    %cst_160 = arith.constant 0.000000e+00 : f32
    %283 = vector.shape_cast %282 : vector<1x256xi1> to vector<1x256xi1>
    %284 = vector.broadcast %283 : vector<1x256xi1> to vector<128x256xi1>
    %285 = vector.broadcast %cst_160 : f32 to vector<128x256xf32>
    %286 = arith.select %284, %277, %285 : vector<128x256xi1>, vector<128x256xf32>
    %c0_161 = arith.constant 0 : index
    %c0_162 = arith.constant 0 : index
    %287 = vector.load %arg12[%c0_161, %c0_162] : memref<1152x256xf32, #tpu.memory_space<vmem>>, vector<128x256xf32>
    tpu.vector_store %arg12[%c0_161, %c0_162], %286 {strides = array<i32>} : memref<1152x256xf32, #tpu.memory_space<vmem>>, vector<128x256xf32>,
    %c16_i32_163 = arith.constant 16 : i32
    %288 = tpu.dynamic_rotate %276 by %c16_i32_163 dim 1 : vector<128x256xf32>, i32 -> vector<128x256xf32>
    %c16_i32_164 = arith.constant 16 : i32
    %289 = vector.broadcast %c16_i32_164 : i32 to vector<1x256xi32>
    %290 = arith.cmpi sge, %0, %289 : vector<1x256xi32>
    %cst_165 = arith.constant 0.000000e+00 : f32
    %291 = vector.shape_cast %290 : vector<1x256xi1> to vector<1x256xi1>
    %292 = vector.broadcast %291 : vector<1x256xi1> to vector<128x256xi1>
    %293 = vector.broadcast %cst_165 : f32 to vector<128x256xf32>
    %294 = arith.select %292, %288, %293 : vector<128x256xi1>, vector<128x256xf32>
    %c128_166 = arith.constant 128 : index
    %c0_167 = arith.constant 0 : index
    %295 = vector.load %arg12[%c128_166, %c0_167] : memref<1152x256xf32, #tpu.memory_space<vmem>>, vector<128x256xf32>
    tpu.vector_store %arg12[%c128_166, %c0_167], %294 {strides = array<i32>} : memref<1152x256xf32, #tpu.memory_space<vmem>>, vector<128x256xf32>,
    %c15_i32_168 = arith.constant 15 : i32
    %296 = tpu.dynamic_rotate %276 by %c15_i32_168 dim 1 : vector<128x256xf32>, i32 -> vector<128x256xf32>
    %c16_i32_169 = arith.constant 16 : i32
    %297 = vector.broadcast %c16_i32_169 : i32 to vector<1x256xi32>
    %298 = arith.cmpi sge, %0, %297 : vector<1x256xi32>
    %c15_i32_170 = arith.constant 15 : i32
    %299 = vector.broadcast %c15_i32_170 : i32 to vector<1x256xi32>
    %300 = arith.cmpi slt, %2, %299 : vector<1x256xi32>
    %301 = arith.andi %298, %300 : vector<1x256xi1>
    %cst_171 = arith.constant 0.000000e+00 : f32
    %302 = vector.shape_cast %301 : vector<1x256xi1> to vector<1x256xi1>
    %303 = vector.broadcast %302 : vector<1x256xi1> to vector<128x256xi1>
    %304 = vector.broadcast %cst_171 : f32 to vector<128x256xf32>
    %305 = arith.select %303, %296, %304 : vector<128x256xi1>, vector<128x256xf32>
    %c256_172 = arith.constant 256 : index
    %c0_173 = arith.constant 0 : index
    %306 = vector.load %arg12[%c256_172, %c0_173] : memref<1152x256xf32, #tpu.memory_space<vmem>>, vector<128x256xf32>
    tpu.vector_store %arg12[%c256_172, %c0_173], %305 {strides = array<i32>} : memref<1152x256xf32, #tpu.memory_space<vmem>>, vector<128x256xf32>,
    %c1_i32_174 = arith.constant 1 : i32
    %307 = tpu.dynamic_rotate %276 by %c1_i32_174 dim 1 : vector<128x256xf32>, i32 -> vector<128x256xf32>
    %c1_i32_175 = arith.constant 1 : i32
    %308 = vector.broadcast %c1_i32_175 : i32 to vector<1x256xi32>
    %309 = arith.cmpi sge, %2, %308 : vector<1x256xi32>
    %cst_176 = arith.constant 0.000000e+00 : f32
    %310 = vector.shape_cast %309 : vector<1x256xi1> to vector<1x256xi1>
    %311 = vector.broadcast %310 : vector<1x256xi1> to vector<128x256xi1>
    %312 = vector.broadcast %cst_176 : f32 to vector<128x256xf32>
    %313 = arith.select %311, %307, %312 : vector<128x256xi1>, vector<128x256xf32>
    %c384_177 = arith.constant 384 : index
    %c0_178 = arith.constant 0 : index
    %314 = vector.load %arg12[%c384_177, %c0_178] : memref<1152x256xf32, #tpu.memory_space<vmem>>, vector<128x256xf32>
    tpu.vector_store %arg12[%c384_177, %c0_178], %313 {strides = array<i32>} : memref<1152x256xf32, #tpu.memory_space<vmem>>, vector<128x256xf32>,
    %c512_179 = arith.constant 512 : index
    %c0_180 = arith.constant 0 : index
    %315 = vector.load %arg12[%c512_179, %c0_180] : memref<1152x256xf32, #tpu.memory_space<vmem>>, vector<128x256xf32>
    tpu.vector_store %arg12[%c512_179, %c0_180], %276 {strides = array<i32>} : memref<1152x256xf32, #tpu.memory_space<vmem>>, vector<128x256xf32>,
    %c255_i32_181 = arith.constant 255 : i32
    %316 = tpu.dynamic_rotate %276 by %c255_i32_181 dim 1 : vector<128x256xf32>, i32 -> vector<128x256xf32>
    %c15_i32_182 = arith.constant 15 : i32
    %317 = vector.broadcast %c15_i32_182 : i32 to vector<1x256xi32>
    %318 = arith.cmpi slt, %2, %317 : vector<1x256xi32>
    %cst_183 = arith.constant 0.000000e+00 : f32
    %319 = vector.shape_cast %318 : vector<1x256xi1> to vector<1x256xi1>
    %320 = vector.broadcast %319 : vector<1x256xi1> to vector<128x256xi1>
    %321 = vector.broadcast %cst_183 : f32 to vector<128x256xf32>
    %322 = arith.select %320, %316, %321 : vector<128x256xi1>, vector<128x256xf32>
    %c640 = arith.constant 640 : index
    %c0_184 = arith.constant 0 : index
    %323 = vector.load %arg12[%c640, %c0_184] : memref<1152x256xf32, #tpu.memory_space<vmem>>, vector<128x256xf32>
    tpu.vector_store %arg12[%c640, %c0_184], %322 {strides = array<i32>} : memref<1152x256xf32, #tpu.memory_space<vmem>>, vector<128x256xf32>,
    %c241_i32_185 = arith.constant 241 : i32
    %324 = tpu.dynamic_rotate %276 by %c241_i32_185 dim 1 : vector<128x256xf32>, i32 -> vector<128x256xf32>
    %c240_i32_186 = arith.constant 240 : i32
    %325 = vector.broadcast %c240_i32_186 : i32 to vector<1x256xi32>
    %326 = arith.cmpi slt, %0, %325 : vector<1x256xi32>
    %c1_i32_187 = arith.constant 1 : i32
    %327 = vector.broadcast %c1_i32_187 : i32 to vector<1x256xi32>
    %328 = arith.cmpi sge, %2, %327 : vector<1x256xi32>
    %329 = arith.andi %326, %328 : vector<1x256xi1>
    %cst_188 = arith.constant 0.000000e+00 : f32
    %330 = vector.shape_cast %329 : vector<1x256xi1> to vector<1x256xi1>
    %331 = vector.broadcast %330 : vector<1x256xi1> to vector<128x256xi1>
    %332 = vector.broadcast %cst_188 : f32 to vector<128x256xf32>
    %333 = arith.select %331, %324, %332 : vector<128x256xi1>, vector<128x256xf32>
    %c768 = arith.constant 768 : index
    %c0_189 = arith.constant 0 : index
    %334 = vector.load %arg12[%c768, %c0_189] : memref<1152x256xf32, #tpu.memory_space<vmem>>, vector<128x256xf32>
    tpu.vector_store %arg12[%c768, %c0_189], %333 {strides = array<i32>} : memref<1152x256xf32, #tpu.memory_space<vmem>>, vector<128x256xf32>,
    %c240_i32_190 = arith.constant 240 : i32
    %335 = tpu.dynamic_rotate %276 by %c240_i32_190 dim 1 : vector<128x256xf32>, i32 -> vector<128x256xf32>
    %c240_i32_191 = arith.constant 240 : i32
    %336 = vector.broadcast %c240_i32_191 : i32 to vector<1x256xi32>
    %337 = arith.cmpi slt, %0, %336 : vector<1x256xi32>
    %cst_192 = arith.constant 0.000000e+00 : f32
    %338 = vector.shape_cast %337 : vector<1x256xi1> to vector<1x256xi1>
    %339 = vector.broadcast %338 : vector<1x256xi1> to vector<128x256xi1>
    %340 = vector.broadcast %cst_192 : f32 to vector<128x256xf32>
    %341 = arith.select %339, %335, %340 : vector<128x256xi1>, vector<128x256xf32>
    %c896 = arith.constant 896 : index
    %c0_193 = arith.constant 0 : index
    %342 = vector.load %arg12[%c896, %c0_193] : memref<1152x256xf32, #tpu.memory_space<vmem>>, vector<128x256xf32>
    tpu.vector_store %arg12[%c896, %c0_193], %341 {strides = array<i32>} : memref<1152x256xf32, #tpu.memory_space<vmem>>, vector<128x256xf32>,
    %c239_i32_194 = arith.constant 239 : i32
    %343 = tpu.dynamic_rotate %276 by %c239_i32_194 dim 1 : vector<128x256xf32>, i32 -> vector<128x256xf32>
    %c240_i32_195 = arith.constant 240 : i32
    %344 = vector.broadcast %c240_i32_195 : i32 to vector<1x256xi32>
    %345 = arith.cmpi slt, %0, %344 : vector<1x256xi32>
    %c15_i32_196 = arith.constant 15 : i32
    %346 = vector.broadcast %c15_i32_196 : i32 to vector<1x256xi32>
    %347 = arith.cmpi slt, %2, %346 : vector<1x256xi32>
    %348 = arith.andi %345, %347 : vector<1x256xi1>
    %cst_197 = arith.constant 0.000000e+00 : f32
    %349 = vector.shape_cast %348 : vector<1x256xi1> to vector<1x256xi1>
    %350 = vector.broadcast %349 : vector<1x256xi1> to vector<128x256xi1>
    %351 = vector.broadcast %cst_197 : f32 to vector<128x256xf32>
    %352 = arith.select %350, %343, %351 : vector<128x256xi1>, vector<128x256xf32>
    %c1024 = arith.constant 1024 : index
    %c0_198 = arith.constant 0 : index
    %353 = vector.load %arg12[%c1024, %c0_198] : memref<1152x256xf32, #tpu.memory_space<vmem>>, vector<128x256xf32>
    tpu.vector_store %arg12[%c1024, %c0_198], %352 {strides = array<i32>} : memref<1152x256xf32, #tpu.memory_space<vmem>>, vector<128x256xf32>,
    %c0_199 = arith.constant 0 : index
    %c0_200 = arith.constant 0 : index
    %354 = vector.load %arg8[%c0_199, %c0_200] : memref<24x1152xf32, #tpu.memory_space<vmem>>, vector<24x1152xf32>
    %c0_201 = arith.constant 0 : index
    %c0_202 = arith.constant 0 : index
    %355 = vector.load %arg12[%c0_201, %c0_202] : memref<1152x256xf32, #tpu.memory_space<vmem>>, vector<1152x256xf32>
    %cst_203 = arith.constant dense<0.000000e+00> : vector<24x256xf32>
    %356 = tpu.matmul %354, %355, %cst_203 {dimension_numbers = #tpu.dot_dimension_numbers<[1], [0], [0], [1], [0, 0, 1, 1], [], []>} : vector<24x1152xf32>, vector<1152x256xf32>, vector<24x256xf32> -> vector<24x256xf32>
    %c0_204 = arith.constant 0 : index
    %c0_205 = arith.constant 0 : index
    %357 = vector.load %arg9[%c0_204, %c0_205] : memref<24x1xf32, #tpu.memory_space<vmem>>, vector<24x1xf32>
    %358 = vector.broadcast %357 : vector<24x1xf32> to vector<24x256xf32>
    %359 = arith.addf %356, %358 : vector<24x256xf32>
    %360 = tpu.iota {dimensions = array<i32: 0>} : vector<24x256xi32>
    %cst_206 = arith.constant -1.000000e+01 : f32
    %cst_207 = arith.constant 1.000000e+01 : f32
    %361 = vector.broadcast %cst_206 : f32 to vector<24x256xf32>
    %362 = arith.maximumf %361, %359 : vector<24x256xf32>
    %363 = vector.broadcast %cst_207 : f32 to vector<24x256xf32>
    %364 = arith.minimumf %363, %362 : vector<24x256xf32>
    %365 = math.exp %364 : vector<24x256xf32>
    %c10_i32 = arith.constant 10 : i32
    %366 = vector.broadcast %c10_i32 : i32 to vector<24x256xi32>
    %367 = arith.cmpi slt, %360, %366 : vector<24x256xi32>
    %368 = arith.select %367, %359, %365 : vector<24x256xi1>, vector<24x256xf32>
    %c0_208 = arith.constant 0 : index
    %c0_209 = arith.constant 0 : index
    %c0_210 = arith.constant 0 : index
    %369 = vector.load %arg10[%c0_208, %c0_209, %c0_210] : memref<1x24x256xf32, #tpu.memory_space<vmem>>, vector<1x24x256xf32>
    %370 = vector.shape_cast %369 : vector<1x24x256xf32> to vector<24x256xf32>
    %371 = vector.shape_cast %368 : vector<24x256xf32> to vector<1x24x256xf32>
    tpu.vector_store %arg10[%c0_208, %c0_209, %c0_210], %371 {strides = array<i32>} : memref<1x24x256xf32, #tpu.memory_space<vmem>>, vector<1x24x256xf32>,
    return
  }
  func.func @transform_0(%arg0: i32) -> (i32, i32, i32) {
    %c0_i32 = arith.constant 0 : i32
    %c0_i32_0 = arith.constant 0 : i32
    %c0_i32_1 = arith.constant 0 : i32
    return %arg0, %c0_i32, %c0_i32_0 : i32, i32, i32
  }
  func.func @transform_1(%arg0: i32) -> (i32, i32) {
    %c0_i32 = arith.constant 0 : i32
    %c0_i32_0 = arith.constant 0 : i32
    %c0_i32_1 = arith.constant 0 : i32
    return %c0_i32, %c0_i32_0 : i32, i32
  }
  func.func @transform_2(%arg0: i32) -> (i32, i32) {
    %c0_i32 = arith.constant 0 : i32
    %c0_i32_0 = arith.constant 0 : i32
    %c0_i32_1 = arith.constant 0 : i32
    return %c0_i32, %c0_i32_0 : i32, i32
  }
  func.func @transform_3(%arg0: i32) -> (i32, i32) {
    %c0_i32 = arith.constant 0 : i32
    %c0_i32_0 = arith.constant 0 : i32
    %c0_i32_1 = arith.constant 0 : i32
    return %c0_i32, %c0_i32_0 : i32, i32
  }
  func.func @transform_4(%arg0: i32) -> (i32, i32) {
    %c0_i32 = arith.constant 0 : i32
    %c0_i32_0 = arith.constant 0 : i32
    %c0_i32_1 = arith.constant 0 : i32
    return %c0_i32, %c0_i32_0 : i32, i32
  }
  func.func @transform_5(%arg0: i32) -> (i32, i32) {
    %c0_i32 = arith.constant 0 : i32
    %c0_i32_0 = arith.constant 0 : i32
    %c0_i32_1 = arith.constant 0 : i32
    return %c0_i32, %c0_i32_0 : i32, i32
  }
  func.func @transform_6(%arg0: i32) -> (i32, i32) {
    %c0_i32 = arith.constant 0 : i32
    %c0_i32_0 = arith.constant 0 : i32
    %c0_i32_1 = arith.constant 0 : i32
    return %c0_i32, %c0_i32_0 : i32, i32
  }
  func.func @transform_7(%arg0: i32) -> (i32, i32) {
    %c0_i32 = arith.constant 0 : i32
    %c0_i32_0 = arith.constant 0 : i32
    %c0_i32_1 = arith.constant 0 : i32
    return %c0_i32, %c0_i32_0 : i32, i32
  }
  func.func @transform_8(%arg0: i32) -> (i32, i32) {
    %c0_i32 = arith.constant 0 : i32
    %c0_i32_0 = arith.constant 0 : i32
    %c0_i32_1 = arith.constant 0 : i32
    return %c0_i32, %c0_i32_0 : i32, i32
  }
  func.func @transform_9(%arg0: i32) -> (i32, i32, i32) {
    %c0_i32 = arith.constant 0 : i32
    %c0_i32_0 = arith.constant 0 : i32
    %c0_i32_1 = arith.constant 0 : i32
    return %arg0, %c0_i32, %c0_i32_0 : i32, i32, i32
  }
}

</mosaic_0001>

<llo_original>
// kernel: _lambda_.1
$region0: #{_lambda_.1}
  #allocation0 [shape = 'u32[]', space=smem, size = 0x4, offset = 0x4, fixed_abs, tag = 'smem constant byte address 0x4 - core index']
  #allocation1 [shape = 'u32[144,128]{1,0:T(1,128)}', space=vmem, size = 0x12000, scoped, tag = 'internal scratch']
  #allocation2 [shape = 'f32[128,256]{1,0:T(8,128)}', space=vmem, size = 0x20000, scoped, tag = 'scratch operand']
  #allocation3 [shape = 'f32[1152,256]{1,0:T(8,128)}', space=vmem, size = 0x120000, scoped, tag = 'scratch operand']
  %s0 = inlined_call_operand.vmem [shape: f32[2,8,256], index: 0, kind: input, shape index: {}]
  %s1 = inlined_call_operand.hbm [shape: f32[32,72], index: 1, kind: input, shape index: {}]
  %s2 = inlined_call_operand.hbm [shape: f32[32,1], index: 2, kind: input, shape index: {}]
  %s3 = inlined_call_operand.hbm [shape: f32[64,288], index: 3, kind: input, shape index: {}]
  %s4 = inlined_call_operand.vmem [shape: f32[64,1], index: 4, kind: input, shape index: {}]
  %s5 = inlined_call_operand.hbm [shape: f32[128,576], index: 5, kind: input, shape index: {}]
  %s6 = inlined_call_operand.hbm [shape: f32[128,1], index: 6, kind: input, shape index: {}]
  %s7 = inlined_call_operand.vmem [shape: f32[24,1152], index: 7, kind: input, shape index: {}]
  %s8 = inlined_call_operand.vmem [shape: f32[24,1], index: 8, kind: input, shape index: {}]
  %s9 = inlined_call_operand.vmem [shape: f32[2,24,256], index: 9, kind: output, shape index: {}]
  %s10 = sld [smem:[#allocation0]]
  $region89: #{_lambda_.1} parent=0
    _
  %s12 = ssub.s32 1, %s10
  %s13 = scalar_select 0, %s12, %s10
  $region1: #{_lambda_.1} parent=0
    #allocation4 [shape = 'u8[16384]{0}', space=vmem, size = 0x4000, scoped, tag = 'input window, operand 1, single buffered']
    #allocation5 [shape = 's32[2]{0}', space=sflag, size = 0x8, scoped, tag = 'scoped memory for _lambda_.1']
    #allocation6 [shape = 'u8[16384]{0}', space=vmem, size = 0x4000, scoped, tag = 'input window, operand 2, single buffered']
    #allocation7 [shape = 's32[1]{0}', space=sflag, size = 0x4, scoped, tag = 'scoped memory for _lambda_.1']
    #allocation8 [shape = 'u8[98304]{0}', space=vmem, size = 0x18000, scoped, tag = 'input window, operand 3, single buffered']
    #allocation9 [shape = 'u8[327680]{0}', space=vmem, size = 0x50000, scoped, tag = 'input window, operand 5, single buffered']
    #allocation10 [shape = 's32[1]{0}', space=sflag, size = 0x4, scoped, tag = 'scoped memory for _lambda_.1']
    #allocation11 [shape = 'u8[65536]{0}', space=vmem, size = 0x10000, scoped, tag = 'input window, operand 6, single buffered']
    %14 = vsyncpa [#allocation5], 0
    %15 = vsyncpa [#allocation7], 0
    %16 = vsyncpa [#allocation10], 0
    loop: start=0, step=1, limit=4
    $region2: #{_lambda_.1} parent=1 // loop_pre_header
      _
    $region3: #{_lambda_.1} parent=1 // loop_header
      %s18 = sphi 0, %s22
      %p19 = scmp.ge.s32.totalorder %s18, 4
      %s28 = sphi 0, %s30
      %s31 = sphi 0, %s28
      %s32 = sphi 0, %s31
      %s48 = sphi 0, %s32
      %s52 = sphi 0, %s52
      %s54 = sphi 0, %s52
      %s55 = sphi 0, %s54
      %s69 = sphi 0, %s55
      %s73 = sphi 0, %s73
      %s75 = sphi 0, %s73
      %s76 = sphi 0, %s75
      %s90 = sphi 0, %s76
      %s94 = sphi 0, %s94
      %s96 = sphi 0, %s94
      %s97 = sphi 0, %s96
      %s111 = sphi 0, %s97
      %s115 = sphi 0, %s115
      %s117 = sphi 0, %s115
      %s118 = sphi 0, %s117
      %s132 = sphi 0, %s118
      %s136 = sphi 0, %s136
      %s138 = sphi 0, %s136
      %s139 = sphi 0, %s138
      %s153 = sphi 0, %s139
      %s157 = sphi 0, %s157
      %s159 = sphi 0, %s157
      %s160 = sphi 0, %s159
      %s174 = sphi 0, %s160
      %s178 = sphi 0, %s178
      %s180 = sphi 0, %s178
      %s181 = sphi 0, %s180
      %s195 = sphi 0, %s181
      %s199 = sphi 0, %s199
      %s201 = sphi 0, %s199
      %s202 = sphi 0, %s201
      %s216 = sphi 0, %s202
      %s222 = sphi 0, %s224
      %s225 = sphi 0, %s222
      %s226 = sphi 0, %s225
      %s242 = sphi 0, %s226
    $region4: #{_lambda_.1} parent=1 // loop_header_branch
      %21 = sbr.rel (%p19) target = $region8
    $region5: #{_lambda_.1} parent=1 // loop_body
      %s23 = ssub.s32 %s18, 1
      %s24 = ssub.s32 %s18, 2
      %s25 = sadd.s32 %s18, 1
      %s26 = ssub.s32 %s18, %s25
      %p27 = scmp.eq.s32.totalorder %s26, 0
      %s29 = sadd.s32 %s28, 1
      %s30 = scalar_select %p27, %s28, %s29
      %p33 = pneg %p27
      %p34 = scmp.eq.s32.totalorder %s18, 1
      %p35 = por %p33, %p34
      %p36 = scmp.ne.s32.totalorder %s28, %s31
      %p37 = scmp.eq.s32.totalorder %s18, 0
      %p38 = por %p36, %p37
      %p39 = scmp.ne.s32.totalorder %s28, %s31
      %p40 = scmp.eq.s32.totalorder %s23, 1
      %p41 = por %p39, %p40
      %p42 = scmp.ne.s32.totalorder %s31, %s32
      %p43 = scmp.eq.s32.totalorder %s23, 0
      %p44 = por %p42, %p43
      %p45 = scmp.ne.s32.totalorder %s31, %s32
      %p46 = scmp.eq.s32.totalorder %s24, 1
      %p47 = por %p45, %p46
      %p49 = scmp.ne.s32.totalorder %s32, %s48
      %p50 = scmp.eq.s32.totalorder %s24, 0
      %p51 = por %p49, %p50
      %s53 = sadd.s32 %s52, 1
      %p56 = scmp.eq.s32.totalorder %s18, 1
      %p57 = scmp.ne.s32.totalorder %s52, %s54
      %p58 = scmp.eq.s32.totalorder %s18, 0
      %p59 = por %p57, %p58
      %p60 = scmp.ne.s32.totalorder %s52, %s54
      %p61 = scmp.eq.s32.totalorder %s23, 1
      %p62 = por %p60, %p61
      %p63 = scmp.ne.s32.totalorder %s54, %s55
      %p64 = scmp.eq.s32.totalorder %s23, 0
      %p65 = por %p63, %p64
      %p66 = scmp.ne.s32.totalorder %s54, %s55
      %p67 = scmp.eq.s32.totalorder %s24, 1
      %p68 = por %p66, %p67
      %p70 = scmp.ne.s32.totalorder %s55, %s69
      %p71 = scmp.eq.s32.totalorder %s24, 0
      %p72 = por %p70, %p71
      %s74 = sadd.s32 %s73, 1
      %p77 = scmp.eq.s32.totalorder %s18, 1
      %p78 = scmp.ne.s32.totalorder %s73, %s75
      %p79 = scmp.eq.s32.totalorder %s18, 0
      %p80 = por %p78, %p79
      %p81 = scmp.ne.s32.totalorder %s73, %s75
      %p82 = scmp.eq.s32.totalorder %s23, 1
      %p83 = por %p81, %p82
      %p84 = scmp.ne.s32.totalorder %s75, %s76
      %p85 = scmp.eq.s32.totalorder %s23, 0
      %p86 = por %p84, %p85
      %p87 = scmp.ne.s32.totalorder %s75, %s76
      %p88 = scmp.eq.s32.totalorder %s24, 1
      %p89 = por %p87, %p88
      %p91 = scmp.ne.s32.totalorder %s76, %s90
      %p92 = scmp.eq.s32.totalorder %s24, 0
      %p93 = por %p91, %p92
      %s95 = sadd.s32 %s94, 1
      %p98 = scmp.eq.s32.totalorder %s18, 1
      %p99 = scmp.ne.s32.totalorder %s94, %s96
      %p100 = scmp.eq.s32.totalorder %s18, 0
      %p101 = por %p99, %p100
      %p102 = scmp.ne.s32.totalorder %s94, %s96
      %p103 = scmp.eq.s32.totalorder %s23, 1
      %p104 = por %p102, %p103
      %p105 = scmp.ne.s32.totalorder %s96, %s97
      %p106 = scmp.eq.s32.totalorder %s23, 0
      %p107 = por %p105, %p106
      %p108 = scmp.ne.s32.totalorder %s96, %s97
      %p109 = scmp.eq.s32.totalorder %s24, 1
      %p110 = por %p108, %p109
      %p112 = scmp.ne.s32.totalorder %s97, %s111
      %p113 = scmp.eq.s32.totalorder %s24, 0
      %p114 = por %p112, %p113
      %s116 = sadd.s32 %s115, 1
      %p119 = scmp.eq.s32.totalorder %s18, 1
      %p120 = scmp.ne.s32.totalorder %s115, %s117
      %p121 = scmp.eq.s32.totalorder %s18, 0
      %p122 = por %p120, %p121
      %p123 = scmp.ne.s32.totalorder %s115, %s117
      %p124 = scmp.eq.s32.totalorder %s23, 1
      %p125 = por %p123, %p124
      %p126 = scmp.ne.s32.totalorder %s117, %s118
      %p127 = scmp.eq.s32.totalorder %s23, 0
      %p128 = por %p126, %p127
      %p129 = scmp.ne.s32.totalorder %s117, %s118
      %p130 = scmp.eq.s32.totalorder %s24, 1
      %p131 = por %p129, %p130
      %p133 = scmp.ne.s32.totalorder %s118, %s132
      %p134 = scmp.eq.s32.totalorder %s24, 0
      %p135 = por %p133, %p134
      %s137 = sadd.s32 %s136, 1
      %p140 = scmp.eq.s32.totalorder %s18, 1
      %p141 = scmp.ne.s32.totalorder %s136, %s138
      %p142 = scmp.eq.s32.totalorder %s18, 0
      %p143 = por %p141, %p142
      %p144 = scmp.ne.s32.totalorder %s136, %s138
      %p145 = scmp.eq.s32.totalorder %s23, 1
      %p146 = por %p144, %p145
      %p147 = scmp.ne.s32.totalorder %s138, %s139
      %p148 = scmp.eq.s32.totalorder %s23, 0
      %p149 = por %p147, %p148
      %p150 = scmp.ne.s32.totalorder %s138, %s139
      %p151 = scmp.eq.s32.totalorder %s24, 1
      %p152 = por %p150, %p151
      %p154 = scmp.ne.s32.totalorder %s139, %s153
      %p155 = scmp.eq.s32.totalorder %s24, 0
      %p156 = por %p154, %p155
      %s158 = sadd.s32 %s157, 1
      %p161 = scmp.eq.s32.totalorder %s18, 1
      %p162 = scmp.ne.s32.totalorder %s157, %s159
      %p163 = scmp.eq.s32.totalorder %s18, 0
      %p164 = por %p162, %p163
      %p165 = scmp.ne.s32.totalorder %s157, %s159
      %p166 = scmp.eq.s32.totalorder %s23, 1
      %p167 = por %p165, %p166
      %p168 = scmp.ne.s32.totalorder %s159, %s160
      %p169 = scmp.eq.s32.totalorder %s23, 0
      %p170 = por %p168, %p169
      %p171 = scmp.ne.s32.totalorder %s159, %s160
      %p172 = scmp.eq.s32.totalorder %s24, 1
      %p173 = por %p171, %p172
      %p175 = scmp.ne.s32.totalorder %s160, %s174
      %p176 = scmp.eq.s32.totalorder %s24, 0
      %p177 = por %p175, %p176
      %s179 = sadd.s32 %s178, 1
      %p182 = scmp.eq.s32.totalorder %s18, 1
      %p183 = scmp.ne.s32.totalorder %s178, %s180
      %p184 = scmp.eq.s32.totalorder %s18, 0
      %p185 = por %p183, %p184
      %p186 = scmp.ne.s32.totalorder %s178, %s180
      %p187 = scmp.eq.s32.totalorder %s23, 1
      %p188 = por %p186, %p187
      %p189 = scmp.ne.s32.totalorder %s180, %s181
      %p190 = scmp.eq.s32.totalorder %s23, 0
      %p191 = por %p189, %p190
      %p192 = scmp.ne.s32.totalorder %s180, %s181
      %p193 = scmp.eq.s32.totalorder %s24, 1
      %p194 = por %p192, %p193
      %p196 = scmp.ne.s32.totalorder %s181, %s195
      %p197 = scmp.eq.s32.totalorder %s24, 0
      %p198 = por %p196, %p197
      %s200 = sadd.s32 %s199, 1
      %p203 = scmp.eq.s32.totalorder %s18, 1
      %p204 = scmp.ne.s32.totalorder %s199, %s201
      %p205 = scmp.eq.s32.totalorder %s18, 0
      %p206 = por %p204, %p205
      %p207 = scmp.ne.s32.totalorder %s199, %s201
      %p208 = scmp.eq.s32.totalorder %s23, 1
      %p209 = por %p207, %p208
      %p210 = scmp.ne.s32.totalorder %s201, %s202
      %p211 = scmp.eq.s32.totalorder %s23, 0
      %p212 = por %p210, %p211
      %p213 = scmp.ne.s32.totalorder %s201, %s202
      %p214 = scmp.eq.s32.totalorder %s24, 1
      %p215 = por %p213, %p214
      %p217 = scmp.ne.s32.totalorder %s202, %s216
      %p218 = scmp.eq.s32.totalorder %s24, 0
      %p219 = por %p217, %p218
      %s220 = ssub.s32 %s18, %s25
      %p221 = scmp.eq.s32.totalorder %s220, 0
      %s223 = sadd.s32 %s222, 1
      %s224 = scalar_select %p221, %s222, %s223
      %p227 = pneg %p221
      %p228 = scmp.eq.s32.totalorder %s18, 1
      %p229 = por %p227, %p228
      %p230 = scmp.ne.s32.totalorder %s222, %s225
      %p231 = scmp.eq.s32.totalorder %s18, 0
      %p232 = por %p230, %p231
      %p233 = scmp.ne.s32.totalorder %s222, %s225
      %p234 = scmp.eq.s32.totalorder %s23, 1
      %p235 = por %p233, %p234
      %p236 = scmp.ne.s32.totalorder %s225, %s226
      %p237 = scmp.eq.s32.totalorder %s23, 0
      %p238 = por %p236, %p237
      %p239 = scmp.ne.s32.totalorder %s225, %s226
      %p240 = scmp.eq.s32.totalorder %s24, 1
      %p241 = por %p239, %p240
      %p243 = scmp.ne.s32.totalorder %s226, %s242
      %p244 = scmp.eq.s32.totalorder %s24, 0
      %p245 = por %p243, %p244
      %p246 = scmp.le.s32.totalorder 1, %s18
      %p247 = scmp.lt.s32.totalorder %s18, 3
      %p248 = pnand %p246, %p247
      %p249 = pneg %p248
      // Predicated region
      $region9: #{_lambda_.1} parent=5 // pred_check
        _
      $region10: #{_lambda_.1} parent=5 // pred_check_branch
        %251 = sbr.rel (%p248) target = $region12
      $region11: #{_lambda_.1} parent=5 // pred_region
        %s252 = ssub.s32 %s18, 1
        // Predicated region
        $region13: #{_lambda_.1} parent=11 // pred_check
          %p253 = pneg %p65
        $region14: #{_lambda_.1} parent=11 // pred_check_branch
          %255 = sbr.rel (%p253) target = $region16
        $region15: #{_lambda_.1} parent=11 // pred_region
          %s257 = ssub.s32 512, 512
          %258 = vsyncadd [#allocation5], %s257
          %s259 = sshll.u32 [#allocation4], 4
          %s260 = int_to_ptr.vmem [resolvable:$true] %s259
          %265 = dma.hbm_to_vmem [thread:$0]  %s1, 512, %s260, [#allocation5], 128, 128, 8
        $region16: #{_lambda_.1} parent=11 // pred_fallthru
          _
        // Predicated region
        $region17: #{_lambda_.1} parent=11 // pred_check
          %p266 = pneg %p86
        $region18: #{_lambda_.1} parent=11 // pred_check_branch
          %268 = sbr.rel (%p266) target = $region20
        $region19: #{_lambda_.1} parent=11 // pred_region
          %s270 = ssub.s32 512, 512
          %271 = vsyncadd [#allocation7], %s270
          %s272 = sshll.u32 [#allocation6], 4
          %s273 = int_to_ptr.vmem [resolvable:$true] %s272
          %278 = dma.hbm_to_vmem [thread:$0]  %s2, 512, %s273, [#allocation7], 128, 128, 8
        $region20: #{_lambda_.1} parent=11 // pred_fallthru
          _
        // Predicated region
        $region21: #{_lambda_.1} parent=11 // pred_check
          %p279 = pneg %p107
        $region22: #{_lambda_.1} parent=11 // pred_check_branch
          %281 = sbr.rel (%p279) target = $region24
        $region23: #{_lambda_.1} parent=11 // pred_region
          %s283 = ssub.s32 3072, 3072
          %284 = vsyncadd [#allocation7], %s283
          %s285 = sshll.u32 [#allocation8], 4
          %s286 = int_to_ptr.vmem [resolvable:$true] %s285
          %291 = dma.hbm_to_vmem [thread:$0]  %s3, 3072, %s286, [#allocation7], 384, 384, 24
        $region24: #{_lambda_.1} parent=11 // pred_fallthru
          _
        // Predicated region
        $region25: #{_lambda_.1} parent=11 // pred_check
          %p292 = pneg %p128
        $region26: #{_lambda_.1} parent=11 // pred_check_branch
          %294 = sbr.rel (%p292) target = $region28
        $region27: #{_lambda_.1} parent=11 // pred_region
          _
        $region28: #{_lambda_.1} parent=11 // pred_fallthru
          _
        // Predicated region
        $region29: #{_lambda_.1} parent=11 // pred_check
          %p295 = pneg %p149
        $region30: #{_lambda_.1} parent=11 // pred_check_branch
          %297 = sbr.rel (%p295) target = $region32
        $region31: #{_lambda_.1} parent=11 // pred_region
          %s299 = ssub.s32 10240, 10240
          %300 = vsyncadd [#allocation10], %s299
          %s301 = sshll.u32 [#allocation9], 4
          %s302 = int_to_ptr.vmem [resolvable:$true] %s301
          %307 = dma.hbm_to_vmem [thread:$0]  %s5, 10240, %s302, [#allocation10], 640, 640, 40
        $region32: #{_lambda_.1} parent=11 // pred_fallthru
          _
        // Predicated region
        $region33: #{_lambda_.1} parent=11 // pred_check
          %p308 = pneg %p170
        $region34: #{_lambda_.1} parent=11 // pred_check_branch
          %310 = sbr.rel (%p308) target = $region36
        $region35: #{_lambda_.1} parent=11 // pred_region
          %s312 = ssub.s32 2048, 2048
          %313 = vsyncadd [#allocation10], %s312
          %s314 = sshll.u32 [#allocation11], 4
          %s315 = int_to_ptr.vmem [resolvable:$true] %s314
          %320 = dma.hbm_to_vmem [thread:$0]  %s6, 2048, %s315, [#allocation10], 128, 128, 8
        $region36: #{_lambda_.1} parent=11 // pred_fallthru
          _
        // Predicated region
        $region37: #{_lambda_.1} parent=11 // pred_check
          %p321 = pneg %p191
        $region38: #{_lambda_.1} parent=11 // pred_check_branch
          %323 = sbr.rel (%p321) target = $region40
        $region39: #{_lambda_.1} parent=11 // pred_region
          _
        $region40: #{_lambda_.1} parent=11 // pred_fallthru
          _
        // Predicated region
        $region41: #{_lambda_.1} parent=11 // pred_check
          %p324 = pneg %p212
        $region42: #{_lambda_.1} parent=11 // pred_check_branch
          %326 = sbr.rel (%p324) target = $region44
        $region43: #{_lambda_.1} parent=11 // pred_region
          _
        $region44: #{_lambda_.1} parent=11 // pred_fallthru
          _
      $region12: #{_lambda_.1} parent=5 // pred_fallthru
        _
      %p327 = scmp.lt.s32.totalorder %s18, 2
      // Predicated region
      $region45: #{_lambda_.1} parent=5 // pred_check
        %p328 = pneg %p327
      $region46: #{_lambda_.1} parent=5 // pred_check_branch
        %330 = sbr.rel (%p328) target = $region48
      $region47: #{_lambda_.1} parent=5 // pred_region
        // Predicated region
        $region49: #{_lambda_.1} parent=47 // pred_check
          %p331 = pneg %p38
        $region50: #{_lambda_.1} parent=47 // pred_check_branch
          %333 = sbr.rel (%p331) target = $region52
        $region51: #{_lambda_.1} parent=47 // pred_region
          %p334 = scmp.lt.s32.totalorder %s18, 1
          %s335 = scalar_select %p334, %s18, 1
          %s336 = smul.addr %s335, 2
          %s337 = smul.addr %s336, 8
          %s338 = scalar_lea.vmem %s0, %s337
        $region52: #{_lambda_.1} parent=47 // pred_fallthru
          _
      $region48: #{_lambda_.1} parent=5 // pred_fallthru
        _
      %p339 = scmp.le.s32.totalorder 1, %s18
      %p340 = scmp.lt.s32.totalorder %s18, 3
      %p341 = pnand %p339, %p340
      %p342 = pneg %p341
      // Predicated region
      $region53: #{_lambda_.1} parent=5 // pred_check
        _
      $region54: #{_lambda_.1} parent=5 // pred_check_branch
        %344 = sbr.rel (%p341) target = $region56
      $region55: #{_lambda_.1} parent=5 // pred_region
        %s345 = ssub.s32 %s18, 1
        // Predicated region
        $region57: #{_lambda_.1} parent=55 // pred_check
          %p346 = pneg %p65
        $region58: #{_lambda_.1} parent=55 // pred_check_branch
          %348 = sbr.rel (%p346) target = $region60
        $region59: #{_lambda_.1} parent=55 // pred_region
          %349 = dma.done [#allocation5], 512
        $region60: #{_lambda_.1} parent=55 // pred_fallthru
          _
        // Predicated region
        $region61: #{_lambda_.1} parent=55 // pred_check
          %p350 = pneg %p86
        $region62: #{_lambda_.1} parent=55 // pred_check_branch
          %352 = sbr.rel (%p350) target = $region64
        $region63: #{_lambda_.1} parent=55 // pred_region
          %353 = dma.done [#allocation7], 512
        $region64: #{_lambda_.1} parent=55 // pred_fallthru
          _
        // Predicated region
        $region65: #{_lambda_.1} parent=55 // pred_check
          %p354 = pneg %p107
        $region66: #{_lambda_.1} parent=55 // pred_check_branch
          %356 = sbr.rel (%p354) target = $region68
        $region67: #{_lambda_.1} parent=55 // pred_region
          %357 = dma.done [#allocation7], 3072
        $region68: #{_lambda_.1} parent=55 // pred_fallthru
          _
        // Predicated region
        $region69: #{_lambda_.1} parent=55 // pred_check
          %p358 = pneg %p149
        $region70: #{_lambda_.1} parent=55 // pred_check_branch
          %360 = sbr.rel (%p358) target = $region72
        $region71: #{_lambda_.1} parent=55 // pred_region
          %361 = dma.done [#allocation10], 10240
        $region72: #{_lambda_.1} parent=55 // pred_fallthru
          _
        // Predicated region
        $region73: #{_lambda_.1} parent=55 // pred_check
          %p362 = pneg %p170
        $region74: #{_lambda_.1} parent=55 // pred_check_branch
          %364 = sbr.rel (%p362) target = $region76
        $region75: #{_lambda_.1} parent=55 // pred_region
          %365 = dma.done [#allocation10], 2048
        $region76: #{_lambda_.1} parent=55 // pred_fallthru
          _
        %p366 = scmp.lt.s32.totalorder %s23, 1
        %s367 = scalar_select %p366, %s23, 1
        %s368 = smul.addr %s367, 2
        %s369 = smul.addr %s368, 8
        %s370 = scalar_lea.vmem %s0, %s369
        %p371 = pneg %p44
        %p372 = pneg %p41
        %p373 = pneg %p65
        %p374 = pneg %p62
        %p375 = pneg %p86
        %p376 = pneg %p83
        %p377 = pneg %p107
        %p378 = pneg %p104
        %p379 = pneg %p128
        %p380 = pneg %p125
        %p381 = pneg %p149
        %p382 = pneg %p146
        %p383 = pneg %p170
        %p384 = pneg %p167
        %p385 = pneg %p191
        %p386 = pneg %p188
        %p387 = pneg %p212
        %p388 = pneg %p209
        %p389 = pneg %p238
        %p390 = pneg %p235
        %p391 = scmp.lt.s32.totalorder %s23, 1
        %s392 = scalar_select %p391, %s23, 1
        %s393 = smul.addr %s392, 6
        %s394 = smul.addr %s393, 8
        %s395 = scalar_lea.vmem %s9, %s394
        %p396 = scmp.lt.s32.totalorder %s23, 1
        %s397 = scalar_select %p396, %s23, 1
        %s398 = smul.addr %s397, 2
        %s399 = smul.addr %s398, 8
        %s400 = scalar_lea.vmem %s0, %s399
        %p401 = scmp.lt.s32.totalorder %s23, 1
        %s402 = scalar_select %p401, %s23, 1
        %s403 = smul.addr %s402, 6
        %s404 = smul.addr %s403, 8
        %s405 = scalar_lea.vmem %s9, %s404
        %v406 = vlaneseq
        %v407 = vand.u32 %v406, 127
        %v408 = vadd.s32 %v407, 128
        %v409 = vand.u32 %v407, 15
        %v410 = vand.u32 %v408, 15
        %v411 = vld [vmem:[%s400] sm:$0xff]
        %v412 = vld [vmem:[%s400 + $0x8] sm:$0xff]
        %413 = vst [vmem:[#allocation2] sm:$0xff] %v411
        %414 = vst [vmem:[#allocation2 + $0x8] sm:$0xff] %v412
        %v415 = vld [vmem:[#allocation2] sm:$0xff]
        %v416 = vld [vmem:[#allocation2 + $0x8] sm:$0xff]
        %417 = vrot.lane.b32.xlu0 %v415, 17
        %v418 = vpop.permute.xlu0 %417
        %419 = vrot.lane.b32.xlu0 %v416, 17
        %v420 = vpop.permute.xlu0 %419
        %vm421 = vcmp.lt.s32.totalorder %v407, 17
        %v422 = vsel %vm421, %v418, %v420
        %v423 = vsel %vm421, %v420, %v418
        %vm424 = vcmp.ge.s32.totalorder %v407, 16
        %vm425 = vcmp.ge.s32.totalorder %v408, 16
        %vm426 = vcmp.ge.s32.totalorder %v409, 1
        %vm427 = vcmp.ge.s32.totalorder %v410, 1
        %vm428 = vmand %vm424, %vm426
        %vm429 = vmand %vm425, %vm427
        %v430 = vsel %vm428, 1, 0
        %v431 = vsel %vm429, 1, 0
        %vm432 = vcmp.eq.s32.totalorder %v430, 1
        %vm433 = vcmp.eq.s32.totalorder %v431, 1
        %v434 = vsel %vm432, %v423, 0.0
        %v435 = vsel %vm433, %v422, 0.0
        %436 = vst [vmem:[#allocation3] sm:$0xff] %v434
        %437 = vst [vmem:[#allocation3 + $0x8] sm:$0xff] %v435
        %438 = vrot.lane.b32.xlu0 %v415, 16
        %v439 = vpop.permute.xlu0 %438
        %440 = vrot.lane.b32.xlu0 %v416, 16
        %v441 = vpop.permute.xlu0 %440
        %vm442 = vcmp.lt.s32.totalorder %v407, 16
        %v443 = vsel %vm442, %v439, %v441
        %v444 = vsel %vm442, %v441, %v439
        %v445 = vsel %vm424, 1, 0
        %v446 = vsel %vm425, 1, 0
        %vm447 = vcmp.eq.s32.totalorder %v445, 1
        %vm448 = vcmp.eq.s32.totalorder %v446, 1
        %v449 = vsel %vm447, %v444, 0.0
        %v450 = vsel %vm448, %v443, 0.0
        %451 = vst [vmem:[#allocation3 + $0x10] sm:$0xff] %v449
        %452 = vst [vmem:[#allocation3 + $0x18] sm:$0xff] %v450
        %453 = vrot.lane.b32.xlu0 %v415, 15
        %v454 = vpop.permute.xlu0 %453
        %455 = vrot.lane.b32.xlu0 %v416, 15
        %v456 = vpop.permute.xlu0 %455
        %vm457 = vcmp.lt.s32.totalorder %v407, 15
        %v458 = vsel %vm457, %v454, %v456
        %v459 = vsel %vm457, %v456, %v454
        %vm460 = vcmp.lt.s32.totalorder %v409, 15
        %vm461 = vcmp.lt.s32.totalorder %v410, 15
        %vm462 = vmand %vm424, %vm460
        %vm463 = vmand %vm425, %vm461
        %v464 = vsel %vm462, 1, 0
        %v465 = vsel %vm463, 1, 0
        %vm466 = vcmp.eq.s32.totalorder %v464, 1
        %vm467 = vcmp.eq.s32.totalorder %v465, 1
        %v468 = vsel %vm466, %v459, 0.0
        %v469 = vsel %vm467, %v458, 0.0
        %470 = vst [vmem:[#allocation3 + $0x20] sm:$0xff] %v468
        %471 = vst [vmem:[#allocation3 + $0x28] sm:$0xff] %v469
        %472 = vrot.lane.b32.xlu0 %v415, 1
        %v473 = vpop.permute.xlu0 %472
        %474 = vrot.lane.b32.xlu0 %v416, 1
        %v475 = vpop.permute.xlu0 %474
        %vm476 = vcmp.lt.s32.totalorder %v407, 1
        %v477 = vsel %vm476, %v473, %v475
        %v478 = vsel %vm476, %v475, %v473
        %v479 = vsel %vm426, 1, 0
        %v480 = vsel %vm427, 1, 0
        %vm481 = vcmp.eq.s32.totalorder %v479, 1
        %vm482 = vcmp.eq.s32.totalorder %v480, 1
        %v483 = vsel %vm481, %v478, 0.0
        %v484 = vsel %vm482, %v477, 0.0
        %485 = vst [vmem:[#allocation3 + $0x30] sm:$0xff] %v483
        %486 = vst [vmem:[#allocation3 + $0x38] sm:$0xff] %v484
        %487 = vst [vmem:[#allocation3 + $0x40] sm:$0xff] %v415
        %488 = vst [vmem:[#allocation3 + $0x48] sm:$0xff] %v416
        %489 = vrot.lane.b32.xlu0 %v415, 127
        %v490 = vpop.permute.xlu0 %489
        %491 = vrot.lane.b32.xlu0 %v416, 127
        %v492 = vpop.permute.xlu0 %491
        %vm493 = vcmp.lt.s32.totalorder %v407, 127
        %v494 = vsel %vm493, %v490, %v492
        %v495 = vsel %vm493, %v492, %v490
        %v496 = vsel %vm460, 1, 0
        %v497 = vsel %vm461, 1, 0
        %vm498 = vcmp.eq.s32.totalorder %v496, 1
        %vm499 = vcmp.eq.s32.totalorder %v497, 1
        %v500 = vsel %vm498, %v494, 0.0
        %v501 = vsel %vm499, %v495, 0.0
        %502 = vst [vmem:[#allocation3 + $0x50] sm:$0xff] %v500
        %503 = vst [vmem:[#allocation3 + $0x58] sm:$0xff] %v501
        %504 = vrot.lane.b32.xlu0 %v415, 113
        %v505 = vpop.permute.xlu0 %504
        %506 = vrot.lane.b32.xlu0 %v416, 113
        %v507 = vpop.permute.xlu0 %506
        %vm508 = vcmp.lt.s32.totalorder %v407, 113
        %v509 = vsel %vm508, %v505, %v507
        %v510 = vsel %vm508, %v507, %v505
        %vm511 = vcmp.lt.s32.totalorder %v407, 240
        %vm512 = vcmp.lt.s32.totalorder %v408, 240
        %vm513 = vmand %vm511, %vm426
        %vm514 = vmand %vm512, %vm427
        %v515 = vsel %vm513, 1, 0
        %v516 = vsel %vm514, 1, 0
        %vm517 = vcmp.eq.s32.totalorder %v515, 1
        %vm518 = vcmp.eq.s32.totalorder %v516, 1
        %v519 = vsel %vm517, %v509, 0.0
        %v520 = vsel %vm518, %v510, 0.0
        %521 = vst [vmem:[#allocation3 + $0x60] sm:$0xff] %v519
        %522 = vst [vmem:[#allocation3 + $0x68] sm:$0xff] %v520
        %523 = vrot.lane.b32.xlu0 %v415, 112
        %v524 = vpop.permute.xlu0 %523
        %525 = vrot.lane.b32.xlu0 %v416, 112
        %v526 = vpop.permute.xlu0 %525
        %vm527 = vcmp.lt.s32.totalorder %v407, 112
        %v528 = vsel %vm527, %v524, %v526
        %v529 = vsel %vm527, %v526, %v524
        %v530 = vsel %vm511, 1, 0
        %v531 = vsel %vm512, 1, 0
        %vm532 = vcmp.eq.s32.totalorder %v530, 1
        %vm533 = vcmp.eq.s32.totalorder %v531, 1
        %v534 = vsel %vm532, %v528, 0.0
        %v535 = vsel %vm533, %v529, 0.0
        %536 = vst [vmem:[#allocation3 + $0x70] sm:$0xff] %v534
        %537 = vst [vmem:[#allocation3 + $0x78] sm:$0xff] %v535
        %538 = vrot.lane.b32.xlu0 %v415, 111
        %v539 = vpop.permute.xlu0 %538
        %540 = vrot.lane.b32.xlu0 %v416, 111
        %v541 = vpop.permute.xlu0 %540
        %vm542 = vcmp.lt.s32.totalorder %v407, 111
        %v543 = vsel %vm542, %v539, %v541
        %v544 = vsel %vm542, %v541, %v539
        %vm545 = vmand %vm511, %vm460
        %vm546 = vmand %vm512, %vm461
        %v547 = vsel %vm545, 1, 0
        %v548 = vsel %vm546, 1, 0
        %vm549 = vcmp.eq.s32.totalorder %v547, 1
        %vm550 = vcmp.eq.s32.totalorder %v548, 1
        %v551 = vsel %vm549, %v543, 0.0
        %v552 = vsel %vm550, %v544, 0.0
        %553 = vst [vmem:[#allocation3 + $0x80] sm:$0xff] %v551
        %554 = vst [vmem:[#allocation3 + $0x88] sm:$0xff] %v552
        %v555 = vld [vmem:[#allocation4] sm:$0xff]
        %v556 = vld [vmem:[#allocation4 + $0x8] sm:$0xff]
        %v557 = vld [vmem:[#allocation4 + $0x10] sm:$0xff]
        %v558 = vld [vmem:[#allocation4 + $0x18] sm:$0xff]
        %v559 = vld [vmem:[#allocation3] sm:$0xff]
        %v560 = vld [vmem:[#allocation3 + $0x8] sm:$0xff]
        %v561 = vld [vmem:[#allocation3 + $0x10] sm:$0xff]
        %v562 = vld [vmem:[#allocation3 + $0x18] sm:$0xff]
        %v563 = vld [vmem:[#allocation3 + $0x20] sm:$0xff]
        %v564 = vld [vmem:[#allocation3 + $0x28] sm:$0xff]
        %v565 = vld [vmem:[#allocation3 + $0x30] sm:$0xff]
        %v566 = vld [vmem:[#allocation3 + $0x38] sm:$0xff]
        %v567 = vld [vmem:[#allocation3 + $0x40] sm:$0xff]
        %v568 = vld [vmem:[#allocation3 + $0x48] sm:$0xff]
        %v569 = vld [vmem:[#allocation3 + $0x50] sm:$0xff]
        %v570 = vld [vmem:[#allocation3 + $0x58] sm:$0xff]
        %v571 = vld [vmem:[#allocation3 + $0x60] sm:$0xff]
        %v572 = vld [vmem:[#allocation3 + $0x68] sm:$0xff]
        %v573 = vld [vmem:[#allocation3 + $0x70] sm:$0xff]
        %v574 = vld [vmem:[#allocation3 + $0x78] sm:$0xff]
        %v575 = vld [vmem:[#allocation3 + $0x80] sm:$0xff]
        %v576 = vld [vmem:[#allocation3 + $0x88] sm:$0xff]
        %v577 = vld [vmem:[#allocation6] sm:$0xff]
        %v578 = vld [vmem:[#allocation6 + $0x8] sm:$0xff]
        %v579 = vld [vmem:[#allocation6 + $0x10] sm:$0xff]
        %v580 = vld [vmem:[#allocation6 + $0x18] sm:$0xff]
        %582 = vset.pattern.permute.xlu0 0
        %583 = vperm.xlu0 %582, %v577
        %v584 = vpop.permute.xlu0 %583
        %587 = vset.pattern.permute.xlu0 0
        %588 = vperm.xlu0 %587, %v578
        %v589 = vpop.permute.xlu0 %588
        %592 = vset.pattern.permute.xlu0 0
        %593 = vperm.xlu0 %592, %v579
        %v594 = vpop.permute.xlu0 %593
        %597 = vset.pattern.permute.xlu0 0
        %598 = vperm.xlu0 %597, %v580
        %v599 = vpop.permute.xlu0 %598
        %vm601 = vcmask 588800
        %v603 = vsel %vm601, %v555, 0
        %v606 = vsel %vm601, %v556, 0
        %v609 = vsel %vm601, %v557, 0
        %v612 = vsel %vm601, %v558, 0
        %614 = vmatprep.subr.mxu0 0.0
        %615 = vmatpush1.msra.mxu0 0.0
        %616 = vmatprep.subr.mxu0 0.0
        %617 = vmatpush1.msra.mxu0 0.0
        %618 = vmatprep.subr.mxu0 0.0
        %619 = vmatpush1.msra.mxu0 0.0
        %620 = vmatprep.subr.mxu0 0.0
        %621 = vmatpush1.msra.mxu0 0.0
        %622 = vmatprep.subr.mxu0 0.0
        %623 = vmatpush1.msra.mxu0 0.0
        %624 = vmatprep.subr.mxu0 0.0
        %625 = vmatpush1.msra.mxu0 0.0
        %626 = vmatprep.subr.mxu0 0.0
        %627 = vmatpush1.msra.mxu0 0.0
        %628 = vmatprep.subr.mxu0 %v576
        %629 = vmatpush1.msra.mxu0 %v575
        %630 = vmatprep.subr.mxu0 %v574
        %631 = vmatpush1.msra.mxu0 %v573
        %632 = vmatprep.subr.mxu0 %v572
        %633 = vmatpush1.msra.mxu0 %v571
        %634 = vmatprep.subr.mxu0 %v570
        %635 = vmatpush1.msra.mxu0 %v569
        %636 = vmatprep.subr.mxu0 %v568
        %637 = vmatpush1.msra.mxu0 %v567
        %638 = vmatprep.subr.mxu0 %v566
        %639 = vmatpush1.msra.mxu0 %v565
        %640 = vmatprep.subr.mxu0 %v564
        %641 = vmatpush1.msra.mxu0 %v563
        %642 = vmatprep.subr.mxu0 %v562
        %643 = vmatpush1.msra.mxu0 %v561
        %644 = vmatprep.subr.mxu0 %v560
        %645 = vmatpush1.msra.mxu0 %v559
        %646 = vmatprep.subr.mxu0 0.0
        %647 = vmatpush2.msra.mxu0 0.0
        %648 = vmatprep.subr.mxu0 0.0
        %649 = vmatpush2.msra.mxu0 0.0
        %650 = vmatprep.subr.mxu0 0.0
        %651 = vmatpush2.msra.mxu0 0.0
        %652 = vmatprep.subr.mxu0 0.0
        %653 = vmatpush2.msra.mxu0 0.0
        %654 = vmatprep.subr.mxu0 0.0
        %655 = vmatpush2.msra.mxu0 0.0
        %656 = vmatprep.subr.mxu0 0.0
        %657 = vmatpush2.msra.mxu0 0.0
        %658 = vmatprep.subr.mxu0 0.0
        %659 = vmatpush2.msra.mxu0 0.0
        %660 = vmatprep.subr.mxu0 0.0
        %661 = vmatpush2.msra.mxu0 0.0
        %662 = vmatprep.subr.mxu0 0.0
        %663 = vmatpush2.msra.mxu0 0.0
        %664 = vmatprep.subr.mxu0 0.0
        %665 = vmatpush2.msra.mxu0 0.0
        %666 = vmatprep.subr.mxu0 0.0
        %667 = vmatpush2.msra.mxu0 0.0
        %668 = vmatprep.subr.mxu0 0.0
        %669 = vmatpush2.msra.mxu0 0.0
        %670 = vmatprep.subr.mxu0 0.0
        %671 = vmatpush2.msra.mxu0 0.0
        %672 = vmatprep.subr.mxu0 0.0
        %673 = vmatpush2.msra.mxu0 0.0
        %674 = vmatprep.subr.mxu0 0.0
        %675 = vmatpush2.msra.mxu0 0.0
        %676 = vmatprep.subr.mxu0 0.0
        %677 = vmatpush2.msra.mxu0 0.0
        %678 = vmatprep.mubr.f32.mxu0 0.0
        %679 = vmatmul.mubr.f32.gmra.mxu0 %v603
        %v680 = vpop.f32.mrf.mxu0
        %v681 = vadd.f32 %v584, %v680
        %v682 = vpop.f32.mrf.mxu0
        %v683 = vadd.f32 %v584, %v682
        %684 = vmatprep.mubr.f32.mxu0 0.0
        %685 = vmatmul.mubr.f32.gmra.mxu0 %v606
        %v686 = vpop.f32.mrf.mxu0
        %v687 = vadd.f32 %v589, %v686
        %v688 = vpop.f32.mrf.mxu0
        %v689 = vadd.f32 %v589, %v688
        %690 = vmatprep.mubr.f32.mxu0 0.0
        %691 = vmatmul.mubr.f32.gmra.mxu0 %v609
        %v692 = vpop.f32.mrf.mxu0
        %v693 = vadd.f32 %v594, %v692
        %v694 = vpop.f32.mrf.mxu0
        %v695 = vadd.f32 %v594, %v694
        %696 = vmatprep.mubr.f32.mxu0 0.0
        %697 = vmatmul.mubr.f32.gmra.mxu0 %v612
        %v698 = vpop.f32.mrf.mxu0
        %v699 = vadd.f32 %v599, %v698
        %v700 = vpop.f32.mrf.mxu0
        %v701 = vadd.f32 %v599, %v700
        %702 = vdwg.mxu0
        %vm703 = vcmp.ge.f32.partialorder %v681, 0.0
        %vm704 = vcmp.ge.f32.partialorder %v683, 0.0
        %vm705 = vcmp.ge.f32.partialorder %v687, 0.0
        %vm706 = vcmp.ge.f32.partialorder %v689, 0.0
        %vm707 = vcmp.ge.f32.partialorder %v693, 0.0
        %vm708 = vcmp.ge.f32.partialorder %v695, 0.0
        %vm709 = vcmp.ge.f32.partialorder %v699, 0.0
        %vm710 = vcmp.ge.f32.partialorder %v701, 0.0
        %v711 = vmul.f32 %v681, 0.01
        %v712 = vmul.f32 %v683, 0.01
        %v713 = vmul.f32 %v687, 0.01
        %v714 = vmul.f32 %v689, 0.01
        %v715 = vmul.f32 %v693, 0.01
        %v716 = vmul.f32 %v695, 0.01
        %v717 = vmul.f32 %v699, 0.01
        %v718 = vmul.f32 %v701, 0.01
        %v719 = vsel %vm703, %v681, %v711
        %v720 = vsel %vm704, %v683, %v712
        %v721 = vsel %vm705, %v687, %v713
        %v722 = vsel %vm706, %v689, %v714
        %v723 = vsel %vm707, %v693, %v715
        %v724 = vsel %vm708, %v695, %v716
        %v725 = vsel %vm709, %v699, %v717
        %v726 = vsel %vm710, %v701, %v718
        %727 = vst [vmem:[#allocation2] sm:$0xff] %v719
        %728 = vst [vmem:[#allocation2 + $0x8] sm:$0xff] %v720
        %729 = vst [vmem:[#allocation2 + $0x10] sm:$0xff] %v721
        %730 = vst [vmem:[#allocation2 + $0x18] sm:$0xff] %v722
        %731 = vst [vmem:[#allocation2 + $0x20] sm:$0xff] %v723
        %732 = vst [vmem:[#allocation2 + $0x28] sm:$0xff] %v724
        %733 = vst [vmem:[#allocation2 + $0x30] sm:$0xff] %v725
        %734 = vst [vmem:[#allocation2 + $0x38] sm:$0xff] %v726
        %v735 = vld [vmem:[#allocation2] sm:$0xff]
        %v736 = vld [vmem:[#allocation2 + $0x8] sm:$0xff]
        %v737 = vld [vmem:[#allocation2 + $0x10] sm:$0xff]
        %v738 = vld [vmem:[#allocation2 + $0x18] sm:$0xff]
        %v739 = vld [vmem:[#allocation2 + $0x20] sm:$0xff]
        %v740 = vld [vmem:[#allocation2 + $0x28] sm:$0xff]
        %v741 = vld [vmem:[#allocation2 + $0x30] sm:$0xff]
        %v742 = vld [vmem:[#allocation2 + $0x38] sm:$0xff]
        %743 = vrot.lane.b32.xlu0 %v735, 17
        %v744 = vpop.permute.xlu0 %743
        %745 = vrot.lane.b32.xlu0 %v737, 17
        %v746 = vpop.permute.xlu0 %745
        %747 = vrot.lane.b32.xlu0 %v739, 17
        %v748 = vpop.permute.xlu0 %747
        %749 = vrot.lane.b32.xlu0 %v741, 17
        %v750 = vpop.permute.xlu0 %749
        %751 = vrot.lane.b32.xlu0 %v736, 17
        %v752 = vpop.permute.xlu0 %751
        %753 = vrot.lane.b32.xlu0 %v738, 17
        %v754 = vpop.permute.xlu0 %753
        %755 = vrot.lane.b32.xlu0 %v740, 17
        %v756 = vpop.permute.xlu0 %755
        %757 = vrot.lane.b32.xlu0 %v742, 17
        %v758 = vpop.permute.xlu0 %757
        %v759 = vsel %vm421, %v744, %v752
        %v760 = vsel %vm421, %v746, %v754
        %v761 = vsel %vm421, %v748, %v756
        %v762 = vsel %vm421, %v750, %v758
        %v763 = vsel %vm421, %v752, %v744
        %v764 = vsel %vm421, %v754, %v746
        %v765 = vsel %vm421, %v756, %v748
        %v766 = vsel %vm421, %v758, %v750
        %v767 = vsel %vm432, %v763, 0.0
        %v768 = vsel %vm433, %v759, 0.0
        %v769 = vsel %vm432, %v764, 0.0
        %v770 = vsel %vm433, %v760, 0.0
        %v771 = vsel %vm432, %v765, 0.0
        %v772 = vsel %vm433, %v761, 0.0
        %v773 = vsel %vm432, %v766, 0.0
        %v774 = vsel %vm433, %v762, 0.0
        %775 = vst [vmem:[#allocation3] sm:$0xff] %v767
        %776 = vst [vmem:[#allocation3 + $0x8] sm:$0xff] %v768
        %777 = vst [vmem:[#allocation3 + $0x10] sm:$0xff] %v769
        %778 = vst [vmem:[#allocation3 + $0x18] sm:$0xff] %v770
        %779 = vst [vmem:[#allocation3 + $0x20] sm:$0xff] %v771
        %780 = vst [vmem:[#allocation3 + $0x28] sm:$0xff] %v772
        %781 = vst [vmem:[#allocation3 + $0x30] sm:$0xff] %v773
        %782 = vst [vmem:[#allocation3 + $0x38] sm:$0xff] %v774
        %783 = vrot.lane.b32.xlu0 %v735, 16
        %v784 = vpop.permute.xlu0 %783
        %785 = vrot.lane.b32.xlu0 %v737, 16
        %v786 = vpop.permute.xlu0 %785
        %787 = vrot.lane.b32.xlu0 %v739, 16
        %v788 = vpop.permute.xlu0 %787
        %789 = vrot.lane.b32.xlu0 %v741, 16
        %v790 = vpop.permute.xlu0 %789
        %791 = vrot.lane.b32.xlu0 %v736, 16
        %v792 = vpop.permute.xlu0 %791
        %793 = vrot.lane.b32.xlu0 %v738, 16
        %v794 = vpop.permute.xlu0 %793
        %795 = vrot.lane.b32.xlu0 %v740, 16
        %v796 = vpop.permute.xlu0 %795
        %797 = vrot.lane.b32.xlu0 %v742, 16
        %v798 = vpop.permute.xlu0 %797
        %v799 = vsel %vm442, %v784, %v792
        %v800 = vsel %vm442, %v786, %v794
        %v801 = vsel %vm442, %v788, %v796
        %v802 = vsel %vm442, %v790, %v798
        %v803 = vsel %vm442, %v792, %v784
        %v804 = vsel %vm442, %v794, %v786
        %v805 = vsel %vm442, %v796, %v788
        %v806 = vsel %vm442, %v798, %v790
        %v807 = vsel %vm447, %v803, 0.0
        %v808 = vsel %vm448, %v799, 0.0
        %v809 = vsel %vm447, %v804, 0.0
        %v810 = vsel %vm448, %v800, 0.0
        %v811 = vsel %vm447, %v805, 0.0
        %v812 = vsel %vm448, %v801, 0.0
        %v813 = vsel %vm447, %v806, 0.0
        %v814 = vsel %vm448, %v802, 0.0
        %815 = vst [vmem:[#allocation3 + $0x40] sm:$0xff] %v807
        %816 = vst [vmem:[#allocation3 + $0x48] sm:$0xff] %v808
        %817 = vst [vmem:[#allocation3 + $0x50] sm:$0xff] %v809
        %818 = vst [vmem:[#allocation3 + $0x58] sm:$0xff] %v810
        %819 = vst [vmem:[#allocation3 + $0x60] sm:$0xff] %v811
        %820 = vst [vmem:[#allocation3 + $0x68] sm:$0xff] %v812
        %821 = vst [vmem:[#allocation3 + $0x70] sm:$0xff] %v813
        %822 = vst [vmem:[#allocation3 + $0x78] sm:$0xff] %v814
        %823 = vrot.lane.b32.xlu0 %v735, 15
        %v824 = vpop.permute.xlu0 %823
        %825 = vrot.lane.b32.xlu0 %v737, 15
        %v826 = vpop.permute.xlu0 %825
        %827 = vrot.lane.b32.xlu0 %v739, 15
        %v828 = vpop.permute.xlu0 %827
        %829 = vrot.lane.b32.xlu0 %v741, 15
        %v830 = vpop.permute.xlu0 %829
        %831 = vrot.lane.b32.xlu0 %v736, 15
        %v832 = vpop.permute.xlu0 %831
        %833 = vrot.lane.b32.xlu0 %v738, 15
        %v834 = vpop.permute.xlu0 %833
        %835 = vrot.lane.b32.xlu0 %v740, 15
        %v836 = vpop.permute.xlu0 %835
        %837 = vrot.lane.b32.xlu0 %v742, 15
        %v838 = vpop.permute.xlu0 %837
        %v839 = vsel %vm457, %v824, %v832
        %v840 = vsel %vm457, %v826, %v834
        %v841 = vsel %vm457, %v828, %v836
        %v842 = vsel %vm457, %v830, %v838
        %v843 = vsel %vm457, %v832, %v824
        %v844 = vsel %vm457, %v834, %v826
        %v845 = vsel %vm457, %v836, %v828
        %v846 = vsel %vm457, %v838, %v830
        %v847 = vsel %vm466, %v843, 0.0
        %v848 = vsel %vm467, %v839, 0.0
        %v849 = vsel %vm466, %v844, 0.0
        %v850 = vsel %vm467, %v840, 0.0
        %v851 = vsel %vm466, %v845, 0.0
        %v852 = vsel %vm467, %v841, 0.0
        %v853 = vsel %vm466, %v846, 0.0
        %v854 = vsel %vm467, %v842, 0.0
        %855 = vst [vmem:[#allocation3 + $0x80] sm:$0xff] %v847
        %856 = vst [vmem:[#allocation3 + $0x88] sm:$0xff] %v848
        %857 = vst [vmem:[#allocation3 + $0x90] sm:$0xff] %v849
        %858 = vst [vmem:[#allocation3 + $0x98] sm:$0xff] %v850
        %859 = vst [vmem:[#allocation3 + $0xa0] sm:$0xff] %v851
        %860 = vst [vmem:[#allocation3 + $0xa8] sm:$0xff] %v852
        %861 = vst [vmem:[#allocation3 + $0xb0] sm:$0xff] %v853
        %862 = vst [vmem:[#allocation3 + $0xb8] sm:$0xff] %v854
        %863 = vrot.lane.b32.xlu0 %v735, 1
        %v864 = vpop.permute.xlu0 %863
        %865 = vrot.lane.b32.xlu0 %v737, 1
        %v866 = vpop.permute.xlu0 %865
        %867 = vrot.lane.b32.xlu0 %v739, 1
        %v868 = vpop.permute.xlu0 %867
        %869 = vrot.lane.b32.xlu0 %v741, 1
        %v870 = vpop.permute.xlu0 %869
        %871 = vrot.lane.b32.xlu0 %v736, 1
        %v872 = vpop.permute.xlu0 %871
        %873 = vrot.lane.b32.xlu0 %v738, 1
        %v874 = vpop.permute.xlu0 %873
        %875 = vrot.lane.b32.xlu0 %v740, 1
        %v876 = vpop.permute.xlu0 %875
        %877 = vrot.lane.b32.xlu0 %v742, 1
        %v878 = vpop.permute.xlu0 %877
        %v879 = vsel %vm476, %v864, %v872
        %v880 = vsel %vm476, %v866, %v874
        %v881 = vsel %vm476, %v868, %v876
        %v882 = vsel %vm476, %v870, %v878
        %v883 = vsel %vm476, %v872, %v864
        %v884 = vsel %vm476, %v874, %v866
        %v885 = vsel %vm476, %v876, %v868
        %v886 = vsel %vm476, %v878, %v870
        %v887 = vsel %vm481, %v883, 0.0
        %v888 = vsel %vm482, %v879, 0.0
        %v889 = vsel %vm481, %v884, 0.0
        %v890 = vsel %vm482, %v880, 0.0
        %v891 = vsel %vm481, %v885, 0.0
        %v892 = vsel %vm482, %v881, 0.0
        %v893 = vsel %vm481, %v886, 0.0
        %v894 = vsel %vm482, %v882, 0.0
        %895 = vst [vmem:[#allocation3 + $0xc0] sm:$0xff] %v887
        %896 = vst [vmem:[#allocation3 + $0xc8] sm:$0xff] %v888
        %897 = vst [vmem:[#allocation3 + $0xd0] sm:$0xff] %v889
        %898 = vst [vmem:[#allocation3 + $0xd8] sm:$0xff] %v890
        %899 = vst [vmem:[#allocation3 + $0xe0] sm:$0xff] %v891
        %900 = vst [vmem:[#allocation3 + $0xe8] sm:$0xff] %v892
        %901 = vst [vmem:[#allocation3 + $0xf0] sm:$0xff] %v893
        %902 = vst [vmem:[#allocation3 + $0xf8] sm:$0xff] %v894
        %903 = vst [vmem:[#allocation3 + $0x100] sm:$0xff] %v735
        %904 = vst [vmem:[#allocation3 + $0x108] sm:$0xff] %v736
        %905 = vst [vmem:[#allocation3 + $0x110] sm:$0xff] %v737
        %906 = vst [vmem:[#allocation3 + $0x118] sm:$0xff] %v738
        %907 = vst [vmem:[#allocation3 + $0x120] sm:$0xff] %v739
        %908 = vst [vmem:[#allocation3 + $0x128] sm:$0xff] %v740
        %909 = vst [vmem:[#allocation3 + $0x130] sm:$0xff] %v741
        %910 = vst [vmem:[#allocation3 + $0x138] sm:$0xff] %v742
        %911 = vrot.lane.b32.xlu0 %v735, 127
        %v912 = vpop.permute.xlu0 %911
        %913 = vrot.lane.b32.xlu0 %v737, 127
        %v914 = vpop.permute.xlu0 %913
        %915 = vrot.lane.b32.xlu0 %v739, 127
        %v916 = vpop.permute.xlu0 %915
        %917 = vrot.lane.b32.xlu0 %v741, 127
        %v918 = vpop.permute.xlu0 %917
        %919 = vrot.lane.b32.xlu0 %v736, 127
        %v920 = vpop.permute.xlu0 %919
        %921 = vrot.lane.b32.xlu0 %v738, 127
        %v922 = vpop.permute.xlu0 %921
        %923 = vrot.lane.b32.xlu0 %v740, 127
        %v924 = vpop.permute.xlu0 %923
        %925 = vrot.lane.b32.xlu0 %v742, 127
        %v926 = vpop.permute.xlu0 %925
        %v927 = vsel %vm493, %v912, %v920
        %v928 = vsel %vm493, %v914, %v922
        %v929 = vsel %vm493, %v916, %v924
        %v930 = vsel %vm493, %v918, %v926
        %v931 = vsel %vm493, %v920, %v912
        %v932 = vsel %vm493, %v922, %v914
        %v933 = vsel %vm493, %v924, %v916
        %v934 = vsel %vm493, %v926, %v918
        %v935 = vsel %vm498, %v927, 0.0
        %v936 = vsel %vm499, %v931, 0.0
        %v937 = vsel %vm498, %v928, 0.0
        %v938 = vsel %vm499, %v932, 0.0
        %v939 = vsel %vm498, %v929, 0.0
        %v940 = vsel %vm499, %v933, 0.0
        %v941 = vsel %vm498, %v930, 0.0
        %v942 = vsel %vm499, %v934, 0.0
        %943 = vst [vmem:[#allocation3 + $0x140] sm:$0xff] %v935
        %944 = vst [vmem:[#allocation3 + $0x148] sm:$0xff] %v936
        %945 = vst [vmem:[#allocation3 + $0x150] sm:$0xff] %v937
        %946 = vst [vmem:[#allocation3 + $0x158] sm:$0xff] %v938
        %947 = vst [vmem:[#allocation3 + $0x160] sm:$0xff] %v939
        %948 = vst [vmem:[#allocation3 + $0x168] sm:$0xff] %v940
        %949 = vst [vmem:[#allocation3 + $0x170] sm:$0xff] %v941
        %950 = vst [vmem:[#allocation3 + $0x178] sm:$0xff] %v942
        %951 = vrot.lane.b32.xlu0 %v735, 113
        %v952 = vpop.permute.xlu0 %951
        %953 = vrot.lane.b32.xlu0 %v737, 113
        %v954 = vpop.permute.xlu0 %953
        %955 = vrot.lane.b32.xlu0 %v739, 113
        %v956 = vpop.permute.xlu0 %955
        %957 = vrot.lane.b32.xlu0 %v741, 113
        %v958 = vpop.permute.xlu0 %957
        %959 = vrot.lane.b32.xlu0 %v736, 113
        %v960 = vpop.permute.xlu0 %959
        %961 = vrot.lane.b32.xlu0 %v738, 113
        %v962 = vpop.permute.xlu0 %961
        %963 = vrot.lane.b32.xlu0 %v740, 113
        %v964 = vpop.permute.xlu0 %963
        %965 = vrot.lane.b32.xlu0 %v742, 113
        %v966 = vpop.permute.xlu0 %965
        %v967 = vsel %vm508, %v952, %v960
        %v968 = vsel %vm508, %v954, %v962
        %v969 = vsel %vm508, %v956, %v964
        %v970 = vsel %vm508, %v958, %v966
        %v971 = vsel %vm508, %v960, %v952
        %v972 = vsel %vm508, %v962, %v954
        %v973 = vsel %vm508, %v964, %v956
        %v974 = vsel %vm508, %v966, %v958
        %v975 = vsel %vm517, %v967, 0.0
        %v976 = vsel %vm518, %v971, 0.0
        %v977 = vsel %vm517, %v968, 0.0
        %v978 = vsel %vm518, %v972, 0.0
        %v979 = vsel %vm517, %v969, 0.0
        %v980 = vsel %vm518, %v973, 0.0
        %v981 = vsel %vm517, %v970, 0.0
        %v982 = vsel %vm518, %v974, 0.0
        %983 = vst [vmem:[#allocation3 + $0x180] sm:$0xff] %v975
        %984 = vst [vmem:[#allocation3 + $0x188] sm:$0xff] %v976
        %985 = vst [vmem:[#allocation3 + $0x190] sm:$0xff] %v977
        %986 = vst [vmem:[#allocation3 + $0x198] sm:$0xff] %v978
        %987 = vst [vmem:[#allocation3 + $0x1a0] sm:$0xff] %v979
        %988 = vst [vmem:[#allocation3 + $0x1a8] sm:$0xff] %v980
        %989 = vst [vmem:[#allocation3 + $0x1b0] sm:$0xff] %v981
        %990 = vst [vmem:[#allocation3 + $0x1b8] sm:$0xff] %v982
        %991 = vrot.lane.b32.xlu0 %v735, 112
        %v992 = vpop.permute.xlu0 %991
        %993 = vrot.lane.b32.xlu0 %v737, 112
        %v994 = vpop.permute.xlu0 %993
        %995 = vrot.lane.b32.xlu0 %v739, 112
        %v996 = vpop.permute.xlu0 %995
        %997 = vrot.lane.b32.xlu0 %v741, 112
        %v998 = vpop.permute.xlu0 %997
        %999 = vrot.lane.b32.xlu0 %v736, 112
        %v1000 = vpop.permute.xlu0 %999
        %1001 = vrot.lane.b32.xlu0 %v738, 112
        %v1002 = vpop.permute.xlu0 %1001
        %1003 = vrot.lane.b32.xlu0 %v740, 112
        %v1004 = vpop.permute.xlu0 %1003
        %1005 = vrot.lane.b32.xlu0 %v742, 112
        %v1006 = vpop.permute.xlu0 %1005
        %v1007 = vsel %vm527, %v992, %v1000
        %v1008 = vsel %vm527, %v994, %v1002
        %v1009 = vsel %vm527, %v996, %v1004
        %v1010 = vsel %vm527, %v998, %v1006
        %v1011 = vsel %vm527, %v1000, %v992
        %v1012 = vsel %vm527, %v1002, %v994
        %v1013 = vsel %vm527, %v1004, %v996
        %v1014 = vsel %vm527, %v1006, %v998
        %v1015 = vsel %vm532, %v1007, 0.0
        %v1016 = vsel %vm533, %v1011, 0.0
        %v1017 = vsel %vm532, %v1008, 0.0
        %v1018 = vsel %vm533, %v1012, 0.0
        %v1019 = vsel %vm532, %v1009, 0.0
        %v1020 = vsel %vm533, %v1013, 0.0
        %v1021 = vsel %vm532, %v1010, 0.0
        %v1022 = vsel %vm533, %v1014, 0.0
        %1023 = vst [vmem:[#allocation3 + $0x1c0] sm:$0xff] %v1015
        %1024 = vst [vmem:[#allocation3 + $0x1c8] sm:$0xff] %v1016
        %1025 = vst [vmem:[#allocation3 + $0x1d0] sm:$0xff] %v1017
        %1026 = vst [vmem:[#allocation3 + $0x1d8] sm:$0xff] %v1018
        %1027 = vst [vmem:[#allocation3 + $0x1e0] sm:$0xff] %v1019
        %1028 = vst [vmem:[#allocation3 + $0x1e8] sm:$0xff] %v1020
        %1029 = vst [vmem:[#allocation3 + $0x1f0] sm:$0xff] %v1021
        %1030 = vst [vmem:[#allocation3 + $0x1f8] sm:$0xff] %v1022
        %1031 = vrot.lane.b32.xlu0 %v735, 111
        %v1032 = vpop.permute.xlu0 %1031
        %1033 = vrot.lane.b32.xlu0 %v737, 111
        %v1034 = vpop.permute.xlu0 %1033
        %1035 = vrot.lane.b32.xlu0 %v739, 111
        %v1036 = vpop.permute.xlu0 %1035
        %1037 = vrot.lane.b32.xlu0 %v741, 111
        %v1038 = vpop.permute.xlu0 %1037
        %1039 = vrot.lane.b32.xlu0 %v736, 111
        %v1040 = vpop.permute.xlu0 %1039
        %1041 = vrot.lane.b32.xlu0 %v738, 111
        %v1042 = vpop.permute.xlu0 %1041
        %1043 = vrot.lane.b32.xlu0 %v740, 111
        %v1044 = vpop.permute.xlu0 %1043
        %1045 = vrot.lane.b32.xlu0 %v742, 111
        %v1046 = vpop.permute.xlu0 %1045
        %v1047 = vsel %vm542, %v1032, %v1040
        %v1048 = vsel %vm542, %v1034, %v1042
        %v1049 = vsel %vm542, %v1036, %v1044
        %v1050 = vsel %vm542, %v1038, %v1046
        %v1051 = vsel %vm542, %v1040, %v1032
        %v1052 = vsel %vm542, %v1042, %v1034
        %v1053 = vsel %vm542, %v1044, %v1036
        %v1054 = vsel %vm542, %v1046, %v1038
        %v1055 = vsel %vm549, %v1047, 0.0
        %v1056 = vsel %vm550, %v1051, 0.0
        %v1057 = vsel %vm549, %v1048, 0.0
        %v1058 = vsel %vm550, %v1052, 0.0
        %v1059 = vsel %vm549, %v1049, 0.0
        %v1060 = vsel %vm550, %v1053, 0.0
        %v1061 = vsel %vm549, %v1050, 0.0
        %v1062 = vsel %vm550, %v1054, 0.0
        %1063 = vst [vmem:[#allocation3 + $0x200] sm:$0xff] %v1055
        %1064 = vst [vmem:[#allocation3 + $0x208] sm:$0xff] %v1056
        %1065 = vst [vmem:[#allocation3 + $0x210] sm:$0xff] %v1057
        %1066 = vst [vmem:[#allocation3 + $0x218] sm:$0xff] %v1058
        %1067 = vst [vmem:[#allocation3 + $0x220] sm:$0xff] %v1059
        %1068 = vst [vmem:[#allocation3 + $0x228] sm:$0xff] %v1060
        %1069 = vst [vmem:[#allocation3 + $0x230] sm:$0xff] %v1061
        %1070 = vst [vmem:[#allocation3 + $0x238] sm:$0xff] %v1062
        %v1071 = vld [vmem:[#allocation8] sm:$0xff]
        %v1072 = vld [vmem:[#allocation8 + $0x8] sm:$0xff]
        %v1073 = vld [vmem:[#allocation8 + $0x10] sm:$0xff]
        %v1074 = vld [vmem:[#allocation8 + $0x18] sm:$0xff]
        %v1075 = vld [vmem:[#allocation8 + $0x20] sm:$0xff]
        %v1076 = vld [vmem:[#allocation8 + $0x28] sm:$0xff]
        %v1077 = vld [vmem:[#allocation8 + $0x30] sm:$0xff]
        %v1078 = vld [vmem:[#allocation8 + $0x38] sm:$0xff]
        %v1079 = vld [vmem:[#allocation8 + $0x40] sm:$0xff]
        %v1080 = vld [vmem:[#allocation8 + $0x48] sm:$0xff]
        %v1081 = vld [vmem:[#allocation8 + $0x50] sm:$0xff]
        %v1082 = vld [vmem:[#allocation8 + $0x58] sm:$0xff]
        %v1083 = vld [vmem:[#allocation8 + $0x60] sm:$0xff]
        %v1084 = vld [vmem:[#allocation8 + $0x68] sm:$0xff]
        %v1085 = vld [vmem:[#allocation8 + $0x70] sm:$0xff]
        %v1086 = vld [vmem:[#allocation8 + $0x78] sm:$0xff]
        %v1087 = vld [vmem:[#allocation8 + $0x80] sm:$0xff]
        %v1088 = vld [vmem:[#allocation8 + $0x88] sm:$0xff]
        %v1089 = vld [vmem:[#allocation8 + $0x90] sm:$0xff]
        %v1090 = vld [vmem:[#allocation8 + $0x98] sm:$0xff]
        %v1091 = vld [vmem:[#allocation8 + $0xa0] sm:$0xff]
        %v1092 = vld [vmem:[#allocation8 + $0xa8] sm:$0xff]
        %v1093 = vld [vmem:[#allocation8 + $0xb0] sm:$0xff]
        %v1094 = vld [vmem:[#allocation8 + $0xb8] sm:$0xff]
        %v1095 = vld [vmem:[#allocation3] sm:$0xff]
        %v1096 = vld [vmem:[#allocation3 + $0x8] sm:$0xff]
        %v1097 = vld [vmem:[#allocation3 + $0x10] sm:$0xff]
        %v1098 = vld [vmem:[#allocation3 + $0x18] sm:$0xff]
        %v1099 = vld [vmem:[#allocation3 + $0x20] sm:$0xff]
        %v1100 = vld [vmem:[#allocation3 + $0x28] sm:$0xff]
        %v1101 = vld [vmem:[#allocation3 + $0x30] sm:$0xff]
        %v1102 = vld [vmem:[#allocation3 + $0x38] sm:$0xff]
        %v1103 = vld [vmem:[#allocation3 + $0x40] sm:$0xff]
        %v1104 = vld [vmem:[#allocation3 + $0x48] sm:$0xff]
        %v1105 = vld [vmem:[#allocation3 + $0x50] sm:$0xff]
        %v1106 = vld [vmem:[#allocation3 + $0x58] sm:$0xff]
        %v1107 = vld [vmem:[#allocation3 + $0x60] sm:$0xff]
        %v1108 = vld [vmem:[#allocation3 + $0x68] sm:$0xff]
        %v1109 = vld [vmem:[#allocation3 + $0x70] sm:$0xff]
        %v1110 = vld [vmem:[#allocation3 + $0x78] sm:$0xff]
        %v1111 = vld [vmem:[#allocation3 + $0x80] sm:$0xff]
        %v1112 = vld [vmem:[#allocation3 + $0x88] sm:$0xff]
        %v1113 = vld [vmem:[#allocation3 + $0x90] sm:$0xff]
        %v1114 = vld [vmem:[#allocation3 + $0x98] sm:$0xff]
        %v1115 = vld [vmem:[#allocation3 + $0xa0] sm:$0xff]
        %v1116 = vld [vmem:[#allocation3 + $0xa8] sm:$0xff]
        %v1117 = vld [vmem:[#allocation3 + $0xb0] sm:$0xff]
        %v1118 = vld [vmem:[#allocation3 + $0xb8] sm:$0xff]
        %v1119 = vld [vmem:[#allocation3 + $0xc0] sm:$0xff]
        %v1120 = vld [vmem:[#allocation3 + $0xc8] sm:$0xff]
        %v1121 = vld [vmem:[#allocation3 + $0xd0] sm:$0xff]
        %v1122 = vld [vmem:[#allocation3 + $0xd8] sm:$0xff]
        %v1123 = vld [vmem:[#allocation3 + $0xe0] sm:$0xff]
        %v1124 = vld [vmem:[#allocation3 + $0xe8] sm:$0xff]
        %v1125 = vld [vmem:[#allocation3 + $0xf0] sm:$0xff]
        %v1126 = vld [vmem:[#allocation3 + $0xf8] sm:$0xff]
        %v1127 = vld [vmem:[#allocation3 + $0x100] sm:$0xff]
        %v1128 = vld [vmem:[#allocation3 + $0x108] sm:$0xff]
        %v1129 = vld [vmem:[#allocation3 + $0x110] sm:$0xff]
        %v1130 = vld [vmem:[#allocation3 + $0x118] sm:$0xff]
        %v1131 = vld [vmem:[#allocation3 + $0x120] sm:$0xff]
        %v1132 = vld [vmem:[#allocation3 + $0x128] sm:$0xff]
        %v1133 = vld [vmem:[#allocation3 + $0x130] sm:$0xff]
        %v1134 = vld [vmem:[#allocation3 + $0x138] sm:$0xff]
        %v1135 = vld [vmem:[#allocation3 + $0x140] sm:$0xff]
        %v1136 = vld [vmem:[#allocation3 + $0x148] sm:$0xff]
        %v1137 = vld [vmem:[#allocation3 + $0x150] sm:$0xff]
        %v1138 = vld [vmem:[#allocation3 + $0x158] sm:$0xff]
        %v1139 = vld [vmem:[#allocation3 + $0x160] sm:$0xff]
        %v1140 = vld [vmem:[#allocation3 + $0x168] sm:$0xff]
        %v1141 = vld [vmem:[#allocation3 + $0x170] sm:$0xff]
        %v1142 = vld [vmem:[#allocation3 + $0x178] sm:$0xff]
        %v1143 = vld [vmem:[#allocation3 + $0x180] sm:$0xff]
        %v1144 = vld [vmem:[#allocation3 + $0x188] sm:$0xff]
        %v1145 = vld [vmem:[#allocation3 + $0x190] sm:$0xff]
        %v1146 = vld [vmem:[#allocation3 + $0x198] sm:$0xff]
        %v1147 = vld [vmem:[#allocation3 + $0x1a0] sm:$0xff]
        %v1148 = vld [vmem:[#allocation3 + $0x1a8] sm:$0xff]
        %v1149 = vld [vmem:[#allocation3 + $0x1b0] sm:$0xff]
        %v1150 = vld [vmem:[#allocation3 + $0x1b8] sm:$0xff]
        %v1151 = vld [vmem:[#allocation3 + $0x1c0] sm:$0xff]
        %v1152 = vld [vmem:[#allocation3 + $0x1c8] sm:$0xff]
        %v1153 = vld [vmem:[#allocation3 + $0x1d0] sm:$0xff]
        %v1154 = vld [vmem:[#allocation3 + $0x1d8] sm:$0xff]
        %v1155 = vld [vmem:[#allocation3 + $0x1e0] sm:$0xff]
        %v1156 = vld [vmem:[#allocation3 + $0x1e8] sm:$0xff]
        %v1157 = vld [vmem:[#allocation3 + $0x1f0] sm:$0xff]
        %v1158 = vld [vmem:[#allocation3 + $0x1f8] sm:$0xff]
        %v1159 = vld [vmem:[#allocation3 + $0x200] sm:$0xff]
        %v1160 = vld [vmem:[#allocation3 + $0x208] sm:$0xff]
        %v1161 = vld [vmem:[#allocation3 + $0x210] sm:$0xff]
        %v1162 = vld [vmem:[#allocation3 + $0x218] sm:$0xff]
        %v1163 = vld [vmem:[#allocation3 + $0x220] sm:$0xff]
        %v1164 = vld [vmem:[#allocation3 + $0x228] sm:$0xff]
        %v1165 = vld [vmem:[#allocation3 + $0x230] sm:$0xff]
        %v1166 = vld [vmem:[#allocation3 + $0x238] sm:$0xff]
        %v1167 = vld [vmem:[%s4] sm:$0xff]
        %v1168 = vld [vmem:[%s4 + $0x8] sm:$0xff]
        %v1169 = vld [vmem:[%s4 + $0x10] sm:$0xff]
        %v1170 = vld [vmem:[%s4 + $0x18] sm:$0xff]
        %v1171 = vld [vmem:[%s4 + $0x20] sm:$0xff]
        %v1172 = vld [vmem:[%s4 + $0x28] sm:$0xff]
        %v1173 = vld [vmem:[%s4 + $0x30] sm:$0xff]
        %v1174 = vld [vmem:[%s4 + $0x38] sm:$0xff]
        %1176 = vset.pattern.permute.xlu0 0
        %1177 = vperm.xlu0 %1176, %v1167
        %v1178 = vpop.permute.xlu0 %1177
        %1181 = vset.pattern.permute.xlu0 0
        %1182 = vperm.xlu0 %1181, %v1168
        %v1183 = vpop.permute.xlu0 %1182
        %1186 = vset.pattern.permute.xlu0 0
        %1187 = vperm.xlu0 %1186, %v1169
        %v1188 = vpop.permute.xlu0 %1187
        %1191 = vset.pattern.permute.xlu0 0
        %1192 = vperm.xlu0 %1191, %v1170
        %v1193 = vpop.permute.xlu0 %1192
        %1196 = vset.pattern.permute.xlu0 0
        %1197 = vperm.xlu0 %1196, %v1171
        %v1198 = vpop.permute.xlu0 %1197
        %1201 = vset.pattern.permute.xlu0 0
        %1202 = vperm.xlu0 %1201, %v1172
        %v1203 = vpop.permute.xlu0 %1202
        %1206 = vset.pattern.permute.xlu0 0
        %1207 = vperm.xlu0 %1206, %v1173
        %v1208 = vpop.permute.xlu0 %1207
        %1211 = vset.pattern.permute.xlu0 0
        %1212 = vperm.xlu0 %1211, %v1174
        %v1213 = vpop.permute.xlu0 %1212
        %vm1215 = vcmask 261120
        %v1217 = vsel %vm1215, %v1073, 0
        %v1220 = vsel %vm1215, %v1076, 0
        %v1223 = vsel %vm1215, %v1079, 0
        %v1226 = vsel %vm1215, %v1082, 0
        %v1229 = vsel %vm1215, %v1085, 0
        %v1232 = vsel %vm1215, %v1088, 0
        %v1235 = vsel %vm1215, %v1091, 0
        %v1238 = vsel %vm1215, %v1094, 0
        %1240 = vmatprep.subr.mxu0 %v1126
        %1241 = vmatpush1.msra.mxu0 %v1125
        %1242 = vmatprep.subr.mxu0 %v1124
        %1243 = vmatpush1.msra.mxu0 %v1123
        %1244 = vmatprep.subr.mxu0 %v1122
        %1245 = vmatpush1.msra.mxu0 %v1121
        %1246 = vmatprep.subr.mxu0 %v1120
        %1247 = vmatpush1.msra.mxu0 %v1119
        %1248 = vmatprep.subr.mxu0 %v1118
        %1249 = vmatpush1.msra.mxu0 %v1117
        %1250 = vmatprep.subr.mxu0 %v1116
        %1251 = vmatpush1.msra.mxu0 %v1115
        %1252 = vmatprep.subr.mxu0 %v1114
        %1253 = vmatpush1.msra.mxu0 %v1113
        %1254 = vmatprep.subr.mxu0 %v1112
        %1255 = vmatpush1.msra.mxu0 %v1111
        %1256 = vmatprep.subr.mxu0 %v1110
        %1257 = vmatpush1.msra.mxu0 %v1109
        %1258 = vmatprep.subr.mxu0 %v1108
        %1259 = vmatpush1.msra.mxu0 %v1107
        %1260 = vmatprep.subr.mxu0 %v1106
        %1261 = vmatpush1.msra.mxu0 %v1105
        %1262 = vmatprep.subr.mxu0 %v1104
        %1263 = vmatpush1.msra.mxu0 %v1103
        %1264 = vmatprep.subr.mxu0 %v1102
        %1265 = vmatpush1.msra.mxu0 %v1101
        %1266 = vmatprep.subr.mxu0 %v1100
        %1267 = vmatpush1.msra.mxu0 %v1099
        %1268 = vmatprep.subr.mxu0 %v1098
        %1269 = vmatpush1.msra.mxu0 %v1097
        %1270 = vmatprep.subr.mxu0 %v1096
        %1271 = vmatpush1.msra.mxu0 %v1095
        %1272 = vmatprep.subr.mxu0 %v1158
        %1273 = vmatpush2.msra.mxu0 %v1157
        %1274 = vmatprep.subr.mxu0 %v1156
        %1275 = vmatpush2.msra.mxu0 %v1155
        %1276 = vmatprep.subr.mxu0 %v1154
        %1277 = vmatpush2.msra.mxu0 %v1153
        %1278 = vmatprep.subr.mxu0 %v1152
        %1279 = vmatpush2.msra.mxu0 %v1151
        %1280 = vmatprep.subr.mxu0 %v1150
        %1281 = vmatpush2.msra.mxu0 %v1149
        %1282 = vmatprep.subr.mxu0 %v1148
        %1283 = vmatpush2.msra.mxu0 %v1147
        %1284 = vmatprep.subr.mxu0 %v1146
        %1285 = vmatpush2.msra.mxu0 %v1145
        %1286 = vmatprep.subr.mxu0 %v1144
        %1287 = vmatpush2.msra.mxu0 %v1143
        %1288 = vmatprep.subr.mxu0 %v1142
        %1289 = vmatpush2.msra.mxu0 %v1141
        %1290 = vmatprep.subr.mxu0 %v1140
        %1291 = vmatpush2.msra.mxu0 %v1139
        %1292 = vmatprep.subr.mxu0 %v1138
        %1293 = vmatpush2.msra.mxu0 %v1137
        %1294 = vmatprep.subr.mxu0 %v1136
        %1295 = vmatpush2.msra.mxu0 %v1135
        %1296 = vmatprep.subr.mxu0 %v1134
        %1297 = vmatpush2.msra.mxu0 %v1133
        %1298 = vmatprep.subr.mxu0 %v1132
        %1299 = vmatpush2.msra.mxu0 %v1131
        %1300 = vmatprep.subr.mxu0 %v1130
        %1301 = vmatpush2.msra.mxu0 %v1129
        %1302 = vmatprep.subr.mxu0 %v1128
        %1303 = vmatpush2.msra.mxu0 %v1127
        %1304 = vmatprep.mubr.f32.mxu0 %v1072
        %1305 = vmatmul.mubr.f32.gmra.mxu0 %v1071
        %v1306 = vpop.f32.mrf.mxu0
        %v1307 = vadd.f32 %v1178, %v1306
        %v1308 = vpop.f32.mrf.mxu0
        %v1309 = vadd.f32 %v1178, %v1308
        %1310 = vmatprep.mubr.f32.mxu0 %v1075
        %1311 = vmatmul.mubr.f32.gmra.mxu0 %v1074
        %v1312 = vpop.f32.mrf.mxu0
        %v1313 = vadd.f32 %v1183, %v1312
        %v1314 = vpop.f32.mrf.mxu0
        %v1315 = vadd.f32 %v1183, %v1314
        %1316 = vmatprep.mubr.f32.mxu0 %v1078
        %1317 = vmatmul.mubr.f32.gmra.mxu0 %v1077
        %v1318 = vpop.f32.mrf.mxu0
        %v1319 = vadd.f32 %v1188, %v1318
        %v1320 = vpop.f32.mrf.mxu0
        %v1321 = vadd.f32 %v1188, %v1320
        %1322 = vmatprep.mubr.f32.mxu0 %v1081
        %1323 = vmatmul.mubr.f32.gmra.mxu0 %v1080
        %v1324 = vpop.f32.mrf.mxu0
        %v1325 = vadd.f32 %v1193, %v1324
        %v1326 = vpop.f32.mrf.mxu0
        %v1327 = vadd.f32 %v1193, %v1326
        %1328 = vmatprep.mubr.f32.mxu0 %v1084
        %1329 = vmatmul.mubr.f32.gmra.mxu0 %v1083
        %v1330 = vpop.f32.mrf.mxu0
        %v1331 = vadd.f32 %v1198, %v1330
        %v1332 = vpop.f32.mrf.mxu0
        %v1333 = vadd.f32 %v1198, %v1332
        %1334 = vmatprep.mubr.f32.mxu0 %v1087
        %1335 = vmatmul.mubr.f32.gmra.mxu0 %v1086
        %v1336 = vpop.f32.mrf.mxu0
        %v1337 = vadd.f32 %v1203, %v1336
        %v1338 = vpop.f32.mrf.mxu0
        %v1339 = vadd.f32 %v1203, %v1338
        %1340 = vmatprep.mubr.f32.mxu0 %v1090
        %1341 = vmatmul.mubr.f32.gmra.mxu0 %v1089
        %v1342 = vpop.f32.mrf.mxu0
        %v1343 = vadd.f32 %v1208, %v1342
        %v1344 = vpop.f32.mrf.mxu0
        %v1345 = vadd.f32 %v1208, %v1344
        %1346 = vmatprep.mubr.f32.mxu0 %v1093
        %1347 = vmatmul.mubr.f32.gmra.mxu0 %v1092
        %v1348 = vpop.f32.mrf.mxu0
        %v1349 = vadd.f32 %v1213, %v1348
        %v1350 = vpop.f32.mrf.mxu0
        %v1351 = vadd.f32 %v1213, %v1350
        %1352 = vdwg.mxu0
        %1353 = vmatprep.subr.mxu0 0.0
        %1354 = vmatpush1.msra.mxu0 0.0
        %1355 = vmatprep.subr.mxu0 0.0
        %1356 = vmatpush1.msra.mxu0 0.0
        %1357 = vmatprep.subr.mxu0 0.0
        %1358 = vmatpush1.msra.mxu0 0.0
        %1359 = vmatprep.subr.mxu0 0.0
        %1360 = vmatpush1.msra.mxu0 0.0
        %1361 = vmatprep.subr.mxu0 0.0
        %1362 = vmatpush1.msra.mxu0 0.0
        %1363 = vmatprep.subr.mxu0 0.0
        %1364 = vmatpush1.msra.mxu0 0.0
        %1365 = vmatprep.subr.mxu0 0.0
        %1366 = vmatpush1.msra.mxu0 0.0
        %1367 = vmatprep.subr.mxu0 0.0
        %1368 = vmatpush1.msra.mxu0 0.0
        %1369 = vmatprep.subr.mxu0 0.0
        %1370 = vmatpush1.msra.mxu0 0.0
        %1371 = vmatprep.subr.mxu0 0.0
        %1372 = vmatpush1.msra.mxu0 0.0
        %1373 = vmatprep.subr.mxu0 0.0
        %1374 = vmatpush1.msra.mxu0 0.0
        %1375 = vmatprep.subr.mxu0 0.0
        %1376 = vmatpush1.msra.mxu0 0.0
        %1377 = vmatprep.subr.mxu0 %v1166
        %1378 = vmatpush1.msra.mxu0 %v1165
        %1379 = vmatprep.subr.mxu0 %v1164
        %1380 = vmatpush1.msra.mxu0 %v1163
        %1381 = vmatprep.subr.mxu0 %v1162
        %1382 = vmatpush1.msra.mxu0 %v1161
        %1383 = vmatprep.subr.mxu0 %v1160
        %1384 = vmatpush1.msra.mxu0 %v1159
        %1385 = vmatprep.subr.mxu0 0.0
        %1386 = vmatpush2.msra.mxu0 0.0
        %1387 = vmatprep.subr.mxu0 0.0
        %1388 = vmatpush2.msra.mxu0 0.0
        %1389 = vmatprep.subr.mxu0 0.0
        %1390 = vmatpush2.msra.mxu0 0.0
        %1391 = vmatprep.subr.mxu0 0.0
        %1392 = vmatpush2.msra.mxu0 0.0
        %1393 = vmatprep.subr.mxu0 0.0
        %1394 = vmatpush2.msra.mxu0 0.0
        %1395 = vmatprep.subr.mxu0 0.0
        %1396 = vmatpush2.msra.mxu0 0.0
        %1397 = vmatprep.subr.mxu0 0.0
        %1398 = vmatpush2.msra.mxu0 0.0
        %1399 = vmatprep.subr.mxu0 0.0
        %1400 = vmatpush2.msra.mxu0 0.0
        %1401 = vmatprep.subr.mxu0 0.0
        %1402 = vmatpush2.msra.mxu0 0.0
        %1403 = vmatprep.subr.mxu0 0.0
        %1404 = vmatpush2.msra.mxu0 0.0
        %1405 = vmatprep.subr.mxu0 0.0
        %1406 = vmatpush2.msra.mxu0 0.0
        %1407 = vmatprep.subr.mxu0 0.0
        %1408 = vmatpush2.msra.mxu0 0.0
        %1409 = vmatprep.subr.mxu0 0.0
        %1410 = vmatpush2.msra.mxu0 0.0
        %1411 = vmatprep.subr.mxu0 0.0
        %1412 = vmatpush2.msra.mxu0 0.0
        %1413 = vmatprep.subr.mxu0 0.0
        %1414 = vmatpush2.msra.mxu0 0.0
        %1415 = vmatprep.subr.mxu0 0.0
        %1416 = vmatpush2.msra.mxu0 0.0
        %1417 = vmatprep.mubr.f32.mxu0 0.0
        %1418 = vmatmul.mubr.f32.gmra.mxu0 %v1217
        %v1419 = vpop.f32.mrf.mxu0
        %v1420 = vadd.f32 %v1307, %v1419
        %v1421 = vpop.f32.mrf.mxu0
        %v1422 = vadd.f32 %v1309, %v1421
        %1423 = vmatprep.mubr.f32.mxu0 0.0
        %1424 = vmatmul.mubr.f32.gmra.mxu0 %v1220
        %v1425 = vpop.f32.mrf.mxu0
        %v1426 = vadd.f32 %v1313, %v1425
        %v1427 = vpop.f32.mrf.mxu0
        %v1428 = vadd.f32 %v1315, %v1427
        %1429 = vmatprep.mubr.f32.mxu0 0.0
        %1430 = vmatmul.mubr.f32.gmra.mxu0 %v1223
        %v1431 = vpop.f32.mrf.mxu0
        %v1432 = vadd.f32 %v1319, %v1431
        %v1433 = vpop.f32.mrf.mxu0
        %v1434 = vadd.f32 %v1321, %v1433
        %1435 = vmatprep.mubr.f32.mxu0 0.0
        %1436 = vmatmul.mubr.f32.gmra.mxu0 %v1226
        %v1437 = vpop.f32.mrf.mxu0
        %v1438 = vadd.f32 %v1325, %v1437
        %v1439 = vpop.f32.mrf.mxu0
        %v1440 = vadd.f32 %v1327, %v1439
        %1441 = vmatprep.mubr.f32.mxu0 0.0
        %1442 = vmatmul.mubr.f32.gmra.mxu0 %v1229
        %v1443 = vpop.f32.mrf.mxu0
        %v1444 = vadd.f32 %v1331, %v1443
        %v1445 = vpop.f32.mrf.mxu0
        %v1446 = vadd.f32 %v1333, %v1445
        %1447 = vmatprep.mubr.f32.mxu0 0.0
        %1448 = vmatmul.mubr.f32.gmra.mxu0 %v1232
        %v1449 = vpop.f32.mrf.mxu0
        %v1450 = vadd.f32 %v1337, %v1449
        %v1451 = vpop.f32.mrf.mxu0
        %v1452 = vadd.f32 %v1339, %v1451
        %1453 = vmatprep.mubr.f32.mxu0 0.0
        %1454 = vmatmul.mubr.f32.gmra.mxu0 %v1235
        %v1455 = vpop.f32.mrf.mxu0
        %v1456 = vadd.f32 %v1343, %v1455
        %v1457 = vpop.f32.mrf.mxu0
        %v1458 = vadd.f32 %v1345, %v1457
        %1459 = vmatprep.mubr.f32.mxu0 0.0
        %1460 = vmatmul.mubr.f32.gmra.mxu0 %v1238
        %v1461 = vpop.f32.mrf.mxu0
        %v1462 = vadd.f32 %v1349, %v1461
        %v1463 = vpop.f32.mrf.mxu0
        %v1464 = vadd.f32 %v1351, %v1463
        %1465 = vdwg.mxu0
        %vm1466 = vcmp.ge.f32.partialorder %v1420, 0.0
        %vm1467 = vcmp.ge.f32.partialorder %v1422, 0.0
        %vm1468 = vcmp.ge.f32.partialorder %v1426, 0.0
        %vm1469 = vcmp.ge.f32.partialorder %v1428, 0.0
        %vm1470 = vcmp.ge.f32.partialorder %v1432, 0.0
        %vm1471 = vcmp.ge.f32.partialorder %v1434, 0.0
        %vm1472 = vcmp.ge.f32.partialorder %v1438, 0.0
        %vm1473 = vcmp.ge.f32.partialorder %v1440, 0.0
        %vm1474 = vcmp.ge.f32.partialorder %v1444, 0.0
        %vm1475 = vcmp.ge.f32.partialorder %v1446, 0.0
        %vm1476 = vcmp.ge.f32.partialorder %v1450, 0.0
        %vm1477 = vcmp.ge.f32.partialorder %v1452, 0.0
        %vm1478 = vcmp.ge.f32.partialorder %v1456, 0.0
        %vm1479 = vcmp.ge.f32.partialorder %v1458, 0.0
        %vm1480 = vcmp.ge.f32.partialorder %v1462, 0.0
        %vm1481 = vcmp.ge.f32.partialorder %v1464, 0.0
        %v1482 = vmul.f32 %v1420, 0.01
        %v1483 = vmul.f32 %v1422, 0.01
        %v1484 = vmul.f32 %v1426, 0.01
        %v1485 = vmul.f32 %v1428, 0.01
        %v1486 = vmul.f32 %v1432, 0.01
        %v1487 = vmul.f32 %v1434, 0.01
        %v1488 = vmul.f32 %v1438, 0.01
        %v1489 = vmul.f32 %v1440, 0.01
        %v1490 = vmul.f32 %v1444, 0.01
        %v1491 = vmul.f32 %v1446, 0.01
        %v1492 = vmul.f32 %v1450, 0.01
        %v1493 = vmul.f32 %v1452, 0.01
        %v1494 = vmul.f32 %v1456, 0.01
        %v1495 = vmul.f32 %v1458, 0.01
        %v1496 = vmul.f32 %v1462, 0.01
        %v1497 = vmul.f32 %v1464, 0.01
        %v1498 = vsel %vm1466, %v1420, %v1482
        %v1499 = vsel %vm1467, %v1422, %v1483
        %v1500 = vsel %vm1468, %v1426, %v1484
        %v1501 = vsel %vm1469, %v1428, %v1485
        %v1502 = vsel %vm1470, %v1432, %v1486
        %v1503 = vsel %vm1471, %v1434, %v1487
        %v1504 = vsel %vm1472, %v1438, %v1488
        %v1505 = vsel %vm1473, %v1440, %v1489
        %v1506 = vsel %vm1474, %v1444, %v1490
        %v1507 = vsel %vm1475, %v1446, %v1491
        %v1508 = vsel %vm1476, %v1450, %v1492
        %v1509 = vsel %vm1477, %v1452, %v1493
        %v1510 = vsel %vm1478, %v1456, %v1494
        %v1511 = vsel %vm1479, %v1458, %v1495
        %v1512 = vsel %vm1480, %v1462, %v1496
        %v1513 = vsel %vm1481, %v1464, %v1497
        %1514 = vst [vmem:[#allocation2] sm:$0xff] %v1498
        %1515 = vst [vmem:[#allocation2 + $0x8] sm:$0xff] %v1499
        %1516 = vst [vmem:[#allocation2 + $0x10] sm:$0xff] %v1500
        %1517 = vst [vmem:[#allocation2 + $0x18] sm:$0xff] %v1501
        %1518 = vst [vmem:[#allocation2 + $0x20] sm:$0xff] %v1502
        %1519 = vst [vmem:[#allocation2 + $0x28] sm:$0xff] %v1503
        %1520 = vst [vmem:[#allocation2 + $0x30] sm:$0xff] %v1504
        %1521 = vst [vmem:[#allocation2 + $0x38] sm:$0xff] %v1505
        %1522 = vst [vmem:[#allocation2 + $0x40] sm:$0xff] %v1506
        %1523 = vst [vmem:[#allocation2 + $0x48] sm:$0xff] %v1507
        %1524 = vst [vmem:[#allocation2 + $0x50] sm:$0xff] %v1508
        %1525 = vst [vmem:[#allocation2 + $0x58] sm:$0xff] %v1509
        %1526 = vst [vmem:[#allocation2 + $0x60] sm:$0xff] %v1510
        %1527 = vst [vmem:[#allocation2 + $0x68] sm:$0xff] %v1511
        %1528 = vst [vmem:[#allocation2 + $0x70] sm:$0xff] %v1512
        %1529 = vst [vmem:[#allocation2 + $0x78] sm:$0xff] %v1513
        %v1530 = vld [vmem:[#allocation2] sm:$0xff]
        %v1531 = vld [vmem:[#allocation2 + $0x8] sm:$0xff]
        %v1532 = vld [vmem:[#allocation2 + $0x10] sm:$0xff]
        %v1533 = vld [vmem:[#allocation2 + $0x18] sm:$0xff]
        %v1534 = vld [vmem:[#allocation2 + $0x20] sm:$0xff]
        %v1535 = vld [vmem:[#allocation2 + $0x28] sm:$0xff]
        %v1536 = vld [vmem:[#allocation2 + $0x30] sm:$0xff]
        %v1537 = vld [vmem:[#allocation2 + $0x38] sm:$0xff]
        %v1538 = vld [vmem:[#allocation2 + $0x40] sm:$0xff]
        %v1539 = vld [vmem:[#allocation2 + $0x48] sm:$0xff]
        %v1540 = vld [vmem:[#allocation2 + $0x50] sm:$0xff]
        %v1541 = vld [vmem:[#allocation2 + $0x58] sm:$0xff]
        %v1542 = vld [vmem:[#allocation2 + $0x60] sm:$0xff]
        %v1543 = vld [vmem:[#allocation2 + $0x68] sm:$0xff]
        %v1544 = vld [vmem:[#allocation2 + $0x70] sm:$0xff]
        %v1545 = vld [vmem:[#allocation2 + $0x78] sm:$0xff]
        %1546 = vrot.lane.b32.xlu0 %v1530, 17
        %v1547 = vpop.permute.xlu0 %1546
        %1548 = vrot.lane.b32.xlu0 %v1532, 17
        %v1549 = vpop.permute.xlu0 %1548
        %1550 = vrot.lane.b32.xlu0 %v1534, 17
        %v1551 = vpop.permute.xlu0 %1550
        %1552 = vrot.lane.b32.xlu0 %v1536, 17
        %v1553 = vpop.permute.xlu0 %1552
        %1554 = vrot.lane.b32.xlu0 %v1538, 17
        %v1555 = vpop.permute.xlu0 %1554
        %1556 = vrot.lane.b32.xlu0 %v1540, 17
        %v1557 = vpop.permute.xlu0 %1556
        %1558 = vrot.lane.b32.xlu0 %v1542, 17
        %v1559 = vpop.permute.xlu0 %1558
        %1560 = vrot.lane.b32.xlu0 %v1544, 17
        %v1561 = vpop.permute.xlu0 %1560
        %1562 = vrot.lane.b32.xlu0 %v1531, 17
        %v1563 = vpop.permute.xlu0 %1562
        %1564 = vrot.lane.b32.xlu0 %v1533, 17
        %v1565 = vpop.permute.xlu0 %1564
        %1566 = vrot.lane.b32.xlu0 %v1535, 17
        %v1567 = vpop.permute.xlu0 %1566
        %1568 = vrot.lane.b32.xlu0 %v1537, 17
        %v1569 = vpop.permute.xlu0 %1568
        %1570 = vrot.lane.b32.xlu0 %v1539, 17
        %v1571 = vpop.permute.xlu0 %1570
        %1572 = vrot.lane.b32.xlu0 %v1541, 17
        %v1573 = vpop.permute.xlu0 %1572
        %1574 = vrot.lane.b32.xlu0 %v1543, 17
        %v1575 = vpop.permute.xlu0 %1574
        %1576 = vrot.lane.b32.xlu0 %v1545, 17
        %v1577 = vpop.permute.xlu0 %1576
        %v1578 = vsel %vm421, %v1547, %v1563
        %v1579 = vsel %vm421, %v1549, %v1565
        %v1580 = vsel %vm421, %v1551, %v1567
        %v1581 = vsel %vm421, %v1553, %v1569
        %v1582 = vsel %vm421, %v1555, %v1571
        %v1583 = vsel %vm421, %v1557, %v1573
        %v1584 = vsel %vm421, %v1559, %v1575
        %v1585 = vsel %vm421, %v1561, %v1577
        %v1586 = vsel %vm421, %v1563, %v1547
        %v1587 = vsel %vm421, %v1565, %v1549
        %v1588 = vsel %vm421, %v1567, %v1551
        %v1589 = vsel %vm421, %v1569, %v1553
        %v1590 = vsel %vm421, %v1571, %v1555
        %v1591 = vsel %vm421, %v1573, %v1557
        %v1592 = vsel %vm421, %v1575, %v1559
        %v1593 = vsel %vm421, %v1577, %v1561
        %v1594 = vsel %vm432, %v1586, 0.0
        %v1595 = vsel %vm433, %v1578, 0.0
        %v1596 = vsel %vm432, %v1587, 0.0
        %v1597 = vsel %vm433, %v1579, 0.0
        %v1598 = vsel %vm432, %v1588, 0.0
        %v1599 = vsel %vm433, %v1580, 0.0
        %v1600 = vsel %vm432, %v1589, 0.0
        %v1601 = vsel %vm433, %v1581, 0.0
        %v1602 = vsel %vm432, %v1590, 0.0
        %v1603 = vsel %vm433, %v1582, 0.0
        %v1604 = vsel %vm432, %v1591, 0.0
        %v1605 = vsel %vm433, %v1583, 0.0
        %v1606 = vsel %vm432, %v1592, 0.0
        %v1607 = vsel %vm433, %v1584, 0.0
        %v1608 = vsel %vm432, %v1593, 0.0
        %v1609 = vsel %vm433, %v1585, 0.0
        %1610 = vst [vmem:[#allocation3] sm:$0xff] %v1594
        %1611 = vst [vmem:[#allocation3 + $0x8] sm:$0xff] %v1595
        %1612 = vst [vmem:[#allocation3 + $0x10] sm:$0xff] %v1596
        %1613 = vst [vmem:[#allocation3 + $0x18] sm:$0xff] %v1597
        %1614 = vst [vmem:[#allocation3 + $0x20] sm:$0xff] %v1598
        %1615 = vst [vmem:[#allocation3 + $0x28] sm:$0xff] %v1599
        %1616 = vst [vmem:[#allocation3 + $0x30] sm:$0xff] %v1600
        %1617 = vst [vmem:[#allocation3 + $0x38] sm:$0xff] %v1601
        %1618 = vst [vmem:[#allocation3 + $0x40] sm:$0xff] %v1602
        %1619 = vst [vmem:[#allocation3 + $0x48] sm:$0xff] %v1603
        %1620 = vst [vmem:[#allocation3 + $0x50] sm:$0xff] %v1604
        %1621 = vst [vmem:[#allocation3 + $0x58] sm:$0xff] %v1605
        %1622 = vst [vmem:[#allocation3 + $0x60] sm:$0xff] %v1606
        %1623 = vst [vmem:[#allocation3 + $0x68] sm:$0xff] %v1607
        %1624 = vst [vmem:[#allocation3 + $0x70] sm:$0xff] %v1608
        %1625 = vst [vmem:[#allocation3 + $0x78] sm:$0xff] %v1609
        %1626 = vrot.lane.b32.xlu0 %v1530, 16
        %v1627 = vpop.permute.xlu0 %1626
        %1628 = vrot.lane.b32.xlu0 %v1532, 16
        %v1629 = vpop.permute.xlu0 %1628
        %1630 = vrot.lane.b32.xlu0 %v1534, 16
        %v1631 = vpop.permute.xlu0 %1630
        %1632 = vrot.lane.b32.xlu0 %v1536, 16
        %v1633 = vpop.permute.xlu0 %1632
        %1634 = vrot.lane.b32.xlu0 %v1538, 16
        %v1635 = vpop.permute.xlu0 %1634
        %1636 = vrot.lane.b32.xlu0 %v1540, 16
        %v1637 = vpop.permute.xlu0 %1636
        %1638 = vrot.lane.b32.xlu0 %v1542, 16
        %v1639 = vpop.permute.xlu0 %1638
        %1640 = vrot.lane.b32.xlu0 %v1544, 16
        %v1641 = vpop.permute.xlu0 %1640
        %1642 = vrot.lane.b32.xlu0 %v1531, 16
        %v1643 = vpop.permute.xlu0 %1642
        %1644 = vrot.lane.b32.xlu0 %v1533, 16
        %v1645 = vpop.permute.xlu0 %1644
        %1646 = vrot.lane.b32.xlu0 %v1535, 16
        %v1647 = vpop.permute.xlu0 %1646
        %1648 = vrot.lane.b32.xlu0 %v1537, 16
        %v1649 = vpop.permute.xlu0 %1648
        %1650 = vrot.lane.b32.xlu0 %v1539, 16
        %v1651 = vpop.permute.xlu0 %1650
        %1652 = vrot.lane.b32.xlu0 %v1541, 16
        %v1653 = vpop.permute.xlu0 %1652
        %1654 = vrot.lane.b32.xlu0 %v1543, 16
        %v1655 = vpop.permute.xlu0 %1654
        %1656 = vrot.lane.b32.xlu0 %v1545, 16
        %v1657 = vpop.permute.xlu0 %1656
        %v1658 = vsel %vm442, %v1627, %v1643
        %v1659 = vsel %vm442, %v1629, %v1645
        %v1660 = vsel %vm442, %v1631, %v1647
        %v1661 = vsel %vm442, %v1633, %v1649
        %v1662 = vsel %vm442, %v1635, %v1651
        %v1663 = vsel %vm442, %v1637, %v1653
        %v1664 = vsel %vm442, %v1639, %v1655
        %v1665 = vsel %vm442, %v1641, %v1657
        %v1666 = vsel %vm442, %v1643, %v1627
        %v1667 = vsel %vm442, %v1645, %v1629
        %v1668 = vsel %vm442, %v1647, %v1631
        %v1669 = vsel %vm442, %v1649, %v1633
        %v1670 = vsel %vm442, %v1651, %v1635
        %v1671 = vsel %vm442, %v1653, %v1637
        %v1672 = vsel %vm442, %v1655, %v1639
        %v1673 = vsel %vm442, %v1657, %v1641
        %v1674 = vsel %vm447, %v1666, 0.0
        %v1675 = vsel %vm448, %v1658, 0.0
        %v1676 = vsel %vm447, %v1667, 0.0
        %v1677 = vsel %vm448, %v1659, 0.0
        %v1678 = vsel %vm447, %v1668, 0.0
        %v1679 = vsel %vm448, %v1660, 0.0
        %v1680 = vsel %vm447, %v1669, 0.0
        %v1681 = vsel %vm448, %v1661, 0.0
        %v1682 = vsel %vm447, %v1670, 0.0
        %v1683 = vsel %vm448, %v1662, 0.0
        %v1684 = vsel %vm447, %v1671, 0.0
        %v1685 = vsel %vm448, %v1663, 0.0
        %v1686 = vsel %vm447, %v1672, 0.0
        %v1687 = vsel %vm448, %v1664, 0.0
        %v1688 = vsel %vm447, %v1673, 0.0
        %v1689 = vsel %vm448, %v1665, 0.0
        %1690 = vst [vmem:[#allocation3 + $0x80] sm:$0xff] %v1674
        %1691 = vst [vmem:[#allocation3 + $0x88] sm:$0xff] %v1675
        %1692 = vst [vmem:[#allocation3 + $0x90] sm:$0xff] %v1676
        %1693 = vst [vmem:[#allocation3 + $0x98] sm:$0xff] %v1677
        %1694 = vst [vmem:[#allocation3 + $0xa0] sm:$0xff] %v1678
        %1695 = vst [vmem:[#allocation3 + $0xa8] sm:$0xff] %v1679
        %1696 = vst [vmem:[#allocation3 + $0xb0] sm:$0xff] %v1680
        %1697 = vst [vmem:[#allocation3 + $0xb8] sm:$0xff] %v1681
        %1698 = vst [vmem:[#allocation3 + $0xc0] sm:$0xff] %v1682
        %1699 = vst [vmem:[#allocation3 + $0xc8] sm:$0xff] %v1683
        %1700 = vst [vmem:[#allocation3 + $0xd0] sm:$0xff] %v1684
        %1701 = vst [vmem:[#allocation3 + $0xd8] sm:$0xff] %v1685
        %1702 = vst [vmem:[#allocation3 + $0xe0] sm:$0xff] %v1686
        %1703 = vst [vmem:[#allocation3 + $0xe8] sm:$0xff] %v1687
        %1704 = vst [vmem:[#allocation3 + $0xf0] sm:$0xff] %v1688
        %1705 = vst [vmem:[#allocation3 + $0xf8] sm:$0xff] %v1689
        %1706 = vrot.lane.b32.xlu0 %v1530, 15
        %v1707 = vpop.permute.xlu0 %1706
        %1708 = vrot.lane.b32.xlu0 %v1532, 15
        %v1709 = vpop.permute.xlu0 %1708
        %1710 = vrot.lane.b32.xlu0 %v1534, 15
        %v1711 = vpop.permute.xlu0 %1710
        %1712 = vrot.lane.b32.xlu0 %v1536, 15
        %v1713 = vpop.permute.xlu0 %1712
        %1714 = vrot.lane.b32.xlu0 %v1538, 15
        %v1715 = vpop.permute.xlu0 %1714
        %1716 = vrot.lane.b32.xlu0 %v1540, 15
        %v1717 = vpop.permute.xlu0 %1716
        %1718 = vrot.lane.b32.xlu0 %v1542, 15
        %v1719 = vpop.permute.xlu0 %1718
        %1720 = vrot.lane.b32.xlu0 %v1544, 15
        %v1721 = vpop.permute.xlu0 %1720
        %1722 = vrot.lane.b32.xlu0 %v1531, 15
        %v1723 = vpop.permute.xlu0 %1722
        %1724 = vrot.lane.b32.xlu0 %v1533, 15
        %v1725 = vpop.permute.xlu0 %1724
        %1726 = vrot.lane.b32.xlu0 %v1535, 15
        %v1727 = vpop.permute.xlu0 %1726
        %1728 = vrot.lane.b32.xlu0 %v1537, 15
        %v1729 = vpop.permute.xlu0 %1728
        %1730 = vrot.lane.b32.xlu0 %v1539, 15
        %v1731 = vpop.permute.xlu0 %1730
        %1732 = vrot.lane.b32.xlu0 %v1541, 15
        %v1733 = vpop.permute.xlu0 %1732
        %1734 = vrot.lane.b32.xlu0 %v1543, 15
        %v1735 = vpop.permute.xlu0 %1734
        %1736 = vrot.lane.b32.xlu0 %v1545, 15
        %v1737 = vpop.permute.xlu0 %1736
        %v1738 = vsel %vm457, %v1707, %v1723
        %v1739 = vsel %vm457, %v1709, %v1725
        %v1740 = vsel %vm457, %v1711, %v1727
        %v1741 = vsel %vm457, %v1713, %v1729
        %v1742 = vsel %vm457, %v1715, %v1731
        %v1743 = vsel %vm457, %v1717, %v1733
        %v1744 = vsel %vm457, %v1719, %v1735
        %v1745 = vsel %vm457, %v1721, %v1737
        %v1746 = vsel %vm457, %v1723, %v1707
        %v1747 = vsel %vm457, %v1725, %v1709
        %v1748 = vsel %vm457, %v1727, %v1711
        %v1749 = vsel %vm457, %v1729, %v1713
        %v1750 = vsel %vm457, %v1731, %v1715
        %v1751 = vsel %vm457, %v1733, %v1717
        %v1752 = vsel %vm457, %v1735, %v1719
        %v1753 = vsel %vm457, %v1737, %v1721
        %v1754 = vsel %vm466, %v1746, 0.0
        %v1755 = vsel %vm467, %v1738, 0.0
        %v1756 = vsel %vm466, %v1747, 0.0
        %v1757 = vsel %vm467, %v1739, 0.0
        %v1758 = vsel %vm466, %v1748, 0.0
        %v1759 = vsel %vm467, %v1740, 0.0
        %v1760 = vsel %vm466, %v1749, 0.0
        %v1761 = vsel %vm467, %v1741, 0.0
        %v1762 = vsel %vm466, %v1750, 0.0
        %v1763 = vsel %vm467, %v1742, 0.0
        %v1764 = vsel %vm466, %v1751, 0.0
        %v1765 = vsel %vm467, %v1743, 0.0
        %v1766 = vsel %vm466, %v1752, 0.0
        %v1767 = vsel %vm467, %v1744, 0.0
        %v1768 = vsel %vm466, %v1753, 0.0
        %v1769 = vsel %vm467, %v1745, 0.0
        %1770 = vst [vmem:[#allocation3 + $0x100] sm:$0xff] %v1754
        %1771 = vst [vmem:[#allocation3 + $0x108] sm:$0xff] %v1755
        %1772 = vst [vmem:[#allocation3 + $0x110] sm:$0xff] %v1756
        %1773 = vst [vmem:[#allocation3 + $0x118] sm:$0xff] %v1757
        %1774 = vst [vmem:[#allocation3 + $0x120] sm:$0xff] %v1758
        %1775 = vst [vmem:[#allocation3 + $0x128] sm:$0xff] %v1759
        %1776 = vst [vmem:[#allocation3 + $0x130] sm:$0xff] %v1760
        %1777 = vst [vmem:[#allocation3 + $0x138] sm:$0xff] %v1761
        %1778 = vst [vmem:[#allocation3 + $0x140] sm:$0xff] %v1762
        %1779 = vst [vmem:[#allocation3 + $0x148] sm:$0xff] %v1763
        %1780 = vst [vmem:[#allocation3 + $0x150] sm:$0xff] %v1764
        %1781 = vst [vmem:[#allocation3 + $0x158] sm:$0xff] %v1765
        %1782 = vst [vmem:[#allocation3 + $0x160] sm:$0xff] %v1766
        %1783 = vst [vmem:[#allocation3 + $0x168] sm:$0xff] %v1767
        %1784 = vst [vmem:[#allocation3 + $0x170] sm:$0xff] %v1768
        %1785 = vst [vmem:[#allocation3 + $0x178] sm:$0xff] %v1769
        %1786 = vrot.lane.b32.xlu0 %v1530, 1
        %v1787 = vpop.permute.xlu0 %1786
        %1788 = vrot.lane.b32.xlu0 %v1532, 1
        %v1789 = vpop.permute.xlu0 %1788
        %1790 = vrot.lane.b32.xlu0 %v1534, 1
        %v1791 = vpop.permute.xlu0 %1790
        %1792 = vrot.lane.b32.xlu0 %v1536, 1
        %v1793 = vpop.permute.xlu0 %1792
        %1794 = vrot.lane.b32.xlu0 %v1538, 1
        %v1795 = vpop.permute.xlu0 %1794
        %1796 = vrot.lane.b32.xlu0 %v1540, 1
        %v1797 = vpop.permute.xlu0 %1796
        %1798 = vrot.lane.b32.xlu0 %v1542, 1
        %v1799 = vpop.permute.xlu0 %1798
        %1800 = vrot.lane.b32.xlu0 %v1544, 1
        %v1801 = vpop.permute.xlu0 %1800
        %1802 = vrot.lane.b32.xlu0 %v1531, 1
        %v1803 = vpop.permute.xlu0 %1802
        %1804 = vrot.lane.b32.xlu0 %v1533, 1
        %v1805 = vpop.permute.xlu0 %1804
        %1806 = vrot.lane.b32.xlu0 %v1535, 1
        %v1807 = vpop.permute.xlu0 %1806
        %1808 = vrot.lane.b32.xlu0 %v1537, 1
        %v1809 = vpop.permute.xlu0 %1808
        %1810 = vrot.lane.b32.xlu0 %v1539, 1
        %v1811 = vpop.permute.xlu0 %1810
        %1812 = vrot.lane.b32.xlu0 %v1541, 1
        %v1813 = vpop.permute.xlu0 %1812
        %1814 = vrot.lane.b32.xlu0 %v1543, 1
        %v1815 = vpop.permute.xlu0 %1814
        %1816 = vrot.lane.b32.xlu0 %v1545, 1
        %v1817 = vpop.permute.xlu0 %1816
        %v1818 = vsel %vm476, %v1787, %v1803
        %v1819 = vsel %vm476, %v1789, %v1805
        %v1820 = vsel %vm476, %v1791, %v1807
        %v1821 = vsel %vm476, %v1793, %v1809
        %v1822 = vsel %vm476, %v1795, %v1811
        %v1823 = vsel %vm476, %v1797, %v1813
        %v1824 = vsel %vm476, %v1799, %v1815
        %v1825 = vsel %vm476, %v1801, %v1817
        %v1826 = vsel %vm476, %v1803, %v1787
        %v1827 = vsel %vm476, %v1805, %v1789
        %v1828 = vsel %vm476, %v1807, %v1791
        %v1829 = vsel %vm476, %v1809, %v1793
        %v1830 = vsel %vm476, %v1811, %v1795
        %v1831 = vsel %vm476, %v1813, %v1797
        %v1832 = vsel %vm476, %v1815, %v1799
        %v1833 = vsel %vm476, %v1817, %v1801
        %v1834 = vsel %vm481, %v1826, 0.0
        %v1835 = vsel %vm482, %v1818, 0.0
        %v1836 = vsel %vm481, %v1827, 0.0
        %v1837 = vsel %vm482, %v1819, 0.0
        %v1838 = vsel %vm481, %v1828, 0.0
        %v1839 = vsel %vm482, %v1820, 0.0
        %v1840 = vsel %vm481, %v1829, 0.0
        %v1841 = vsel %vm482, %v1821, 0.0
        %v1842 = vsel %vm481, %v1830, 0.0
        %v1843 = vsel %vm482, %v1822, 0.0
        %v1844 = vsel %vm481, %v1831, 0.0
        %v1845 = vsel %vm482, %v1823, 0.0
        %v1846 = vsel %vm481, %v1832, 0.0
        %v1847 = vsel %vm482, %v1824, 0.0
        %v1848 = vsel %vm481, %v1833, 0.0
        %v1849 = vsel %vm482, %v1825, 0.0
        %1850 = vst [vmem:[#allocation3 + $0x180] sm:$0xff] %v1834
        %1851 = vst [vmem:[#allocation3 + $0x188] sm:$0xff] %v1835
        %1852 = vst [vmem:[#allocation3 + $0x190] sm:$0xff] %v1836
        %1853 = vst [vmem:[#allocation3 + $0x198] sm:$0xff] %v1837
        %1854 = vst [vmem:[#allocation3 + $0x1a0] sm:$0xff] %v1838
        %1855 = vst [vmem:[#allocation3 + $0x1a8] sm:$0xff] %v1839
        %1856 = vst [vmem:[#allocation3 + $0x1b0] sm:$0xff] %v1840
        %1857 = vst [vmem:[#allocation3 + $0x1b8] sm:$0xff] %v1841
        %1858 = vst [vmem:[#allocation3 + $0x1c0] sm:$0xff] %v1842
        %1859 = vst [vmem:[#allocation3 + $0x1c8] sm:$0xff] %v1843
        %1860 = vst [vmem:[#allocation3 + $0x1d0] sm:$0xff] %v1844
        %1861 = vst [vmem:[#allocation3 + $0x1d8] sm:$0xff] %v1845
        %1862 = vst [vmem:[#allocation3 + $0x1e0] sm:$0xff] %v1846
        %1863 = vst [vmem:[#allocation3 + $0x1e8] sm:$0xff] %v1847
        %1864 = vst [vmem:[#allocation3 + $0x1f0] sm:$0xff] %v1848
        %1865 = vst [vmem:[#allocation3 + $0x1f8] sm:$0xff] %v1849
        %1866 = vst [vmem:[#allocation3 + $0x200] sm:$0xff] %v1530
        %1867 = vst [vmem:[#allocation3 + $0x208] sm:$0xff] %v1531
        %1868 = vst [vmem:[#allocation3 + $0x210] sm:$0xff] %v1532
        %1869 = vst [vmem:[#allocation3 + $0x218] sm:$0xff] %v1533
        %1870 = vst [vmem:[#allocation3 + $0x220] sm:$0xff] %v1534
        %1871 = vst [vmem:[#allocation3 + $0x228] sm:$0xff] %v1535
        %1872 = vst [vmem:[#allocation3 + $0x230] sm:$0xff] %v1536
        %1873 = vst [vmem:[#allocation3 + $0x238] sm:$0xff] %v1537
        %1874 = vst [vmem:[#allocation3 + $0x240] sm:$0xff] %v1538
        %1875 = vst [vmem:[#allocation3 + $0x248] sm:$0xff] %v1539
        %1876 = vst [vmem:[#allocation3 + $0x250] sm:$0xff] %v1540
        %1877 = vst [vmem:[#allocation3 + $0x258] sm:$0xff] %v1541
        %1878 = vst [vmem:[#allocation3 + $0x260] sm:$0xff] %v1542
        %1879 = vst [vmem:[#allocation3 + $0x268] sm:$0xff] %v1543
        %1880 = vst [vmem:[#allocation3 + $0x270] sm:$0xff] %v1544
        %1881 = vst [vmem:[#allocation3 + $0x278] sm:$0xff] %v1545
        %1882 = vrot.lane.b32.xlu0 %v1530, 127
        %v1883 = vpop.permute.xlu0 %1882
        %1884 = vrot.lane.b32.xlu0 %v1532, 127
        %v1885 = vpop.permute.xlu0 %1884
        %1886 = vrot.lane.b32.xlu0 %v1534, 127
        %v1887 = vpop.permute.xlu0 %1886
        %1888 = vrot.lane.b32.xlu0 %v1536, 127
        %v1889 = vpop.permute.xlu0 %1888
        %1890 = vrot.lane.b32.xlu0 %v1538, 127
        %v1891 = vpop.permute.xlu0 %1890
        %1892 = vrot.lane.b32.xlu0 %v1540, 127
        %v1893 = vpop.permute.xlu0 %1892
        %1894 = vrot.lane.b32.xlu0 %v1542, 127
        %v1895 = vpop.permute.xlu0 %1894
        %1896 = vrot.lane.b32.xlu0 %v1544, 127
        %v1897 = vpop.permute.xlu0 %1896
        %1898 = vrot.lane.b32.xlu0 %v1531, 127
        %v1899 = vpop.permute.xlu0 %1898
        %1900 = vrot.lane.b32.xlu0 %v1533, 127
        %v1901 = vpop.permute.xlu0 %1900
        %1902 = vrot.lane.b32.xlu0 %v1535, 127
        %v1903 = vpop.permute.xlu0 %1902
        %1904 = vrot.lane.b32.xlu0 %v1537, 127
        %v1905 = vpop.permute.xlu0 %1904
        %1906 = vrot.lane.b32.xlu0 %v1539, 127
        %v1907 = vpop.permute.xlu0 %1906
        %1908 = vrot.lane.b32.xlu0 %v1541, 127
        %v1909 = vpop.permute.xlu0 %1908
        %1910 = vrot.lane.b32.xlu0 %v1543, 127
        %v1911 = vpop.permute.xlu0 %1910
        %1912 = vrot.lane.b32.xlu0 %v1545, 127
        %v1913 = vpop.permute.xlu0 %1912
        %v1914 = vsel %vm493, %v1883, %v1899
        %v1915 = vsel %vm493, %v1885, %v1901
        %v1916 = vsel %vm493, %v1887, %v1903
        %v1917 = vsel %vm493, %v1889, %v1905
        %v1918 = vsel %vm493, %v1891, %v1907
        %v1919 = vsel %vm493, %v1893, %v1909
        %v1920 = vsel %vm493, %v1895, %v1911
        %v1921 = vsel %vm493, %v1897, %v1913
        %v1922 = vsel %vm493, %v1899, %v1883
        %v1923 = vsel %vm493, %v1901, %v1885
        %v1924 = vsel %vm493, %v1903, %v1887
        %v1925 = vsel %vm493, %v1905, %v1889
        %v1926 = vsel %vm493, %v1907, %v1891
        %v1927 = vsel %vm493, %v1909, %v1893
        %v1928 = vsel %vm493, %v1911, %v1895
        %v1929 = vsel %vm493, %v1913, %v1897
        %v1930 = vsel %vm498, %v1914, 0.0
        %v1931 = vsel %vm499, %v1922, 0.0
        %v1932 = vsel %vm498, %v1915, 0.0
        %v1933 = vsel %vm499, %v1923, 0.0
        %v1934 = vsel %vm498, %v1916, 0.0
        %v1935 = vsel %vm499, %v1924, 0.0
        %v1936 = vsel %vm498, %v1917, 0.0
        %v1937 = vsel %vm499, %v1925, 0.0
        %v1938 = vsel %vm498, %v1918, 0.0
        %v1939 = vsel %vm499, %v1926, 0.0
        %v1940 = vsel %vm498, %v1919, 0.0
        %v1941 = vsel %vm499, %v1927, 0.0
        %v1942 = vsel %vm498, %v1920, 0.0
        %v1943 = vsel %vm499, %v1928, 0.0
        %v1944 = vsel %vm498, %v1921, 0.0
        %v1945 = vsel %vm499, %v1929, 0.0
        %1946 = vst [vmem:[#allocation3 + $0x280] sm:$0xff] %v1930
        %1947 = vst [vmem:[#allocation3 + $0x288] sm:$0xff] %v1931
        %1948 = vst [vmem:[#allocation3 + $0x290] sm:$0xff] %v1932
        %1949 = vst [vmem:[#allocation3 + $0x298] sm:$0xff] %v1933
        %1950 = vst [vmem:[#allocation3 + $0x2a0] sm:$0xff] %v1934
        %1951 = vst [vmem:[#allocation3 + $0x2a8] sm:$0xff] %v1935
        %1952 = vst [vmem:[#allocation3 + $0x2b0] sm:$0xff] %v1936
        %1953 = vst [vmem:[#allocation3 + $0x2b8] sm:$0xff] %v1937
        %1954 = vst [vmem:[#allocation3 + $0x2c0] sm:$0xff] %v1938
        %1955 = vst [vmem:[#allocation3 + $0x2c8] sm:$0xff] %v1939
        %1956 = vst [vmem:[#allocation3 + $0x2d0] sm:$0xff] %v1940
        %1957 = vst [vmem:[#allocation3 + $0x2d8] sm:$0xff] %v1941
        %1958 = vst [vmem:[#allocation3 + $0x2e0] sm:$0xff] %v1942
        %1959 = vst [vmem:[#allocation3 + $0x2e8] sm:$0xff] %v1943
        %1960 = vst [vmem:[#allocation3 + $0x2f0] sm:$0xff] %v1944
        %1961 = vst [vmem:[#allocation3 + $0x2f8] sm:$0xff] %v1945
        %1962 = vrot.lane.b32.xlu0 %v1530, 113
        %v1963 = vpop.permute.xlu0 %1962
        %1964 = vrot.lane.b32.xlu0 %v1532, 113
        %v1965 = vpop.permute.xlu0 %1964
        %1966 = vrot.lane.b32.xlu0 %v1534, 113
        %v1967 = vpop.permute.xlu0 %1966
        %1968 = vrot.lane.b32.xlu0 %v1536, 113
        %v1969 = vpop.permute.xlu0 %1968
        %1970 = vrot.lane.b32.xlu0 %v1538, 113
        %v1971 = vpop.permute.xlu0 %1970
        %1972 = vrot.lane.b32.xlu0 %v1540, 113
        %v1973 = vpop.permute.xlu0 %1972
        %1974 = vrot.lane.b32.xlu0 %v1542, 113
        %v1975 = vpop.permute.xlu0 %1974
        %1976 = vrot.lane.b32.xlu0 %v1544, 113
        %v1977 = vpop.permute.xlu0 %1976
        %1978 = vrot.lane.b32.xlu0 %v1531, 113
        %v1979 = vpop.permute.xlu0 %1978
        %1980 = vrot.lane.b32.xlu0 %v1533, 113
        %v1981 = vpop.permute.xlu0 %1980
        %1982 = vrot.lane.b32.xlu0 %v1535, 113
        %v1983 = vpop.permute.xlu0 %1982
        %1984 = vrot.lane.b32.xlu0 %v1537, 113
        %v1985 = vpop.permute.xlu0 %1984
        %1986 = vrot.lane.b32.xlu0 %v1539, 113
        %v1987 = vpop.permute.xlu0 %1986
        %1988 = vrot.lane.b32.xlu0 %v1541, 113
        %v1989 = vpop.permute.xlu0 %1988
        %1990 = vrot.lane.b32.xlu0 %v1543, 113
        %v1991 = vpop.permute.xlu0 %1990
        %1992 = vrot.lane.b32.xlu0 %v1545, 113
        %v1993 = vpop.permute.xlu0 %1992
        %v1994 = vsel %vm508, %v1963, %v1979
        %v1995 = vsel %vm508, %v1965, %v1981
        %v1996 = vsel %vm508, %v1967, %v1983
        %v1997 = vsel %vm508, %v1969, %v1985
        %v1998 = vsel %vm508, %v1971, %v1987
        %v1999 = vsel %vm508, %v1973, %v1989
        %v2000 = vsel %vm508, %v1975, %v1991
        %v2001 = vsel %vm508, %v1977, %v1993
        %v2002 = vsel %vm508, %v1979, %v1963
        %v2003 = vsel %vm508, %v1981, %v1965
        %v2004 = vsel %vm508, %v1983, %v1967
        %v2005 = vsel %vm508, %v1985, %v1969
        %v2006 = vsel %vm508, %v1987, %v1971
        %v2007 = vsel %vm508, %v1989, %v1973
        %v2008 = vsel %vm508, %v1991, %v1975
        %v2009 = vsel %vm508, %v1993, %v1977
        %v2010 = vsel %vm517, %v1994, 0.0
        %v2011 = vsel %vm518, %v2002, 0.0
        %v2012 = vsel %vm517, %v1995, 0.0
        %v2013 = vsel %vm518, %v2003, 0.0
        %v2014 = vsel %vm517, %v1996, 0.0
        %v2015 = vsel %vm518, %v2004, 0.0
        %v2016 = vsel %vm517, %v1997, 0.0
        %v2017 = vsel %vm518, %v2005, 0.0
        %v2018 = vsel %vm517, %v1998, 0.0
        %v2019 = vsel %vm518, %v2006, 0.0
        %v2020 = vsel %vm517, %v1999, 0.0
        %v2021 = vsel %vm518, %v2007, 0.0
        %v2022 = vsel %vm517, %v2000, 0.0
        %v2023 = vsel %vm518, %v2008, 0.0
        %v2024 = vsel %vm517, %v2001, 0.0
        %v2025 = vsel %vm518, %v2009, 0.0
        %2026 = vst [vmem:[#allocation3 + $0x300] sm:$0xff] %v2010
        %2027 = vst [vmem:[#allocation3 + $0x308] sm:$0xff] %v2011
        %2028 = vst [vmem:[#allocation3 + $0x310] sm:$0xff] %v2012
        %2029 = vst [vmem:[#allocation3 + $0x318] sm:$0xff] %v2013
        %2030 = vst [vmem:[#allocation3 + $0x320] sm:$0xff] %v2014
        %2031 = vst [vmem:[#allocation3 + $0x328] sm:$0xff] %v2015
        %2032 = vst [vmem:[#allocation3 + $0x330] sm:$0xff] %v2016
        %2033 = vst [vmem:[#allocation3 + $0x338] sm:$0xff] %v2017
        %2034 = vst [vmem:[#allocation3 + $0x340] sm:$0xff] %v2018
        %2035 = vst [vmem:[#allocation3 + $0x348] sm:$0xff] %v2019
        %2036 = vst [vmem:[#allocation3 + $0x350] sm:$0xff] %v2020
        %2037 = vst [vmem:[#allocation3 + $0x358] sm:$0xff] %v2021
        %2038 = vst [vmem:[#allocation3 + $0x360] sm:$0xff] %v2022
        %2039 = vst [vmem:[#allocation3 + $0x368] sm:$0xff] %v2023
        %2040 = vst [vmem:[#allocation3 + $0x370] sm:$0xff] %v2024
        %2041 = vst [vmem:[#allocation3 + $0x378] sm:$0xff] %v2025
        %2042 = vrot.lane.b32.xlu0 %v1530, 112
        %v2043 = vpop.permute.xlu0 %2042
        %2044 = vrot.lane.b32.xlu0 %v1532, 112
        %v2045 = vpop.permute.xlu0 %2044
        %2046 = vrot.lane.b32.xlu0 %v1534, 112
        %v2047 = vpop.permute.xlu0 %2046
        %2048 = vrot.lane.b32.xlu0 %v1536, 112
        %v2049 = vpop.permute.xlu0 %2048
        %2050 = vrot.lane.b32.xlu0 %v1538, 112
        %v2051 = vpop.permute.xlu0 %2050
        %2052 = vrot.lane.b32.xlu0 %v1540, 112
        %v2053 = vpop.permute.xlu0 %2052
        %2054 = vrot.lane.b32.xlu0 %v1542, 112
        %v2055 = vpop.permute.xlu0 %2054
        %2056 = vrot.lane.b32.xlu0 %v1544, 112
        %v2057 = vpop.permute.xlu0 %2056
        %2058 = vrot.lane.b32.xlu0 %v1531, 112
        %v2059 = vpop.permute.xlu0 %2058
        %2060 = vrot.lane.b32.xlu0 %v1533, 112
        %v2061 = vpop.permute.xlu0 %2060
        %2062 = vrot.lane.b32.xlu0 %v1535, 112
        %v2063 = vpop.permute.xlu0 %2062
        %2064 = vrot.lane.b32.xlu0 %v1537, 112
        %v2065 = vpop.permute.xlu0 %2064
        %2066 = vrot.lane.b32.xlu0 %v1539, 112
        %v2067 = vpop.permute.xlu0 %2066
        %2068 = vrot.lane.b32.xlu0 %v1541, 112
        %v2069 = vpop.permute.xlu0 %2068
        %2070 = vrot.lane.b32.xlu0 %v1543, 112
        %v2071 = vpop.permute.xlu0 %2070
        %2072 = vrot.lane.b32.xlu0 %v1545, 112
        %v2073 = vpop.permute.xlu0 %2072
        %v2074 = vsel %vm527, %v2043, %v2059
        %v2075 = vsel %vm527, %v2045, %v2061
        %v2076 = vsel %vm527, %v2047, %v2063
        %v2077 = vsel %vm527, %v2049, %v2065
        %v2078 = vsel %vm527, %v2051, %v2067
        %v2079 = vsel %vm527, %v2053, %v2069
        %v2080 = vsel %vm527, %v2055, %v2071
        %v2081 = vsel %vm527, %v2057, %v2073
        %v2082 = vsel %vm527, %v2059, %v2043
        %v2083 = vsel %vm527, %v2061, %v2045
        %v2084 = vsel %vm527, %v2063, %v2047
        %v2085 = vsel %vm527, %v2065, %v2049
        %v2086 = vsel %vm527, %v2067, %v2051
        %v2087 = vsel %vm527, %v2069, %v2053
        %v2088 = vsel %vm527, %v2071, %v2055
        %v2089 = vsel %vm527, %v2073, %v2057
        %v2090 = vsel %vm532, %v2074, 0.0
        %v2091 = vsel %vm533, %v2082, 0.0
        %v2092 = vsel %vm532, %v2075, 0.0
        %v2093 = vsel %vm533, %v2083, 0.0
        %v2094 = vsel %vm532, %v2076, 0.0
        %v2095 = vsel %vm533, %v2084, 0.0
        %v2096 = vsel %vm532, %v2077, 0.0
        %v2097 = vsel %vm533, %v2085, 0.0
        %v2098 = vsel %vm532, %v2078, 0.0
        %v2099 = vsel %vm533, %v2086, 0.0
        %v2100 = vsel %vm532, %v2079, 0.0
        %v2101 = vsel %vm533, %v2087, 0.0
        %v2102 = vsel %vm532, %v2080, 0.0
        %v2103 = vsel %vm533, %v2088, 0.0
        %v2104 = vsel %vm532, %v2081, 0.0
        %v2105 = vsel %vm533, %v2089, 0.0
        %2106 = vst [vmem:[#allocation3 + $0x380] sm:$0xff] %v2090
        %2107 = vst [vmem:[#allocation3 + $0x388] sm:$0xff] %v2091
        %2108 = vst [vmem:[#allocation3 + $0x390] sm:$0xff] %v2092
        %2109 = vst [vmem:[#allocation3 + $0x398] sm:$0xff] %v2093
        %2110 = vst [vmem:[#allocation3 + $0x3a0] sm:$0xff] %v2094
        %2111 = vst [vmem:[#allocation3 + $0x3a8] sm:$0xff] %v2095
        %2112 = vst [vmem:[#allocation3 + $0x3b0] sm:$0xff] %v2096
        %2113 = vst [vmem:[#allocation3 + $0x3b8] sm:$0xff] %v2097
        %2114 = vst [vmem:[#allocation3 + $0x3c0] sm:$0xff] %v2098
        %2115 = vst [vmem:[#allocation3 + $0x3c8] sm:$0xff] %v2099
        %2116 = vst [vmem:[#allocation3 + $0x3d0] sm:$0xff] %v2100
        %2117 = vst [vmem:[#allocation3 + $0x3d8] sm:$0xff] %v2101
        %2118 = vst [vmem:[#allocation3 + $0x3e0] sm:$0xff] %v2102
        %2119 = vst [vmem:[#allocation3 + $0x3e8] sm:$0xff] %v2103
        %2120 = vst [vmem:[#allocation3 + $0x3f0] sm:$0xff] %v2104
        %2121 = vst [vmem:[#allocation3 + $0x3f8] sm:$0xff] %v2105
        %2122 = vrot.lane.b32.xlu0 %v1530, 111
        %v2123 = vpop.permute.xlu0 %2122
        %2124 = vrot.lane.b32.xlu0 %v1532, 111
        %v2125 = vpop.permute.xlu0 %2124
        %2126 = vrot.lane.b32.xlu0 %v1534, 111
        %v2127 = vpop.permute.xlu0 %2126
        %2128 = vrot.lane.b32.xlu0 %v1536, 111
        %v2129 = vpop.permute.xlu0 %2128
        %2130 = vrot.lane.b32.xlu0 %v1538, 111
        %v2131 = vpop.permute.xlu0 %2130
        %2132 = vrot.lane.b32.xlu0 %v1540, 111
        %v2133 = vpop.permute.xlu0 %2132
        %2134 = vrot.lane.b32.xlu0 %v1542, 111
        %v2135 = vpop.permute.xlu0 %2134
        %2136 = vrot.lane.b32.xlu0 %v1544, 111
        %v2137 = vpop.permute.xlu0 %2136
        %2138 = vrot.lane.b32.xlu0 %v1531, 111
        %v2139 = vpop.permute.xlu0 %2138
        %2140 = vrot.lane.b32.xlu0 %v1533, 111
        %v2141 = vpop.permute.xlu0 %2140
        %2142 = vrot.lane.b32.xlu0 %v1535, 111
        %v2143 = vpop.permute.xlu0 %2142
        %2144 = vrot.lane.b32.xlu0 %v1537, 111
        %v2145 = vpop.permute.xlu0 %2144
        %2146 = vrot.lane.b32.xlu0 %v1539, 111
        %v2147 = vpop.permute.xlu0 %2146
        %2148 = vrot.lane.b32.xlu0 %v1541, 111
        %v2149 = vpop.permute.xlu0 %2148
        %2150 = vrot.lane.b32.xlu0 %v1543, 111
        %v2151 = vpop.permute.xlu0 %2150
        %2152 = vrot.lane.b32.xlu0 %v1545, 111
        %v2153 = vpop.permute.xlu0 %2152
        %v2154 = vsel %vm542, %v2123, %v2139
        %v2155 = vsel %vm542, %v2125, %v2141
        %v2156 = vsel %vm542, %v2127, %v2143
        %v2157 = vsel %vm542, %v2129, %v2145
        %v2158 = vsel %vm542, %v2131, %v2147
        %v2159 = vsel %vm542, %v2133, %v2149
        %v2160 = vsel %vm542, %v2135, %v2151
        %v2161 = vsel %vm542, %v2137, %v2153
        %v2162 = vsel %vm542, %v2139, %v2123
        %v2163 = vsel %vm542, %v2141, %v2125
        %v2164 = vsel %vm542, %v2143, %v2127
        %v2165 = vsel %vm542, %v2145, %v2129
        %v2166 = vsel %vm542, %v2147, %v2131
        %v2167 = vsel %vm542, %v2149, %v2133
        %v2168 = vsel %vm542, %v2151, %v2135
        %v2169 = vsel %vm542, %v2153, %v2137
        %v2170 = vsel %vm549, %v2154, 0.0
        %v2171 = vsel %vm550, %v2162, 0.0
        %v2172 = vsel %vm549, %v2155, 0.0
        %v2173 = vsel %vm550, %v2163, 0.0
        %v2174 = vsel %vm549, %v2156, 0.0
        %v2175 = vsel %vm550, %v2164, 0.0
        %v2176 = vsel %vm549, %v2157, 0.0
        %v2177 = vsel %vm550, %v2165, 0.0
        %v2178 = vsel %vm549, %v2158, 0.0
        %v2179 = vsel %vm550, %v2166, 0.0
        %v2180 = vsel %vm549, %v2159, 0.0
        %v2181 = vsel %vm550, %v2167, 0.0
        %v2182 = vsel %vm549, %v2160, 0.0
        %v2183 = vsel %vm550, %v2168, 0.0
        %v2184 = vsel %vm549, %v2161, 0.0
        %v2185 = vsel %vm550, %v2169, 0.0
        %2186 = vst [vmem:[#allocation3 + $0x400] sm:$0xff] %v2170
        %2187 = vst [vmem:[#allocation3 + $0x408] sm:$0xff] %v2171
        %2188 = vst [vmem:[#allocation3 + $0x410] sm:$0xff] %v2172
        %2189 = vst [vmem:[#allocation3 + $0x418] sm:$0xff] %v2173
        %2190 = vst [vmem:[#allocation3 + $0x420] sm:$0xff] %v2174
        %2191 = vst [vmem:[#allocation3 + $0x428] sm:$0xff] %v2175
        %2192 = vst [vmem:[#allocation3 + $0x430] sm:$0xff] %v2176
        %2193 = vst [vmem:[#allocation3 + $0x438] sm:$0xff] %v2177
        %2194 = vst [vmem:[#allocation3 + $0x440] sm:$0xff] %v2178
        %2195 = vst [vmem:[#allocation3 + $0x448] sm:$0xff] %v2179
        %2196 = vst [vmem:[#allocation3 + $0x450] sm:$0xff] %v2180
        %2197 = vst [vmem:[#allocation3 + $0x458] sm:$0xff] %v2181
        %2198 = vst [vmem:[#allocation3 + $0x460] sm:$0xff] %v2182
        %2199 = vst [vmem:[#allocation3 + $0x468] sm:$0xff] %v2183
        %2200 = vst [vmem:[#allocation3 + $0x470] sm:$0xff] %v2184
        %2201 = vst [vmem:[#allocation3 + $0x478] sm:$0xff] %v2185
        %v2202 = vld [vmem:[#allocation9] sm:$0xff]
        %v2203 = vld [vmem:[#allocation9 + $0x8] sm:$0xff]
        %v2204 = vld [vmem:[#allocation9 + $0x10] sm:$0xff]
        %v2205 = vld [vmem:[#allocation9 + $0x18] sm:$0xff]
        %v2206 = vld [vmem:[#allocation9 + $0x20] sm:$0xff]
        %v2207 = vld [vmem:[#allocation9 + $0x28] sm:$0xff]
        %v2208 = vld [vmem:[#allocation9 + $0x30] sm:$0xff]
        %v2209 = vld [vmem:[#allocation9 + $0x38] sm:$0xff]
        %v2210 = vld [vmem:[#allocation9 + $0x40] sm:$0xff]
        %v2211 = vld [vmem:[#allocation9 + $0x48] sm:$0xff]
        %v2212 = vld [vmem:[#allocation9 + $0x50] sm:$0xff]
        %v2213 = vld [vmem:[#allocation9 + $0x58] sm:$0xff]
        %v2214 = vld [vmem:[#allocation9 + $0x60] sm:$0xff]
        %v2215 = vld [vmem:[#allocation9 + $0x68] sm:$0xff]
        %v2216 = vld [vmem:[#allocation9 + $0x70] sm:$0xff]
        %v2217 = vld [vmem:[#allocation9 + $0x78] sm:$0xff]
        %v2218 = vld [vmem:[#allocation9 + $0x80] sm:$0xff]
        %v2219 = vld [vmem:[#allocation9 + $0x88] sm:$0xff]
        %v2220 = vld [vmem:[#allocation9 + $0x90] sm:$0xff]
        %v2221 = vld [vmem:[#allocation9 + $0x98] sm:$0xff]
        %v2222 = vld [vmem:[#allocation9 + $0xa0] sm:$0xff]
        %v2223 = vld [vmem:[#allocation9 + $0xa8] sm:$0xff]
        %v2224 = vld [vmem:[#allocation9 + $0xb0] sm:$0xff]
        %v2225 = vld [vmem:[#allocation9 + $0xb8] sm:$0xff]
        %v2226 = vld [vmem:[#allocation9 + $0xc0] sm:$0xff]
        %v2227 = vld [vmem:[#allocation9 + $0xc8] sm:$0xff]
        %v2228 = vld [vmem:[#allocation9 + $0xd0] sm:$0xff]
        %v2229 = vld [vmem:[#allocation9 + $0xd8] sm:$0xff]
        %v2230 = vld [vmem:[#allocation9 + $0xe0] sm:$0xff]
        %v2231 = vld [vmem:[#allocation9 + $0xe8] sm:$0xff]
        %v2232 = vld [vmem:[#allocation9 + $0xf0] sm:$0xff]
        %v2233 = vld [vmem:[#allocation9 + $0xf8] sm:$0xff]
        %v2234 = vld [vmem:[#allocation9 + $0x100] sm:$0xff]
        %v2235 = vld [vmem:[#allocation9 + $0x108] sm:$0xff]
        %v2236 = vld [vmem:[#allocation9 + $0x110] sm:$0xff]
        %v2237 = vld [vmem:[#allocation9 + $0x118] sm:$0xff]
        %v2238 = vld [vmem:[#allocation9 + $0x120] sm:$0xff]
        %v2239 = vld [vmem:[#allocation9 + $0x128] sm:$0xff]
        %v2240 = vld [vmem:[#allocation9 + $0x130] sm:$0xff]
        %v2241 = vld [vmem:[#allocation9 + $0x138] sm:$0xff]
        %v2242 = vld [vmem:[#allocation9 + $0x140] sm:$0xff]
        %v2243 = vld [vmem:[#allocation9 + $0x148] sm:$0xff]
        %v2244 = vld [vmem:[#allocation9 + $0x150] sm:$0xff]
        %v2245 = vld [vmem:[#allocation9 + $0x158] sm:$0xff]
        %v2246 = vld [vmem:[#allocation9 + $0x160] sm:$0xff]
        %v2247 = vld [vmem:[#allocation9 + $0x168] sm:$0xff]
        %v2248 = vld [vmem:[#allocation9 + $0x170] sm:$0xff]
        %v2249 = vld [vmem:[#allocation9 + $0x178] sm:$0xff]
        %v2250 = vld [vmem:[#allocation9 + $0x180] sm:$0xff]
        %v2251 = vld [vmem:[#allocation9 + $0x188] sm:$0xff]
        %v2252 = vld [vmem:[#allocation9 + $0x190] sm:$0xff]
        %v2253 = vld [vmem:[#allocation9 + $0x198] sm:$0xff]
        %v2254 = vld [vmem:[#allocation9 + $0x1a0] sm:$0xff]
        %v2255 = vld [vmem:[#allocation9 + $0x1a8] sm:$0xff]
        %v2256 = vld [vmem:[#allocation9 + $0x1b0] sm:$0xff]
        %v2257 = vld [vmem:[#allocation9 + $0x1b8] sm:$0xff]
        %v2258 = vld [vmem:[#allocation9 + $0x1c0] sm:$0xff]
        %v2259 = vld [vmem:[#allocation9 + $0x1c8] sm:$0xff]
        %v2260 = vld [vmem:[#allocation9 + $0x1d0] sm:$0xff]
        %v2261 = vld [vmem:[#allocation9 + $0x1d8] sm:$0xff]
        %v2262 = vld [vmem:[#allocation9 + $0x1e0] sm:$0xff]
        %v2263 = vld [vmem:[#allocation9 + $0x1e8] sm:$0xff]
        %v2264 = vld [vmem:[#allocation9 + $0x1f0] sm:$0xff]
        %v2265 = vld [vmem:[#allocation9 + $0x1f8] sm:$0xff]
        %v2266 = vld [vmem:[#allocation9 + $0x200] sm:$0xff]
        %v2267 = vld [vmem:[#allocation9 + $0x208] sm:$0xff]
        %v2268 = vld [vmem:[#allocation9 + $0x210] sm:$0xff]
        %v2269 = vld [vmem:[#allocation9 + $0x218] sm:$0xff]
        %v2270 = vld [vmem:[#allocation9 + $0x220] sm:$0xff]
        %v2271 = vld [vmem:[#allocation9 + $0x228] sm:$0xff]
        %v2272 = vld [vmem:[#allocation9 + $0x230] sm:$0xff]
        %v2273 = vld [vmem:[#allocation9 + $0x238] sm:$0xff]
        %v2274 = vld [vmem:[#allocation9 + $0x240] sm:$0xff]
        %v2275 = vld [vmem:[#allocation9 + $0x248] sm:$0xff]
        %v2276 = vld [vmem:[#allocation9 + $0x250] sm:$0xff]
        %v2277 = vld [vmem:[#allocation9 + $0x258] sm:$0xff]
        %v2278 = vld [vmem:[#allocation9 + $0x260] sm:$0xff]
        %v2279 = vld [vmem:[#allocation9 + $0x268] sm:$0xff]
        %v2280 = vld [vmem:[#allocation9 + $0x270] sm:$0xff]
        %v2281 = vld [vmem:[#allocation9 + $0x278] sm:$0xff]
        %v2282 = vld [vmem:[#allocation3] sm:$0xff]
        %v2283 = vld [vmem:[#allocation3 + $0x8] sm:$0xff]
        %v2284 = vld [vmem:[#allocation3 + $0x10] sm:$0xff]
        %v2285 = vld [vmem:[#allocation3 + $0x18] sm:$0xff]
        %v2286 = vld [vmem:[#allocation3 + $0x20] sm:$0xff]
        %v2287 = vld [vmem:[#allocation3 + $0x28] sm:$0xff]
        %v2288 = vld [vmem:[#allocation3 + $0x30] sm:$0xff]
        %v2289 = vld [vmem:[#allocation3 + $0x38] sm:$0xff]
        %v2290 = vld [vmem:[#allocation3 + $0x40] sm:$0xff]
        %v2291 = vld [vmem:[#allocation3 + $0x48] sm:$0xff]
        %v2292 = vld [vmem:[#allocation3 + $0x50] sm:$0xff]
        %v2293 = vld [vmem:[#allocation3 + $0x58] sm:$0xff]
        %v2294 = vld [vmem:[#allocation3 + $0x60] sm:$0xff]
        %v2295 = vld [vmem:[#allocation3 + $0x68] sm:$0xff]
        %v2296 = vld [vmem:[#allocation3 + $0x70] sm:$0xff]
        %v2297 = vld [vmem:[#allocation3 + $0x78] sm:$0xff]
        %v2298 = vld [vmem:[#allocation3 + $0x80] sm:$0xff]
        %v2299 = vld [vmem:[#allocation3 + $0x88] sm:$0xff]
        %v2300 = vld [vmem:[#allocation3 + $0x90] sm:$0xff]
        %v2301 = vld [vmem:[#allocation3 + $0x98] sm:$0xff]
        %v2302 = vld [vmem:[#allocation3 + $0xa0] sm:$0xff]
        %v2303 = vld [vmem:[#allocation3 + $0xa8] sm:$0xff]
        %v2304 = vld [vmem:[#allocation3 + $0xb0] sm:$0xff]
        %v2305 = vld [vmem:[#allocation3 + $0xb8] sm:$0xff]
        %v2306 = vld [vmem:[#allocation3 + $0xc0] sm:$0xff]
        %v2307 = vld [vmem:[#allocation3 + $0xc8] sm:$0xff]
        %v2308 = vld [vmem:[#allocation3 + $0xd0] sm:$0xff]
        %v2309 = vld [vmem:[#allocation3 + $0xd8] sm:$0xff]
        %v2310 = vld [vmem:[#allocation3 + $0xe0] sm:$0xff]
        %v2311 = vld [vmem:[#allocation3 + $0xe8] sm:$0xff]
        %v2312 = vld [vmem:[#allocation3 + $0xf0] sm:$0xff]
        %v2313 = vld [vmem:[#allocation3 + $0xf8] sm:$0xff]
        %v2314 = vld [vmem:[#allocation3 + $0x100] sm:$0xff]
        %v2315 = vld [vmem:[#allocation3 + $0x108] sm:$0xff]
        %v2316 = vld [vmem:[#allocation3 + $0x110] sm:$0xff]
        %v2317 = vld [vmem:[#allocation3 + $0x118] sm:$0xff]
        %v2318 = vld [vmem:[#allocation3 + $0x120] sm:$0xff]
        %v2319 = vld [vmem:[#allocation3 + $0x128] sm:$0xff]
        %v2320 = vld [vmem:[#allocation3 + $0x130] sm:$0xff]
        %v2321 = vld [vmem:[#allocation3 + $0x138] sm:$0xff]
        %v2322 = vld [vmem:[#allocation3 + $0x140] sm:$0xff]
        %v2323 = vld [vmem:[#allocation3 + $0x148] sm:$0xff]
        %v2324 = vld [vmem:[#allocation3 + $0x150] sm:$0xff]
        %v2325 = vld [vmem:[#allocation3 + $0x158] sm:$0xff]
        %v2326 = vld [vmem:[#allocation3 + $0x160] sm:$0xff]
        %v2327 = vld [vmem:[#allocation3 + $0x168] sm:$0xff]
        %v2328 = vld [vmem:[#allocation3 + $0x170] sm:$0xff]
        %v2329 = vld [vmem:[#allocation3 + $0x178] sm:$0xff]
        %v2330 = vld [vmem:[#allocation3 + $0x180] sm:$0xff]
        %v2331 = vld [vmem:[#allocation3 + $0x188] sm:$0xff]
        %v2332 = vld [vmem:[#allocation3 + $0x190] sm:$0xff]
        %v2333 = vld [vmem:[#allocation3 + $0x198] sm:$0xff]
        %v2334 = vld [vmem:[#allocation3 + $0x1a0] sm:$0xff]
        %v2335 = vld [vmem:[#allocation3 + $0x1a8] sm:$0xff]
        %v2336 = vld [vmem:[#allocation3 + $0x1b0] sm:$0xff]
        %v2337 = vld [vmem:[#allocation3 + $0x1b8] sm:$0xff]
        %v2338 = vld [vmem:[#allocation3 + $0x1c0] sm:$0xff]
        %v2339 = vld [vmem:[#allocation3 + $0x1c8] sm:$0xff]
        %v2340 = vld [vmem:[#allocation3 + $0x1d0] sm:$0xff]
        %v2341 = vld [vmem:[#allocation3 + $0x1d8] sm:$0xff]
        %v2342 = vld [vmem:[#allocation3 + $0x1e0] sm:$0xff]
        %v2343 = vld [vmem:[#allocation3 + $0x1e8] sm:$0xff]
        %v2344 = vld [vmem:[#allocation3 + $0x1f0] sm:$0xff]
        %v2345 = vld [vmem:[#allocation3 + $0x1f8] sm:$0xff]
        %v2346 = vld [vmem:[#allocation3 + $0x200] sm:$0xff]
        %v2347 = vld [vmem:[#allocation3 + $0x208] sm:$0xff]
        %v2348 = vld [vmem:[#allocation3 + $0x210] sm:$0xff]
        %v2349 = vld [vmem:[#allocation3 + $0x218] sm:$0xff]
        %v2350 = vld [vmem:[#allocation3 + $0x220] sm:$0xff]
        %v2351 = vld [vmem:[#allocation3 + $0x228] sm:$0xff]
        %v2352 = vld [vmem:[#allocation3 + $0x230] sm:$0xff]
        %v2353 = vld [vmem:[#allocation3 + $0x238] sm:$0xff]
        %v2354 = vld [vmem:[#allocation3 + $0x240] sm:$0xff]
        %v2355 = vld [vmem:[#allocation3 + $0x248] sm:$0xff]
        %v2356 = vld [vmem:[#allocation3 + $0x250] sm:$0xff]
        %v2357 = vld [vmem:[#allocation3 + $0x258] sm:$0xff]
        %v2358 = vld [vmem:[#allocation3 + $0x260] sm:$0xff]
        %v2359 = vld [vmem:[#allocation3 + $0x268] sm:$0xff]
        %v2360 = vld [vmem:[#allocation3 + $0x270] sm:$0xff]
        %v2361 = vld [vmem:[#allocation3 + $0x278] sm:$0xff]
        %v2362 = vld [vmem:[#allocation3 + $0x280] sm:$0xff]
        %v2363 = vld [vmem:[#allocation3 + $0x288] sm:$0xff]
        %v2364 = vld [vmem:[#allocation3 + $0x290] sm:$0xff]
        %v2365 = vld [vmem:[#allocation3 + $0x298] sm:$0xff]
        %v2366 = vld [vmem:[#allocation3 + $0x2a0] sm:$0xff]
        %v2367 = vld [vmem:[#allocation3 + $0x2a8] sm:$0xff]
        %v2368 = vld [vmem:[#allocation3 + $0x2b0] sm:$0xff]
        %v2369 = vld [vmem:[#allocation3 + $0x2b8] sm:$0xff]
        %v2370 = vld [vmem:[#allocation3 + $0x2c0] sm:$0xff]
        %v2371 = vld [vmem:[#allocation3 + $0x2c8] sm:$0xff]
        %v2372 = vld [vmem:[#allocation3 + $0x2d0] sm:$0xff]
        %v2373 = vld [vmem:[#allocation3 + $0x2d8] sm:$0xff]
        %v2374 = vld [vmem:[#allocation3 + $0x2e0] sm:$0xff]
        %v2375 = vld [vmem:[#allocation3 + $0x2e8] sm:$0xff]
        %v2376 = vld [vmem:[#allocation3 + $0x2f0] sm:$0xff]
        %v2377 = vld [vmem:[#allocation3 + $0x2f8] sm:$0xff]
        %v2378 = vld [vmem:[#allocation3 + $0x300] sm:$0xff]
        %v2379 = vld [vmem:[#allocation3 + $0x308] sm:$0xff]
        %v2380 = vld [vmem:[#allocation3 + $0x310] sm:$0xff]
        %v2381 = vld [vmem:[#allocation3 + $0x318] sm:$0xff]
        %v2382 = vld [vmem:[#allocation3 + $0x320] sm:$0xff]
        %v2383 = vld [vmem:[#allocation3 + $0x328] sm:$0xff]
        %v2384 = vld [vmem:[#allocation3 + $0x330] sm:$0xff]
        %v2385 = vld [vmem:[#allocation3 + $0x338] sm:$0xff]
        %v2386 = vld [vmem:[#allocation3 + $0x340] sm:$0xff]
        %v2387 = vld [vmem:[#allocation3 + $0x348] sm:$0xff]
        %v2388 = vld [vmem:[#allocation3 + $0x350] sm:$0xff]
        %v2389 = vld [vmem:[#allocation3 + $0x358] sm:$0xff]
        %v2390 = vld [vmem:[#allocation3 + $0x360] sm:$0xff]
        %v2391 = vld [vmem:[#allocation3 + $0x368] sm:$0xff]
        %v2392 = vld [vmem:[#allocation3 + $0x370] sm:$0xff]
        %v2393 = vld [vmem:[#allocation3 + $0x378] sm:$0xff]
        %v2394 = vld [vmem:[#allocation3 + $0x380] sm:$0xff]
        %v2395 = vld [vmem:[#allocation3 + $0x388] sm:$0xff]
        %v2396 = vld [vmem:[#allocation3 + $0x390] sm:$0xff]
        %v2397 = vld [vmem:[#allocation3 + $0x398] sm:$0xff]
        %v2398 = vld [vmem:[#allocation3 + $0x3a0] sm:$0xff]
        %v2399 = vld [vmem:[#allocation3 + $0x3a8] sm:$0xff]
        %v2400 = vld [vmem:[#allocation3 + $0x3b0] sm:$0xff]
        %v2401 = vld [vmem:[#allocation3 + $0x3b8] sm:$0xff]
        %v2402 = vld [vmem:[#allocation3 + $0x3c0] sm:$0xff]
        %v2403 = vld [vmem:[#allocation3 + $0x3c8] sm:$0xff]
        %v2404 = vld [vmem:[#allocation3 + $0x3d0] sm:$0xff]
        %v2405 = vld [vmem:[#allocation3 + $0x3d8] sm:$0xff]
        %v2406 = vld [vmem:[#allocation3 + $0x3e0] sm:$0xff]
        %v2407 = vld [vmem:[#allocation3 + $0x3e8] sm:$0xff]
        %v2408 = vld [vmem:[#allocation3 + $0x3f0] sm:$0xff]
        %v2409 = vld [vmem:[#allocation3 + $0x3f8] sm:$0xff]
        %v2410 = vld [vmem:[#allocation3 + $0x400] sm:$0xff]
        %v2411 = vld [vmem:[#allocation3 + $0x408] sm:$0xff]
        %v2412 = vld [vmem:[#allocation3 + $0x410] sm:$0xff]
        %v2413 = vld [vmem:[#allocation3 + $0x418] sm:$0xff]
        %v2414 = vld [vmem:[#allocation3 + $0x420] sm:$0xff]
        %v2415 = vld [vmem:[#allocation3 + $0x428] sm:$0xff]
        %v2416 = vld [vmem:[#allocation3 + $0x430] sm:$0xff]
        %v2417 = vld [vmem:[#allocation3 + $0x438] sm:$0xff]
        %v2418 = vld [vmem:[#allocation3 + $0x440] sm:$0xff]
        %v2419 = vld [vmem:[#allocation3 + $0x448] sm:$0xff]
        %v2420 = vld [vmem:[#allocation3 + $0x450] sm:$0xff]
        %v2421 = vld [vmem:[#allocation3 + $0x458] sm:$0xff]
        %v2422 = vld [vmem:[#allocation3 + $0x460] sm:$0xff]
        %v2423 = vld [vmem:[#allocation3 + $0x468] sm:$0xff]
        %v2424 = vld [vmem:[#allocation3 + $0x470] sm:$0xff]
        %v2425 = vld [vmem:[#allocation3 + $0x478] sm:$0xff]
        %v2426 = vld [vmem:[#allocation11] sm:$0xff]
        %v2427 = vld [vmem:[#allocation11 + $0x8] sm:$0xff]
        %v2428 = vld [vmem:[#allocation11 + $0x10] sm:$0xff]
        %v2429 = vld [vmem:[#allocation11 + $0x18] sm:$0xff]
        %v2430 = vld [vmem:[#allocation11 + $0x20] sm:$0xff]
        %v2431 = vld [vmem:[#allocation11 + $0x28] sm:$0xff]
        %v2432 = vld [vmem:[#allocation11 + $0x30] sm:$0xff]
        %v2433 = vld [vmem:[#allocation11 + $0x38] sm:$0xff]
        %v2434 = vld [vmem:[#allocation11 + $0x40] sm:$0xff]
        %v2435 = vld [vmem:[#allocation11 + $0x48] sm:$0xff]
        %v2436 = vld [vmem:[#allocation11 + $0x50] sm:$0xff]
        %v2437 = vld [vmem:[#allocation11 + $0x58] sm:$0xff]
        %v2438 = vld [vmem:[#allocation11 + $0x60] sm:$0xff]
        %v2439 = vld [vmem:[#allocation11 + $0x68] sm:$0xff]
        %v2440 = vld [vmem:[#allocation11 + $0x70] sm:$0xff]
        %v2441 = vld [vmem:[#allocation11 + $0x78] sm:$0xff]
        %2443 = vset.pattern.permute.xlu0 0
        %2444 = vperm.xlu0 %2443, %v2426
        %v2445 = vpop.permute.xlu0 %2444
        %2448 = vset.pattern.permute.xlu0 0
        %2449 = vperm.xlu0 %2448, %v2427
        %v2450 = vpop.permute.xlu0 %2449
        %2453 = vset.pattern.permute.xlu0 0
        %2454 = vperm.xlu0 %2453, %v2428
        %v2455 = vpop.permute.xlu0 %2454
        %2458 = vset.pattern.permute.xlu0 0
        %2459 = vperm.xlu0 %2458, %v2429
        %v2460 = vpop.permute.xlu0 %2459
        %2463 = vset.pattern.permute.xlu0 0
        %2464 = vperm.xlu0 %2463, %v2430
        %v2465 = vpop.permute.xlu0 %2464
        %2468 = vset.pattern.permute.xlu0 0
        %2469 = vperm.xlu0 %2468, %v2431
        %v2470 = vpop.permute.xlu0 %2469
        %2473 = vset.pattern.permute.xlu0 0
        %2474 = vperm.xlu0 %2473, %v2432
        %v2475 = vpop.permute.xlu0 %2474
        %2478 = vset.pattern.permute.xlu0 0
        %2479 = vperm.xlu0 %2478, %v2433
        %v2480 = vpop.permute.xlu0 %2479
        %2483 = vset.pattern.permute.xlu0 0
        %2484 = vperm.xlu0 %2483, %v2434
        %v2485 = vpop.permute.xlu0 %2484
        %2488 = vset.pattern.permute.xlu0 0
        %2489 = vperm.xlu0 %2488, %v2435
        %v2490 = vpop.permute.xlu0 %2489
        %2493 = vset.pattern.permute.xlu0 0
        %2494 = vperm.xlu0 %2493, %v2436
        %v2495 = vpop.permute.xlu0 %2494
        %2498 = vset.pattern.permute.xlu0 0
        %2499 = vperm.xlu0 %2498, %v2437
        %v2500 = vpop.permute.xlu0 %2499
        %2503 = vset.pattern.permute.xlu0 0
        %2504 = vperm.xlu0 %2503, %v2438
        %v2505 = vpop.permute.xlu0 %2504
        %2508 = vset.pattern.permute.xlu0 0
        %2509 = vperm.xlu0 %2508, %v2439
        %v2510 = vpop.permute.xlu0 %2509
        %2513 = vset.pattern.permute.xlu0 0
        %2514 = vperm.xlu0 %2513, %v2440
        %v2515 = vpop.permute.xlu0 %2514
        %2518 = vset.pattern.permute.xlu0 0
        %2519 = vperm.xlu0 %2518, %v2441
        %v2520 = vpop.permute.xlu0 %2519
        %vm2522 = vcmask 523264
        %v2524 = vsel %vm2522, %v2206, 0
        %v2527 = vsel %vm2522, %v2211, 0
        %v2530 = vsel %vm2522, %v2216, 0
        %v2533 = vsel %vm2522, %v2221, 0
        %v2536 = vsel %vm2522, %v2226, 0
        %v2539 = vsel %vm2522, %v2231, 0
        %v2542 = vsel %vm2522, %v2236, 0
        %v2545 = vsel %vm2522, %v2241, 0
        %v2548 = vsel %vm2522, %v2246, 0
        %v2551 = vsel %vm2522, %v2251, 0
        %v2554 = vsel %vm2522, %v2256, 0
        %v2557 = vsel %vm2522, %v2261, 0
        %v2560 = vsel %vm2522, %v2266, 0
        %v2563 = vsel %vm2522, %v2271, 0
        %v2566 = vsel %vm2522, %v2276, 0
        %v2569 = vsel %vm2522, %v2281, 0
        %2571 = vmatprep.subr.mxu0 %v2313
        %2572 = vmatpush1.msra.mxu0 %v2312
        %2573 = vmatprep.subr.mxu0 %v2311
        %2574 = vmatpush1.msra.mxu0 %v2310
        %2575 = vmatprep.subr.mxu0 %v2309
        %2576 = vmatpush1.msra.mxu0 %v2308
        %2577 = vmatprep.subr.mxu0 %v2307
        %2578 = vmatpush1.msra.mxu0 %v2306
        %2579 = vmatprep.subr.mxu0 %v2305
        %2580 = vmatpush1.msra.mxu0 %v2304
        %2581 = vmatprep.subr.mxu0 %v2303
        %2582 = vmatpush1.msra.mxu0 %v2302
        %2583 = vmatprep.subr.mxu0 %v2301
        %2584 = vmatpush1.msra.mxu0 %v2300
        %2585 = vmatprep.subr.mxu0 %v2299
        %2586 = vmatpush1.msra.mxu0 %v2298
        %2587 = vmatprep.subr.mxu0 %v2297
        %2588 = vmatpush1.msra.mxu0 %v2296
        %2589 = vmatprep.subr.mxu0 %v2295
        %2590 = vmatpush1.msra.mxu0 %v2294
        %2591 = vmatprep.subr.mxu0 %v2293
        %2592 = vmatpush1.msra.mxu0 %v2292
        %2593 = vmatprep.subr.mxu0 %v2291
        %2594 = vmatpush1.msra.mxu0 %v2290
        %2595 = vmatprep.subr.mxu0 %v2289
        %2596 = vmatpush1.msra.mxu0 %v2288
        %2597 = vmatprep.subr.mxu0 %v2287
        %2598 = vmatpush1.msra.mxu0 %v2286
        %2599 = vmatprep.subr.mxu0 %v2285
        %2600 = vmatpush1.msra.mxu0 %v2284
        %2601 = vmatprep.subr.mxu0 %v2283
        %2602 = vmatpush1.msra.mxu0 %v2282
        %2603 = vmatprep.subr.mxu0 %v2345
        %2604 = vmatpush2.msra.mxu0 %v2344
        %2605 = vmatprep.subr.mxu0 %v2343
        %2606 = vmatpush2.msra.mxu0 %v2342
        %2607 = vmatprep.subr.mxu0 %v2341
        %2608 = vmatpush2.msra.mxu0 %v2340
        %2609 = vmatprep.subr.mxu0 %v2339
        %2610 = vmatpush2.msra.mxu0 %v2338
        %2611 = vmatprep.subr.mxu0 %v2337
        %2612 = vmatpush2.msra.mxu0 %v2336
        %2613 = vmatprep.subr.mxu0 %v2335
        %2614 = vmatpush2.msra.mxu0 %v2334
        %2615 = vmatprep.subr.mxu0 %v2333
        %2616 = vmatpush2.msra.mxu0 %v2332
        %2617 = vmatprep.subr.mxu0 %v2331
        %2618 = vmatpush2.msra.mxu0 %v2330
        %2619 = vmatprep.subr.mxu0 %v2329
        %2620 = vmatpush2.msra.mxu0 %v2328
        %2621 = vmatprep.subr.mxu0 %v2327
        %2622 = vmatpush2.msra.mxu0 %v2326
        %2623 = vmatprep.subr.mxu0 %v2325
        %2624 = vmatpush2.msra.mxu0 %v2324
        %2625 = vmatprep.subr.mxu0 %v2323
        %2626 = vmatpush2.msra.mxu0 %v2322
        %2627 = vmatprep.subr.mxu0 %v2321
        %2628 = vmatpush2.msra.mxu0 %v2320
        %2629 = vmatprep.subr.mxu0 %v2319
        %2630 = vmatpush2.msra.mxu0 %v2318
        %2631 = vmatprep.subr.mxu0 %v2317
        %2632 = vmatpush2.msra.mxu0 %v2316
        %2633 = vmatprep.subr.mxu0 %v2315
        %2634 = vmatpush2.msra.mxu0 %v2314
        %2635 = vmatprep.mubr.f32.mxu0 %v2203
        %2636 = vmatmul.mubr.f32.gmra.mxu0 %v2202
        %v2637 = vpop.f32.mrf.mxu0
        %v2638 = vadd.f32 %v2445, %v2637
        %v2639 = vpop.f32.mrf.mxu0
        %v2640 = vadd.f32 %v2445, %v2639
        %2641 = vmatprep.mubr.f32.mxu0 %v2208
        %2642 = vmatmul.mubr.f32.gmra.mxu0 %v2207
        %v2643 = vpop.f32.mrf.mxu0
        %v2644 = vadd.f32 %v2450, %v2643
        %v2645 = vpop.f32.mrf.mxu0
        %v2646 = vadd.f32 %v2450, %v2645
        %2647 = vmatprep.mubr.f32.mxu0 %v2213
        %2648 = vmatmul.mubr.f32.gmra.mxu0 %v2212
        %v2649 = vpop.f32.mrf.mxu0
        %v2650 = vadd.f32 %v2455, %v2649
        %v2651 = vpop.f32.mrf.mxu0
        %v2652 = vadd.f32 %v2455, %v2651
        %2653 = vmatprep.mubr.f32.mxu0 %v2218
        %2654 = vmatmul.mubr.f32.gmra.mxu0 %v2217
        %v2655 = vpop.f32.mrf.mxu0
        %v2656 = vadd.f32 %v2460, %v2655
        %v2657 = vpop.f32.mrf.mxu0
        %v2658 = vadd.f32 %v2460, %v2657
        %2659 = vmatprep.mubr.f32.mxu0 %v2223
        %2660 = vmatmul.mubr.f32.gmra.mxu0 %v2222
        %v2661 = vpop.f32.mrf.mxu0
        %v2662 = vadd.f32 %v2465, %v2661
        %v2663 = vpop.f32.mrf.mxu0
        %v2664 = vadd.f32 %v2465, %v2663
        %2665 = vmatprep.mubr.f32.mxu0 %v2228
        %2666 = vmatmul.mubr.f32.gmra.mxu0 %v2227
        %v2667 = vpop.f32.mrf.mxu0
        %v2668 = vadd.f32 %v2470, %v2667
        %v2669 = vpop.f32.mrf.mxu0
        %v2670 = vadd.f32 %v2470, %v2669
        %2671 = vmatprep.mubr.f32.mxu0 %v2233
        %2672 = vmatmul.mubr.f32.gmra.mxu0 %v2232
        %v2673 = vpop.f32.mrf.mxu0
        %v2674 = vadd.f32 %v2475, %v2673
        %v2675 = vpop.f32.mrf.mxu0
        %v2676 = vadd.f32 %v2475, %v2675
        %2677 = vmatprep.mubr.f32.mxu0 %v2238
        %2678 = vmatmul.mubr.f32.gmra.mxu0 %v2237
        %v2679 = vpop.f32.mrf.mxu0
        %v2680 = vadd.f32 %v2480, %v2679
        %v2681 = vpop.f32.mrf.mxu0
        %v2682 = vadd.f32 %v2480, %v2681
        %2683 = vmatprep.mubr.f32.mxu0 %v2243
        %2684 = vmatmul.mubr.f32.gmra.mxu0 %v2242
        %v2685 = vpop.f32.mrf.mxu0
        %v2686 = vadd.f32 %v2485, %v2685
        %v2687 = vpop.f32.mrf.mxu0
        %v2688 = vadd.f32 %v2485, %v2687
        %2689 = vmatprep.mubr.f32.mxu0 %v2248
        %2690 = vmatmul.mubr.f32.gmra.mxu0 %v2247
        %v2691 = vpop.f32.mrf.mxu0
        %v2692 = vadd.f32 %v2490, %v2691
        %v2693 = vpop.f32.mrf.mxu0
        %v2694 = vadd.f32 %v2490, %v2693
        %2695 = vmatprep.mubr.f32.mxu0 %v2253
        %2696 = vmatmul.mubr.f32.gmra.mxu0 %v2252
        %v2697 = vpop.f32.mrf.mxu0
        %v2698 = vadd.f32 %v2495, %v2697
        %v2699 = vpop.f32.mrf.mxu0
        %v2700 = vadd.f32 %v2495, %v2699
        %2701 = vmatprep.mubr.f32.mxu0 %v2258
        %2702 = vmatmul.mubr.f32.gmra.mxu0 %v2257
        %v2703 = vpop.f32.mrf.mxu0
        %v2704 = vadd.f32 %v2500, %v2703
        %v2705 = vpop.f32.mrf.mxu0
        %v2706 = vadd.f32 %v2500, %v2705
        %2707 = vmatprep.mubr.f32.mxu0 %v2263
        %2708 = vmatmul.mubr.f32.gmra.mxu0 %v2262
        %v2709 = vpop.f32.mrf.mxu0
        %v2710 = vadd.f32 %v2505, %v2709
        %v2711 = vpop.f32.mrf.mxu0
        %v2712 = vadd.f32 %v2505, %v2711
        %2713 = vmatprep.mubr.f32.mxu0 %v2268
        %2714 = vmatmul.mubr.f32.gmra.mxu0 %v2267
        %v2715 = vpop.f32.mrf.mxu0
        %v2716 = vadd.f32 %v2510, %v2715
        %v2717 = vpop.f32.mrf.mxu0
        %v2718 = vadd.f32 %v2510, %v2717
        %2719 = vmatprep.mubr.f32.mxu0 %v2273
        %2720 = vmatmul.mubr.f32.gmra.mxu0 %v2272
        %v2721 = vpop.f32.mrf.mxu0
        %v2722 = vadd.f32 %v2515, %v2721
        %v2723 = vpop.f32.mrf.mxu0
        %v2724 = vadd.f32 %v2515, %v2723
        %2725 = vmatprep.mubr.f32.mxu0 %v2278
        %2726 = vmatmul.mubr.f32.gmra.mxu0 %v2277
        %v2727 = vpop.f32.mrf.mxu0
        %v2728 = vadd.f32 %v2520, %v2727
        %v2729 = vpop.f32.mrf.mxu0
        %v2730 = vadd.f32 %v2520, %v2729
        %2731 = vdwg.mxu0
        %2732 = vmatprep.subr.mxu0 %v2377
        %2733 = vmatpush1.msra.mxu0 %v2376
        %2734 = vmatprep.subr.mxu0 %v2375
        %2735 = vmatpush1.msra.mxu0 %v2374
        %2736 = vmatprep.subr.mxu0 %v2373
        %2737 = vmatpush1.msra.mxu0 %v2372
        %2738 = vmatprep.subr.mxu0 %v2371
        %2739 = vmatpush1.msra.mxu0 %v2370
        %2740 = vmatprep.subr.mxu0 %v2369
        %2741 = vmatpush1.msra.mxu0 %v2368
        %2742 = vmatprep.subr.mxu0 %v2367
        %2743 = vmatpush1.msra.mxu0 %v2366
        %2744 = vmatprep.subr.mxu0 %v2365
        %2745 = vmatpush1.msra.mxu0 %v2364
        %2746 = vmatprep.subr.mxu0 %v2363
        %2747 = vmatpush1.msra.mxu0 %v2362
        %2748 = vmatprep.subr.mxu0 %v2361
        %2749 = vmatpush1.msra.mxu0 %v2360
        %2750 = vmatprep.subr.mxu0 %v2359
        %2751 = vmatpush1.msra.mxu0 %v2358
        %2752 = vmatprep.subr.mxu0 %v2357
        %2753 = vmatpush1.msra.mxu0 %v2356
        %2754 = vmatprep.subr.mxu0 %v2355
        %2755 = vmatpush1.msra.mxu0 %v2354
        %2756 = vmatprep.subr.mxu0 %v2353
        %2757 = vmatpush1.msra.mxu0 %v2352
        %2758 = vmatprep.subr.mxu0 %v2351
        %2759 = vmatpush1.msra.mxu0 %v2350
        %2760 = vmatprep.subr.mxu0 %v2349
        %2761 = vmatpush1.msra.mxu0 %v2348
        %2762 = vmatprep.subr.mxu0 %v2347
        %2763 = vmatpush1.msra.mxu0 %v2346
        %2764 = vmatprep.subr.mxu0 %v2409
        %2765 = vmatpush2.msra.mxu0 %v2408
        %2766 = vmatprep.subr.mxu0 %v2407
        %2767 = vmatpush2.msra.mxu0 %v2406
        %2768 = vmatprep.subr.mxu0 %v2405
        %2769 = vmatpush2.msra.mxu0 %v2404
        %2770 = vmatprep.subr.mxu0 %v2403
        %2771 = vmatpush2.msra.mxu0 %v2402
        %2772 = vmatprep.subr.mxu0 %v2401
        %2773 = vmatpush2.msra.mxu0 %v2400
        %2774 = vmatprep.subr.mxu0 %v2399
        %2775 = vmatpush2.msra.mxu0 %v2398
        %2776 = vmatprep.subr.mxu0 %v2397
        %2777 = vmatpush2.msra.mxu0 %v2396
        %2778 = vmatprep.subr.mxu0 %v2395
        %2779 = vmatpush2.msra.mxu0 %v2394
        %2780 = vmatprep.subr.mxu0 %v2393
        %2781 = vmatpush2.msra.mxu0 %v2392
        %2782 = vmatprep.subr.mxu0 %v2391
        %2783 = vmatpush2.msra.mxu0 %v2390
        %2784 = vmatprep.subr.mxu0 %v2389
        %2785 = vmatpush2.msra.mxu0 %v2388
        %2786 = vmatprep.subr.mxu0 %v2387
        %2787 = vmatpush2.msra.mxu0 %v2386
        %2788 = vmatprep.subr.mxu0 %v2385
        %2789 = vmatpush2.msra.mxu0 %v2384
        %2790 = vmatprep.subr.mxu0 %v2383
        %2791 = vmatpush2.msra.mxu0 %v2382
        %2792 = vmatprep.subr.mxu0 %v2381
        %2793 = vmatpush2.msra.mxu0 %v2380
        %2794 = vmatprep.subr.mxu0 %v2379
        %2795 = vmatpush2.msra.mxu0 %v2378
        %2796 = vmatprep.mubr.f32.mxu0 %v2205
        %2797 = vmatmul.mubr.f32.gmra.mxu0 %v2204
        %v2798 = vpop.f32.mrf.mxu0
        %v2799 = vadd.f32 %v2638, %v2798
        %v2800 = vpop.f32.mrf.mxu0
        %v2801 = vadd.f32 %v2640, %v2800
        %2802 = vmatprep.mubr.f32.mxu0 %v2210
        %2803 = vmatmul.mubr.f32.gmra.mxu0 %v2209
        %v2804 = vpop.f32.mrf.mxu0
        %v2805 = vadd.f32 %v2644, %v2804
        %v2806 = vpop.f32.mrf.mxu0
        %v2807 = vadd.f32 %v2646, %v2806
        %2808 = vmatprep.mubr.f32.mxu0 %v2215
        %2809 = vmatmul.mubr.f32.gmra.mxu0 %v2214
        %v2810 = vpop.f32.mrf.mxu0
        %v2811 = vadd.f32 %v2650, %v2810
        %v2812 = vpop.f32.mrf.mxu0
        %v2813 = vadd.f32 %v2652, %v2812
        %2814 = vmatprep.mubr.f32.mxu0 %v2220
        %2815 = vmatmul.mubr.f32.gmra.mxu0 %v2219
        %v2816 = vpop.f32.mrf.mxu0
        %v2817 = vadd.f32 %v2656, %v2816
        %v2818 = vpop.f32.mrf.mxu0
        %v2819 = vadd.f32 %v2658, %v2818
        %2820 = vmatprep.mubr.f32.mxu0 %v2225
        %2821 = vmatmul.mubr.f32.gmra.mxu0 %v2224
        %v2822 = vpop.f32.mrf.mxu0
        %v2823 = vadd.f32 %v2662, %v2822
        %v2824 = vpop.f32.mrf.mxu0
        %v2825 = vadd.f32 %v2664, %v2824
        %2826 = vmatprep.mubr.f32.mxu0 %v2230
        %2827 = vmatmul.mubr.f32.gmra.mxu0 %v2229
        %v2828 = vpop.f32.mrf.mxu0
        %v2829 = vadd.f32 %v2668, %v2828
        %v2830 = vpop.f32.mrf.mxu0
        %v2831 = vadd.f32 %v2670, %v2830
        %2832 = vmatprep.mubr.f32.mxu0 %v2235
        %2833 = vmatmul.mubr.f32.gmra.mxu0 %v2234
        %v2834 = vpop.f32.mrf.mxu0
        %v2835 = vadd.f32 %v2674, %v2834
        %v2836 = vpop.f32.mrf.mxu0
        %v2837 = vadd.f32 %v2676, %v2836
        %2838 = vmatprep.mubr.f32.mxu0 %v2240
        %2839 = vmatmul.mubr.f32.gmra.mxu0 %v2239
        %v2840 = vpop.f32.mrf.mxu0
        %v2841 = vadd.f32 %v2680, %v2840
        %v2842 = vpop.f32.mrf.mxu0
        %v2843 = vadd.f32 %v2682, %v2842
        %2844 = vmatprep.mubr.f32.mxu0 %v2245
        %2845 = vmatmul.mubr.f32.gmra.mxu0 %v2244
        %v2846 = vpop.f32.mrf.mxu0
        %v2847 = vadd.f32 %v2686, %v2846
        %v2848 = vpop.f32.mrf.mxu0
        %v2849 = vadd.f32 %v2688, %v2848
        %2850 = vmatprep.mubr.f32.mxu0 %v2250
        %2851 = vmatmul.mubr.f32.gmra.mxu0 %v2249
        %v2852 = vpop.f32.mrf.mxu0
        %v2853 = vadd.f32 %v2692, %v2852
        %v2854 = vpop.f32.mrf.mxu0
        %v2855 = vadd.f32 %v2694, %v2854
        %2856 = vmatprep.mubr.f32.mxu0 %v2255
        %2857 = vmatmul.mubr.f32.gmra.mxu0 %v2254
        %v2858 = vpop.f32.mrf.mxu0
        %v2859 = vadd.f32 %v2698, %v2858
        %v2860 = vpop.f32.mrf.mxu0
        %v2861 = vadd.f32 %v2700, %v2860
        %2862 = vmatprep.mubr.f32.mxu0 %v2260
        %2863 = vmatmul.mubr.f32.gmra.mxu0 %v2259
        %v2864 = vpop.f32.mrf.mxu0
        %v2865 = vadd.f32 %v2704, %v2864
        %v2866 = vpop.f32.mrf.mxu0
        %v2867 = vadd.f32 %v2706, %v2866
        %2868 = vmatprep.mubr.f32.mxu0 %v2265
        %2869 = vmatmul.mubr.f32.gmra.mxu0 %v2264
        %v2870 = vpop.f32.mrf.mxu0
        %v2871 = vadd.f32 %v2710, %v2870
        %v2872 = vpop.f32.mrf.mxu0
        %v2873 = vadd.f32 %v2712, %v2872
        %2874 = vmatprep.mubr.f32.mxu0 %v2270
        %2875 = vmatmul.mubr.f32.gmra.mxu0 %v2269
        %v2876 = vpop.f32.mrf.mxu0
        %v2877 = vadd.f32 %v2716, %v2876
        %v2878 = vpop.f32.mrf.mxu0
        %v2879 = vadd.f32 %v2718, %v2878
        %2880 = vmatprep.mubr.f32.mxu0 %v2275
        %2881 = vmatmul.mubr.f32.gmra.mxu0 %v2274
        %v2882 = vpop.f32.mrf.mxu0
        %v2883 = vadd.f32 %v2722, %v2882
        %v2884 = vpop.f32.mrf.mxu0
        %v2885 = vadd.f32 %v2724, %v2884
        %2886 = vmatprep.mubr.f32.mxu0 %v2280
        %2887 = vmatmul.mubr.f32.gmra.mxu0 %v2279
        %v2888 = vpop.f32.mrf.mxu0
        %v2889 = vadd.f32 %v2728, %v2888
        %v2890 = vpop.f32.mrf.mxu0
        %v2891 = vadd.f32 %v2730, %v2890
        %2892 = vdwg.mxu0
        %2893 = vmatprep.subr.mxu0 0.0
        %2894 = vmatpush1.msra.mxu0 0.0
        %2895 = vmatprep.subr.mxu0 0.0
        %2896 = vmatpush1.msra.mxu0 0.0
        %2897 = vmatprep.subr.mxu0 0.0
        %2898 = vmatpush1.msra.mxu0 0.0
        %2899 = vmatprep.subr.mxu0 0.0
        %2900 = vmatpush1.msra.mxu0 0.0
        %2901 = vmatprep.subr.mxu0 0.0
        %2902 = vmatpush1.msra.mxu0 0.0
        %2903 = vmatprep.subr.mxu0 0.0
        %2904 = vmatpush1.msra.mxu0 0.0
        %2905 = vmatprep.subr.mxu0 0.0
        %2906 = vmatpush1.msra.mxu0 0.0
        %2907 = vmatprep.subr.mxu0 0.0
        %2908 = vmatpush1.msra.mxu0 0.0
        %2909 = vmatprep.subr.mxu0 %v2425
        %2910 = vmatpush1.msra.mxu0 %v2424
        %2911 = vmatprep.subr.mxu0 %v2423
        %2912 = vmatpush1.msra.mxu0 %v2422
        %2913 = vmatprep.subr.mxu0 %v2421
        %2914 = vmatpush1.msra.mxu0 %v2420
        %2915 = vmatprep.subr.mxu0 %v2419
        %2916 = vmatpush1.msra.mxu0 %v2418
        %2917 = vmatprep.subr.mxu0 %v2417
        %2918 = vmatpush1.msra.mxu0 %v2416
        %2919 = vmatprep.subr.mxu0 %v2415
        %2920 = vmatpush1.msra.mxu0 %v2414
        %2921 = vmatprep.subr.mxu0 %v2413
        %2922 = vmatpush1.msra.mxu0 %v2412
        %2923 = vmatprep.subr.mxu0 %v2411
        %2924 = vmatpush1.msra.mxu0 %v2410
        %2925 = vmatprep.subr.mxu0 0.0
        %2926 = vmatpush2.msra.mxu0 0.0
        %2927 = vmatprep.subr.mxu0 0.0
        %2928 = vmatpush2.msra.mxu0 0.0
        %2929 = vmatprep.subr.mxu0 0.0
        %2930 = vmatpush2.msra.mxu0 0.0
        %2931 = vmatprep.subr.mxu0 0.0
        %2932 = vmatpush2.msra.mxu0 0.0
        %2933 = vmatprep.subr.mxu0 0.0
        %2934 = vmatpush2.msra.mxu0 0.0
        %2935 = vmatprep.subr.mxu0 0.0
        %2936 = vmatpush2.msra.mxu0 0.0
        %2937 = vmatprep.subr.mxu0 0.0
        %2938 = vmatpush2.msra.mxu0 0.0
        %2939 = vmatprep.subr.mxu0 0.0
        %2940 = vmatpush2.msra.mxu0 0.0
        %2941 = vmatprep.subr.mxu0 0.0
        %2942 = vmatpush2.msra.mxu0 0.0
        %2943 = vmatprep.subr.mxu0 0.0
        %2944 = vmatpush2.msra.mxu0 0.0
        %2945 = vmatprep.subr.mxu0 0.0
        %2946 = vmatpush2.msra.mxu0 0.0
        %2947 = vmatprep.subr.mxu0 0.0
        %2948 = vmatpush2.msra.mxu0 0.0
        %2949 = vmatprep.subr.mxu0 0.0
        %2950 = vmatpush2.msra.mxu0 0.0
        %2951 = vmatprep.subr.mxu0 0.0
        %2952 = vmatpush2.msra.mxu0 0.0
        %2953 = vmatprep.subr.mxu0 0.0
        %2954 = vmatpush2.msra.mxu0 0.0
        %2955 = vmatprep.subr.mxu0 0.0
        %2956 = vmatpush2.msra.mxu0 0.0
        %2957 = vmatprep.mubr.f32.mxu0 0.0
        %2958 = vmatmul.mubr.f32.gmra.mxu0 %v2524
        %v2959 = vpop.f32.mrf.mxu0
        %v2960 = vadd.f32 %v2799, %v2959
        %v2961 = vpop.f32.mrf.mxu0
        %v2962 = vadd.f32 %v2801, %v2961
        %2963 = vmatprep.mubr.f32.mxu0 0.0
        %2964 = vmatmul.mubr.f32.gmra.mxu0 %v2527
        %v2965 = vpop.f32.mrf.mxu0
        %v2966 = vadd.f32 %v2805, %v2965
        %v2967 = vpop.f32.mrf.mxu0
        %v2968 = vadd.f32 %v2807, %v2967
        %2969 = vmatprep.mubr.f32.mxu0 0.0
        %2970 = vmatmul.mubr.f32.gmra.mxu0 %v2530
        %v2971 = vpop.f32.mrf.mxu0
        %v2972 = vadd.f32 %v2811, %v2971
        %v2973 = vpop.f32.mrf.mxu0
        %v2974 = vadd.f32 %v2813, %v2973
        %2975 = vmatprep.mubr.f32.mxu0 0.0
        %2976 = vmatmul.mubr.f32.gmra.mxu0 %v2533
        %v2977 = vpop.f32.mrf.mxu0
        %v2978 = vadd.f32 %v2817, %v2977
        %v2979 = vpop.f32.mrf.mxu0
        %v2980 = vadd.f32 %v2819, %v2979
        %2981 = vmatprep.mubr.f32.mxu0 0.0
        %2982 = vmatmul.mubr.f32.gmra.mxu0 %v2536
        %v2983 = vpop.f32.mrf.mxu0
        %v2984 = vadd.f32 %v2823, %v2983
        %v2985 = vpop.f32.mrf.mxu0
        %v2986 = vadd.f32 %v2825, %v2985
        %2987 = vmatprep.mubr.f32.mxu0 0.0
        %2988 = vmatmul.mubr.f32.gmra.mxu0 %v2539
        %v2989 = vpop.f32.mrf.mxu0
        %v2990 = vadd.f32 %v2829, %v2989
        %v2991 = vpop.f32.mrf.mxu0
        %v2992 = vadd.f32 %v2831, %v2991
        %2993 = vmatprep.mubr.f32.mxu0 0.0
        %2994 = vmatmul.mubr.f32.gmra.mxu0 %v2542
        %v2995 = vpop.f32.mrf.mxu0
        %v2996 = vadd.f32 %v2835, %v2995
        %v2997 = vpop.f32.mrf.mxu0
        %v2998 = vadd.f32 %v2837, %v2997
        %2999 = vmatprep.mubr.f32.mxu0 0.0
        %3000 = vmatmul.mubr.f32.gmra.mxu0 %v2545
        %v3001 = vpop.f32.mrf.mxu0
        %v3002 = vadd.f32 %v2841, %v3001
        %v3003 = vpop.f32.mrf.mxu0
        %v3004 = vadd.f32 %v2843, %v3003
        %3005 = vmatprep.mubr.f32.mxu0 0.0
        %3006 = vmatmul.mubr.f32.gmra.mxu0 %v2548
        %v3007 = vpop.f32.mrf.mxu0
        %v3008 = vadd.f32 %v2847, %v3007
        %v3009 = vpop.f32.mrf.mxu0
        %v3010 = vadd.f32 %v2849, %v3009
        %3011 = vmatprep.mubr.f32.mxu0 0.0
        %3012 = vmatmul.mubr.f32.gmra.mxu0 %v2551
        %v3013 = vpop.f32.mrf.mxu0
        %v3014 = vadd.f32 %v2853, %v3013
        %v3015 = vpop.f32.mrf.mxu0
        %v3016 = vadd.f32 %v2855, %v3015
        %3017 = vmatprep.mubr.f32.mxu0 0.0
        %3018 = vmatmul.mubr.f32.gmra.mxu0 %v2554
        %v3019 = vpop.f32.mrf.mxu0
        %v3020 = vadd.f32 %v2859, %v3019
        %v3021 = vpop.f32.mrf.mxu0
        %v3022 = vadd.f32 %v2861, %v3021
        %3023 = vmatprep.mubr.f32.mxu0 0.0
        %3024 = vmatmul.mubr.f32.gmra.mxu0 %v2557
        %v3025 = vpop.f32.mrf.mxu0
        %v3026 = vadd.f32 %v2865, %v3025
        %v3027 = vpop.f32.mrf.mxu0
        %v3028 = vadd.f32 %v2867, %v3027
        %3029 = vmatprep.mubr.f32.mxu0 0.0
        %3030 = vmatmul.mubr.f32.gmra.mxu0 %v2560
        %v3031 = vpop.f32.mrf.mxu0
        %v3032 = vadd.f32 %v2871, %v3031
        %v3033 = vpop.f32.mrf.mxu0
        %v3034 = vadd.f32 %v2873, %v3033
        %3035 = vmatprep.mubr.f32.mxu0 0.0
        %3036 = vmatmul.mubr.f32.gmra.mxu0 %v2563
        %v3037 = vpop.f32.mrf.mxu0
        %v3038 = vadd.f32 %v2877, %v3037
        %v3039 = vpop.f32.mrf.mxu0
        %v3040 = vadd.f32 %v2879, %v3039
        %3041 = vmatprep.mubr.f32.mxu0 0.0
        %3042 = vmatmul.mubr.f32.gmra.mxu0 %v2566
        %v3043 = vpop.f32.mrf.mxu0
        %v3044 = vadd.f32 %v2883, %v3043
        %v3045 = vpop.f32.mrf.mxu0
        %v3046 = vadd.f32 %v2885, %v3045
        %3047 = vmatprep.mubr.f32.mxu0 0.0
        %3048 = vmatmul.mubr.f32.gmra.mxu0 %v2569
        %v3049 = vpop.f32.mrf.mxu0
        %v3050 = vadd.f32 %v2889, %v3049
        %v3051 = vpop.f32.mrf.mxu0
        %v3052 = vadd.f32 %v2891, %v3051
        %3053 = vdwg.mxu0
        %vm3054 = vcmp.ge.f32.partialorder %v2960, 0.0
        %vm3055 = vcmp.ge.f32.partialorder %v2962, 0.0
        %vm3056 = vcmp.ge.f32.partialorder %v2966, 0.0
        %vm3057 = vcmp.ge.f32.partialorder %v2968, 0.0
        %vm3058 = vcmp.ge.f32.partialorder %v2972, 0.0
        %vm3059 = vcmp.ge.f32.partialorder %v2974, 0.0
        %vm3060 = vcmp.ge.f32.partialorder %v2978, 0.0
        %vm3061 = vcmp.ge.f32.partialorder %v2980, 0.0
        %vm3062 = vcmp.ge.f32.partialorder %v2984, 0.0
        %vm3063 = vcmp.ge.f32.partialorder %v2986, 0.0
        %vm3064 = vcmp.ge.f32.partialorder %v2990, 0.0
        %vm3065 = vcmp.ge.f32.partialorder %v2992, 0.0
        %vm3066 = vcmp.ge.f32.partialorder %v2996, 0.0
        %vm3067 = vcmp.ge.f32.partialorder %v2998, 0.0
        %vm3068 = vcmp.ge.f32.partialorder %v3002, 0.0
        %vm3069 = vcmp.ge.f32.partialorder %v3004, 0.0
        %vm3070 = vcmp.ge.f32.partialorder %v3008, 0.0
        %vm3071 = vcmp.ge.f32.partialorder %v3010, 0.0
        %vm3072 = vcmp.ge.f32.partialorder %v3014, 0.0
        %vm3073 = vcmp.ge.f32.partialorder %v3016, 0.0
        %vm3074 = vcmp.ge.f32.partialorder %v3020, 0.0
        %vm3075 = vcmp.ge.f32.partialorder %v3022, 0.0
        %vm3076 = vcmp.ge.f32.partialorder %v3026, 0.0
        %vm3077 = vcmp.ge.f32.partialorder %v3028, 0.0
        %vm3078 = vcmp.ge.f32.partialorder %v3032, 0.0
        %vm3079 = vcmp.ge.f32.partialorder %v3034, 0.0
        %vm3080 = vcmp.ge.f32.partialorder %v3038, 0.0
        %vm3081 = vcmp.ge.f32.partialorder %v3040, 0.0
        %vm3082 = vcmp.ge.f32.partialorder %v3044, 0.0
        %vm3083 = vcmp.ge.f32.partialorder %v3046, 0.0
        %vm3084 = vcmp.ge.f32.partialorder %v3050, 0.0
        %vm3085 = vcmp.ge.f32.partialorder %v3052, 0.0
        %v3086 = vmul.f32 %v2960, 0.01
        %v3087 = vmul.f32 %v2962, 0.01
        %v3088 = vmul.f32 %v2966, 0.01
        %v3089 = vmul.f32 %v2968, 0.01
        %v3090 = vmul.f32 %v2972, 0.01
        %v3091 = vmul.f32 %v2974, 0.01
        %v3092 = vmul.f32 %v2978, 0.01
        %v3093 = vmul.f32 %v2980, 0.01
        %v3094 = vmul.f32 %v2984, 0.01
        %v3095 = vmul.f32 %v2986, 0.01
        %v3096 = vmul.f32 %v2990, 0.01
        %v3097 = vmul.f32 %v2992, 0.01
        %v3098 = vmul.f32 %v2996, 0.01
        %v3099 = vmul.f32 %v2998, 0.01
        %v3100 = vmul.f32 %v3002, 0.01
        %v3101 = vmul.f32 %v3004, 0.01
        %v3102 = vmul.f32 %v3008, 0.01
        %v3103 = vmul.f32 %v3010, 0.01
        %v3104 = vmul.f32 %v3014, 0.01
        %v3105 = vmul.f32 %v3016, 0.01
        %v3106 = vmul.f32 %v3020, 0.01
        %v3107 = vmul.f32 %v3022, 0.01
        %v3108 = vmul.f32 %v3026, 0.01
        %v3109 = vmul.f32 %v3028, 0.01
        %v3110 = vmul.f32 %v3032, 0.01
        %v3111 = vmul.f32 %v3034, 0.01
        %v3112 = vmul.f32 %v3038, 0.01
        %v3113 = vmul.f32 %v3040, 0.01
        %v3114 = vmul.f32 %v3044, 0.01
        %v3115 = vmul.f32 %v3046, 0.01
        %v3116 = vmul.f32 %v3050, 0.01
        %v3117 = vmul.f32 %v3052, 0.01
        %v3118 = vsel %vm3054, %v2960, %v3086
        %v3119 = vsel %vm3055, %v2962, %v3087
        %v3120 = vsel %vm3056, %v2966, %v3088
        %v3121 = vsel %vm3057, %v2968, %v3089
        %v3122 = vsel %vm3058, %v2972, %v3090
        %v3123 = vsel %vm3059, %v2974, %v3091
        %v3124 = vsel %vm3060, %v2978, %v3092
        %v3125 = vsel %vm3061, %v2980, %v3093
        %v3126 = vsel %vm3062, %v2984, %v3094
        %v3127 = vsel %vm3063, %v2986, %v3095
        %v3128 = vsel %vm3064, %v2990, %v3096
        %v3129 = vsel %vm3065, %v2992, %v3097
        %v3130 = vsel %vm3066, %v2996, %v3098
        %v3131 = vsel %vm3067, %v2998, %v3099
        %v3132 = vsel %vm3068, %v3002, %v3100
        %v3133 = vsel %vm3069, %v3004, %v3101
        %v3134 = vsel %vm3070, %v3008, %v3102
        %v3135 = vsel %vm3071, %v3010, %v3103
        %v3136 = vsel %vm3072, %v3014, %v3104
        %v3137 = vsel %vm3073, %v3016, %v3105
        %v3138 = vsel %vm3074, %v3020, %v3106
        %v3139 = vsel %vm3075, %v3022, %v3107
        %v3140 = vsel %vm3076, %v3026, %v3108
        %v3141 = vsel %vm3077, %v3028, %v3109
        %v3142 = vsel %vm3078, %v3032, %v3110
        %v3143 = vsel %vm3079, %v3034, %v3111
        %v3144 = vsel %vm3080, %v3038, %v3112
        %v3145 = vsel %vm3081, %v3040, %v3113
        %v3146 = vsel %vm3082, %v3044, %v3114
        %v3147 = vsel %vm3083, %v3046, %v3115
        %v3148 = vsel %vm3084, %v3050, %v3116
        %v3149 = vsel %vm3085, %v3052, %v3117
        %3150 = vst [vmem:[#allocation2] sm:$0xff] %v3118
        %3151 = vst [vmem:[#allocation2 + $0x8] sm:$0xff] %v3119
        %3152 = vst [vmem:[#allocation2 + $0x10] sm:$0xff] %v3120
        %3153 = vst [vmem:[#allocation2 + $0x18] sm:$0xff] %v3121
        %3154 = vst [vmem:[#allocation2 + $0x20] sm:$0xff] %v3122
        %3155 = vst [vmem:[#allocation2 + $0x28] sm:$0xff] %v3123
        %3156 = vst [vmem:[#allocation2 + $0x30] sm:$0xff] %v3124
        %3157 = vst [vmem:[#allocation2 + $0x38] sm:$0xff] %v3125
        %3158 = vst [vmem:[#allocation2 + $0x40] sm:$0xff] %v3126
        %3159 = vst [vmem:[#allocation2 + $0x48] sm:$0xff] %v3127
        %3160 = vst [vmem:[#allocation2 + $0x50] sm:$0xff] %v3128
        %3161 = vst [vmem:[#allocation2 + $0x58] sm:$0xff] %v3129
        %3162 = vst [vmem:[#allocation2 + $0x60] sm:$0xff] %v3130
        %3163 = vst [vmem:[#allocation2 + $0x68] sm:$0xff] %v3131
        %3164 = vst [vmem:[#allocation2 + $0x70] sm:$0xff] %v3132
        %3165 = vst [vmem:[#allocation2 + $0x78] sm:$0xff] %v3133
        %3166 = vst [vmem:[#allocation2 + $0x80] sm:$0xff] %v3134
        %3167 = vst [vmem:[#allocation2 + $0x88] sm:$0xff] %v3135
        %3168 = vst [vmem:[#allocation2 + $0x90] sm:$0xff] %v3136
        %3169 = vst [vmem:[#allocation2 + $0x98] sm:$0xff] %v3137
        %3170 = vst [vmem:[#allocation2 + $0xa0] sm:$0xff] %v3138
        %3171 = vst [vmem:[#allocation2 + $0xa8] sm:$0xff] %v3139
        %3172 = vst [vmem:[#allocation2 + $0xb0] sm:$0xff] %v3140
        %3173 = vst [vmem:[#allocation2 + $0xb8] sm:$0xff] %v3141
        %3174 = vst [vmem:[#allocation2 + $0xc0] sm:$0xff] %v3142
        %3175 = vst [vmem:[#allocation2 + $0xc8] sm:$0xff] %v3143
        %3176 = vst [vmem:[#allocation2 + $0xd0] sm:$0xff] %v3144
        %3177 = vst [vmem:[#allocation2 + $0xd8] sm:$0xff] %v3145
        %3178 = vst [vmem:[#allocation2 + $0xe0] sm:$0xff] %v3146
        %3179 = vst [vmem:[#allocation2 + $0xe8] sm:$0xff] %v3147
        %3180 = vst [vmem:[#allocation2 + $0xf0] sm:$0xff] %v3148
        %3181 = vst [vmem:[#allocation2 + $0xf8] sm:$0xff] %v3149
        %v3182 = vld [vmem:[#allocation2] sm:$0xff]
        %v3183 = vld [vmem:[#allocation2 + $0x8] sm:$0xff]
        %v3184 = vld [vmem:[#allocation2 + $0x10] sm:$0xff]
        %v3185 = vld [vmem:[#allocation2 + $0x18] sm:$0xff]
        %v3186 = vld [vmem:[#allocation2 + $0x20] sm:$0xff]
        %v3187 = vld [vmem:[#allocation2 + $0x28] sm:$0xff]
        %v3188 = vld [vmem:[#allocation2 + $0x30] sm:$0xff]
        %v3189 = vld [vmem:[#allocation2 + $0x38] sm:$0xff]
        %v3190 = vld [vmem:[#allocation2 + $0x40] sm:$0xff]
        %v3191 = vld [vmem:[#allocation2 + $0x48] sm:$0xff]
        %v3192 = vld [vmem:[#allocation2 + $0x50] sm:$0xff]
        %v3193 = vld [vmem:[#allocation2 + $0x58] sm:$0xff]
        %v3194 = vld [vmem:[#allocation2 + $0x60] sm:$0xff]
        %v3195 = vld [vmem:[#allocation2 + $0x68] sm:$0xff]
        %v3196 = vld [vmem:[#allocation2 + $0x70] sm:$0xff]
        %v3197 = vld [vmem:[#allocation2 + $0x78] sm:$0xff]
        %v3198 = vld [vmem:[#allocation2 + $0x80] sm:$0xff]
        %v3199 = vld [vmem:[#allocation2 + $0x88] sm:$0xff]
        %v3200 = vld [vmem:[#allocation2 + $0x90] sm:$0xff]
        %v3201 = vld [vmem:[#allocation2 + $0x98] sm:$0xff]
        %v3202 = vld [vmem:[#allocation2 + $0xa0] sm:$0xff]
        %v3203 = vld [vmem:[#allocation2 + $0xa8] sm:$0xff]
        %v3204 = vld [vmem:[#allocation2 + $0xb0] sm:$0xff]
        %v3205 = vld [vmem:[#allocation2 + $0xb8] sm:$0xff]
        %v3206 = vld [vmem:[#allocation2 + $0xc0] sm:$0xff]
        %v3207 = vld [vmem:[#allocation2 + $0xc8] sm:$0xff]
        %v3208 = vld [vmem:[#allocation2 + $0xd0] sm:$0xff]
        %v3209 = vld [vmem:[#allocation2 + $0xd8] sm:$0xff]
        %v3210 = vld [vmem:[#allocation2 + $0xe0] sm:$0xff]
        %v3211 = vld [vmem:[#allocation2 + $0xe8] sm:$0xff]
        %v3212 = vld [vmem:[#allocation2 + $0xf0] sm:$0xff]
        %v3213 = vld [vmem:[#allocation2 + $0xf8] sm:$0xff]
        %3214 = vrot.lane.b32.xlu0 %v3182, 17
        %v3215 = vpop.permute.xlu0 %3214
        %3216 = vrot.lane.b32.xlu0 %v3184, 17
        %v3217 = vpop.permute.xlu0 %3216
        %3218 = vrot.lane.b32.xlu0 %v3186, 17
        %v3219 = vpop.permute.xlu0 %3218
        %3220 = vrot.lane.b32.xlu0 %v3188, 17
        %v3221 = vpop.permute.xlu0 %3220
        %3222 = vrot.lane.b32.xlu0 %v3190, 17
        %v3223 = vpop.permute.xlu0 %3222
        %3224 = vrot.lane.b32.xlu0 %v3192, 17
        %v3225 = vpop.permute.xlu0 %3224
        %3226 = vrot.lane.b32.xlu0 %v3194, 17
        %v3227 = vpop.permute.xlu0 %3226
        %3228 = vrot.lane.b32.xlu0 %v3196, 17
        %v3229 = vpop.permute.xlu0 %3228
        %3230 = vrot.lane.b32.xlu0 %v3198, 17
        %v3231 = vpop.permute.xlu0 %3230
        %3232 = vrot.lane.b32.xlu0 %v3200, 17
        %v3233 = vpop.permute.xlu0 %3232
        %3234 = vrot.lane.b32.xlu0 %v3202, 17
        %v3235 = vpop.permute.xlu0 %3234
        %3236 = vrot.lane.b32.xlu0 %v3204, 17
        %v3237 = vpop.permute.xlu0 %3236
        %3238 = vrot.lane.b32.xlu0 %v3206, 17
        %v3239 = vpop.permute.xlu0 %3238
        %3240 = vrot.lane.b32.xlu0 %v3208, 17
        %v3241 = vpop.permute.xlu0 %3240
        %3242 = vrot.lane.b32.xlu0 %v3210, 17
        %v3243 = vpop.permute.xlu0 %3242
        %3244 = vrot.lane.b32.xlu0 %v3212, 17
        %v3245 = vpop.permute.xlu0 %3244
        %3246 = vrot.lane.b32.xlu0 %v3183, 17
        %v3247 = vpop.permute.xlu0 %3246
        %3248 = vrot.lane.b32.xlu0 %v3185, 17
        %v3249 = vpop.permute.xlu0 %3248
        %3250 = vrot.lane.b32.xlu0 %v3187, 17
        %v3251 = vpop.permute.xlu0 %3250
        %3252 = vrot.lane.b32.xlu0 %v3189, 17
        %v3253 = vpop.permute.xlu0 %3252
        %3254 = vrot.lane.b32.xlu0 %v3191, 17
        %v3255 = vpop.permute.xlu0 %3254
        %3256 = vrot.lane.b32.xlu0 %v3193, 17
        %v3257 = vpop.permute.xlu0 %3256
        %3258 = vrot.lane.b32.xlu0 %v3195, 17
        %v3259 = vpop.permute.xlu0 %3258
        %3260 = vrot.lane.b32.xlu0 %v3197, 17
        %v3261 = vpop.permute.xlu0 %3260
        %3262 = vrot.lane.b32.xlu0 %v3199, 17
        %v3263 = vpop.permute.xlu0 %3262
        %3264 = vrot.lane.b32.xlu0 %v3201, 17
        %v3265 = vpop.permute.xlu0 %3264
        %3266 = vrot.lane.b32.xlu0 %v3203, 17
        %v3267 = vpop.permute.xlu0 %3266
        %3268 = vrot.lane.b32.xlu0 %v3205, 17
        %v3269 = vpop.permute.xlu0 %3268
        %3270 = vrot.lane.b32.xlu0 %v3207, 17
        %v3271 = vpop.permute.xlu0 %3270
        %3272 = vrot.lane.b32.xlu0 %v3209, 17
        %v3273 = vpop.permute.xlu0 %3272
        %3274 = vrot.lane.b32.xlu0 %v3211, 17
        %v3275 = vpop.permute.xlu0 %3274
        %3276 = vrot.lane.b32.xlu0 %v3213, 17
        %v3277 = vpop.permute.xlu0 %3276
        %v3278 = vsel %vm421, %v3215, %v3247
        %v3279 = vsel %vm421, %v3217, %v3249
        %v3280 = vsel %vm421, %v3219, %v3251
        %v3281 = vsel %vm421, %v3221, %v3253
        %v3282 = vsel %vm421, %v3223, %v3255
        %v3283 = vsel %vm421, %v3225, %v3257
        %v3284 = vsel %vm421, %v3227, %v3259
        %v3285 = vsel %vm421, %v3229, %v3261
        %v3286 = vsel %vm421, %v3231, %v3263
        %v3287 = vsel %vm421, %v3233, %v3265
        %v3288 = vsel %vm421, %v3235, %v3267
        %v3289 = vsel %vm421, %v3237, %v3269
        %v3290 = vsel %vm421, %v3239, %v3271
        %v3291 = vsel %vm421, %v3241, %v3273
        %v3292 = vsel %vm421, %v3243, %v3275
        %v3293 = vsel %vm421, %v3245, %v3277
        %v3294 = vsel %vm421, %v3247, %v3215
        %v3295 = vsel %vm421, %v3249, %v3217
        %v3296 = vsel %vm421, %v3251, %v3219
        %v3297 = vsel %vm421, %v3253, %v3221
        %v3298 = vsel %vm421, %v3255, %v3223
        %v3299 = vsel %vm421, %v3257, %v3225
        %v3300 = vsel %vm421, %v3259, %v3227
        %v3301 = vsel %vm421, %v3261, %v3229
        %v3302 = vsel %vm421, %v3263, %v3231
        %v3303 = vsel %vm421, %v3265, %v3233
        %v3304 = vsel %vm421, %v3267, %v3235
        %v3305 = vsel %vm421, %v3269, %v3237
        %v3306 = vsel %vm421, %v3271, %v3239
        %v3307 = vsel %vm421, %v3273, %v3241
        %v3308 = vsel %vm421, %v3275, %v3243
        %v3309 = vsel %vm421, %v3277, %v3245
        %v3310 = vsel %vm432, %v3294, 0.0
        %v3311 = vsel %vm433, %v3278, 0.0
        %v3312 = vsel %vm432, %v3295, 0.0
        %v3313 = vsel %vm433, %v3279, 0.0
        %v3314 = vsel %vm432, %v3296, 0.0
        %v3315 = vsel %vm433, %v3280, 0.0
        %v3316 = vsel %vm432, %v3297, 0.0
        %v3317 = vsel %vm433, %v3281, 0.0
        %v3318 = vsel %vm432, %v3298, 0.0
        %v3319 = vsel %vm433, %v3282, 0.0
        %v3320 = vsel %vm432, %v3299, 0.0
        %v3321 = vsel %vm433, %v3283, 0.0
        %v3322 = vsel %vm432, %v3300, 0.0
        %v3323 = vsel %vm433, %v3284, 0.0
        %v3324 = vsel %vm432, %v3301, 0.0
        %v3325 = vsel %vm433, %v3285, 0.0
        %v3326 = vsel %vm432, %v3302, 0.0
        %v3327 = vsel %vm433, %v3286, 0.0
        %v3328 = vsel %vm432, %v3303, 0.0
        %v3329 = vsel %vm433, %v3287, 0.0
        %v3330 = vsel %vm432, %v3304, 0.0
        %v3331 = vsel %vm433, %v3288, 0.0
        %v3332 = vsel %vm432, %v3305, 0.0
        %v3333 = vsel %vm433, %v3289, 0.0
        %v3334 = vsel %vm432, %v3306, 0.0
        %v3335 = vsel %vm433, %v3290, 0.0
        %v3336 = vsel %vm432, %v3307, 0.0
        %v3337 = vsel %vm433, %v3291, 0.0
        %v3338 = vsel %vm432, %v3308, 0.0
        %v3339 = vsel %vm433, %v3292, 0.0
        %v3340 = vsel %vm432, %v3309, 0.0
        %v3341 = vsel %vm433, %v3293, 0.0
        %3342 = vst [vmem:[#allocation3] sm:$0xff] %v3310
        %3343 = vst [vmem:[#allocation3 + $0x8] sm:$0xff] %v3311
        %3344 = vst [vmem:[#allocation3 + $0x10] sm:$0xff] %v3312
        %3345 = vst [vmem:[#allocation3 + $0x18] sm:$0xff] %v3313
        %3346 = vst [vmem:[#allocation3 + $0x20] sm:$0xff] %v3314
        %3347 = vst [vmem:[#allocation3 + $0x28] sm:$0xff] %v3315
        %3348 = vst [vmem:[#allocation3 + $0x30] sm:$0xff] %v3316
        %3349 = vst [vmem:[#allocation3 + $0x38] sm:$0xff] %v3317
        %3350 = vst [vmem:[#allocation3 + $0x40] sm:$0xff] %v3318
        %3351 = vst [vmem:[#allocation3 + $0x48] sm:$0xff] %v3319
        %3352 = vst [vmem:[#allocation3 + $0x50] sm:$0xff] %v3320
        %3353 = vst [vmem:[#allocation3 + $0x58] sm:$0xff] %v3321
        %3354 = vst [vmem:[#allocation3 + $0x60] sm:$0xff] %v3322
        %3355 = vst [vmem:[#allocation3 + $0x68] sm:$0xff] %v3323
        %3356 = vst [vmem:[#allocation3 + $0x70] sm:$0xff] %v3324
        %3357 = vst [vmem:[#allocation3 + $0x78] sm:$0xff] %v3325
        %3358 = vst [vmem:[#allocation3 + $0x80] sm:$0xff] %v3326
        %3359 = vst [vmem:[#allocation3 + $0x88] sm:$0xff] %v3327
        %3360 = vst [vmem:[#allocation3 + $0x90] sm:$0xff] %v3328
        %3361 = vst [vmem:[#allocation3 + $0x98] sm:$0xff] %v3329
        %3362 = vst [vmem:[#allocation3 + $0xa0] sm:$0xff] %v3330
        %3363 = vst [vmem:[#allocation3 + $0xa8] sm:$0xff] %v3331
        %3364 = vst [vmem:[#allocation3 + $0xb0] sm:$0xff] %v3332
        %3365 = vst [vmem:[#allocation3 + $0xb8] sm:$0xff] %v3333
        %3366 = vst [vmem:[#allocation3 + $0xc0] sm:$0xff] %v3334
        %3367 = vst [vmem:[#allocation3 + $0xc8] sm:$0xff] %v3335
        %3368 = vst [vmem:[#allocation3 + $0xd0] sm:$0xff] %v3336
        %3369 = vst [vmem:[#allocation3 + $0xd8] sm:$0xff] %v3337
        %3370 = vst [vmem:[#allocation3 + $0xe0] sm:$0xff] %v3338
        %3371 = vst [vmem:[#allocation3 + $0xe8] sm:$0xff] %v3339
        %3372 = vst [vmem:[#allocation3 + $0xf0] sm:$0xff] %v3340
        %3373 = vst [vmem:[#allocation3 + $0xf8] sm:$0xff] %v3341
        %3374 = vrot.lane.b32.xlu0 %v3182, 16
        %v3375 = vpop.permute.xlu0 %3374
        %3376 = vrot.lane.b32.xlu0 %v3184, 16
        %v3377 = vpop.permute.xlu0 %3376
        %3378 = vrot.lane.b32.xlu0 %v3186, 16
        %v3379 = vpop.permute.xlu0 %3378
        %3380 = vrot.lane.b32.xlu0 %v3188, 16
        %v3381 = vpop.permute.xlu0 %3380
        %3382 = vrot.lane.b32.xlu0 %v3190, 16
        %v3383 = vpop.permute.xlu0 %3382
        %3384 = vrot.lane.b32.xlu0 %v3192, 16
        %v3385 = vpop.permute.xlu0 %3384
        %3386 = vrot.lane.b32.xlu0 %v3194, 16
        %v3387 = vpop.permute.xlu0 %3386
        %3388 = vrot.lane.b32.xlu0 %v3196, 16
        %v3389 = vpop.permute.xlu0 %3388
        %3390 = vrot.lane.b32.xlu0 %v3198, 16
        %v3391 = vpop.permute.xlu0 %3390
        %3392 = vrot.lane.b32.xlu0 %v3200, 16
        %v3393 = vpop.permute.xlu0 %3392
        %3394 = vrot.lane.b32.xlu0 %v3202, 16
        %v3395 = vpop.permute.xlu0 %3394
        %3396 = vrot.lane.b32.xlu0 %v3204, 16
        %v3397 = vpop.permute.xlu0 %3396
        %3398 = vrot.lane.b32.xlu0 %v3206, 16
        %v3399 = vpop.permute.xlu0 %3398
        %3400 = vrot.lane.b32.xlu0 %v3208, 16
        %v3401 = vpop.permute.xlu0 %3400
        %3402 = vrot.lane.b32.xlu0 %v3210, 16
        %v3403 = vpop.permute.xlu0 %3402
        %3404 = vrot.lane.b32.xlu0 %v3212, 16
        %v3405 = vpop.permute.xlu0 %3404
        %3406 = vrot.lane.b32.xlu0 %v3183, 16
        %v3407 = vpop.permute.xlu0 %3406
        %3408 = vrot.lane.b32.xlu0 %v3185, 16
        %v3409 = vpop.permute.xlu0 %3408
        %3410 = vrot.lane.b32.xlu0 %v3187, 16
        %v3411 = vpop.permute.xlu0 %3410
        %3412 = vrot.lane.b32.xlu0 %v3189, 16
        %v3413 = vpop.permute.xlu0 %3412
        %3414 = vrot.lane.b32.xlu0 %v3191, 16
        %v3415 = vpop.permute.xlu0 %3414
        %3416 = vrot.lane.b32.xlu0 %v3193, 16
        %v3417 = vpop.permute.xlu0 %3416
        %3418 = vrot.lane.b32.xlu0 %v3195, 16
        %v3419 = vpop.permute.xlu0 %3418
        %3420 = vrot.lane.b32.xlu0 %v3197, 16
        %v3421 = vpop.permute.xlu0 %3420
        %3422 = vrot.lane.b32.xlu0 %v3199, 16
        %v3423 = vpop.permute.xlu0 %3422
        %3424 = vrot.lane.b32.xlu0 %v3201, 16
        %v3425 = vpop.permute.xlu0 %3424
        %3426 = vrot.lane.b32.xlu0 %v3203, 16
        %v3427 = vpop.permute.xlu0 %3426
        %3428 = vrot.lane.b32.xlu0 %v3205, 16
        %v3429 = vpop.permute.xlu0 %3428
        %3430 = vrot.lane.b32.xlu0 %v3207, 16
        %v3431 = vpop.permute.xlu0 %3430
        %3432 = vrot.lane.b32.xlu0 %v3209, 16
        %v3433 = vpop.permute.xlu0 %3432
        %3434 = vrot.lane.b32.xlu0 %v3211, 16
        %v3435 = vpop.permute.xlu0 %3434
        %3436 = vrot.lane.b32.xlu0 %v3213, 16
        %v3437 = vpop.permute.xlu0 %3436
        %v3438 = vsel %vm442, %v3375, %v3407
        %v3439 = vsel %vm442, %v3377, %v3409
        %v3440 = vsel %vm442, %v3379, %v3411
        %v3441 = vsel %vm442, %v3381, %v3413
        %v3442 = vsel %vm442, %v3383, %v3415
        %v3443 = vsel %vm442, %v3385, %v3417
        %v3444 = vsel %vm442, %v3387, %v3419
        %v3445 = vsel %vm442, %v3389, %v3421
        %v3446 = vsel %vm442, %v3391, %v3423
        %v3447 = vsel %vm442, %v3393, %v3425
        %v3448 = vsel %vm442, %v3395, %v3427
        %v3449 = vsel %vm442, %v3397, %v3429
        %v3450 = vsel %vm442, %v3399, %v3431
        %v3451 = vsel %vm442, %v3401, %v3433
        %v3452 = vsel %vm442, %v3403, %v3435
        %v3453 = vsel %vm442, %v3405, %v3437
        %v3454 = vsel %vm442, %v3407, %v3375
        %v3455 = vsel %vm442, %v3409, %v3377
        %v3456 = vsel %vm442, %v3411, %v3379
        %v3457 = vsel %vm442, %v3413, %v3381
        %v3458 = vsel %vm442, %v3415, %v3383
        %v3459 = vsel %vm442, %v3417, %v3385
        %v3460 = vsel %vm442, %v3419, %v3387
        %v3461 = vsel %vm442, %v3421, %v3389
        %v3462 = vsel %vm442, %v3423, %v3391
        %v3463 = vsel %vm442, %v3425, %v3393
        %v3464 = vsel %vm442, %v3427, %v3395
        %v3465 = vsel %vm442, %v3429, %v3397
        %v3466 = vsel %vm442, %v3431, %v3399
        %v3467 = vsel %vm442, %v3433, %v3401
        %v3468 = vsel %vm442, %v3435, %v3403
        %v3469 = vsel %vm442, %v3437, %v3405
        %v3470 = vsel %vm447, %v3454, 0.0
        %v3471 = vsel %vm448, %v3438, 0.0
        %v3472 = vsel %vm447, %v3455, 0.0
        %v3473 = vsel %vm448, %v3439, 0.0
        %v3474 = vsel %vm447, %v3456, 0.0
        %v3475 = vsel %vm448, %v3440, 0.0
        %v3476 = vsel %vm447, %v3457, 0.0
        %v3477 = vsel %vm448, %v3441, 0.0
        %v3478 = vsel %vm447, %v3458, 0.0
        %v3479 = vsel %vm448, %v3442, 0.0
        %v3480 = vsel %vm447, %v3459, 0.0
        %v3481 = vsel %vm448, %v3443, 0.0
        %v3482 = vsel %vm447, %v3460, 0.0
        %v3483 = vsel %vm448, %v3444, 0.0
        %v3484 = vsel %vm447, %v3461, 0.0
        %v3485 = vsel %vm448, %v3445, 0.0
        %v3486 = vsel %vm447, %v3462, 0.0
        %v3487 = vsel %vm448, %v3446, 0.0
        %v3488 = vsel %vm447, %v3463, 0.0
        %v3489 = vsel %vm448, %v3447, 0.0
        %v3490 = vsel %vm447, %v3464, 0.0
        %v3491 = vsel %vm448, %v3448, 0.0
        %v3492 = vsel %vm447, %v3465, 0.0
        %v3493 = vsel %vm448, %v3449, 0.0
        %v3494 = vsel %vm447, %v3466, 0.0
        %v3495 = vsel %vm448, %v3450, 0.0
        %v3496 = vsel %vm447, %v3467, 0.0
        %v3497 = vsel %vm448, %v3451, 0.0
        %v3498 = vsel %vm447, %v3468, 0.0
        %v3499 = vsel %vm448, %v3452, 0.0
        %v3500 = vsel %vm447, %v3469, 0.0
        %v3501 = vsel %vm448, %v3453, 0.0
        %3502 = vst [vmem:[#allocation3 + $0x100] sm:$0xff] %v3470
        %3503 = vst [vmem:[#allocation3 + $0x108] sm:$0xff] %v3471
        %3504 = vst [vmem:[#allocation3 + $0x110] sm:$0xff] %v3472
        %3505 = vst [vmem:[#allocation3 + $0x118] sm:$0xff] %v3473
        %3506 = vst [vmem:[#allocation3 + $0x120] sm:$0xff] %v3474
        %3507 = vst [vmem:[#allocation3 + $0x128] sm:$0xff] %v3475
        %3508 = vst [vmem:[#allocation3 + $0x130] sm:$0xff] %v3476
        %3509 = vst [vmem:[#allocation3 + $0x138] sm:$0xff] %v3477
        %3510 = vst [vmem:[#allocation3 + $0x140] sm:$0xff] %v3478
        %3511 = vst [vmem:[#allocation3 + $0x148] sm:$0xff] %v3479
        %3512 = vst [vmem:[#allocation3 + $0x150] sm:$0xff] %v3480
        %3513 = vst [vmem:[#allocation3 + $0x158] sm:$0xff] %v3481
        %3514 = vst [vmem:[#allocation3 + $0x160] sm:$0xff] %v3482
        %3515 = vst [vmem:[#allocation3 + $0x168] sm:$0xff] %v3483
        %3516 = vst [vmem:[#allocation3 + $0x170] sm:$0xff] %v3484
        %3517 = vst [vmem:[#allocation3 + $0x178] sm:$0xff] %v3485
        %3518 = vst [vmem:[#allocation3 + $0x180] sm:$0xff] %v3486
        %3519 = vst [vmem:[#allocation3 + $0x188] sm:$0xff] %v3487
        %3520 = vst [vmem:[#allocation3 + $0x190] sm:$0xff] %v3488
        %3521 = vst [vmem:[#allocation3 + $0x198] sm:$0xff] %v3489
        %3522 = vst [vmem:[#allocation3 + $0x1a0] sm:$0xff] %v3490
        %3523 = vst [vmem:[#allocation3 + $0x1a8] sm:$0xff] %v3491
        %3524 = vst [vmem:[#allocation3 + $0x1b0] sm:$0xff] %v3492
        %3525 = vst [vmem:[#allocation3 + $0x1b8] sm:$0xff] %v3493
        %3526 = vst [vmem:[#allocation3 + $0x1c0] sm:$0xff] %v3494
        %3527 = vst [vmem:[#allocation3 + $0x1c8] sm:$0xff] %v3495
        %3528 = vst [vmem:[#allocation3 + $0x1d0] sm:$0xff] %v3496
        %3529 = vst [vmem:[#allocation3 + $0x1d8] sm:$0xff] %v3497
        %3530 = vst [vmem:[#allocation3 + $0x1e0] sm:$0xff] %v3498
        %3531 = vst [vmem:[#allocation3 + $0x1e8] sm:$0xff] %v3499
        %3532 = vst [vmem:[#allocation3 + $0x1f0] sm:$0xff] %v3500
        %3533 = vst [vmem:[#allocation3 + $0x1f8] sm:$0xff] %v3501
        %3534 = vrot.lane.b32.xlu0 %v3182, 15
        %v3535 = vpop.permute.xlu0 %3534
        %3536 = vrot.lane.b32.xlu0 %v3184, 15
        %v3537 = vpop.permute.xlu0 %3536
        %3538 = vrot.lane.b32.xlu0 %v3186, 15
        %v3539 = vpop.permute.xlu0 %3538
        %3540 = vrot.lane.b32.xlu0 %v3188, 15
        %v3541 = vpop.permute.xlu0 %3540
        %3542 = vrot.lane.b32.xlu0 %v3190, 15
        %v3543 = vpop.permute.xlu0 %3542
        %3544 = vrot.lane.b32.xlu0 %v3192, 15
        %v3545 = vpop.permute.xlu0 %3544
        %3546 = vrot.lane.b32.xlu0 %v3194, 15
        %v3547 = vpop.permute.xlu0 %3546
        %3548 = vrot.lane.b32.xlu0 %v3196, 15
        %v3549 = vpop.permute.xlu0 %3548
        %3550 = vrot.lane.b32.xlu0 %v3198, 15
        %v3551 = vpop.permute.xlu0 %3550
        %3552 = vrot.lane.b32.xlu0 %v3200, 15
        %v3553 = vpop.permute.xlu0 %3552
        %3554 = vrot.lane.b32.xlu0 %v3202, 15
        %v3555 = vpop.permute.xlu0 %3554
        %3556 = vrot.lane.b32.xlu0 %v3204, 15
        %v3557 = vpop.permute.xlu0 %3556
        %3558 = vrot.lane.b32.xlu0 %v3206, 15
        %v3559 = vpop.permute.xlu0 %3558
        %3560 = vrot.lane.b32.xlu0 %v3208, 15
        %v3561 = vpop.permute.xlu0 %3560
        %3562 = vrot.lane.b32.xlu0 %v3210, 15
        %v3563 = vpop.permute.xlu0 %3562
        %3564 = vrot.lane.b32.xlu0 %v3212, 15
        %v3565 = vpop.permute.xlu0 %3564
        %3566 = vrot.lane.b32.xlu0 %v3183, 15
        %v3567 = vpop.permute.xlu0 %3566
        %3568 = vrot.lane.b32.xlu0 %v3185, 15
        %v3569 = vpop.permute.xlu0 %3568
        %3570 = vrot.lane.b32.xlu0 %v3187, 15
        %v3571 = vpop.permute.xlu0 %3570
        %3572 = vrot.lane.b32.xlu0 %v3189, 15
        %v3573 = vpop.permute.xlu0 %3572
        %3574 = vrot.lane.b32.xlu0 %v3191, 15
        %v3575 = vpop.permute.xlu0 %3574
        %3576 = vrot.lane.b32.xlu0 %v3193, 15
        %v3577 = vpop.permute.xlu0 %3576
        %3578 = vrot.lane.b32.xlu0 %v3195, 15
        %v3579 = vpop.permute.xlu0 %3578
        %3580 = vrot.lane.b32.xlu0 %v3197, 15
        %v3581 = vpop.permute.xlu0 %3580
        %3582 = vrot.lane.b32.xlu0 %v3199, 15
        %v3583 = vpop.permute.xlu0 %3582
        %3584 = vrot.lane.b32.xlu0 %v3201, 15
        %v3585 = vpop.permute.xlu0 %3584
        %3586 = vrot.lane.b32.xlu0 %v3203, 15
        %v3587 = vpop.permute.xlu0 %3586
        %3588 = vrot.lane.b32.xlu0 %v3205, 15
        %v3589 = vpop.permute.xlu0 %3588
        %3590 = vrot.lane.b32.xlu0 %v3207, 15
        %v3591 = vpop.permute.xlu0 %3590
        %3592 = vrot.lane.b32.xlu0 %v3209, 15
        %v3593 = vpop.permute.xlu0 %3592
        %3594 = vrot.lane.b32.xlu0 %v3211, 15
        %v3595 = vpop.permute.xlu0 %3594
        %3596 = vrot.lane.b32.xlu0 %v3213, 15
        %v3597 = vpop.permute.xlu0 %3596
        %v3598 = vsel %vm457, %v3535, %v3567
        %v3599 = vsel %vm457, %v3537, %v3569
        %v3600 = vsel %vm457, %v3539, %v3571
        %v3601 = vsel %vm457, %v3541, %v3573
        %v3602 = vsel %vm457, %v3543, %v3575
        %v3603 = vsel %vm457, %v3545, %v3577
        %v3604 = vsel %vm457, %v3547, %v3579
        %v3605 = vsel %vm457, %v3549, %v3581
        %v3606 = vsel %vm457, %v3551, %v3583
        %v3607 = vsel %vm457, %v3553, %v3585
        %v3608 = vsel %vm457, %v3555, %v3587
        %v3609 = vsel %vm457, %v3557, %v3589
        %v3610 = vsel %vm457, %v3559, %v3591
        %v3611 = vsel %vm457, %v3561, %v3593
        %v3612 = vsel %vm457, %v3563, %v3595
        %v3613 = vsel %vm457, %v3565, %v3597
        %v3614 = vsel %vm457, %v3567, %v3535
        %v3615 = vsel %vm457, %v3569, %v3537
        %v3616 = vsel %vm457, %v3571, %v3539
        %v3617 = vsel %vm457, %v3573, %v3541
        %v3618 = vsel %vm457, %v3575, %v3543
        %v3619 = vsel %vm457, %v3577, %v3545
        %v3620 = vsel %vm457, %v3579, %v3547
        %v3621 = vsel %vm457, %v3581, %v3549
        %v3622 = vsel %vm457, %v3583, %v3551
        %v3623 = vsel %vm457, %v3585, %v3553
        %v3624 = vsel %vm457, %v3587, %v3555
        %v3625 = vsel %vm457, %v3589, %v3557
        %v3626 = vsel %vm457, %v3591, %v3559
        %v3627 = vsel %vm457, %v3593, %v3561
        %v3628 = vsel %vm457, %v3595, %v3563
        %v3629 = vsel %vm457, %v3597, %v3565
        %v3630 = vsel %vm466, %v3614, 0.0
        %v3631 = vsel %vm467, %v3598, 0.0
        %v3632 = vsel %vm466, %v3615, 0.0
        %v3633 = vsel %vm467, %v3599, 0.0
        %v3634 = vsel %vm466, %v3616, 0.0
        %v3635 = vsel %vm467, %v3600, 0.0
        %v3636 = vsel %vm466, %v3617, 0.0
        %v3637 = vsel %vm467, %v3601, 0.0
        %v3638 = vsel %vm466, %v3618, 0.0
        %v3639 = vsel %vm467, %v3602, 0.0
        %v3640 = vsel %vm466, %v3619, 0.0
        %v3641 = vsel %vm467, %v3603, 0.0
        %v3642 = vsel %vm466, %v3620, 0.0
        %v3643 = vsel %vm467, %v3604, 0.0
        %v3644 = vsel %vm466, %v3621, 0.0
        %v3645 = vsel %vm467, %v3605, 0.0
        %v3646 = vsel %vm466, %v3622, 0.0
        %v3647 = vsel %vm467, %v3606, 0.0
        %v3648 = vsel %vm466, %v3623, 0.0
        %v3649 = vsel %vm467, %v3607, 0.0
        %v3650 = vsel %vm466, %v3624, 0.0
        %v3651 = vsel %vm467, %v3608, 0.0
        %v3652 = vsel %vm466, %v3625, 0.0
        %v3653 = vsel %vm467, %v3609, 0.0
        %v3654 = vsel %vm466, %v3626, 0.0
        %v3655 = vsel %vm467, %v3610, 0.0
        %v3656 = vsel %vm466, %v3627, 0.0
        %v3657 = vsel %vm467, %v3611, 0.0
        %v3658 = vsel %vm466, %v3628, 0.0
        %v3659 = vsel %vm467, %v3612, 0.0
        %v3660 = vsel %vm466, %v3629, 0.0
        %v3661 = vsel %vm467, %v3613, 0.0
        %3662 = vst [vmem:[#allocation3 + $0x200] sm:$0xff] %v3630
        %3663 = vst [vmem:[#allocation3 + $0x208] sm:$0xff] %v3631
        %3664 = vst [vmem:[#allocation3 + $0x210] sm:$0xff] %v3632
        %3665 = vst [vmem:[#allocation3 + $0x218] sm:$0xff] %v3633
        %3666 = vst [vmem:[#allocation3 + $0x220] sm:$0xff] %v3634
        %3667 = vst [vmem:[#allocation3 + $0x228] sm:$0xff] %v3635
        %3668 = vst [vmem:[#allocation3 + $0x230] sm:$0xff] %v3636
        %3669 = vst [vmem:[#allocation3 + $0x238] sm:$0xff] %v3637
        %3670 = vst [vmem:[#allocation3 + $0x240] sm:$0xff] %v3638
        %3671 = vst [vmem:[#allocation3 + $0x248] sm:$0xff] %v3639
        %3672 = vst [vmem:[#allocation3 + $0x250] sm:$0xff] %v3640
        %3673 = vst [vmem:[#allocation3 + $0x258] sm:$0xff] %v3641
        %3674 = vst [vmem:[#allocation3 + $0x260] sm:$0xff] %v3642
        %3675 = vst [vmem:[#allocation3 + $0x268] sm:$0xff] %v3643
        %3676 = vst [vmem:[#allocation3 + $0x270] sm:$0xff] %v3644
        %3677 = vst [vmem:[#allocation3 + $0x278] sm:$0xff] %v3645
        %3678 = vst [vmem:[#allocation3 + $0x280] sm:$0xff] %v3646
        %3679 = vst [vmem:[#allocation3 + $0x288] sm:$0xff] %v3647
        %3680 = vst [vmem:[#allocation3 + $0x290] sm:$0xff] %v3648
        %3681 = vst [vmem:[#allocation3 + $0x298] sm:$0xff] %v3649
        %3682 = vst [vmem:[#allocation3 + $0x2a0] sm:$0xff] %v3650
        %3683 = vst [vmem:[#allocation3 + $0x2a8] sm:$0xff] %v3651
        %3684 = vst [vmem:[#allocation3 + $0x2b0] sm:$0xff] %v3652
        %3685 = vst [vmem:[#allocation3 + $0x2b8] sm:$0xff] %v3653
        %3686 = vst [vmem:[#allocation3 + $0x2c0] sm:$0xff] %v3654
        %3687 = vst [vmem:[#allocation3 + $0x2c8] sm:$0xff] %v3655
        %3688 = vst [vmem:[#allocation3 + $0x2d0] sm:$0xff] %v3656
        %3689 = vst [vmem:[#allocation3 + $0x2d8] sm:$0xff] %v3657
        %3690 = vst [vmem:[#allocation3 + $0x2e0] sm:$0xff] %v3658
        %3691 = vst [vmem:[#allocation3 + $0x2e8] sm:$0xff] %v3659
        %3692 = vst [vmem:[#allocation3 + $0x2f0] sm:$0xff] %v3660
        %3693 = vst [vmem:[#allocation3 + $0x2f8] sm:$0xff] %v3661
        %3694 = vrot.lane.b32.xlu0 %v3182, 1
        %v3695 = vpop.permute.xlu0 %3694
        %3696 = vrot.lane.b32.xlu0 %v3184, 1
        %v3697 = vpop.permute.xlu0 %3696
        %3698 = vrot.lane.b32.xlu0 %v3186, 1
        %v3699 = vpop.permute.xlu0 %3698
        %3700 = vrot.lane.b32.xlu0 %v3188, 1
        %v3701 = vpop.permute.xlu0 %3700
        %3702 = vrot.lane.b32.xlu0 %v3190, 1
        %v3703 = vpop.permute.xlu0 %3702
        %3704 = vrot.lane.b32.xlu0 %v3192, 1
        %v3705 = vpop.permute.xlu0 %3704
        %3706 = vrot.lane.b32.xlu0 %v3194, 1
        %v3707 = vpop.permute.xlu0 %3706
        %3708 = vrot.lane.b32.xlu0 %v3196, 1
        %v3709 = vpop.permute.xlu0 %3708
        %3710 = vrot.lane.b32.xlu0 %v3198, 1
        %v3711 = vpop.permute.xlu0 %3710
        %3712 = vrot.lane.b32.xlu0 %v3200, 1
        %v3713 = vpop.permute.xlu0 %3712
        %3714 = vrot.lane.b32.xlu0 %v3202, 1
        %v3715 = vpop.permute.xlu0 %3714
        %3716 = vrot.lane.b32.xlu0 %v3204, 1
        %v3717 = vpop.permute.xlu0 %3716
        %3718 = vrot.lane.b32.xlu0 %v3206, 1
        %v3719 = vpop.permute.xlu0 %3718
        %3720 = vrot.lane.b32.xlu0 %v3208, 1
        %v3721 = vpop.permute.xlu0 %3720
        %3722 = vrot.lane.b32.xlu0 %v3210, 1
        %v3723 = vpop.permute.xlu0 %3722
        %3724 = vrot.lane.b32.xlu0 %v3212, 1
        %v3725 = vpop.permute.xlu0 %3724
        %3726 = vrot.lane.b32.xlu0 %v3183, 1
        %v3727 = vpop.permute.xlu0 %3726
        %3728 = vrot.lane.b32.xlu0 %v3185, 1
        %v3729 = vpop.permute.xlu0 %3728
        %3730 = vrot.lane.b32.xlu0 %v3187, 1
        %v3731 = vpop.permute.xlu0 %3730
        %3732 = vrot.lane.b32.xlu0 %v3189, 1
        %v3733 = vpop.permute.xlu0 %3732
        %3734 = vrot.lane.b32.xlu0 %v3191, 1
        %v3735 = vpop.permute.xlu0 %3734
        %3736 = vrot.lane.b32.xlu0 %v3193, 1
        %v3737 = vpop.permute.xlu0 %3736
        %3738 = vrot.lane.b32.xlu0 %v3195, 1
        %v3739 = vpop.permute.xlu0 %3738
        %3740 = vrot.lane.b32.xlu0 %v3197, 1
        %v3741 = vpop.permute.xlu0 %3740
        %3742 = vrot.lane.b32.xlu0 %v3199, 1
        %v3743 = vpop.permute.xlu0 %3742
        %3744 = vrot.lane.b32.xlu0 %v3201, 1
        %v3745 = vpop.permute.xlu0 %3744
        %3746 = vrot.lane.b32.xlu0 %v3203, 1
        %v3747 = vpop.permute.xlu0 %3746
        %3748 = vrot.lane.b32.xlu0 %v3205, 1
        %v3749 = vpop.permute.xlu0 %3748
        %3750 = vrot.lane.b32.xlu0 %v3207, 1
        %v3751 = vpop.permute.xlu0 %3750
        %3752 = vrot.lane.b32.xlu0 %v3209, 1
        %v3753 = vpop.permute.xlu0 %3752
        %3754 = vrot.lane.b32.xlu0 %v3211, 1
        %v3755 = vpop.permute.xlu0 %3754
        %3756 = vrot.lane.b32.xlu0 %v3213, 1
        %v3757 = vpop.permute.xlu0 %3756
        %v3758 = vsel %vm476, %v3695, %v3727
        %v3759 = vsel %vm476, %v3697, %v3729
        %v3760 = vsel %vm476, %v3699, %v3731
        %v3761 = vsel %vm476, %v3701, %v3733
        %v3762 = vsel %vm476, %v3703, %v3735
        %v3763 = vsel %vm476, %v3705, %v3737
        %v3764 = vsel %vm476, %v3707, %v3739
        %v3765 = vsel %vm476, %v3709, %v3741
        %v3766 = vsel %vm476, %v3711, %v3743
        %v3767 = vsel %vm476, %v3713, %v3745
        %v3768 = vsel %vm476, %v3715, %v3747
        %v3769 = vsel %vm476, %v3717, %v3749
        %v3770 = vsel %vm476, %v3719, %v3751
        %v3771 = vsel %vm476, %v3721, %v3753
        %v3772 = vsel %vm476, %v3723, %v3755
        %v3773 = vsel %vm476, %v3725, %v3757
        %v3774 = vsel %vm476, %v3727, %v3695
        %v3775 = vsel %vm476, %v3729, %v3697
        %v3776 = vsel %vm476, %v3731, %v3699
        %v3777 = vsel %vm476, %v3733, %v3701
        %v3778 = vsel %vm476, %v3735, %v3703
        %v3779 = vsel %vm476, %v3737, %v3705
        %v3780 = vsel %vm476, %v3739, %v3707
        %v3781 = vsel %vm476, %v3741, %v3709
        %v3782 = vsel %vm476, %v3743, %v3711
        %v3783 = vsel %vm476, %v3745, %v3713
        %v3784 = vsel %vm476, %v3747, %v3715
        %v3785 = vsel %vm476, %v3749, %v3717
        %v3786 = vsel %vm476, %v3751, %v3719
        %v3787 = vsel %vm476, %v3753, %v3721
        %v3788 = vsel %vm476, %v3755, %v3723
        %v3789 = vsel %vm476, %v3757, %v3725
        %v3790 = vsel %vm481, %v3774, 0.0
        %v3791 = vsel %vm482, %v3758, 0.0
        %v3792 = vsel %vm481, %v3775, 0.0
        %v3793 = vsel %vm482, %v3759, 0.0
        %v3794 = vsel %vm481, %v3776, 0.0
        %v3795 = vsel %vm482, %v3760, 0.0
        %v3796 = vsel %vm481, %v3777, 0.0
        %v3797 = vsel %vm482, %v3761, 0.0
        %v3798 = vsel %vm481, %v3778, 0.0
        %v3799 = vsel %vm482, %v3762, 0.0
        %v3800 = vsel %vm481, %v3779, 0.0
        %v3801 = vsel %vm482, %v3763, 0.0
        %v3802 = vsel %vm481, %v3780, 0.0
        %v3803 = vsel %vm482, %v3764, 0.0
        %v3804 = vsel %vm481, %v3781, 0.0
        %v3805 = vsel %vm482, %v3765, 0.0
        %v3806 = vsel %vm481, %v3782, 0.0
        %v3807 = vsel %vm482, %v3766, 0.0
        %v3808 = vsel %vm481, %v3783, 0.0
        %v3809 = vsel %vm482, %v3767, 0.0
        %v3810 = vsel %vm481, %v3784, 0.0
        %v3811 = vsel %vm482, %v3768, 0.0
        %v3812 = vsel %vm481, %v3785, 0.0
        %v3813 = vsel %vm482, %v3769, 0.0
        %v3814 = vsel %vm481, %v3786, 0.0
        %v3815 = vsel %vm482, %v3770, 0.0
        %v3816 = vsel %vm481, %v3787, 0.0
        %v3817 = vsel %vm482, %v3771, 0.0
        %v3818 = vsel %vm481, %v3788, 0.0
        %v3819 = vsel %vm482, %v3772, 0.0
        %v3820 = vsel %vm481, %v3789, 0.0
        %v3821 = vsel %vm482, %v3773, 0.0
        %3822 = vst [vmem:[#allocation3 + $0x300] sm:$0xff] %v3790
        %3823 = vst [vmem:[#allocation3 + $0x308] sm:$0xff] %v3791
        %3824 = vst [vmem:[#allocation3 + $0x310] sm:$0xff] %v3792
        %3825 = vst [vmem:[#allocation3 + $0x318] sm:$0xff] %v3793
        %3826 = vst [vmem:[#allocation3 + $0x320] sm:$0xff] %v3794
        %3827 = vst [vmem:[#allocation3 + $0x328] sm:$0xff] %v3795
        %3828 = vst [vmem:[#allocation3 + $0x330] sm:$0xff] %v3796
        %3829 = vst [vmem:[#allocation3 + $0x338] sm:$0xff] %v3797
        %3830 = vst [vmem:[#allocation3 + $0x340] sm:$0xff] %v3798
        %3831 = vst [vmem:[#allocation3 + $0x348] sm:$0xff] %v3799
        %3832 = vst [vmem:[#allocation3 + $0x350] sm:$0xff] %v3800
        %3833 = vst [vmem:[#allocation3 + $0x358] sm:$0xff] %v3801
        %3834 = vst [vmem:[#allocation3 + $0x360] sm:$0xff] %v3802
        %3835 = vst [vmem:[#allocation3 + $0x368] sm:$0xff] %v3803
        %3836 = vst [vmem:[#allocation3 + $0x370] sm:$0xff] %v3804
        %3837 = vst [vmem:[#allocation3 + $0x378] sm:$0xff] %v3805
        %3838 = vst [vmem:[#allocation3 + $0x380] sm:$0xff] %v3806
        %3839 = vst [vmem:[#allocation3 + $0x388] sm:$0xff] %v3807
        %3840 = vst [vmem:[#allocation3 + $0x390] sm:$0xff] %v3808
        %3841 = vst [vmem:[#allocation3 + $0x398] sm:$0xff] %v3809
        %3842 = vst [vmem:[#allocation3 + $0x3a0] sm:$0xff] %v3810
        %3843 = vst [vmem:[#allocation3 + $0x3a8] sm:$0xff] %v3811
        %3844 = vst [vmem:[#allocation3 + $0x3b0] sm:$0xff] %v3812
        %3845 = vst [vmem:[#allocation3 + $0x3b8] sm:$0xff] %v3813
        %3846 = vst [vmem:[#allocation3 + $0x3c0] sm:$0xff] %v3814
        %3847 = vst [vmem:[#allocation3 + $0x3c8] sm:$0xff] %v3815
        %3848 = vst [vmem:[#allocation3 + $0x3d0] sm:$0xff] %v3816
        %3849 = vst [vmem:[#allocation3 + $0x3d8] sm:$0xff] %v3817
        %3850 = vst [vmem:[#allocation3 + $0x3e0] sm:$0xff] %v3818
        %3851 = vst [vmem:[#allocation3 + $0x3e8] sm:$0xff] %v3819
        %3852 = vst [vmem:[#allocation3 + $0x3f0] sm:$0xff] %v3820
        %3853 = vst [vmem:[#allocation3 + $0x3f8] sm:$0xff] %v3821
        %3854 = vst [vmem:[#allocation3 + $0x400] sm:$0xff] %v3182
        %3855 = vst [vmem:[#allocation3 + $0x408] sm:$0xff] %v3183
        %3856 = vst [vmem:[#allocation3 + $0x410] sm:$0xff] %v3184
        %3857 = vst [vmem:[#allocation3 + $0x418] sm:$0xff] %v3185
        %3858 = vst [vmem:[#allocation3 + $0x420] sm:$0xff] %v3186
        %3859 = vst [vmem:[#allocation3 + $0x428] sm:$0xff] %v3187
        %3860 = vst [vmem:[#allocation3 + $0x430] sm:$0xff] %v3188
        %3861 = vst [vmem:[#allocation3 + $0x438] sm:$0xff] %v3189
        %3862 = vst [vmem:[#allocation3 + $0x440] sm:$0xff] %v3190
        %3863 = vst [vmem:[#allocation3 + $0x448] sm:$0xff] %v3191
        %3864 = vst [vmem:[#allocation3 + $0x450] sm:$0xff] %v3192
        %3865 = vst [vmem:[#allocation3 + $0x458] sm:$0xff] %v3193
        %3866 = vst [vmem:[#allocation3 + $0x460] sm:$0xff] %v3194
        %3867 = vst [vmem:[#allocation3 + $0x468] sm:$0xff] %v3195
        %3868 = vst [vmem:[#allocation3 + $0x470] sm:$0xff] %v3196
        %3869 = vst [vmem:[#allocation3 + $0x478] sm:$0xff] %v3197
        %3870 = vst [vmem:[#allocation3 + $0x480] sm:$0xff] %v3198
        %3871 = vst [vmem:[#allocation3 + $0x488] sm:$0xff] %v3199
        %3872 = vst [vmem:[#allocation3 + $0x490] sm:$0xff] %v3200
        %3873 = vst [vmem:[#allocation3 + $0x498] sm:$0xff] %v3201
        %3874 = vst [vmem:[#allocation3 + $0x4a0] sm:$0xff] %v3202
        %3875 = vst [vmem:[#allocation3 + $0x4a8] sm:$0xff] %v3203
        %3876 = vst [vmem:[#allocation3 + $0x4b0] sm:$0xff] %v3204
        %3877 = vst [vmem:[#allocation3 + $0x4b8] sm:$0xff] %v3205
        %3878 = vst [vmem:[#allocation3 + $0x4c0] sm:$0xff] %v3206
        %3879 = vst [vmem:[#allocation3 + $0x4c8] sm:$0xff] %v3207
        %3880 = vst [vmem:[#allocation3 + $0x4d0] sm:$0xff] %v3208
        %3881 = vst [vmem:[#allocation3 + $0x4d8] sm:$0xff] %v3209
        %3882 = vst [vmem:[#allocation3 + $0x4e0] sm:$0xff] %v3210
        %3883 = vst [vmem:[#allocation3 + $0x4e8] sm:$0xff] %v3211
        %3884 = vst [vmem:[#allocation3 + $0x4f0] sm:$0xff] %v3212
        %3885 = vst [vmem:[#allocation3 + $0x4f8] sm:$0xff] %v3213
        %3886 = vrot.lane.b32.xlu0 %v3182, 127
        %v3887 = vpop.permute.xlu0 %3886
        %3888 = vrot.lane.b32.xlu0 %v3184, 127
        %v3889 = vpop.permute.xlu0 %3888
        %3890 = vrot.lane.b32.xlu0 %v3186, 127
        %v3891 = vpop.permute.xlu0 %3890
        %3892 = vrot.lane.b32.xlu0 %v3188, 127
        %v3893 = vpop.permute.xlu0 %3892
        %3894 = vrot.lane.b32.xlu0 %v3190, 127
        %v3895 = vpop.permute.xlu0 %3894
        %3896 = vrot.lane.b32.xlu0 %v3192, 127
        %v3897 = vpop.permute.xlu0 %3896
        %3898 = vrot.lane.b32.xlu0 %v3194, 127
        %v3899 = vpop.permute.xlu0 %3898
        %3900 = vrot.lane.b32.xlu0 %v3196, 127
        %v3901 = vpop.permute.xlu0 %3900
        %3902 = vrot.lane.b32.xlu0 %v3198, 127
        %v3903 = vpop.permute.xlu0 %3902
        %3904 = vrot.lane.b32.xlu0 %v3200, 127
        %v3905 = vpop.permute.xlu0 %3904
        %3906 = vrot.lane.b32.xlu0 %v3202, 127
        %v3907 = vpop.permute.xlu0 %3906
        %3908 = vrot.lane.b32.xlu0 %v3204, 127
        %v3909 = vpop.permute.xlu0 %3908
        %3910 = vrot.lane.b32.xlu0 %v3206, 127
        %v3911 = vpop.permute.xlu0 %3910
        %3912 = vrot.lane.b32.xlu0 %v3208, 127
        %v3913 = vpop.permute.xlu0 %3912
        %3914 = vrot.lane.b32.xlu0 %v3210, 127
        %v3915 = vpop.permute.xlu0 %3914
        %3916 = vrot.lane.b32.xlu0 %v3212, 127
        %v3917 = vpop.permute.xlu0 %3916
        %3918 = vrot.lane.b32.xlu0 %v3183, 127
        %v3919 = vpop.permute.xlu0 %3918
        %3920 = vrot.lane.b32.xlu0 %v3185, 127
        %v3921 = vpop.permute.xlu0 %3920
        %3922 = vrot.lane.b32.xlu0 %v3187, 127
        %v3923 = vpop.permute.xlu0 %3922
        %3924 = vrot.lane.b32.xlu0 %v3189, 127
        %v3925 = vpop.permute.xlu0 %3924
        %3926 = vrot.lane.b32.xlu0 %v3191, 127
        %v3927 = vpop.permute.xlu0 %3926
        %3928 = vrot.lane.b32.xlu0 %v3193, 127
        %v3929 = vpop.permute.xlu0 %3928
        %3930 = vrot.lane.b32.xlu0 %v3195, 127
        %v3931 = vpop.permute.xlu0 %3930
        %3932 = vrot.lane.b32.xlu0 %v3197, 127
        %v3933 = vpop.permute.xlu0 %3932
        %3934 = vrot.lane.b32.xlu0 %v3199, 127
        %v3935 = vpop.permute.xlu0 %3934
        %3936 = vrot.lane.b32.xlu0 %v3201, 127
        %v3937 = vpop.permute.xlu0 %3936
        %3938 = vrot.lane.b32.xlu0 %v3203, 127
        %v3939 = vpop.permute.xlu0 %3938
        %3940 = vrot.lane.b32.xlu0 %v3205, 127
        %v3941 = vpop.permute.xlu0 %3940
        %3942 = vrot.lane.b32.xlu0 %v3207, 127
        %v3943 = vpop.permute.xlu0 %3942
        %3944 = vrot.lane.b32.xlu0 %v3209, 127
        %v3945 = vpop.permute.xlu0 %3944
        %3946 = vrot.lane.b32.xlu0 %v3211, 127
        %v3947 = vpop.permute.xlu0 %3946
        %3948 = vrot.lane.b32.xlu0 %v3213, 127
        %v3949 = vpop.permute.xlu0 %3948
        %v3950 = vsel %vm493, %v3887, %v3919
        %v3951 = vsel %vm493, %v3889, %v3921
        %v3952 = vsel %vm493, %v3891, %v3923
        %v3953 = vsel %vm493, %v3893, %v3925
        %v3954 = vsel %vm493, %v3895, %v3927
        %v3955 = vsel %vm493, %v3897, %v3929
        %v3956 = vsel %vm493, %v3899, %v3931
        %v3957 = vsel %vm493, %v3901, %v3933
        %v3958 = vsel %vm493, %v3903, %v3935
        %v3959 = vsel %vm493, %v3905, %v3937
        %v3960 = vsel %vm493, %v3907, %v3939
        %v3961 = vsel %vm493, %v3909, %v3941
        %v3962 = vsel %vm493, %v3911, %v3943
        %v3963 = vsel %vm493, %v3913, %v3945
        %v3964 = vsel %vm493, %v3915, %v3947
        %v3965 = vsel %vm493, %v3917, %v3949
        %v3966 = vsel %vm493, %v3919, %v3887
        %v3967 = vsel %vm493, %v3921, %v3889
        %v3968 = vsel %vm493, %v3923, %v3891
        %v3969 = vsel %vm493, %v3925, %v3893
        %v3970 = vsel %vm493, %v3927, %v3895
        %v3971 = vsel %vm493, %v3929, %v3897
        %v3972 = vsel %vm493, %v3931, %v3899
        %v3973 = vsel %vm493, %v3933, %v3901
        %v3974 = vsel %vm493, %v3935, %v3903
        %v3975 = vsel %vm493, %v3937, %v3905
        %v3976 = vsel %vm493, %v3939, %v3907
        %v3977 = vsel %vm493, %v3941, %v3909
        %v3978 = vsel %vm493, %v3943, %v3911
        %v3979 = vsel %vm493, %v3945, %v3913
        %v3980 = vsel %vm493, %v3947, %v3915
        %v3981 = vsel %vm493, %v3949, %v3917
        %v3982 = vsel %vm498, %v3950, 0.0
        %v3983 = vsel %vm499, %v3966, 0.0
        %v3984 = vsel %vm498, %v3951, 0.0
        %v3985 = vsel %vm499, %v3967, 0.0
        %v3986 = vsel %vm498, %v3952, 0.0
        %v3987 = vsel %vm499, %v3968, 0.0
        %v3988 = vsel %vm498, %v3953, 0.0
        %v3989 = vsel %vm499, %v3969, 0.0
        %v3990 = vsel %vm498, %v3954, 0.0
        %v3991 = vsel %vm499, %v3970, 0.0
        %v3992 = vsel %vm498, %v3955, 0.0
        %v3993 = vsel %vm499, %v3971, 0.0
        %v3994 = vsel %vm498, %v3956, 0.0
        %v3995 = vsel %vm499, %v3972, 0.0
        %v3996 = vsel %vm498, %v3957, 0.0
        %v3997 = vsel %vm499, %v3973, 0.0
        %v3998 = vsel %vm498, %v3958, 0.0
        %v3999 = vsel %vm499, %v3974, 0.0
        %v4000 = vsel %vm498, %v3959, 0.0
        %v4001 = vsel %vm499, %v3975, 0.0
        %v4002 = vsel %vm498, %v3960, 0.0
        %v4003 = vsel %vm499, %v3976, 0.0
        %v4004 = vsel %vm498, %v3961, 0.0
        %v4005 = vsel %vm499, %v3977, 0.0
        %v4006 = vsel %vm498, %v3962, 0.0
        %v4007 = vsel %vm499, %v3978, 0.0
        %v4008 = vsel %vm498, %v3963, 0.0
        %v4009 = vsel %vm499, %v3979, 0.0
        %v4010 = vsel %vm498, %v3964, 0.0
        %v4011 = vsel %vm499, %v3980, 0.0
        %v4012 = vsel %vm498, %v3965, 0.0
        %v4013 = vsel %vm499, %v3981, 0.0
        %4014 = vst [vmem:[#allocation3 + $0x500] sm:$0xff] %v3982
        %4015 = vst [vmem:[#allocation3 + $0x508] sm:$0xff] %v3983
        %4016 = vst [vmem:[#allocation3 + $0x510] sm:$0xff] %v3984
        %4017 = vst [vmem:[#allocation3 + $0x518] sm:$0xff] %v3985
        %4018 = vst [vmem:[#allocation3 + $0x520] sm:$0xff] %v3986
        %4019 = vst [vmem:[#allocation3 + $0x528] sm:$0xff] %v3987
        %4020 = vst [vmem:[#allocation3 + $0x530] sm:$0xff] %v3988
        %4021 = vst [vmem:[#allocation3 + $0x538] sm:$0xff] %v3989
        %4022 = vst [vmem:[#allocation3 + $0x540] sm:$0xff] %v3990
        %4023 = vst [vmem:[#allocation3 + $0x548] sm:$0xff] %v3991
        %4024 = vst [vmem:[#allocation3 + $0x550] sm:$0xff] %v3992
        %4025 = vst [vmem:[#allocation3 + $0x558] sm:$0xff] %v3993
        %4026 = vst [vmem:[#allocation3 + $0x560] sm:$0xff] %v3994
        %4027 = vst [vmem:[#allocation3 + $0x568] sm:$0xff] %v3995
        %4028 = vst [vmem:[#allocation3 + $0x570] sm:$0xff] %v3996
        %4029 = vst [vmem:[#allocation3 + $0x578] sm:$0xff] %v3997
        %4030 = vst [vmem:[#allocation3 + $0x580] sm:$0xff] %v3998
        %4031 = vst [vmem:[#allocation3 + $0x588] sm:$0xff] %v3999
        %4032 = vst [vmem:[#allocation3 + $0x590] sm:$0xff] %v4000
        %4033 = vst [vmem:[#allocation3 + $0x598] sm:$0xff] %v4001
        %4034 = vst [vmem:[#allocation3 + $0x5a0] sm:$0xff] %v4002
        %4035 = vst [vmem:[#allocation3 + $0x5a8] sm:$0xff] %v4003
        %4036 = vst [vmem:[#allocation3 + $0x5b0] sm:$0xff] %v4004
        %4037 = vst [vmem:[#allocation3 + $0x5b8] sm:$0xff] %v4005
        %4038 = vst [vmem:[#allocation3 + $0x5c0] sm:$0xff] %v4006
        %4039 = vst [vmem:[#allocation3 + $0x5c8] sm:$0xff] %v4007
        %4040 = vst [vmem:[#allocation3 + $0x5d0] sm:$0xff] %v4008
        %4041 = vst [vmem:[#allocation3 + $0x5d8] sm:$0xff] %v4009
        %4042 = vst [vmem:[#allocation3 + $0x5e0] sm:$0xff] %v4010
        %4043 = vst [vmem:[#allocation3 + $0x5e8] sm:$0xff] %v4011
        %4044 = vst [vmem:[#allocation3 + $0x5f0] sm:$0xff] %v4012
        %4045 = vst [vmem:[#allocation3 + $0x5f8] sm:$0xff] %v4013
        %4046 = vrot.lane.b32.xlu0 %v3182, 113
        %v4047 = vpop.permute.xlu0 %4046
        %4048 = vrot.lane.b32.xlu0 %v3184, 113
        %v4049 = vpop.permute.xlu0 %4048
        %4050 = vrot.lane.b32.xlu0 %v3186, 113
        %v4051 = vpop.permute.xlu0 %4050
        %4052 = vrot.lane.b32.xlu0 %v3188, 113
        %v4053 = vpop.permute.xlu0 %4052
        %4054 = vrot.lane.b32.xlu0 %v3190, 113
        %v4055 = vpop.permute.xlu0 %4054
        %4056 = vrot.lane.b32.xlu0 %v3192, 113
        %v4057 = vpop.permute.xlu0 %4056
        %4058 = vrot.lane.b32.xlu0 %v3194, 113
        %v4059 = vpop.permute.xlu0 %4058
        %4060 = vrot.lane.b32.xlu0 %v3196, 113
        %v4061 = vpop.permute.xlu0 %4060
        %4062 = vrot.lane.b32.xlu0 %v3198, 113
        %v4063 = vpop.permute.xlu0 %4062
        %4064 = vrot.lane.b32.xlu0 %v3200, 113
        %v4065 = vpop.permute.xlu0 %4064
        %4066 = vrot.lane.b32.xlu0 %v3202, 113
        %v4067 = vpop.permute.xlu0 %4066
        %4068 = vrot.lane.b32.xlu0 %v3204, 113
        %v4069 = vpop.permute.xlu0 %4068
        %4070 = vrot.lane.b32.xlu0 %v3206, 113
        %v4071 = vpop.permute.xlu0 %4070
        %4072 = vrot.lane.b32.xlu0 %v3208, 113
        %v4073 = vpop.permute.xlu0 %4072
        %4074 = vrot.lane.b32.xlu0 %v3210, 113
        %v4075 = vpop.permute.xlu0 %4074
        %4076 = vrot.lane.b32.xlu0 %v3212, 113
        %v4077 = vpop.permute.xlu0 %4076
        %4078 = vrot.lane.b32.xlu0 %v3183, 113
        %v4079 = vpop.permute.xlu0 %4078
        %4080 = vrot.lane.b32.xlu0 %v3185, 113
        %v4081 = vpop.permute.xlu0 %4080
        %4082 = vrot.lane.b32.xlu0 %v3187, 113
        %v4083 = vpop.permute.xlu0 %4082
        %4084 = vrot.lane.b32.xlu0 %v3189, 113
        %v4085 = vpop.permute.xlu0 %4084
        %4086 = vrot.lane.b32.xlu0 %v3191, 113
        %v4087 = vpop.permute.xlu0 %4086
        %4088 = vrot.lane.b32.xlu0 %v3193, 113
        %v4089 = vpop.permute.xlu0 %4088
        %4090 = vrot.lane.b32.xlu0 %v3195, 113
        %v4091 = vpop.permute.xlu0 %4090
        %4092 = vrot.lane.b32.xlu0 %v3197, 113
        %v4093 = vpop.permute.xlu0 %4092
        %4094 = vrot.lane.b32.xlu0 %v3199, 113
        %v4095 = vpop.permute.xlu0 %4094
        %4096 = vrot.lane.b32.xlu0 %v3201, 113
        %v4097 = vpop.permute.xlu0 %4096
        %4098 = vrot.lane.b32.xlu0 %v3203, 113
        %v4099 = vpop.permute.xlu0 %4098
        %4100 = vrot.lane.b32.xlu0 %v3205, 113
        %v4101 = vpop.permute.xlu0 %4100
        %4102 = vrot.lane.b32.xlu0 %v3207, 113
        %v4103 = vpop.permute.xlu0 %4102
        %4104 = vrot.lane.b32.xlu0 %v3209, 113
        %v4105 = vpop.permute.xlu0 %4104
        %4106 = vrot.lane.b32.xlu0 %v3211, 113
        %v4107 = vpop.permute.xlu0 %4106
        %4108 = vrot.lane.b32.xlu0 %v3213, 113
        %v4109 = vpop.permute.xlu0 %4108
        %v4110 = vsel %vm508, %v4047, %v4079
        %v4111 = vsel %vm508, %v4049, %v4081
        %v4112 = vsel %vm508, %v4051, %v4083
        %v4113 = vsel %vm508, %v4053, %v4085
        %v4114 = vsel %vm508, %v4055, %v4087
        %v4115 = vsel %vm508, %v4057, %v4089
        %v4116 = vsel %vm508, %v4059, %v4091
        %v4117 = vsel %vm508, %v4061, %v4093
        %v4118 = vsel %vm508, %v4063, %v4095
        %v4119 = vsel %vm508, %v4065, %v4097
        %v4120 = vsel %vm508, %v4067, %v4099
        %v4121 = vsel %vm508, %v4069, %v4101
        %v4122 = vsel %vm508, %v4071, %v4103
        %v4123 = vsel %vm508, %v4073, %v4105
        %v4124 = vsel %vm508, %v4075, %v4107
        %v4125 = vsel %vm508, %v4077, %v4109
        %v4126 = vsel %vm508, %v4079, %v4047
        %v4127 = vsel %vm508, %v4081, %v4049
        %v4128 = vsel %vm508, %v4083, %v4051
        %v4129 = vsel %vm508, %v4085, %v4053
        %v4130 = vsel %vm508, %v4087, %v4055
        %v4131 = vsel %vm508, %v4089, %v4057
        %v4132 = vsel %vm508, %v4091, %v4059
        %v4133 = vsel %vm508, %v4093, %v4061
        %v4134 = vsel %vm508, %v4095, %v4063
        %v4135 = vsel %vm508, %v4097, %v4065
        %v4136 = vsel %vm508, %v4099, %v4067
        %v4137 = vsel %vm508, %v4101, %v4069
        %v4138 = vsel %vm508, %v4103, %v4071
        %v4139 = vsel %vm508, %v4105, %v4073
        %v4140 = vsel %vm508, %v4107, %v4075
        %v4141 = vsel %vm508, %v4109, %v4077
        %v4142 = vsel %vm517, %v4110, 0.0
        %v4143 = vsel %vm518, %v4126, 0.0
        %v4144 = vsel %vm517, %v4111, 0.0
        %v4145 = vsel %vm518, %v4127, 0.0
        %v4146 = vsel %vm517, %v4112, 0.0
        %v4147 = vsel %vm518, %v4128, 0.0
        %v4148 = vsel %vm517, %v4113, 0.0
        %v4149 = vsel %vm518, %v4129, 0.0
        %v4150 = vsel %vm517, %v4114, 0.0
        %v4151 = vsel %vm518, %v4130, 0.0
        %v4152 = vsel %vm517, %v4115, 0.0
        %v4153 = vsel %vm518, %v4131, 0.0
        %v4154 = vsel %vm517, %v4116, 0.0
        %v4155 = vsel %vm518, %v4132, 0.0
        %v4156 = vsel %vm517, %v4117, 0.0
        %v4157 = vsel %vm518, %v4133, 0.0
        %v4158 = vsel %vm517, %v4118, 0.0
        %v4159 = vsel %vm518, %v4134, 0.0
        %v4160 = vsel %vm517, %v4119, 0.0
        %v4161 = vsel %vm518, %v4135, 0.0
        %v4162 = vsel %vm517, %v4120, 0.0
        %v4163 = vsel %vm518, %v4136, 0.0
        %v4164 = vsel %vm517, %v4121, 0.0
        %v4165 = vsel %vm518, %v4137, 0.0
        %v4166 = vsel %vm517, %v4122, 0.0
        %v4167 = vsel %vm518, %v4138, 0.0
        %v4168 = vsel %vm517, %v4123, 0.0
        %v4169 = vsel %vm518, %v4139, 0.0
        %v4170 = vsel %vm517, %v4124, 0.0
        %v4171 = vsel %vm518, %v4140, 0.0
        %v4172 = vsel %vm517, %v4125, 0.0
        %v4173 = vsel %vm518, %v4141, 0.0
        %4174 = vst [vmem:[#allocation3 + $0x600] sm:$0xff] %v4142
        %4175 = vst [vmem:[#allocation3 + $0x608] sm:$0xff] %v4143
        %4176 = vst [vmem:[#allocation3 + $0x610] sm:$0xff] %v4144
        %4177 = vst [vmem:[#allocation3 + $0x618] sm:$0xff] %v4145
        %4178 = vst [vmem:[#allocation3 + $0x620] sm:$0xff] %v4146
        %4179 = vst [vmem:[#allocation3 + $0x628] sm:$0xff] %v4147
        %4180 = vst [vmem:[#allocation3 + $0x630] sm:$0xff] %v4148
        %4181 = vst [vmem:[#allocation3 + $0x638] sm:$0xff] %v4149
        %4182 = vst [vmem:[#allocation3 + $0x640] sm:$0xff] %v4150
        %4183 = vst [vmem:[#allocation3 + $0x648] sm:$0xff] %v4151
        %4184 = vst [vmem:[#allocation3 + $0x650] sm:$0xff] %v4152
        %4185 = vst [vmem:[#allocation3 + $0x658] sm:$0xff] %v4153
        %4186 = vst [vmem:[#allocation3 + $0x660] sm:$0xff] %v4154
        %4187 = vst [vmem:[#allocation3 + $0x668] sm:$0xff] %v4155
        %4188 = vst [vmem:[#allocation3 + $0x670] sm:$0xff] %v4156
        %4189 = vst [vmem:[#allocation3 + $0x678] sm:$0xff] %v4157
        %4190 = vst [vmem:[#allocation3 + $0x680] sm:$0xff] %v4158
        %4191 = vst [vmem:[#allocation3 + $0x688] sm:$0xff] %v4159
        %4192 = vst [vmem:[#allocation3 + $0x690] sm:$0xff] %v4160
        %4193 = vst [vmem:[#allocation3 + $0x698] sm:$0xff] %v4161
        %4194 = vst [vmem:[#allocation3 + $0x6a0] sm:$0xff] %v4162
        %4195 = vst [vmem:[#allocation3 + $0x6a8] sm:$0xff] %v4163
        %4196 = vst [vmem:[#allocation3 + $0x6b0] sm:$0xff] %v4164
        %4197 = vst [vmem:[#allocation3 + $0x6b8] sm:$0xff] %v4165
        %4198 = vst [vmem:[#allocation3 + $0x6c0] sm:$0xff] %v4166
        %4199 = vst [vmem:[#allocation3 + $0x6c8] sm:$0xff] %v4167
        %4200 = vst [vmem:[#allocation3 + $0x6d0] sm:$0xff] %v4168
        %4201 = vst [vmem:[#allocation3 + $0x6d8] sm:$0xff] %v4169
        %4202 = vst [vmem:[#allocation3 + $0x6e0] sm:$0xff] %v4170
        %4203 = vst [vmem:[#allocation3 + $0x6e8] sm:$0xff] %v4171
        %4204 = vst [vmem:[#allocation3 + $0x6f0] sm:$0xff] %v4172
        %4205 = vst [vmem:[#allocation3 + $0x6f8] sm:$0xff] %v4173
        %4206 = vrot.lane.b32.xlu0 %v3182, 112
        %v4207 = vpop.permute.xlu0 %4206
        %4208 = vrot.lane.b32.xlu0 %v3184, 112
        %v4209 = vpop.permute.xlu0 %4208
        %4210 = vrot.lane.b32.xlu0 %v3186, 112
        %v4211 = vpop.permute.xlu0 %4210
        %4212 = vrot.lane.b32.xlu0 %v3188, 112
        %v4213 = vpop.permute.xlu0 %4212
        %4214 = vrot.lane.b32.xlu0 %v3190, 112
        %v4215 = vpop.permute.xlu0 %4214
        %4216 = vrot.lane.b32.xlu0 %v3192, 112
        %v4217 = vpop.permute.xlu0 %4216
        %4218 = vrot.lane.b32.xlu0 %v3194, 112
        %v4219 = vpop.permute.xlu0 %4218
        %4220 = vrot.lane.b32.xlu0 %v3196, 112
        %v4221 = vpop.permute.xlu0 %4220
        %4222 = vrot.lane.b32.xlu0 %v3198, 112
        %v4223 = vpop.permute.xlu0 %4222
        %4224 = vrot.lane.b32.xlu0 %v3200, 112
        %v4225 = vpop.permute.xlu0 %4224
        %4226 = vrot.lane.b32.xlu0 %v3202, 112
        %v4227 = vpop.permute.xlu0 %4226
        %4228 = vrot.lane.b32.xlu0 %v3204, 112
        %v4229 = vpop.permute.xlu0 %4228
        %4230 = vrot.lane.b32.xlu0 %v3206, 112
        %v4231 = vpop.permute.xlu0 %4230
        %4232 = vrot.lane.b32.xlu0 %v3208, 112
        %v4233 = vpop.permute.xlu0 %4232
        %4234 = vrot.lane.b32.xlu0 %v3210, 112
        %v4235 = vpop.permute.xlu0 %4234
        %4236 = vrot.lane.b32.xlu0 %v3212, 112
        %v4237 = vpop.permute.xlu0 %4236
        %4238 = vrot.lane.b32.xlu0 %v3183, 112
        %v4239 = vpop.permute.xlu0 %4238
        %4240 = vrot.lane.b32.xlu0 %v3185, 112
        %v4241 = vpop.permute.xlu0 %4240
        %4242 = vrot.lane.b32.xlu0 %v3187, 112
        %v4243 = vpop.permute.xlu0 %4242
        %4244 = vrot.lane.b32.xlu0 %v3189, 112
        %v4245 = vpop.permute.xlu0 %4244
        %4246 = vrot.lane.b32.xlu0 %v3191, 112
        %v4247 = vpop.permute.xlu0 %4246
        %4248 = vrot.lane.b32.xlu0 %v3193, 112
        %v4249 = vpop.permute.xlu0 %4248
        %4250 = vrot.lane.b32.xlu0 %v3195, 112
        %v4251 = vpop.permute.xlu0 %4250
        %4252 = vrot.lane.b32.xlu0 %v3197, 112
        %v4253 = vpop.permute.xlu0 %4252
        %4254 = vrot.lane.b32.xlu0 %v3199, 112
        %v4255 = vpop.permute.xlu0 %4254
        %4256 = vrot.lane.b32.xlu0 %v3201, 112
        %v4257 = vpop.permute.xlu0 %4256
        %4258 = vrot.lane.b32.xlu0 %v3203, 112
        %v4259 = vpop.permute.xlu0 %4258
        %4260 = vrot.lane.b32.xlu0 %v3205, 112
        %v4261 = vpop.permute.xlu0 %4260
        %4262 = vrot.lane.b32.xlu0 %v3207, 112
        %v4263 = vpop.permute.xlu0 %4262
        %4264 = vrot.lane.b32.xlu0 %v3209, 112
        %v4265 = vpop.permute.xlu0 %4264
        %4266 = vrot.lane.b32.xlu0 %v3211, 112
        %v4267 = vpop.permute.xlu0 %4266
        %4268 = vrot.lane.b32.xlu0 %v3213, 112
        %v4269 = vpop.permute.xlu0 %4268
        %v4270 = vsel %vm527, %v4207, %v4239
        %v4271 = vsel %vm527, %v4209, %v4241
        %v4272 = vsel %vm527, %v4211, %v4243
        %v4273 = vsel %vm527, %v4213, %v4245
        %v4274 = vsel %vm527, %v4215, %v4247
        %v4275 = vsel %vm527, %v4217, %v4249
        %v4276 = vsel %vm527, %v4219, %v4251
        %v4277 = vsel %vm527, %v4221, %v4253
        %v4278 = vsel %vm527, %v4223, %v4255
        %v4279 = vsel %vm527, %v4225, %v4257
        %v4280 = vsel %vm527, %v4227, %v4259
        %v4281 = vsel %vm527, %v4229, %v4261
        %v4282 = vsel %vm527, %v4231, %v4263
        %v4283 = vsel %vm527, %v4233, %v4265
        %v4284 = vsel %vm527, %v4235, %v4267
        %v4285 = vsel %vm527, %v4237, %v4269
        %v4286 = vsel %vm527, %v4239, %v4207
        %v4287 = vsel %vm527, %v4241, %v4209
        %v4288 = vsel %vm527, %v4243, %v4211
        %v4289 = vsel %vm527, %v4245, %v4213
        %v4290 = vsel %vm527, %v4247, %v4215
        %v4291 = vsel %vm527, %v4249, %v4217
        %v4292 = vsel %vm527, %v4251, %v4219
        %v4293 = vsel %vm527, %v4253, %v4221
        %v4294 = vsel %vm527, %v4255, %v4223
        %v4295 = vsel %vm527, %v4257, %v4225
        %v4296 = vsel %vm527, %v4259, %v4227
        %v4297 = vsel %vm527, %v4261, %v4229
        %v4298 = vsel %vm527, %v4263, %v4231
        %v4299 = vsel %vm527, %v4265, %v4233
        %v4300 = vsel %vm527, %v4267, %v4235
        %v4301 = vsel %vm527, %v4269, %v4237
        %v4302 = vsel %vm532, %v4270, 0.0
        %v4303 = vsel %vm533, %v4286, 0.0
        %v4304 = vsel %vm532, %v4271, 0.0
        %v4305 = vsel %vm533, %v4287, 0.0
        %v4306 = vsel %vm532, %v4272, 0.0
        %v4307 = vsel %vm533, %v4288, 0.0
        %v4308 = vsel %vm532, %v4273, 0.0
        %v4309 = vsel %vm533, %v4289, 0.0
        %v4310 = vsel %vm532, %v4274, 0.0
        %v4311 = vsel %vm533, %v4290, 0.0
        %v4312 = vsel %vm532, %v4275, 0.0
        %v4313 = vsel %vm533, %v4291, 0.0
        %v4314 = vsel %vm532, %v4276, 0.0
        %v4315 = vsel %vm533, %v4292, 0.0
        %v4316 = vsel %vm532, %v4277, 0.0
        %v4317 = vsel %vm533, %v4293, 0.0
        %v4318 = vsel %vm532, %v4278, 0.0
        %v4319 = vsel %vm533, %v4294, 0.0
        %v4320 = vsel %vm532, %v4279, 0.0
        %v4321 = vsel %vm533, %v4295, 0.0
        %v4322 = vsel %vm532, %v4280, 0.0
        %v4323 = vsel %vm533, %v4296, 0.0
        %v4324 = vsel %vm532, %v4281, 0.0
        %v4325 = vsel %vm533, %v4297, 0.0
        %v4326 = vsel %vm532, %v4282, 0.0
        %v4327 = vsel %vm533, %v4298, 0.0
        %v4328 = vsel %vm532, %v4283, 0.0
        %v4329 = vsel %vm533, %v4299, 0.0
        %v4330 = vsel %vm532, %v4284, 0.0
        %v4331 = vsel %vm533, %v4300, 0.0
        %v4332 = vsel %vm532, %v4285, 0.0
        %v4333 = vsel %vm533, %v4301, 0.0
        %4334 = vst [vmem:[#allocation3 + $0x700] sm:$0xff] %v4302
        %4335 = vst [vmem:[#allocation3 + $0x708] sm:$0xff] %v4303
        %4336 = vst [vmem:[#allocation3 + $0x710] sm:$0xff] %v4304
        %4337 = vst [vmem:[#allocation3 + $0x718] sm:$0xff] %v4305
        %4338 = vst [vmem:[#allocation3 + $0x720] sm:$0xff] %v4306
        %4339 = vst [vmem:[#allocation3 + $0x728] sm:$0xff] %v4307
        %4340 = vst [vmem:[#allocation3 + $0x730] sm:$0xff] %v4308
        %4341 = vst [vmem:[#allocation3 + $0x738] sm:$0xff] %v4309
        %4342 = vst [vmem:[#allocation3 + $0x740] sm:$0xff] %v4310
        %4343 = vst [vmem:[#allocation3 + $0x748] sm:$0xff] %v4311
        %4344 = vst [vmem:[#allocation3 + $0x750] sm:$0xff] %v4312
        %4345 = vst [vmem:[#allocation3 + $0x758] sm:$0xff] %v4313
        %4346 = vst [vmem:[#allocation3 + $0x760] sm:$0xff] %v4314
        %4347 = vst [vmem:[#allocation3 + $0x768] sm:$0xff] %v4315
        %4348 = vst [vmem:[#allocation3 + $0x770] sm:$0xff] %v4316
        %4349 = vst [vmem:[#allocation3 + $0x778] sm:$0xff] %v4317
        %4350 = vst [vmem:[#allocation3 + $0x780] sm:$0xff] %v4318
        %4351 = vst [vmem:[#allocation3 + $0x788] sm:$0xff] %v4319
        %4352 = vst [vmem:[#allocation3 + $0x790] sm:$0xff] %v4320
        %4353 = vst [vmem:[#allocation3 + $0x798] sm:$0xff] %v4321
        %4354 = vst [vmem:[#allocation3 + $0x7a0] sm:$0xff] %v4322
        %4355 = vst [vmem:[#allocation3 + $0x7a8] sm:$0xff] %v4323
        %4356 = vst [vmem:[#allocation3 + $0x7b0] sm:$0xff] %v4324
        %4357 = vst [vmem:[#allocation3 + $0x7b8] sm:$0xff] %v4325
        %4358 = vst [vmem:[#allocation3 + $0x7c0] sm:$0xff] %v4326
        %4359 = vst [vmem:[#allocation3 + $0x7c8] sm:$0xff] %v4327
        %4360 = vst [vmem:[#allocation3 + $0x7d0] sm:$0xff] %v4328
        %4361 = vst [vmem:[#allocation3 + $0x7d8] sm:$0xff] %v4329
        %4362 = vst [vmem:[#allocation3 + $0x7e0] sm:$0xff] %v4330
        %4363 = vst [vmem:[#allocation3 + $0x7e8] sm:$0xff] %v4331
        %4364 = vst [vmem:[#allocation3 + $0x7f0] sm:$0xff] %v4332
        %4365 = vst [vmem:[#allocation3 + $0x7f8] sm:$0xff] %v4333
        %4366 = vrot.lane.b32.xlu0 %v3182, 111
        %v4367 = vpop.permute.xlu0 %4366
        %4368 = vrot.lane.b32.xlu0 %v3184, 111
        %v4369 = vpop.permute.xlu0 %4368
        %4370 = vrot.lane.b32.xlu0 %v3186, 111
        %v4371 = vpop.permute.xlu0 %4370
        %4372 = vrot.lane.b32.xlu0 %v3188, 111
        %v4373 = vpop.permute.xlu0 %4372
        %4374 = vrot.lane.b32.xlu0 %v3190, 111
        %v4375 = vpop.permute.xlu0 %4374
        %4376 = vrot.lane.b32.xlu0 %v3192, 111
        %v4377 = vpop.permute.xlu0 %4376
        %4378 = vrot.lane.b32.xlu0 %v3194, 111
        %v4379 = vpop.permute.xlu0 %4378
        %4380 = vrot.lane.b32.xlu0 %v3196, 111
        %v4381 = vpop.permute.xlu0 %4380
        %4382 = vrot.lane.b32.xlu0 %v3198, 111
        %v4383 = vpop.permute.xlu0 %4382
        %4384 = vrot.lane.b32.xlu0 %v3200, 111
        %v4385 = vpop.permute.xlu0 %4384
        %4386 = vrot.lane.b32.xlu0 %v3202, 111
        %v4387 = vpop.permute.xlu0 %4386
        %4388 = vrot.lane.b32.xlu0 %v3204, 111
        %v4389 = vpop.permute.xlu0 %4388
        %4390 = vrot.lane.b32.xlu0 %v3206, 111
        %v4391 = vpop.permute.xlu0 %4390
        %4392 = vrot.lane.b32.xlu0 %v3208, 111
        %v4393 = vpop.permute.xlu0 %4392
        %4394 = vrot.lane.b32.xlu0 %v3210, 111
        %v4395 = vpop.permute.xlu0 %4394
        %4396 = vrot.lane.b32.xlu0 %v3212, 111
        %v4397 = vpop.permute.xlu0 %4396
        %4398 = vrot.lane.b32.xlu0 %v3183, 111
        %v4399 = vpop.permute.xlu0 %4398
        %4400 = vrot.lane.b32.xlu0 %v3185, 111
        %v4401 = vpop.permute.xlu0 %4400
        %4402 = vrot.lane.b32.xlu0 %v3187, 111
        %v4403 = vpop.permute.xlu0 %4402
        %4404 = vrot.lane.b32.xlu0 %v3189, 111
        %v4405 = vpop.permute.xlu0 %4404
        %4406 = vrot.lane.b32.xlu0 %v3191, 111
        %v4407 = vpop.permute.xlu0 %4406
        %4408 = vrot.lane.b32.xlu0 %v3193, 111
        %v4409 = vpop.permute.xlu0 %4408
        %4410 = vrot.lane.b32.xlu0 %v3195, 111
        %v4411 = vpop.permute.xlu0 %4410
        %4412 = vrot.lane.b32.xlu0 %v3197, 111
        %v4413 = vpop.permute.xlu0 %4412
        %4414 = vrot.lane.b32.xlu0 %v3199, 111
        %v4415 = vpop.permute.xlu0 %4414
        %4416 = vrot.lane.b32.xlu0 %v3201, 111
        %v4417 = vpop.permute.xlu0 %4416
        %4418 = vrot.lane.b32.xlu0 %v3203, 111
        %v4419 = vpop.permute.xlu0 %4418
        %4420 = vrot.lane.b32.xlu0 %v3205, 111
        %v4421 = vpop.permute.xlu0 %4420
        %4422 = vrot.lane.b32.xlu0 %v3207, 111
        %v4423 = vpop.permute.xlu0 %4422
        %4424 = vrot.lane.b32.xlu0 %v3209, 111
        %v4425 = vpop.permute.xlu0 %4424
        %4426 = vrot.lane.b32.xlu0 %v3211, 111
        %v4427 = vpop.permute.xlu0 %4426
        %4428 = vrot.lane.b32.xlu0 %v3213, 111
        %v4429 = vpop.permute.xlu0 %4428
        %v4430 = vsel %vm542, %v4367, %v4399
        %v4431 = vsel %vm542, %v4369, %v4401
        %v4432 = vsel %vm542, %v4371, %v4403
        %v4433 = vsel %vm542, %v4373, %v4405
        %v4434 = vsel %vm542, %v4375, %v4407
        %v4435 = vsel %vm542, %v4377, %v4409
        %v4436 = vsel %vm542, %v4379, %v4411
        %v4437 = vsel %vm542, %v4381, %v4413
        %v4438 = vsel %vm542, %v4383, %v4415
        %v4439 = vsel %vm542, %v4385, %v4417
        %v4440 = vsel %vm542, %v4387, %v4419
        %v4441 = vsel %vm542, %v4389, %v4421
        %v4442 = vsel %vm542, %v4391, %v4423
        %v4443 = vsel %vm542, %v4393, %v4425
        %v4444 = vsel %vm542, %v4395, %v4427
        %v4445 = vsel %vm542, %v4397, %v4429
        %v4446 = vsel %vm542, %v4399, %v4367
        %v4447 = vsel %vm542, %v4401, %v4369
        %v4448 = vsel %vm542, %v4403, %v4371
        %v4449 = vsel %vm542, %v4405, %v4373
        %v4450 = vsel %vm542, %v4407, %v4375
        %v4451 = vsel %vm542, %v4409, %v4377
        %v4452 = vsel %vm542, %v4411, %v4379
        %v4453 = vsel %vm542, %v4413, %v4381
        %v4454 = vsel %vm542, %v4415, %v4383
        %v4455 = vsel %vm542, %v4417, %v4385
        %v4456 = vsel %vm542, %v4419, %v4387
        %v4457 = vsel %vm542, %v4421, %v4389
        %v4458 = vsel %vm542, %v4423, %v4391
        %v4459 = vsel %vm542, %v4425, %v4393
        %v4460 = vsel %vm542, %v4427, %v4395
        %v4461 = vsel %vm542, %v4429, %v4397
        %v4462 = vsel %vm549, %v4430, 0.0
        %v4463 = vsel %vm550, %v4446, 0.0
        %v4464 = vsel %vm549, %v4431, 0.0
        %v4465 = vsel %vm550, %v4447, 0.0
        %v4466 = vsel %vm549, %v4432, 0.0
        %v4467 = vsel %vm550, %v4448, 0.0
        %v4468 = vsel %vm549, %v4433, 0.0
        %v4469 = vsel %vm550, %v4449, 0.0
        %v4470 = vsel %vm549, %v4434, 0.0
        %v4471 = vsel %vm550, %v4450, 0.0
        %v4472 = vsel %vm549, %v4435, 0.0
        %v4473 = vsel %vm550, %v4451, 0.0
        %v4474 = vsel %vm549, %v4436, 0.0
        %v4475 = vsel %vm550, %v4452, 0.0
        %v4476 = vsel %vm549, %v4437, 0.0
        %v4477 = vsel %vm550, %v4453, 0.0
        %v4478 = vsel %vm549, %v4438, 0.0
        %v4479 = vsel %vm550, %v4454, 0.0
        %v4480 = vsel %vm549, %v4439, 0.0
        %v4481 = vsel %vm550, %v4455, 0.0
        %v4482 = vsel %vm549, %v4440, 0.0
        %v4483 = vsel %vm550, %v4456, 0.0
        %v4484 = vsel %vm549, %v4441, 0.0
        %v4485 = vsel %vm550, %v4457, 0.0
        %v4486 = vsel %vm549, %v4442, 0.0
        %v4487 = vsel %vm550, %v4458, 0.0
        %v4488 = vsel %vm549, %v4443, 0.0
        %v4489 = vsel %vm550, %v4459, 0.0
        %v4490 = vsel %vm549, %v4444, 0.0
        %v4491 = vsel %vm550, %v4460, 0.0
        %v4492 = vsel %vm549, %v4445, 0.0
        %v4493 = vsel %vm550, %v4461, 0.0
        %4494 = vst [vmem:[#allocation3 + $0x800] sm:$0xff] %v4462
        %4495 = vst [vmem:[#allocation3 + $0x808] sm:$0xff] %v4463
        %4496 = vst [vmem:[#allocation3 + $0x810] sm:$0xff] %v4464
        %4497 = vst [vmem:[#allocation3 + $0x818] sm:$0xff] %v4465
        %4498 = vst [vmem:[#allocation3 + $0x820] sm:$0xff] %v4466
        %4499 = vst [vmem:[#allocation3 + $0x828] sm:$0xff] %v4467
        %4500 = vst [vmem:[#allocation3 + $0x830] sm:$0xff] %v4468
        %4501 = vst [vmem:[#allocation3 + $0x838] sm:$0xff] %v4469
        %4502 = vst [vmem:[#allocation3 + $0x840] sm:$0xff] %v4470
        %4503 = vst [vmem:[#allocation3 + $0x848] sm:$0xff] %v4471
        %4504 = vst [vmem:[#allocation3 + $0x850] sm:$0xff] %v4472
        %4505 = vst [vmem:[#allocation3 + $0x858] sm:$0xff] %v4473
        %4506 = vst [vmem:[#allocation3 + $0x860] sm:$0xff] %v4474
        %4507 = vst [vmem:[#allocation3 + $0x868] sm:$0xff] %v4475
        %4508 = vst [vmem:[#allocation3 + $0x870] sm:$0xff] %v4476
        %4509 = vst [vmem:[#allocation3 + $0x878] sm:$0xff] %v4477
        %4510 = vst [vmem:[#allocation3 + $0x880] sm:$0xff] %v4478
        %4511 = vst [vmem:[#allocation3 + $0x888] sm:$0xff] %v4479
        %4512 = vst [vmem:[#allocation3 + $0x890] sm:$0xff] %v4480
        %4513 = vst [vmem:[#allocation3 + $0x898] sm:$0xff] %v4481
        %4514 = vst [vmem:[#allocation3 + $0x8a0] sm:$0xff] %v4482
        %4515 = vst [vmem:[#allocation3 + $0x8a8] sm:$0xff] %v4483
        %4516 = vst [vmem:[#allocation3 + $0x8b0] sm:$0xff] %v4484
        %4517 = vst [vmem:[#allocation3 + $0x8b8] sm:$0xff] %v4485
        %4518 = vst [vmem:[#allocation3 + $0x8c0] sm:$0xff] %v4486
        %4519 = vst [vmem:[#allocation3 + $0x8c8] sm:$0xff] %v4487
        %4520 = vst [vmem:[#allocation3 + $0x8d0] sm:$0xff] %v4488
        %4521 = vst [vmem:[#allocation3 + $0x8d8] sm:$0xff] %v4489
        %4522 = vst [vmem:[#allocation3 + $0x8e0] sm:$0xff] %v4490
        %4523 = vst [vmem:[#allocation3 + $0x8e8] sm:$0xff] %v4491
        %4524 = vst [vmem:[#allocation3 + $0x8f0] sm:$0xff] %v4492
        %4525 = vst [vmem:[#allocation3 + $0x8f8] sm:$0xff] %v4493
        %v4526 = vld [vmem:[%s7] sm:$0xff]
        %v4527 = vld [vmem:[%s7 + $0x8] sm:$0xff]
        %v4528 = vld [vmem:[%s7 + $0x10] sm:$0xff]
        %v4529 = vld [vmem:[%s7 + $0x18] sm:$0xff]
        %v4530 = vld [vmem:[%s7 + $0x20] sm:$0xff]
        %v4531 = vld [vmem:[%s7 + $0x28] sm:$0xff]
        %v4532 = vld [vmem:[%s7 + $0x30] sm:$0xff]
        %v4533 = vld [vmem:[%s7 + $0x38] sm:$0xff]
        %v4534 = vld [vmem:[%s7 + $0x40] sm:$0xff]
        %v4535 = vld [vmem:[%s7 + $0x48] sm:$0xff]
        %v4536 = vld [vmem:[%s7 + $0x50] sm:$0xff]
        %v4537 = vld [vmem:[%s7 + $0x58] sm:$0xff]
        %v4538 = vld [vmem:[%s7 + $0x60] sm:$0xff]
        %v4539 = vld [vmem:[%s7 + $0x68] sm:$0xff]
        %v4540 = vld [vmem:[%s7 + $0x70] sm:$0xff]
        %v4541 = vld [vmem:[%s7 + $0x78] sm:$0xff]
        %v4542 = vld [vmem:[%s7 + $0x80] sm:$0xff]
        %v4543 = vld [vmem:[%s7 + $0x88] sm:$0xff]
        %v4544 = vld [vmem:[%s7 + $0x90] sm:$0xff]
        %v4545 = vld [vmem:[%s7 + $0x98] sm:$0xff]
        %v4546 = vld [vmem:[%s7 + $0xa0] sm:$0xff]
        %v4547 = vld [vmem:[%s7 + $0xa8] sm:$0xff]
        %v4548 = vld [vmem:[%s7 + $0xb0] sm:$0xff]
        %v4549 = vld [vmem:[%s7 + $0xb8] sm:$0xff]
        %v4550 = vld [vmem:[%s7 + $0xc0] sm:$0xff]
        %v4551 = vld [vmem:[%s7 + $0xc8] sm:$0xff]
        %v4552 = vld [vmem:[%s7 + $0xd0] sm:$0xff]
        %v4553 = vld [vmem:[#allocation3] sm:$0xff]
        %v4554 = vld [vmem:[#allocation3 + $0x8] sm:$0xff]
        %v4555 = vld [vmem:[#allocation3 + $0x10] sm:$0xff]
        %v4556 = vld [vmem:[#allocation3 + $0x18] sm:$0xff]
        %v4557 = vld [vmem:[#allocation3 + $0x20] sm:$0xff]
        %v4558 = vld [vmem:[#allocation3 + $0x28] sm:$0xff]
        %v4559 = vld [vmem:[#allocation3 + $0x30] sm:$0xff]
        %v4560 = vld [vmem:[#allocation3 + $0x38] sm:$0xff]
        %v4561 = vld [vmem:[#allocation3 + $0x40] sm:$0xff]
        %v4562 = vld [vmem:[#allocation3 + $0x48] sm:$0xff]
        %v4563 = vld [vmem:[#allocation3 + $0x50] sm:$0xff]
        %v4564 = vld [vmem:[#allocation3 + $0x58] sm:$0xff]
        %v4565 = vld [vmem:[#allocation3 + $0x60] sm:$0xff]
        %v4566 = vld [vmem:[#allocation3 + $0x68] sm:$0xff]
        %v4567 = vld [vmem:[#allocation3 + $0x70] sm:$0xff]
        %v4568 = vld [vmem:[#allocation3 + $0x78] sm:$0xff]
        %v4569 = vld [vmem:[#allocation3 + $0x80] sm:$0xff]
        %v4570 = vld [vmem:[#allocation3 + $0x88] sm:$0xff]
        %v4571 = vld [vmem:[#allocation3 + $0x90] sm:$0xff]
        %v4572 = vld [vmem:[#allocation3 + $0x98] sm:$0xff]
        %v4573 = vld [vmem:[#allocation3 + $0xa0] sm:$0xff]
        %v4574 = vld [vmem:[#allocation3 + $0xa8] sm:$0xff]
        %v4575 = vld [vmem:[#allocation3 + $0xb0] sm:$0xff]
        %v4576 = vld [vmem:[#allocation3 + $0xb8] sm:$0xff]
        %v4577 = vld [vmem:[#allocation3 + $0xc0] sm:$0xff]
        %v4578 = vld [vmem:[#allocation3 + $0xc8] sm:$0xff]
        %v4579 = vld [vmem:[#allocation3 + $0xd0] sm:$0xff]
        %v4580 = vld [vmem:[#allocation3 + $0xd8] sm:$0xff]
        %v4581 = vld [vmem:[#allocation3 + $0xe0] sm:$0xff]
        %v4582 = vld [vmem:[#allocation3 + $0xe8] sm:$0xff]
        %v4583 = vld [vmem:[#allocation3 + $0xf0] sm:$0xff]
        %v4584 = vld [vmem:[#allocation3 + $0xf8] sm:$0xff]
        %v4585 = vld [vmem:[#allocation3 + $0x100] sm:$0xff]
        %v4586 = vld [vmem:[#allocation3 + $0x108] sm:$0xff]
        %v4587 = vld [vmem:[#allocation3 + $0x110] sm:$0xff]
        %v4588 = vld [vmem:[#allocation3 + $0x118] sm:$0xff]
        %v4589 = vld [vmem:[#allocation3 + $0x120] sm:$0xff]
        %v4590 = vld [vmem:[#allocation3 + $0x128] sm:$0xff]
        %v4591 = vld [vmem:[#allocation3 + $0x130] sm:$0xff]
        %v4592 = vld [vmem:[#allocation3 + $0x138] sm:$0xff]
        %v4593 = vld [vmem:[#allocation3 + $0x140] sm:$0xff]
        %v4594 = vld [vmem:[#allocation3 + $0x148] sm:$0xff]
        %v4595 = vld [vmem:[#allocation3 + $0x150] sm:$0xff]
        %v4596 = vld [vmem:[#allocation3 + $0x158] sm:$0xff]
        %v4597 = vld [vmem:[#allocation3 + $0x160] sm:$0xff]
        %v4598 = vld [vmem:[#allocation3 + $0x168] sm:$0xff]
        %v4599 = vld [vmem:[#allocation3 + $0x170] sm:$0xff]
        %v4600 = vld [vmem:[#allocation3 + $0x178] sm:$0xff]
        %v4601 = vld [vmem:[#allocation3 + $0x180] sm:$0xff]
        %v4602 = vld [vmem:[#allocation3 + $0x188] sm:$0xff]
        %v4603 = vld [vmem:[#allocation3 + $0x190] sm:$0xff]
        %v4604 = vld [vmem:[#allocation3 + $0x198] sm:$0xff]
        %v4605 = vld [vmem:[#allocation3 + $0x1a0] sm:$0xff]
        %v4606 = vld [vmem:[#allocation3 + $0x1a8] sm:$0xff]
        %v4607 = vld [vmem:[#allocation3 + $0x1b0] sm:$0xff]
        %v4608 = vld [vmem:[#allocation3 + $0x1b8] sm:$0xff]
        %v4609 = vld [vmem:[#allocation3 + $0x1c0] sm:$0xff]
        %v4610 = vld [vmem:[#allocation3 + $0x1c8] sm:$0xff]
        %v4611 = vld [vmem:[#allocation3 + $0x1d0] sm:$0xff]
        %v4612 = vld [vmem:[#allocation3 + $0x1d8] sm:$0xff]
        %v4613 = vld [vmem:[#allocation3 + $0x1e0] sm:$0xff]
        %v4614 = vld [vmem:[#allocation3 + $0x1e8] sm:$0xff]
        %v4615 = vld [vmem:[#allocation3 + $0x1f0] sm:$0xff]
        %v4616 = vld [vmem:[#allocation3 + $0x1f8] sm:$0xff]
        %v4617 = vld [vmem:[#allocation3 + $0x200] sm:$0xff]
        %v4618 = vld [vmem:[#allocation3 + $0x208] sm:$0xff]
        %v4619 = vld [vmem:[#allocation3 + $0x210] sm:$0xff]
        %v4620 = vld [vmem:[#allocation3 + $0x218] sm:$0xff]
        %v4621 = vld [vmem:[#allocation3 + $0x220] sm:$0xff]
        %v4622 = vld [vmem:[#allocation3 + $0x228] sm:$0xff]
        %v4623 = vld [vmem:[#allocation3 + $0x230] sm:$0xff]
        %v4624 = vld [vmem:[#allocation3 + $0x238] sm:$0xff]
        %v4625 = vld [vmem:[#allocation3 + $0x240] sm:$0xff]
        %v4626 = vld [vmem:[#allocation3 + $0x248] sm:$0xff]
        %v4627 = vld [vmem:[#allocation3 + $0x250] sm:$0xff]
        %v4628 = vld [vmem:[#allocation3 + $0x258] sm:$0xff]
        %v4629 = vld [vmem:[#allocation3 + $0x260] sm:$0xff]
        %v4630 = vld [vmem:[#allocation3 + $0x268] sm:$0xff]
        %v4631 = vld [vmem:[#allocation3 + $0x270] sm:$0xff]
        %v4632 = vld [vmem:[#allocation3 + $0x278] sm:$0xff]
        %v4633 = vld [vmem:[#allocation3 + $0x280] sm:$0xff]
        %v4634 = vld [vmem:[#allocation3 + $0x288] sm:$0xff]
        %v4635 = vld [vmem:[#allocation3 + $0x290] sm:$0xff]
        %v4636 = vld [vmem:[#allocation3 + $0x298] sm:$0xff]
        %v4637 = vld [vmem:[#allocation3 + $0x2a0] sm:$0xff]
        %v4638 = vld [vmem:[#allocation3 + $0x2a8] sm:$0xff]
        %v4639 = vld [vmem:[#allocation3 + $0x2b0] sm:$0xff]
        %v4640 = vld [vmem:[#allocation3 + $0x2b8] sm:$0xff]
        %v4641 = vld [vmem:[#allocation3 + $0x2c0] sm:$0xff]
        %v4642 = vld [vmem:[#allocation3 + $0x2c8] sm:$0xff]
        %v4643 = vld [vmem:[#allocation3 + $0x2d0] sm:$0xff]
        %v4644 = vld [vmem:[#allocation3 + $0x2d8] sm:$0xff]
        %v4645 = vld [vmem:[#allocation3 + $0x2e0] sm:$0xff]
        %v4646 = vld [vmem:[#allocation3 + $0x2e8] sm:$0xff]
        %v4647 = vld [vmem:[#allocation3 + $0x2f0] sm:$0xff]
        %v4648 = vld [vmem:[#allocation3 + $0x2f8] sm:$0xff]
        %v4649 = vld [vmem:[#allocation3 + $0x300] sm:$0xff]
        %v4650 = vld [vmem:[#allocation3 + $0x308] sm:$0xff]
        %v4651 = vld [vmem:[#allocation3 + $0x310] sm:$0xff]
        %v4652 = vld [vmem:[#allocation3 + $0x318] sm:$0xff]
        %v4653 = vld [vmem:[#allocation3 + $0x320] sm:$0xff]
        %v4654 = vld [vmem:[#allocation3 + $0x328] sm:$0xff]
        %v4655 = vld [vmem:[#allocation3 + $0x330] sm:$0xff]
        %v4656 = vld [vmem:[#allocation3 + $0x338] sm:$0xff]
        %v4657 = vld [vmem:[#allocation3 + $0x340] sm:$0xff]
        %v4658 = vld [vmem:[#allocation3 + $0x348] sm:$0xff]
        %v4659 = vld [vmem:[#allocation3 + $0x350] sm:$0xff]
        %v4660 = vld [vmem:[#allocation3 + $0x358] sm:$0xff]
        %v4661 = vld [vmem:[#allocation3 + $0x360] sm:$0xff]
        %v4662 = vld [vmem:[#allocation3 + $0x368] sm:$0xff]
        %v4663 = vld [vmem:[#allocation3 + $0x370] sm:$0xff]
        %v4664 = vld [vmem:[#allocation3 + $0x378] sm:$0xff]
        %v4665 = vld [vmem:[#allocation3 + $0x380] sm:$0xff]
        %v4666 = vld [vmem:[#allocation3 + $0x388] sm:$0xff]
        %v4667 = vld [vmem:[#allocation3 + $0x390] sm:$0xff]
        %v4668 = vld [vmem:[#allocation3 + $0x398] sm:$0xff]
        %v4669 = vld [vmem:[#allocation3 + $0x3a0] sm:$0xff]
        %v4670 = vld [vmem:[#allocation3 + $0x3a8] sm:$0xff]
        %v4671 = vld [vmem:[#allocation3 + $0x3b0] sm:$0xff]
        %v4672 = vld [vmem:[#allocation3 + $0x3b8] sm:$0xff]
        %v4673 = vld [vmem:[#allocation3 + $0x3c0] sm:$0xff]
        %v4674 = vld [vmem:[#allocation3 + $0x3c8] sm:$0xff]
        %v4675 = vld [vmem:[#allocation3 + $0x3d0] sm:$0xff]
        %v4676 = vld [vmem:[#allocation3 + $0x3d8] sm:$0xff]
        %v4677 = vld [vmem:[#allocation3 + $0x3e0] sm:$0xff]
        %v4678 = vld [vmem:[#allocation3 + $0x3e8] sm:$0xff]
        %v4679 = vld [vmem:[#allocation3 + $0x3f0] sm:$0xff]
        %v4680 = vld [vmem:[#allocation3 + $0x3f8] sm:$0xff]
        %v4681 = vld [vmem:[#allocation3 + $0x400] sm:$0xff]
        %v4682 = vld [vmem:[#allocation3 + $0x408] sm:$0xff]
        %v4683 = vld [vmem:[#allocation3 + $0x410] sm:$0xff]
        %v4684 = vld [vmem:[#allocation3 + $0x418] sm:$0xff]
        %v4685 = vld [vmem:[#allocation3 + $0x420] sm:$0xff]
        %v4686 = vld [vmem:[#allocation3 + $0x428] sm:$0xff]
        %v4687 = vld [vmem:[#allocation3 + $0x430] sm:$0xff]
        %v4688 = vld [vmem:[#allocation3 + $0x438] sm:$0xff]
        %v4689 = vld [vmem:[#allocation3 + $0x440] sm:$0xff]
        %v4690 = vld [vmem:[#allocation3 + $0x448] sm:$0xff]
        %v4691 = vld [vmem:[#allocation3 + $0x450] sm:$0xff]
        %v4692 = vld [vmem:[#allocation3 + $0x458] sm:$0xff]
        %v4693 = vld [vmem:[#allocation3 + $0x460] sm:$0xff]
        %v4694 = vld [vmem:[#allocation3 + $0x468] sm:$0xff]
        %v4695 = vld [vmem:[#allocation3 + $0x470] sm:$0xff]
        %v4696 = vld [vmem:[#allocation3 + $0x478] sm:$0xff]
        %v4697 = vld [vmem:[#allocation3 + $0x480] sm:$0xff]
        %v4698 = vld [vmem:[#allocation3 + $0x488] sm:$0xff]
        %v4699 = vld [vmem:[#allocation3 + $0x490] sm:$0xff]
        %v4700 = vld [vmem:[#allocation3 + $0x498] sm:$0xff]
        %v4701 = vld [vmem:[#allocation3 + $0x4a0] sm:$0xff]
        %v4702 = vld [vmem:[#allocation3 + $0x4a8] sm:$0xff]
        %v4703 = vld [vmem:[#allocation3 + $0x4b0] sm:$0xff]
        %v4704 = vld [vmem:[#allocation3 + $0x4b8] sm:$0xff]
        %v4705 = vld [vmem:[#allocation3 + $0x4c0] sm:$0xff]
        %v4706 = vld [vmem:[#allocation3 + $0x4c8] sm:$0xff]
        %v4707 = vld [vmem:[#allocation3 + $0x4d0] sm:$0xff]
        %v4708 = vld [vmem:[#allocation3 + $0x4d8] sm:$0xff]
        %v4709 = vld [vmem:[#allocation3 + $0x4e0] sm:$0xff]
        %v4710 = vld [vmem:[#allocation3 + $0x4e8] sm:$0xff]
        %v4711 = vld [vmem:[#allocation3 + $0x4f0] sm:$0xff]
        %v4712 = vld [vmem:[#allocation3 + $0x4f8] sm:$0xff]
        %v4713 = vld [vmem:[#allocation3 + $0x500] sm:$0xff]
        %v4714 = vld [vmem:[#allocation3 + $0x508] sm:$0xff]
        %v4715 = vld [vmem:[#allocation3 + $0x510] sm:$0xff]
        %v4716 = vld [vmem:[#allocation3 + $0x518] sm:$0xff]
        %v4717 = vld [vmem:[#allocation3 + $0x520] sm:$0xff]
        %v4718 = vld [vmem:[#allocation3 + $0x528] sm:$0xff]
        %v4719 = vld [vmem:[#allocation3 + $0x530] sm:$0xff]
        %v4720 = vld [vmem:[#allocation3 + $0x538] sm:$0xff]
        %v4721 = vld [vmem:[#allocation3 + $0x540] sm:$0xff]
        %v4722 = vld [vmem:[#allocation3 + $0x548] sm:$0xff]
        %v4723 = vld [vmem:[#allocation3 + $0x550] sm:$0xff]
        %v4724 = vld [vmem:[#allocation3 + $0x558] sm:$0xff]
        %v4725 = vld [vmem:[#allocation3 + $0x560] sm:$0xff]
        %v4726 = vld [vmem:[#allocation3 + $0x568] sm:$0xff]
        %v4727 = vld [vmem:[#allocation3 + $0x570] sm:$0xff]
        %v4728 = vld [vmem:[#allocation3 + $0x578] sm:$0xff]
        %v4729 = vld [vmem:[#allocation3 + $0x580] sm:$0xff]
        %v4730 = vld [vmem:[#allocation3 + $0x588] sm:$0xff]
        %v4731 = vld [vmem:[#allocation3 + $0x590] sm:$0xff]
        %v4732 = vld [vmem:[#allocation3 + $0x598] sm:$0xff]
        %v4733 = vld [vmem:[#allocation3 + $0x5a0] sm:$0xff]
        %v4734 = vld [vmem:[#allocation3 + $0x5a8] sm:$0xff]
        %v4735 = vld [vmem:[#allocation3 + $0x5b0] sm:$0xff]
        %v4736 = vld [vmem:[#allocation3 + $0x5b8] sm:$0xff]
        %v4737 = vld [vmem:[#allocation3 + $0x5c0] sm:$0xff]
        %v4738 = vld [vmem:[#allocation3 + $0x5c8] sm:$0xff]
        %v4739 = vld [vmem:[#allocation3 + $0x5d0] sm:$0xff]
        %v4740 = vld [vmem:[#allocation3 + $0x5d8] sm:$0xff]
        %v4741 = vld [vmem:[#allocation3 + $0x5e0] sm:$0xff]
        %v4742 = vld [vmem:[#allocation3 + $0x5e8] sm:$0xff]
        %v4743 = vld [vmem:[#allocation3 + $0x5f0] sm:$0xff]
        %v4744 = vld [vmem:[#allocation3 + $0x5f8] sm:$0xff]
        %v4745 = vld [vmem:[#allocation3 + $0x600] sm:$0xff]
        %v4746 = vld [vmem:[#allocation3 + $0x608] sm:$0xff]
        %v4747 = vld [vmem:[#allocation3 + $0x610] sm:$0xff]
        %v4748 = vld [vmem:[#allocation3 + $0x618] sm:$0xff]
        %v4749 = vld [vmem:[#allocation3 + $0x620] sm:$0xff]
        %v4750 = vld [vmem:[#allocation3 + $0x628] sm:$0xff]
        %v4751 = vld [vmem:[#allocation3 + $0x630] sm:$0xff]
        %v4752 = vld [vmem:[#allocation3 + $0x638] sm:$0xff]
        %v4753 = vld [vmem:[#allocation3 + $0x640] sm:$0xff]
        %v4754 = vld [vmem:[#allocation3 + $0x648] sm:$0xff]
        %v4755 = vld [vmem:[#allocation3 + $0x650] sm:$0xff]
        %v4756 = vld [vmem:[#allocation3 + $0x658] sm:$0xff]
        %v4757 = vld [vmem:[#allocation3 + $0x660] sm:$0xff]
        %v4758 = vld [vmem:[#allocation3 + $0x668] sm:$0xff]
        %v4759 = vld [vmem:[#allocation3 + $0x670] sm:$0xff]
        %v4760 = vld [vmem:[#allocation3 + $0x678] sm:$0xff]
        %v4761 = vld [vmem:[#allocation3 + $0x680] sm:$0xff]
        %v4762 = vld [vmem:[#allocation3 + $0x688] sm:$0xff]
        %v4763 = vld [vmem:[#allocation3 + $0x690] sm:$0xff]
        %v4764 = vld [vmem:[#allocation3 + $0x698] sm:$0xff]
        %v4765 = vld [vmem:[#allocation3 + $0x6a0] sm:$0xff]
        %v4766 = vld [vmem:[#allocation3 + $0x6a8] sm:$0xff]
        %v4767 = vld [vmem:[#allocation3 + $0x6b0] sm:$0xff]
        %v4768 = vld [vmem:[#allocation3 + $0x6b8] sm:$0xff]
        %v4769 = vld [vmem:[#allocation3 + $0x6c0] sm:$0xff]
        %v4770 = vld [vmem:[#allocation3 + $0x6c8] sm:$0xff]
        %v4771 = vld [vmem:[#allocation3 + $0x6d0] sm:$0xff]
        %v4772 = vld [vmem:[#allocation3 + $0x6d8] sm:$0xff]
        %v4773 = vld [vmem:[#allocation3 + $0x6e0] sm:$0xff]
        %v4774 = vld [vmem:[#allocation3 + $0x6e8] sm:$0xff]
        %v4775 = vld [vmem:[#allocation3 + $0x6f0] sm:$0xff]
        %v4776 = vld [vmem:[#allocation3 + $0x6f8] sm:$0xff]
        %v4777 = vld [vmem:[#allocation3 + $0x700] sm:$0xff]
        %v4778 = vld [vmem:[#allocation3 + $0x708] sm:$0xff]
        %v4779 = vld [vmem:[#allocation3 + $0x710] sm:$0xff]
        %v4780 = vld [vmem:[#allocation3 + $0x718] sm:$0xff]
        %v4781 = vld [vmem:[#allocation3 + $0x720] sm:$0xff]
        %v4782 = vld [vmem:[#allocation3 + $0x728] sm:$0xff]
        %v4783 = vld [vmem:[#allocation3 + $0x730] sm:$0xff]
        %v4784 = vld [vmem:[#allocation3 + $0x738] sm:$0xff]
        %v4785 = vld [vmem:[#allocation3 + $0x740] sm:$0xff]
        %v4786 = vld [vmem:[#allocation3 + $0x748] sm:$0xff]
        %v4787 = vld [vmem:[#allocation3 + $0x750] sm:$0xff]
        %v4788 = vld [vmem:[#allocation3 + $0x758] sm:$0xff]
        %v4789 = vld [vmem:[#allocation3 + $0x760] sm:$0xff]
        %v4790 = vld [vmem:[#allocation3 + $0x768] sm:$0xff]
        %v4791 = vld [vmem:[#allocation3 + $0x770] sm:$0xff]
        %v4792 = vld [vmem:[#allocation3 + $0x778] sm:$0xff]
        %v4793 = vld [vmem:[#allocation3 + $0x780] sm:$0xff]
        %v4794 = vld [vmem:[#allocation3 + $0x788] sm:$0xff]
        %v4795 = vld [vmem:[#allocation3 + $0x790] sm:$0xff]
        %v4796 = vld [vmem:[#allocation3 + $0x798] sm:$0xff]
        %v4797 = vld [vmem:[#allocation3 + $0x7a0] sm:$0xff]
        %v4798 = vld [vmem:[#allocation3 + $0x7a8] sm:$0xff]
        %v4799 = vld [vmem:[#allocation3 + $0x7b0] sm:$0xff]
        %v4800 = vld [vmem:[#allocation3 + $0x7b8] sm:$0xff]
        %v4801 = vld [vmem:[#allocation3 + $0x7c0] sm:$0xff]
        %v4802 = vld [vmem:[#allocation3 + $0x7c8] sm:$0xff]
        %v4803 = vld [vmem:[#allocation3 + $0x7d0] sm:$0xff]
        %v4804 = vld [vmem:[#allocation3 + $0x7d8] sm:$0xff]
        %v4805 = vld [vmem:[#allocation3 + $0x7e0] sm:$0xff]
        %v4806 = vld [vmem:[#allocation3 + $0x7e8] sm:$0xff]
        %v4807 = vld [vmem:[#allocation3 + $0x7f0] sm:$0xff]
        %v4808 = vld [vmem:[#allocation3 + $0x7f8] sm:$0xff]
        %v4809 = vld [vmem:[#allocation3 + $0x800] sm:$0xff]
        %v4810 = vld [vmem:[#allocation3 + $0x808] sm:$0xff]
        %v4811 = vld [vmem:[#allocation3 + $0x810] sm:$0xff]
        %v4812 = vld [vmem:[#allocation3 + $0x818] sm:$0xff]
        %v4813 = vld [vmem:[#allocation3 + $0x820] sm:$0xff]
        %v4814 = vld [vmem:[#allocation3 + $0x828] sm:$0xff]
        %v4815 = vld [vmem:[#allocation3 + $0x830] sm:$0xff]
        %v4816 = vld [vmem:[#allocation3 + $0x838] sm:$0xff]
        %v4817 = vld [vmem:[#allocation3 + $0x840] sm:$0xff]
        %v4818 = vld [vmem:[#allocation3 + $0x848] sm:$0xff]
        %v4819 = vld [vmem:[#allocation3 + $0x850] sm:$0xff]
        %v4820 = vld [vmem:[#allocation3 + $0x858] sm:$0xff]
        %v4821 = vld [vmem:[#allocation3 + $0x860] sm:$0xff]
        %v4822 = vld [vmem:[#allocation3 + $0x868] sm:$0xff]
        %v4823 = vld [vmem:[#allocation3 + $0x870] sm:$0xff]
        %v4824 = vld [vmem:[#allocation3 + $0x878] sm:$0xff]
        %v4825 = vld [vmem:[#allocation3 + $0x880] sm:$0xff]
        %v4826 = vld [vmem:[#allocation3 + $0x888] sm:$0xff]
        %v4827 = vld [vmem:[#allocation3 + $0x890] sm:$0xff]
        %v4828 = vld [vmem:[#allocation3 + $0x898] sm:$0xff]
        %v4829 = vld [vmem:[#allocation3 + $0x8a0] sm:$0xff]
        %v4830 = vld [vmem:[#allocation3 + $0x8a8] sm:$0xff]
        %v4831 = vld [vmem:[#allocation3 + $0x8b0] sm:$0xff]
        %v4832 = vld [vmem:[#allocation3 + $0x8b8] sm:$0xff]
        %v4833 = vld [vmem:[#allocation3 + $0x8c0] sm:$0xff]
        %v4834 = vld [vmem:[#allocation3 + $0x8c8] sm:$0xff]
        %v4835 = vld [vmem:[#allocation3 + $0x8d0] sm:$0xff]
        %v4836 = vld [vmem:[#allocation3 + $0x8d8] sm:$0xff]
        %v4837 = vld [vmem:[#allocation3 + $0x8e0] sm:$0xff]
        %v4838 = vld [vmem:[#allocation3 + $0x8e8] sm:$0xff]
        %v4839 = vld [vmem:[#allocation3 + $0x8f0] sm:$0xff]
        %v4840 = vld [vmem:[#allocation3 + $0x8f8] sm:$0xff]
        %v4841 = vld [vmem:[%s8] sm:$0xff]
        %v4842 = vld [vmem:[%s8 + $0x8] sm:$0xff]
        %v4843 = vld [vmem:[%s8 + $0x10] sm:$0xff]
        %4845 = vset.pattern.permute.xlu0 0
        %4846 = vperm.xlu0 %4845, %v4841
        %v4847 = vpop.permute.xlu0 %4846
        %4850 = vset.pattern.permute.xlu0 0
        %4851 = vperm.xlu0 %4850, %v4842
        %v4852 = vpop.permute.xlu0 %4851
        %4855 = vset.pattern.permute.xlu0 0
        %4856 = vperm.xlu0 %4855, %v4843
        %v4857 = vpop.permute.xlu0 %4856
        %4859 = vmatprep.subr.mxu0 %v4584
        %4860 = vmatpush1.msra.mxu0 %v4583
        %4861 = vmatprep.subr.mxu0 %v4582
        %4862 = vmatpush1.msra.mxu0 %v4581
        %4863 = vmatprep.subr.mxu0 %v4580
        %4864 = vmatpush1.msra.mxu0 %v4579
        %4865 = vmatprep.subr.mxu0 %v4578
        %4866 = vmatpush1.msra.mxu0 %v4577
        %4867 = vmatprep.subr.mxu0 %v4576
        %4868 = vmatpush1.msra.mxu0 %v4575
        %4869 = vmatprep.subr.mxu0 %v4574
        %4870 = vmatpush1.msra.mxu0 %v4573
        %4871 = vmatprep.subr.mxu0 %v4572
        %4872 = vmatpush1.msra.mxu0 %v4571
        %4873 = vmatprep.subr.mxu0 %v4570
        %4874 = vmatpush1.msra.mxu0 %v4569
        %4875 = vmatprep.subr.mxu0 %v4568
        %4876 = vmatpush1.msra.mxu0 %v4567
        %4877 = vmatprep.subr.mxu0 %v4566
        %4878 = vmatpush1.msra.mxu0 %v4565
        %4879 = vmatprep.subr.mxu0 %v4564
        %4880 = vmatpush1.msra.mxu0 %v4563
        %4881 = vmatprep.subr.mxu0 %v4562
        %4882 = vmatpush1.msra.mxu0 %v4561
        %4883 = vmatprep.subr.mxu0 %v4560
        %4884 = vmatpush1.msra.mxu0 %v4559
        %4885 = vmatprep.subr.mxu0 %v4558
        %4886 = vmatpush1.msra.mxu0 %v4557
        %4887 = vmatprep.subr.mxu0 %v4556
        %4888 = vmatpush1.msra.mxu0 %v4555
        %4889 = vmatprep.subr.mxu0 %v4554
        %4890 = vmatpush1.msra.mxu0 %v4553
        %4891 = vmatprep.subr.mxu0 %v4616
        %4892 = vmatpush2.msra.mxu0 %v4615
        %4893 = vmatprep.subr.mxu0 %v4614
        %4894 = vmatpush2.msra.mxu0 %v4613
        %4895 = vmatprep.subr.mxu0 %v4612
        %4896 = vmatpush2.msra.mxu0 %v4611
        %4897 = vmatprep.subr.mxu0 %v4610
        %4898 = vmatpush2.msra.mxu0 %v4609
        %4899 = vmatprep.subr.mxu0 %v4608
        %4900 = vmatpush2.msra.mxu0 %v4607
        %4901 = vmatprep.subr.mxu0 %v4606
        %4902 = vmatpush2.msra.mxu0 %v4605
        %4903 = vmatprep.subr.mxu0 %v4604
        %4904 = vmatpush2.msra.mxu0 %v4603
        %4905 = vmatprep.subr.mxu0 %v4602
        %4906 = vmatpush2.msra.mxu0 %v4601
        %4907 = vmatprep.subr.mxu0 %v4600
        %4908 = vmatpush2.msra.mxu0 %v4599
        %4909 = vmatprep.subr.mxu0 %v4598
        %4910 = vmatpush2.msra.mxu0 %v4597
        %4911 = vmatprep.subr.mxu0 %v4596
        %4912 = vmatpush2.msra.mxu0 %v4595
        %4913 = vmatprep.subr.mxu0 %v4594
        %4914 = vmatpush2.msra.mxu0 %v4593
        %4915 = vmatprep.subr.mxu0 %v4592
        %4916 = vmatpush2.msra.mxu0 %v4591
        %4917 = vmatprep.subr.mxu0 %v4590
        %4918 = vmatpush2.msra.mxu0 %v4589
        %4919 = vmatprep.subr.mxu0 %v4588
        %4920 = vmatpush2.msra.mxu0 %v4587
        %4921 = vmatprep.subr.mxu0 %v4586
        %4922 = vmatpush2.msra.mxu0 %v4585
        %4923 = vmatprep.mubr.f32.mxu0 %v4527
        %4924 = vmatmul.mubr.f32.gmra.mxu0 %v4526
        %v4925 = vpop.f32.mrf.mxu0
        %v4926 = vadd.f32 %v4847, %v4925
        %v4927 = vpop.f32.mrf.mxu0
        %v4928 = vadd.f32 %v4847, %v4927
        %4929 = vmatprep.mubr.f32.mxu0 %v4536
        %4930 = vmatmul.mubr.f32.gmra.mxu0 %v4535
        %v4931 = vpop.f32.mrf.mxu0
        %v4932 = vadd.f32 %v4852, %v4931
        %v4933 = vpop.f32.mrf.mxu0
        %v4934 = vadd.f32 %v4852, %v4933
        %4935 = vmatprep.mubr.f32.mxu0 %v4545
        %4936 = vmatmul.mubr.f32.gmra.mxu0 %v4544
        %v4937 = vpop.f32.mrf.mxu0
        %v4938 = vadd.f32 %v4857, %v4937
        %v4939 = vpop.f32.mrf.mxu0
        %v4940 = vadd.f32 %v4857, %v4939
        %4941 = vdwg.mxu0
        %4942 = vmatprep.subr.mxu0 %v4648
        %4943 = vmatpush1.msra.mxu0 %v4647
        %4944 = vmatprep.subr.mxu0 %v4646
        %4945 = vmatpush1.msra.mxu0 %v4645
        %4946 = vmatprep.subr.mxu0 %v4644
        %4947 = vmatpush1.msra.mxu0 %v4643
        %4948 = vmatprep.subr.mxu0 %v4642
        %4949 = vmatpush1.msra.mxu0 %v4641
        %4950 = vmatprep.subr.mxu0 %v4640
        %4951 = vmatpush1.msra.mxu0 %v4639
        %4952 = vmatprep.subr.mxu0 %v4638
        %4953 = vmatpush1.msra.mxu0 %v4637
        %4954 = vmatprep.subr.mxu0 %v4636
        %4955 = vmatpush1.msra.mxu0 %v4635
        %4956 = vmatprep.subr.mxu0 %v4634
        %4957 = vmatpush1.msra.mxu0 %v4633
        %4958 = vmatprep.subr.mxu0 %v4632
        %4959 = vmatpush1.msra.mxu0 %v4631
        %4960 = vmatprep.subr.mxu0 %v4630
        %4961 = vmatpush1.msra.mxu0 %v4629
        %4962 = vmatprep.subr.mxu0 %v4628
        %4963 = vmatpush1.msra.mxu0 %v4627
        %4964 = vmatprep.subr.mxu0 %v4626
        %4965 = vmatpush1.msra.mxu0 %v4625
        %4966 = vmatprep.subr.mxu0 %v4624
        %4967 = vmatpush1.msra.mxu0 %v4623
        %4968 = vmatprep.subr.mxu0 %v4622
        %4969 = vmatpush1.msra.mxu0 %v4621
        %4970 = vmatprep.subr.mxu0 %v4620
        %4971 = vmatpush1.msra.mxu0 %v4619
        %4972 = vmatprep.subr.mxu0 %v4618
        %4973 = vmatpush1.msra.mxu0 %v4617
        %4974 = vmatprep.subr.mxu0 %v4680
        %4975 = vmatpush2.msra.mxu0 %v4679
        %4976 = vmatprep.subr.mxu0 %v4678
        %4977 = vmatpush2.msra.mxu0 %v4677
        %4978 = vmatprep.subr.mxu0 %v4676
        %4979 = vmatpush2.msra.mxu0 %v4675
        %4980 = vmatprep.subr.mxu0 %v4674
        %4981 = vmatpush2.msra.mxu0 %v4673
        %4982 = vmatprep.subr.mxu0 %v4672
        %4983 = vmatpush2.msra.mxu0 %v4671
        %4984 = vmatprep.subr.mxu0 %v4670
        %4985 = vmatpush2.msra.mxu0 %v4669
        %4986 = vmatprep.subr.mxu0 %v4668
        %4987 = vmatpush2.msra.mxu0 %v4667
        %4988 = vmatprep.subr.mxu0 %v4666
        %4989 = vmatpush2.msra.mxu0 %v4665
        %4990 = vmatprep.subr.mxu0 %v4664
        %4991 = vmatpush2.msra.mxu0 %v4663
        %4992 = vmatprep.subr.mxu0 %v4662
        %4993 = vmatpush2.msra.mxu0 %v4661
        %4994 = vmatprep.subr.mxu0 %v4660
        %4995 = vmatpush2.msra.mxu0 %v4659
        %4996 = vmatprep.subr.mxu0 %v4658
        %4997 = vmatpush2.msra.mxu0 %v4657
        %4998 = vmatprep.subr.mxu0 %v4656
        %4999 = vmatpush2.msra.mxu0 %v4655
        %5000 = vmatprep.subr.mxu0 %v4654
        %5001 = vmatpush2.msra.mxu0 %v4653
        %5002 = vmatprep.subr.mxu0 %v4652
        %5003 = vmatpush2.msra.mxu0 %v4651
        %5004 = vmatprep.subr.mxu0 %v4650
        %5005 = vmatpush2.msra.mxu0 %v4649
        %5006 = vmatprep.mubr.f32.mxu0 %v4529
        %5007 = vmatmul.mubr.f32.gmra.mxu0 %v4528
        %v5008 = vpop.f32.mrf.mxu0
        %v5009 = vadd.f32 %v4926, %v5008
        %v5010 = vpop.f32.mrf.mxu0
        %v5011 = vadd.f32 %v4928, %v5010
        %5012 = vmatprep.mubr.f32.mxu0 %v4538
        %5013 = vmatmul.mubr.f32.gmra.mxu0 %v4537
        %v5014 = vpop.f32.mrf.mxu0
        %v5015 = vadd.f32 %v4932, %v5014
        %v5016 = vpop.f32.mrf.mxu0
        %v5017 = vadd.f32 %v4934, %v5016
        %5018 = vmatprep.mubr.f32.mxu0 %v4547
        %5019 = vmatmul.mubr.f32.gmra.mxu0 %v4546
        %v5020 = vpop.f32.mrf.mxu0
        %v5021 = vadd.f32 %v4938, %v5020
        %v5022 = vpop.f32.mrf.mxu0
        %v5023 = vadd.f32 %v4940, %v5022
        %5024 = vdwg.mxu0
        %5025 = vmatprep.subr.mxu0 %v4712
        %5026 = vmatpush1.msra.mxu0 %v4711
        %5027 = vmatprep.subr.mxu0 %v4710
        %5028 = vmatpush1.msra.mxu0 %v4709
        %5029 = vmatprep.subr.mxu0 %v4708
        %5030 = vmatpush1.msra.mxu0 %v4707
        %5031 = vmatprep.subr.mxu0 %v4706
        %5032 = vmatpush1.msra.mxu0 %v4705
        %5033 = vmatprep.subr.mxu0 %v4704
        %5034 = vmatpush1.msra.mxu0 %v4703
        %5035 = vmatprep.subr.mxu0 %v4702
        %5036 = vmatpush1.msra.mxu0 %v4701
        %5037 = vmatprep.subr.mxu0 %v4700
        %5038 = vmatpush1.msra.mxu0 %v4699
        %5039 = vmatprep.subr.mxu0 %v4698
        %5040 = vmatpush1.msra.mxu0 %v4697
        %5041 = vmatprep.subr.mxu0 %v4696
        %5042 = vmatpush1.msra.mxu0 %v4695
        %5043 = vmatprep.subr.mxu0 %v4694
        %5044 = vmatpush1.msra.mxu0 %v4693
        %5045 = vmatprep.subr.mxu0 %v4692
        %5046 = vmatpush1.msra.mxu0 %v4691
        %5047 = vmatprep.subr.mxu0 %v4690
        %5048 = vmatpush1.msra.mxu0 %v4689
        %5049 = vmatprep.subr.mxu0 %v4688
        %5050 = vmatpush1.msra.mxu0 %v4687
        %5051 = vmatprep.subr.mxu0 %v4686
        %5052 = vmatpush1.msra.mxu0 %v4685
        %5053 = vmatprep.subr.mxu0 %v4684
        %5054 = vmatpush1.msra.mxu0 %v4683
        %5055 = vmatprep.subr.mxu0 %v4682
        %5056 = vmatpush1.msra.mxu0 %v4681
        %5057 = vmatprep.subr.mxu0 %v4744
        %5058 = vmatpush2.msra.mxu0 %v4743
        %5059 = vmatprep.subr.mxu0 %v4742
        %5060 = vmatpush2.msra.mxu0 %v4741
        %5061 = vmatprep.subr.mxu0 %v4740
        %5062 = vmatpush2.msra.mxu0 %v4739
        %5063 = vmatprep.subr.mxu0 %v4738
        %5064 = vmatpush2.msra.mxu0 %v4737
        %5065 = vmatprep.subr.mxu0 %v4736
        %5066 = vmatpush2.msra.mxu0 %v4735
        %5067 = vmatprep.subr.mxu0 %v4734
        %5068 = vmatpush2.msra.mxu0 %v4733
        %5069 = vmatprep.subr.mxu0 %v4732
        %5070 = vmatpush2.msra.mxu0 %v4731
        %5071 = vmatprep.subr.mxu0 %v4730
        %5072 = vmatpush2.msra.mxu0 %v4729
        %5073 = vmatprep.subr.mxu0 %v4728
        %5074 = vmatpush2.msra.mxu0 %v4727
        %5075 = vmatprep.subr.mxu0 %v4726
        %5076 = vmatpush2.msra.mxu0 %v4725
        %5077 = vmatprep.subr.mxu0 %v4724
        %5078 = vmatpush2.msra.mxu0 %v4723
        %5079 = vmatprep.subr.mxu0 %v4722
        %5080 = vmatpush2.msra.mxu0 %v4721
        %5081 = vmatprep.subr.mxu0 %v4720
        %5082 = vmatpush2.msra.mxu0 %v4719
        %5083 = vmatprep.subr.mxu0 %v4718
        %5084 = vmatpush2.msra.mxu0 %v4717
        %5085 = vmatprep.subr.mxu0 %v4716
        %5086 = vmatpush2.msra.mxu0 %v4715
        %5087 = vmatprep.subr.mxu0 %v4714
        %5088 = vmatpush2.msra.mxu0 %v4713
        %5089 = vmatprep.mubr.f32.mxu0 %v4531
        %5090 = vmatmul.mubr.f32.gmra.mxu0 %v4530
        %v5091 = vpop.f32.mrf.mxu0
        %v5092 = vadd.f32 %v5009, %v5091
        %v5093 = vpop.f32.mrf.mxu0
        %v5094 = vadd.f32 %v5011, %v5093
        %5095 = vmatprep.mubr.f32.mxu0 %v4540
        %5096 = vmatmul.mubr.f32.gmra.mxu0 %v4539
        %v5097 = vpop.f32.mrf.mxu0
        %v5098 = vadd.f32 %v5015, %v5097
        %v5099 = vpop.f32.mrf.mxu0
        %v5100 = vadd.f32 %v5017, %v5099
        %5101 = vmatprep.mubr.f32.mxu0 %v4549
        %5102 = vmatmul.mubr.f32.gmra.mxu0 %v4548
        %v5103 = vpop.f32.mrf.mxu0
        %v5104 = vadd.f32 %v5021, %v5103
        %v5105 = vpop.f32.mrf.mxu0
        %v5106 = vadd.f32 %v5023, %v5105
        %5107 = vdwg.mxu0
        %5108 = vmatprep.subr.mxu0 %v4776
        %5109 = vmatpush1.msra.mxu0 %v4775
        %5110 = vmatprep.subr.mxu0 %v4774
        %5111 = vmatpush1.msra.mxu0 %v4773
        %5112 = vmatprep.subr.mxu0 %v4772
        %5113 = vmatpush1.msra.mxu0 %v4771
        %5114 = vmatprep.subr.mxu0 %v4770
        %5115 = vmatpush1.msra.mxu0 %v4769
        %5116 = vmatprep.subr.mxu0 %v4768
        %5117 = vmatpush1.msra.mxu0 %v4767
        %5118 = vmatprep.subr.mxu0 %v4766
        %5119 = vmatpush1.msra.mxu0 %v4765
        %5120 = vmatprep.subr.mxu0 %v4764
        %5121 = vmatpush1.msra.mxu0 %v4763
        %5122 = vmatprep.subr.mxu0 %v4762
        %5123 = vmatpush1.msra.mxu0 %v4761
        %5124 = vmatprep.subr.mxu0 %v4760
        %5125 = vmatpush1.msra.mxu0 %v4759
        %5126 = vmatprep.subr.mxu0 %v4758
        %5127 = vmatpush1.msra.mxu0 %v4757
        %5128 = vmatprep.subr.mxu0 %v4756
        %5129 = vmatpush1.msra.mxu0 %v4755
        %5130 = vmatprep.subr.mxu0 %v4754
        %5131 = vmatpush1.msra.mxu0 %v4753
        %5132 = vmatprep.subr.mxu0 %v4752
        %5133 = vmatpush1.msra.mxu0 %v4751
        %5134 = vmatprep.subr.mxu0 %v4750
        %5135 = vmatpush1.msra.mxu0 %v4749
        %5136 = vmatprep.subr.mxu0 %v4748
        %5137 = vmatpush1.msra.mxu0 %v4747
        %5138 = vmatprep.subr.mxu0 %v4746
        %5139 = vmatpush1.msra.mxu0 %v4745
        %5140 = vmatprep.subr.mxu0 %v4808
        %5141 = vmatpush2.msra.mxu0 %v4807
        %5142 = vmatprep.subr.mxu0 %v4806
        %5143 = vmatpush2.msra.mxu0 %v4805
        %5144 = vmatprep.subr.mxu0 %v4804
        %5145 = vmatpush2.msra.mxu0 %v4803
        %5146 = vmatprep.subr.mxu0 %v4802
        %5147 = vmatpush2.msra.mxu0 %v4801
        %5148 = vmatprep.subr.mxu0 %v4800
        %5149 = vmatpush2.msra.mxu0 %v4799
        %5150 = vmatprep.subr.mxu0 %v4798
        %5151 = vmatpush2.msra.mxu0 %v4797
        %5152 = vmatprep.subr.mxu0 %v4796
        %5153 = vmatpush2.msra.mxu0 %v4795
        %5154 = vmatprep.subr.mxu0 %v4794
        %5155 = vmatpush2.msra.mxu0 %v4793
        %5156 = vmatprep.subr.mxu0 %v4792
        %5157 = vmatpush2.msra.mxu0 %v4791
        %5158 = vmatprep.subr.mxu0 %v4790
        %5159 = vmatpush2.msra.mxu0 %v4789
        %5160 = vmatprep.subr.mxu0 %v4788
        %5161 = vmatpush2.msra.mxu0 %v4787
        %5162 = vmatprep.subr.mxu0 %v4786
        %5163 = vmatpush2.msra.mxu0 %v4785
        %5164 = vmatprep.subr.mxu0 %v4784
        %5165 = vmatpush2.msra.mxu0 %v4783
        %5166 = vmatprep.subr.mxu0 %v4782
        %5167 = vmatpush2.msra.mxu0 %v4781
        %5168 = vmatprep.subr.mxu0 %v4780
        %5169 = vmatpush2.msra.mxu0 %v4779
        %5170 = vmatprep.subr.mxu0 %v4778
        %5171 = vmatpush2.msra.mxu0 %v4777
        %5172 = vmatprep.mubr.f32.mxu0 %v4533
        %5173 = vmatmul.mubr.f32.gmra.mxu0 %v4532
        %v5174 = vpop.f32.mrf.mxu0
        %v5175 = vadd.f32 %v5092, %v5174
        %v5176 = vpop.f32.mrf.mxu0
        %v5177 = vadd.f32 %v5094, %v5176
        %5178 = vmatprep.mubr.f32.mxu0 %v4542
        %5179 = vmatmul.mubr.f32.gmra.mxu0 %v4541
        %v5180 = vpop.f32.mrf.mxu0
        %v5181 = vadd.f32 %v5098, %v5180
        %v5182 = vpop.f32.mrf.mxu0
        %v5183 = vadd.f32 %v5100, %v5182
        %5184 = vmatprep.mubr.f32.mxu0 %v4551
        %5185 = vmatmul.mubr.f32.gmra.mxu0 %v4550
        %v5186 = vpop.f32.mrf.mxu0
        %v5187 = vadd.f32 %v5104, %v5186
        %v5188 = vpop.f32.mrf.mxu0
        %v5189 = vadd.f32 %v5106, %v5188
        %5190 = vdwg.mxu0
        %5191 = vmatprep.subr.mxu0 %v4840
        %5192 = vmatpush1.msra.mxu0 %v4839
        %5193 = vmatprep.subr.mxu0 %v4838
        %5194 = vmatpush1.msra.mxu0 %v4837
        %5195 = vmatprep.subr.mxu0 %v4836
        %5196 = vmatpush1.msra.mxu0 %v4835
        %5197 = vmatprep.subr.mxu0 %v4834
        %5198 = vmatpush1.msra.mxu0 %v4833
        %5199 = vmatprep.subr.mxu0 %v4832
        %5200 = vmatpush1.msra.mxu0 %v4831
        %5201 = vmatprep.subr.mxu0 %v4830
        %5202 = vmatpush1.msra.mxu0 %v4829
        %5203 = vmatprep.subr.mxu0 %v4828
        %5204 = vmatpush1.msra.mxu0 %v4827
        %5205 = vmatprep.subr.mxu0 %v4826
        %5206 = vmatpush1.msra.mxu0 %v4825
        %5207 = vmatprep.subr.mxu0 %v4824
        %5208 = vmatpush1.msra.mxu0 %v4823
        %5209 = vmatprep.subr.mxu0 %v4822
        %5210 = vmatpush1.msra.mxu0 %v4821
        %5211 = vmatprep.subr.mxu0 %v4820
        %5212 = vmatpush1.msra.mxu0 %v4819
        %5213 = vmatprep.subr.mxu0 %v4818
        %5214 = vmatpush1.msra.mxu0 %v4817
        %5215 = vmatprep.subr.mxu0 %v4816
        %5216 = vmatpush1.msra.mxu0 %v4815
        %5217 = vmatprep.subr.mxu0 %v4814
        %5218 = vmatpush1.msra.mxu0 %v4813
        %5219 = vmatprep.subr.mxu0 %v4812
        %5220 = vmatpush1.msra.mxu0 %v4811
        %5221 = vmatprep.subr.mxu0 %v4810
        %5222 = vmatpush1.msra.mxu0 %v4809
        %5223 = vmatprep.subr.mxu0 0.0
        %5224 = vmatpush2.msra.mxu0 0.0
        %5225 = vmatprep.subr.mxu0 0.0
        %5226 = vmatpush2.msra.mxu0 0.0
        %5227 = vmatprep.subr.mxu0 0.0
        %5228 = vmatpush2.msra.mxu0 0.0
        %5229 = vmatprep.subr.mxu0 0.0
        %5230 = vmatpush2.msra.mxu0 0.0
        %5231 = vmatprep.subr.mxu0 0.0
        %5232 = vmatpush2.msra.mxu0 0.0
        %5233 = vmatprep.subr.mxu0 0.0
        %5234 = vmatpush2.msra.mxu0 0.0
        %5235 = vmatprep.subr.mxu0 0.0
        %5236 = vmatpush2.msra.mxu0 0.0
        %5237 = vmatprep.subr.mxu0 0.0
        %5238 = vmatpush2.msra.mxu0 0.0
        %5239 = vmatprep.subr.mxu0 0.0
        %5240 = vmatpush2.msra.mxu0 0.0
        %5241 = vmatprep.subr.mxu0 0.0
        %5242 = vmatpush2.msra.mxu0 0.0
        %5243 = vmatprep.subr.mxu0 0.0
        %5244 = vmatpush2.msra.mxu0 0.0
        %5245 = vmatprep.subr.mxu0 0.0
        %5246 = vmatpush2.msra.mxu0 0.0
        %5247 = vmatprep.subr.mxu0 0.0
        %5248 = vmatpush2.msra.mxu0 0.0
        %5249 = vmatprep.subr.mxu0 0.0
        %5250 = vmatpush2.msra.mxu0 0.0
        %5251 = vmatprep.subr.mxu0 0.0
        %5252 = vmatpush2.msra.mxu0 0.0
        %5253 = vmatprep.subr.mxu0 0.0
        %5254 = vmatpush2.msra.mxu0 0.0
        %5255 = vmatprep.mubr.f32.mxu0 0.0
        %5256 = vmatmul.mubr.f32.gmra.mxu0 %v4534
        %v5257 = vpop.f32.mrf.mxu0
        %v5258 = vadd.f32 %v5175, %v5257
        %v5259 = vpop.f32.mrf.mxu0
        %v5260 = vadd.f32 %v5177, %v5259
        %5261 = vmatprep.mubr.f32.mxu0 0.0
        %5262 = vmatmul.mubr.f32.gmra.mxu0 %v4543
        %v5263 = vpop.f32.mrf.mxu0
        %v5264 = vadd.f32 %v5181, %v5263
        %v5265 = vpop.f32.mrf.mxu0
        %v5266 = vadd.f32 %v5183, %v5265
        %5267 = vmatprep.mubr.f32.mxu0 0.0
        %5268 = vmatmul.mubr.f32.gmra.mxu0 %v4552
        %v5269 = vpop.f32.mrf.mxu0
        %v5270 = vadd.f32 %v5187, %v5269
        %v5271 = vpop.f32.mrf.mxu0
        %v5272 = vadd.f32 %v5189, %v5271
        %5273 = vdwg.mxu0
        %v5274 = vlaneseq
        %v5275 = vshrl.u32 %v5274, 7
        %v5276 = vadd.s32 %v5275, 8
        %v5277 = vadd.s32 %v5275, 16
        %v5278 = vmax.f32 %v5258, -10.0
        %v5279 = vmax.f32 %v5260, -10.0
        %v5280 = vmax.f32 %v5264, -10.0
        %v5281 = vmax.f32 %v5266, -10.0
        %v5282 = vmax.f32 %v5270, -10.0
        %v5283 = vmax.f32 %v5272, -10.0
        %v5284 = vmin.f32 %v5278, 10.0
        %v5285 = vmin.f32 %v5279, 10.0
        %v5286 = vmin.f32 %v5280, 10.0
        %v5287 = vmin.f32 %v5281, 10.0
        %v5288 = vmin.f32 %v5282, 10.0
        %v5289 = vmin.f32 %v5283, 10.0
        %v5290 = vmul.f32 %v5284, 1.442695
        %v5291 = vpow.pop %v5290
        %v5292 = vmul.f32 %v5285, 1.442695
        %v5293 = vpow.pop %v5292
        %v5294 = vmul.f32 %v5286, 1.442695
        %v5295 = vpow.pop %v5294
        %v5296 = vmul.f32 %v5287, 1.442695
        %v5297 = vpow.pop %v5296
        %v5298 = vmul.f32 %v5288, 1.442695
        %v5299 = vpow.pop %v5298
        %v5300 = vmul.f32 %v5289, 1.442695
        %v5301 = vpow.pop %v5300
        %vm5302 = vcmp.lt.s32.totalorder %v5275, 10
        %vm5303 = vcmp.lt.s32.totalorder %v5276, 10
        %vm5304 = vcmp.lt.s32.totalorder %v5277, 10
        %v5305 = vsel %vm5302, %v5258, %v5291
        %v5306 = vsel %vm5302, %v5260, %v5293
        %v5307 = vsel %vm5303, %v5264, %v5295
        %v5308 = vsel %vm5303, %v5266, %v5297
        %v5309 = vsel %vm5304, %v5270, %v5299
        %v5310 = vsel %vm5304, %v5272, %v5301
        %5311 = vst [vmem:[%s405] sm:$0xff] %v5305
        %5312 = vst [vmem:[%s405 + $0x8] sm:$0xff] %v5306
        %5313 = vst [vmem:[%s405 + $0x10] sm:$0xff] %v5307
        %5314 = vst [vmem:[%s405 + $0x18] sm:$0xff] %v5308
        %5315 = vst [vmem:[%s405 + $0x20] sm:$0xff] %v5309
        %5316 = vst [vmem:[%s405 + $0x28] sm:$0xff] %v5310
        %p5317 = scmp.lt.s32.totalorder %s23, 1
        %s5318 = scalar_select %p5317, %s23, 1
        %s5319 = smul.addr %s5318, 6
        %s5320 = smul.addr %s5319, 8
        %s5321 = scalar_lea.vmem %s9, %s5320
        // Predicated region
        $region77: #{_lambda_.1} parent=55 // pred_check
          %p5322 = pneg %p235
        $region78: #{_lambda_.1} parent=55 // pred_check_branch
          %5324 = sbr.rel (%p5322) target = $region80
        $region79: #{_lambda_.1} parent=55 // pred_region
          _
        $region80: #{_lambda_.1} parent=55 // pred_fallthru
          _
      $region56: #{_lambda_.1} parent=5 // pred_fallthru
        _
      %p5325 = scmp.le.s32.totalorder 2, %s18
      // Predicated region
      $region81: #{_lambda_.1} parent=5 // pred_check
        %p5326 = pneg %p5325
      $region82: #{_lambda_.1} parent=5 // pred_check_branch
        %5328 = sbr.rel (%p5326) target = $region84
      $region83: #{_lambda_.1} parent=5 // pred_region
        %s5329 = ssub.s32 %s18, 2
        // Predicated region
        $region85: #{_lambda_.1} parent=83 // pred_check
          %p5330 = pneg %p241
        $region86: #{_lambda_.1} parent=83 // pred_check_branch
          %5332 = sbr.rel (%p5330) target = $region88
        $region87: #{_lambda_.1} parent=83 // pred_region
          %p5333 = scmp.lt.s32.totalorder %s24, 1
          %s5334 = scalar_select %p5333, %s24, 1
          %s5335 = smul.addr %s5334, 6
          %s5336 = smul.addr %s5335, 8
          %s5337 = scalar_lea.vmem %s9, %s5336
        $region88: #{_lambda_.1} parent=83 // pred_fallthru
          _
      $region84: #{_lambda_.1} parent=5 // pred_fallthru
        _
    $region6: #{_lambda_.1} parent=1 // loop_footer
      %s22 = sadd.s32 1, %s18
    $region7: #{_lambda_.1} parent=1 // loop_footer_branch
      %17 = sbr.rel target = $region3
    $region8: #{_lambda_.1} parent=1 // loop_exit
      _
    %5338 = vsyncpa [#allocation5], 1
    %s5339 = scalar_lea.sflag [#allocation5], 1
    %5340 = vsyncpa %s5339, 1
    %5341 = vsyncpa [#allocation7], 1
    %5342 = vsyncpa [#allocation10], 1

</llo_original>
